<compile_context>
chip_gen: v5e
topology: v5e:2x2
jax: 0.10.0
libtpu: 0.0.40
codegen_flags: <defaults>
</compile_context>

<pallas_src>
import jax
import jax.numpy as jnp
import numpy as np
from jax import lax
from jax.experimental import pallas as pl
from jax.experimental.pallas import tpu as pltpu


# ----------------------------- fused Pallas kernel ------------------------------

def fused_cnn_kernel(x_ref, w1_ref, b1_ref, pc1_ref, w2_ref, b2_ref,
                     w3a_ref, w3b_ref, b3_ref, o_ref):
    B = o_ref.shape[0]          # images per grid step (multiple of 8)
    HB = 14 * B                 # rows per parity half of the image block
    f32 = jnp.float32
    bf16 = jnp.bfloat16

    # Image block, row = (r % 2) * 14B + (r // 2) * B + b  (parity-major input rows).
    X = x_ref[0]                                             # (28B, 28) f32

    # ---- conv1 5x5 (1 -> 32) + bias + relu, banded over kernel rows ----
    # Computed as separate even / odd output-row slabs so the 2x2 row average below
    # is a plain slab add.  Row index of each slab = p*B + b (p = oh//2).
    acc_e = None
    acc_o = None
    for kh in range(5):
        w = w1_ref[kh]                                       # (28, 768) bf16
        pe = (kh % 2) * HB + (kh // 2) * B                   # rows feeding even oh = 2p
        po = ((kh + 1) % 2) * HB + ((kh + 1) // 2) * B       # rows feeding odd  oh = 2p+1
        de = jnp.dot(X[pe:pe + 12 * B, :].astype(bf16), w, preferred_element_type=f32)
        do = jnp.dot(X[po:po + 12 * B, :].astype(bf16), w, preferred_element_type=f32)
        acc_e = de if acc_e is None else acc_e + de
        acc_o = do if acc_o is None else acc_o + do
    c1e = jnp.maximum(acc_e + b1_ref[...], 0.0)              # (12B, 768)  oh even
    c1o = jnp.maximum(acc_o + b1_ref[...], 0.0)              # (12B, 768)  oh odd

    # ---- avg_pool2d(2,2): rows = even+odd slab add, columns = Pc1 selection matmul ----
    # (the 1/4 scale is folded into the conv2 weights)
    pooled = c1e + c1o                                       # (12B, 768), row = p*B + b
    t = jnp.dot(pooled.astype(bf16), pc1_ref[...], preferred_element_type=f32)   # (12B, 384)

    # ---- conv2 3x3 (32 -> 64) + bias + relu, banded over kernel rows ----
    acc2 = None
    for kh in range(3):
        h = t[kh * B:(kh + 10) * B, :].astype(bf16)          # (10B, 384)
        d = jnp.dot(h, w2_ref[kh], preferred_element_type=f32)
        acc2 = d if acc2 is None else acc2 + d
    c2 = jnp.maximum(acc2 + b2_ref[...], 0.0)                # (10B, 640), row = oh2*B + b

    # ---- avg_pool2d(5,5) rows via slab adds (columns + 1/25 folded into fc weights) ----
    q0 = c2[0:B] + c2[B:2 * B] + c2[2 * B:3 * B] + c2[3 * B:4 * B] + c2[4 * B:5 * B]
    q1 = (c2[5 * B:6 * B] + c2[6 * B:7 * B] + c2[7 * B:8 * B]
          + c2[8 * B:9 * B] + c2[9 * B:10 * B])              # (B, 640) each

    # ---- fc1 (64 -> 50, NCHW reshape(-1,64) permutation folded into W3A/W3B) + relu ----
    y = (jnp.dot(q0.astype(bf16), w3a_ref[...], preferred_element_type=f32)
         + jnp.dot(q1.astype(bf16), w3b_ref[...], preferred_element_type=f32)
         + b3_ref[...])
    o_ref[...] = jnp.maximum(y, 0.0)                         # (B, 256) lane-dense slab


# --------------------- parameter preprocessing (done once, host side) ---------------------

def prep_params(params):
    """Torch-shaped params -> banded / pooling / permuted bf16 matrices for the kernel."""
    w1, b1, w2, b2, w3, b3 = [np.asarray(p, np.float32) for p in params]

    # conv1 banded weights: W1b[kh, j, 32*ow + co] = w1[co, 0, kh, j - ow], 0 <= j-ow <= 4
    W1b = np.zeros((5, 28, 24, 32), np.float32)
    for kh in range(5):
        for kw in range(5):
            for ow in range(24):
                W1b[kh, ow + kw, ow, :] = w1[:, 0, kh, kw]
    W1b = W1b.reshape(5, 28, 768)
    b1big = np.tile(b1, 24).reshape(1, 768)                   # col = 32*ow + co

    # 2x2 column pool (plain sum; the 1/4 avg scale is folded into W2b below)
    Pc1 = np.zeros((24, 32, 12, 32), np.float32)
    eye32 = np.eye(32, dtype=np.float32)
    for ow in range(24):
        Pc1[ow, :, ow // 2, :] = eye32
    Pc1 = Pc1.reshape(768, 384)

    # conv2 banded weights (0.25 folded in):
    # W2b[kh, 32*m + ci, 64*ow2 + co] = 0.25 * w2[co, ci, kh, m - ow2], 0 <= m-ow2 <= 2
    W2b = np.zeros((3, 12, 32, 10, 64), np.float32)
    for kh in range(3):
        for kw in range(3):
            for ow in range(10):
                W2b[kh, ow + kw, :, ow, :] = 0.25 * w2[:, :, kh, kw].T
    W2b = W2b.reshape(3, 384, 640)
    b2big = np.tile(b2, 10).reshape(1, 640)                   # col = 64*ow2 + co

    # fc1 with the PyTorch NCHW reshape(-1,64) permutation, the 5x5 column pool and the
    # 1/25 scale folded in; output features zero-padded 50 -> 64 (output col = 64*r + f).
    W3fc = np.zeros((2, 2, 64, 4, 64), np.float32)            # [ph, pw, c, r, f]
    for r in range(4):
        for j in range(64):
            c = 16 * r + j // 4
            ph = (j % 4) // 2
            pw = j % 2
            W3fc[ph, pw, c, r, :50] = w3[:, j]
    W3A = np.zeros((2, 640, 256), np.float32)                 # [ph, 64*ow2 + ci, 64*r + f]
    for ph in range(2):
        for ow2 in range(10):
            W3A[ph, 64 * ow2:64 * ow2 + 64, :] = W3fc[ph, ow2 // 5].reshape(64, 256)
    W3A *= (1.0 / 25.0)
    b3big = np.tile(np.pad(b3, (0, 14)), 4).reshape(1, 256)

    bf = jnp.bfloat16
    return (jnp.asarray(W1b, bf), jnp.asarray(b1big, jnp.float32),
            jnp.asarray(Pc1, bf), jnp.asarray(W2b, bf), jnp.asarray(b2big, jnp.float32),
            jnp.asarray(W3A[0], bf), jnp.asarray(W3A[1], bf),
            jnp.asarray(b3big, jnp.float32))


# ------------------------------- wrapper ------------------------------------

def forward(x, prepped, block_b=8):
    W1b, b1big, Pc1, W2b, b2big, W3A, W3B, b3big = prepped
    assert x.shape[1:] == (1, 28, 28), "CNN_version_2 geometry requires 1x28x28 inputs"
    assert block_b % 8 == 0, "batch block must be a multiple of 8"
    N = x.shape[0]
    B = block_b
    G = -(-N // B)                       # number of grid steps
    Npad = G * B

    # Pack B images per grid step, rows in parity-major order:
    # x_blk[g, (r%2)*14B + (r//2)*B + b, c] = x[g*B + b, 0, r, c]
    xp = x[:, 0]
    if Npad != N:
        xp = jnp.pad(xp, ((0, Npad - N), (0, 0), (0, 0)))
    x_blk = (xp.reshape(G, B, 14, 2, 28)
               .transpose(0, 3, 2, 1, 4)
               .reshape(G, 28 * B, 28))

    c2d = lambda n: (0, 0)
    c3d = lambda n: (0, 0, 0)
    out = pl.pallas_call(
        fused_cnn_kernel,
        out_shape=jax.ShapeDtypeStruct((Npad, 256), jnp.float32),
        grid=(G,),
        in_specs=[
            pl.BlockSpec((1, 28 * B, 28), lambda n: (n, 0, 0)),  # B images, parity-major rows
            pl.BlockSpec((5, 28, 768), c3d),    # banded conv1 weights (bf16)
            pl.BlockSpec((1, 768), c2d),        # conv1 bias, tiled over ow
            pl.BlockSpec((768, 384), c2d),      # 2x2 column-pool selection (bf16)
            pl.BlockSpec((3, 384, 640), c3d),   # banded conv2 weights (bf16, 1/4 folded)
            pl.BlockSpec((1, 640), c2d),        # conv2 bias, tiled over ow2
            pl.BlockSpec((640, 256), c2d),      # fc weights ph=0 (5x5 pool + 1/25 folded)
            pl.BlockSpec((640, 256), c2d),      # fc weights ph=1
            pl.BlockSpec((1, 256), c2d),        # fc bias, padded 50->64, tiled over r
        ],
        out_specs=pl.BlockSpec((B, 256), lambda n: (n, 0)),
        compiler_params=pltpu.CompilerParams(
            dimension_semantics=("parallel",),
            vmem_limit_bytes=32 * 1024 * 1024),
    )(x_blk, W1b, b1big, Pc1, W2b, b2big, W3A, W3B, b3big)

    out = out[:N]
    # col = 64*r + f, r the PyTorch reshape(-1,64) row within the sample, f zero-padded to 64
    return out.reshape(N, 4, 64)[:, :, :50].reshape(N * 4, 50)


# --------------------------- pure-JAX reference ------------------------------

def reference(x, params):
    w1, b1, w2, b2, w3, b3 = params
    N = x.shape[0]
    y = lax.conv_general_dilated(x, w1, (1, 1), 'VALID',
                                 dimension_numbers=('NCHW', 'OIHW', 'NCHW'))
    y = jax.nn.relu(y + b1[None, :, None, None])
    y = y.reshape(N, 32, 12, 2, 12, 2).mean(axis=(3, 5))      # avg_pool2d(2, 2)
    y = lax.conv_general_dilated(y, w2, (1, 1), 'VALID',
                                 dimension_numbers=('NCHW', 'OIHW', 'NCHW'))
    y = jax.nn.relu(y + b2[None, :, None, None])
    y = y.reshape(N, 64, 2, 5, 2, 5).mean(axis=(3, 5))        # avg_pool2d(5, 5)
    y = y.reshape(-1, 64)
    return jax.nn.relu(y @ w3.T + b3)


# ----------------------------------- main ------------------------------------

if __name__ == "__main__":
    key = jax.random.PRNGKey(0)
    ks = jax.random.split(key, 7)
    N = 16  # two batch-blocks of 8 -> even grid length (keeps both v7x TensorCores busy)

    x = jax.random.normal(ks[0], (N, 1, 28, 28), jnp.float32)
    w1 = jax.random.normal(ks[1], (32, 1, 5, 5), jnp.float32) * 0.2   # Conv2d(1, 32, 5)
    b1 = jax.random.normal(ks[2], (32,), jnp.float32) * 0.1
    w2 = jax.random.normal(ks[3], (64, 32, 3, 3), jnp.float32) * 0.1  # Conv2d(32, 64, 3)
    b2 = jax.random.normal(ks[4], (64,), jnp.float32) * 0.1
    w3 = jax.random.normal(ks[5], (50, 64), jnp.float32) * 0.1        # Linear(64, 50)
    b3 = jax.random.normal(ks[6], (50,), jnp.float32) * 0.1
    params = (w1, b1, w2, b2, w3, b3)

    prepped = prep_params(params)          # hoisted out of the per-call (jitted) path
    fwd = jax.jit(forward, static_argnames=("block_b",))
    out = fwd(x, prepped, block_b=8)
    out = jax.block_until_ready(out)

    assert out.shape == (N * 4, 50), out.shape
    ref = reference(x, params)
    # bf16 MXU operands with f32 accumulation -> compare at bf16-level tolerance
    np.testing.assert_allclose(np.asarray(out), np.asarray(ref), rtol=3e-2, atol=3e-2)

    print("KERNEL_OK")
</pallas_src>

<mosaic_0001>
module attributes {stable_mosaic.version = 11 : i64} {
  func.func @fused_cnn_kernel(%arg0: i32, %arg1: memref<1x224x28xf32, #tpu.memory_space<vmem>>, %arg2: memref<5x28x768xbf16, #tpu.memory_space<vmem>>, %arg3: memref<1x768xf32, #tpu.memory_space<vmem>>, %arg4: memref<768x384xbf16, #tpu.memory_space<vmem>>, %arg5: memref<3x384x640xbf16, #tpu.memory_space<vmem>>, %arg6: memref<1x640xf32, #tpu.memory_space<vmem>>, %arg7: memref<640x256xbf16, #tpu.memory_space<vmem>>, %arg8: memref<640x256xbf16, #tpu.memory_space<vmem>>, %arg9: memref<1x256xf32, #tpu.memory_space<vmem>>, %arg10: memref<8x256xf32, #tpu.memory_space<vmem>>) attributes {dimension_semantics = [#tpu.dimension_semantics<parallel>], iteration_bounds = array<i64: 2>, scalar_prefetch = 0 : i64, scratch_operands = 0 : i64, tpu.core_type = #tpu.core_type<tc>, window_params = [{transform_indices = @transform_0, window_bounds = array<i64: 1, 224, 28>}, {pipeline_mode = #tpu.pipeline_mode<synchronous>, transform_indices = @transform_1, window_bounds = array<i64: 5, 28, 768>}, {pipeline_mode = #tpu.pipeline_mode<synchronous>, transform_indices = @transform_2, window_bounds = array<i64: 1, 768>}, {pipeline_mode = #tpu.pipeline_mode<synchronous>, transform_indices = @transform_3, window_bounds = array<i64: 768, 384>}, {pipeline_mode = #tpu.pipeline_mode<synchronous>, transform_indices = @transform_4, window_bounds = array<i64: 3, 384, 640>}, {pipeline_mode = #tpu.pipeline_mode<synchronous>, transform_indices = @transform_5, window_bounds = array<i64: 1, 640>}, {pipeline_mode = #tpu.pipeline_mode<synchronous>, transform_indices = @transform_6, window_bounds = array<i64: 640, 256>}, {pipeline_mode = #tpu.pipeline_mode<synchronous>, transform_indices = @transform_7, window_bounds = array<i64: 640, 256>}, {pipeline_mode = #tpu.pipeline_mode<synchronous>, transform_indices = @transform_8, window_bounds = array<i64: 1, 256>}, {transform_indices = @transform_9, window_bounds = array<i64: 8, 256>}]} {
    %c0 = arith.constant 0 : index
    %c0_0 = arith.constant 0 : index
    %c0_1 = arith.constant 0 : index
    %0 = vector.load %arg1[%c0, %c0_0, %c0_1] : memref<1x224x28xf32, #tpu.memory_space<vmem>>, vector<1x224x28xf32>
    %1 = vector.shape_cast %0 : vector<1x224x28xf32> to vector<224x28xf32>
    %c0_2 = arith.constant 0 : index
    %c0_3 = arith.constant 0 : index
    %c0_4 = arith.constant 0 : index
    %2 = vector.load %arg2[%c0_2, %c0_3, %c0_4] : memref<5x28x768xbf16, #tpu.memory_space<vmem>>, vector<1x28x768xbf16>
    %3 = vector.shape_cast %2 : vector<1x28x768xbf16> to vector<28x768xbf16>
    %4 = vector.extract_strided_slice %1 {offsets = [0, 0], sizes = [96, 28], strides = [1, 1]} : vector<224x28xf32> to vector<96x28xf32>
    %5 = arith.truncf %4 : vector<96x28xf32> to vector<96x28xbf16>
    %cst = arith.constant dense<0.000000e+00> : vector<96x768xf32>
    %6 = tpu.matmul %5, %3, %cst {dimension_numbers = #tpu.dot_dimension_numbers<[1], [0], [0], [1], [0, 0, 1, 1], [], []>} : vector<96x28xbf16>, vector<28x768xbf16>, vector<96x768xf32> -> vector<96x768xf32>
    %7 = vector.extract_strided_slice %1 {offsets = [112, 0], sizes = [96, 28], strides = [1, 1]} : vector<224x28xf32> to vector<96x28xf32>
    %8 = arith.truncf %7 : vector<96x28xf32> to vector<96x28xbf16>
    %cst_5 = arith.constant dense<0.000000e+00> : vector<96x768xf32>
    %9 = tpu.matmul %8, %3, %cst_5 {dimension_numbers = #tpu.dot_dimension_numbers<[1], [0], [0], [1], [0, 0, 1, 1], [], []>} : vector<96x28xbf16>, vector<28x768xbf16>, vector<96x768xf32> -> vector<96x768xf32>
    %c1 = arith.constant 1 : index
    %c0_6 = arith.constant 0 : index
    %c0_7 = arith.constant 0 : index
    %10 = vector.load %arg2[%c1, %c0_6, %c0_7] : memref<5x28x768xbf16, #tpu.memory_space<vmem>>, vector<1x28x768xbf16>
    %11 = vector.shape_cast %10 : vector<1x28x768xbf16> to vector<28x768xbf16>
    %12 = vector.extract_strided_slice %1 {offsets = [112, 0], sizes = [96, 28], strides = [1, 1]} : vector<224x28xf32> to vector<96x28xf32>
    %13 = arith.truncf %12 : vector<96x28xf32> to vector<96x28xbf16>
    %cst_8 = arith.constant dense<0.000000e+00> : vector<96x768xf32>
    %14 = tpu.matmul %13, %11, %cst_8 {dimension_numbers = #tpu.dot_dimension_numbers<[1], [0], [0], [1], [0, 0, 1, 1], [], []>} : vector<96x28xbf16>, vector<28x768xbf16>, vector<96x768xf32> -> vector<96x768xf32>
    %15 = vector.extract_strided_slice %1 {offsets = [8, 0], sizes = [96, 28], strides = [1, 1]} : vector<224x28xf32> to vector<96x28xf32>
    %16 = arith.truncf %15 : vector<96x28xf32> to vector<96x28xbf16>
    %cst_9 = arith.constant dense<0.000000e+00> : vector<96x768xf32>
    %17 = tpu.matmul %16, %11, %cst_9 {dimension_numbers = #tpu.dot_dimension_numbers<[1], [0], [0], [1], [0, 0, 1, 1], [], []>} : vector<96x28xbf16>, vector<28x768xbf16>, vector<96x768xf32> -> vector<96x768xf32>
    %18 = arith.addf %6, %14 : vector<96x768xf32>
    %19 = arith.addf %9, %17 : vector<96x768xf32>
    %c2 = arith.constant 2 : index
    %c0_10 = arith.constant 0 : index
    %c0_11 = arith.constant 0 : index
    %20 = vector.load %arg2[%c2, %c0_10, %c0_11] : memref<5x28x768xbf16, #tpu.memory_space<vmem>>, vector<1x28x768xbf16>
    %21 = vector.shape_cast %20 : vector<1x28x768xbf16> to vector<28x768xbf16>
    %22 = vector.extract_strided_slice %1 {offsets = [8, 0], sizes = [96, 28], strides = [1, 1]} : vector<224x28xf32> to vector<96x28xf32>
    %23 = arith.truncf %22 : vector<96x28xf32> to vector<96x28xbf16>
    %cst_12 = arith.constant dense<0.000000e+00> : vector<96x768xf32>
    %24 = tpu.matmul %23, %21, %cst_12 {dimension_numbers = #tpu.dot_dimension_numbers<[1], [0], [0], [1], [0, 0, 1, 1], [], []>} : vector<96x28xbf16>, vector<28x768xbf16>, vector<96x768xf32> -> vector<96x768xf32>
    %25 = vector.extract_strided_slice %1 {offsets = [120, 0], sizes = [96, 28], strides = [1, 1]} : vector<224x28xf32> to vector<96x28xf32>
    %26 = arith.truncf %25 : vector<96x28xf32> to vector<96x28xbf16>
    %cst_13 = arith.constant dense<0.000000e+00> : vector<96x768xf32>
    %27 = tpu.matmul %26, %21, %cst_13 {dimension_numbers = #tpu.dot_dimension_numbers<[1], [0], [0], [1], [0, 0, 1, 1], [], []>} : vector<96x28xbf16>, vector<28x768xbf16>, vector<96x768xf32> -> vector<96x768xf32>
    %28 = arith.addf %18, %24 : vector<96x768xf32>
    %29 = arith.addf %19, %27 : vector<96x768xf32>
    %c3 = arith.constant 3 : index
    %c0_14 = arith.constant 0 : index
    %c0_15 = arith.constant 0 : index
    %30 = vector.load %arg2[%c3, %c0_14, %c0_15] : memref<5x28x768xbf16, #tpu.memory_space<vmem>>, vector<1x28x768xbf16>
    %31 = vector.shape_cast %30 : vector<1x28x768xbf16> to vector<28x768xbf16>
    %32 = vector.extract_strided_slice %1 {offsets = [120, 0], sizes = [96, 28], strides = [1, 1]} : vector<224x28xf32> to vector<96x28xf32>
    %33 = arith.truncf %32 : vector<96x28xf32> to vector<96x28xbf16>
    %cst_16 = arith.constant dense<0.000000e+00> : vector<96x768xf32>
    %34 = tpu.matmul %33, %31, %cst_16 {dimension_numbers = #tpu.dot_dimension_numbers<[1], [0], [0], [1], [0, 0, 1, 1], [], []>} : vector<96x28xbf16>, vector<28x768xbf16>, vector<96x768xf32> -> vector<96x768xf32>
    %35 = vector.extract_strided_slice %1 {offsets = [16, 0], sizes = [96, 28], strides = [1, 1]} : vector<224x28xf32> to vector<96x28xf32>
    %36 = arith.truncf %35 : vector<96x28xf32> to vector<96x28xbf16>
    %cst_17 = arith.constant dense<0.000000e+00> : vector<96x768xf32>
    %37 = tpu.matmul %36, %31, %cst_17 {dimension_numbers = #tpu.dot_dimension_numbers<[1], [0], [0], [1], [0, 0, 1, 1], [], []>} : vector<96x28xbf16>, vector<28x768xbf16>, vector<96x768xf32> -> vector<96x768xf32>
    %38 = arith.addf %28, %34 : vector<96x768xf32>
    %39 = arith.addf %29, %37 : vector<96x768xf32>
    %c4 = arith.constant 4 : index
    %c0_18 = arith.constant 0 : index
    %c0_19 = arith.constant 0 : index
    %40 = vector.load %arg2[%c4, %c0_18, %c0_19] : memref<5x28x768xbf16, #tpu.memory_space<vmem>>, vector<1x28x768xbf16>
    %41 = vector.shape_cast %40 : vector<1x28x768xbf16> to vector<28x768xbf16>
    %42 = vector.extract_strided_slice %1 {offsets = [16, 0], sizes = [96, 28], strides = [1, 1]} : vector<224x28xf32> to vector<96x28xf32>
    %43 = arith.truncf %42 : vector<96x28xf32> to vector<96x28xbf16>
    %cst_20 = arith.constant dense<0.000000e+00> : vector<96x768xf32>
    %44 = tpu.matmul %43, %41, %cst_20 {dimension_numbers = #tpu.dot_dimension_numbers<[1], [0], [0], [1], [0, 0, 1, 1], [], []>} : vector<96x28xbf16>, vector<28x768xbf16>, vector<96x768xf32> -> vector<96x768xf32>
    %45 = vector.extract_strided_slice %1 {offsets = [128, 0], sizes = [96, 28], strides = [1, 1]} : vector<224x28xf32> to vector<96x28xf32>
    %46 = arith.truncf %45 : vector<96x28xf32> to vector<96x28xbf16>
    %cst_21 = arith.constant dense<0.000000e+00> : vector<96x768xf32>
    %47 = tpu.matmul %46, %41, %cst_21 {dimension_numbers = #tpu.dot_dimension_numbers<[1], [0], [0], [1], [0, 0, 1, 1], [], []>} : vector<96x28xbf16>, vector<28x768xbf16>, vector<96x768xf32> -> vector<96x768xf32>
    %48 = arith.addf %38, %44 : vector<96x768xf32>
    %49 = arith.addf %39, %47 : vector<96x768xf32>
    %c0_22 = arith.constant 0 : index
    %c0_23 = arith.constant 0 : index
    %50 = vector.load %arg3[%c0_22, %c0_23] : memref<1x768xf32, #tpu.memory_space<vmem>>, vector<1x768xf32>
    %51 = vector.broadcast %50 : vector<1x768xf32> to vector<96x768xf32>
    %52 = arith.addf %48, %51 : vector<96x768xf32>
    %cst_24 = arith.constant 0.000000e+00 : f32
    %53 = vector.broadcast %cst_24 : f32 to vector<96x768xf32>
    %54 = arith.maximumf %52, %53 : vector<96x768xf32>
    %c0_25 = arith.constant 0 : index
    %c0_26 = arith.constant 0 : index
    %55 = vector.load %arg3[%c0_25, %c0_26] : memref<1x768xf32, #tpu.memory_space<vmem>>, vector<1x768xf32>
    %56 = vector.broadcast %55 : vector<1x768xf32> to vector<96x768xf32>
    %57 = arith.addf %49, %56 : vector<96x768xf32>
    %cst_27 = arith.constant 0.000000e+00 : f32
    %58 = vector.broadcast %cst_27 : f32 to vector<96x768xf32>
    %59 = arith.maximumf %57, %58 : vector<96x768xf32>
    %60 = arith.addf %54, %59 : vector<96x768xf32>
    %61 = arith.truncf %60 : vector<96x768xf32> to vector<96x768xbf16>
    %c0_28 = arith.constant 0 : index
    %c0_29 = arith.constant 0 : index
    %62 = vector.load %arg4[%c0_28, %c0_29] : memref<768x384xbf16, #tpu.memory_space<vmem>>, vector<768x384xbf16>
    %cst_30 = arith.constant dense<0.000000e+00> : vector<96x384xf32>
    %63 = tpu.matmul %61, %62, %cst_30 {dimension_numbers = #tpu.dot_dimension_numbers<[1], [0], [0], [1], [0, 0, 1, 1], [], []>} : vector<96x768xbf16>, vector<768x384xbf16>, vector<96x384xf32> -> vector<96x384xf32>
    %64 = vector.extract_strided_slice %63 {offsets = [0, 0], sizes = [80, 384], strides = [1, 1]} : vector<96x384xf32> to vector<80x384xf32>
    %65 = arith.truncf %64 : vector<80x384xf32> to vector<80x384xbf16>
    %c0_31 = arith.constant 0 : index
    %c0_32 = arith.constant 0 : index
    %c0_33 = arith.constant 0 : index
    %66 = vector.load %arg5[%c0_31, %c0_32, %c0_33] : memref<3x384x640xbf16, #tpu.memory_space<vmem>>, vector<1x384x640xbf16>
    %67 = vector.shape_cast %66 : vector<1x384x640xbf16> to vector<384x640xbf16>
    %cst_34 = arith.constant dense<0.000000e+00> : vector<80x640xf32>
    %68 = tpu.matmul %65, %67, %cst_34 {dimension_numbers = #tpu.dot_dimension_numbers<[1], [0], [0], [1], [0, 0, 1, 1], [], []>} : vector<80x384xbf16>, vector<384x640xbf16>, vector<80x640xf32> -> vector<80x640xf32>
    %69 = vector.extract_strided_slice %63 {offsets = [8, 0], sizes = [80, 384], strides = [1, 1]} : vector<96x384xf32> to vector<80x384xf32>
    %70 = arith.truncf %69 : vector<80x384xf32> to vector<80x384xbf16>
    %c1_35 = arith.constant 1 : index
    %c0_36 = arith.constant 0 : index
    %c0_37 = arith.constant 0 : index
    %71 = vector.load %arg5[%c1_35, %c0_36, %c0_37] : memref<3x384x640xbf16, #tpu.memory_space<vmem>>, vector<1x384x640xbf16>
    %72 = vector.shape_cast %71 : vector<1x384x640xbf16> to vector<384x640xbf16>
    %cst_38 = arith.constant dense<0.000000e+00> : vector<80x640xf32>
    %73 = tpu.matmul %70, %72, %cst_38 {dimension_numbers = #tpu.dot_dimension_numbers<[1], [0], [0], [1], [0, 0, 1, 1], [], []>} : vector<80x384xbf16>, vector<384x640xbf16>, vector<80x640xf32> -> vector<80x640xf32>
    %74 = arith.addf %68, %73 : vector<80x640xf32>
    %75 = vector.extract_strided_slice %63 {offsets = [16, 0], sizes = [80, 384], strides = [1, 1]} : vector<96x384xf32> to vector<80x384xf32>
    %76 = arith.truncf %75 : vector<80x384xf32> to vector<80x384xbf16>
    %c2_39 = arith.constant 2 : index
    %c0_40 = arith.constant 0 : index
    %c0_41 = arith.constant 0 : index
    %77 = vector.load %arg5[%c2_39, %c0_40, %c0_41] : memref<3x384x640xbf16, #tpu.memory_space<vmem>>, vector<1x384x640xbf16>
    %78 = vector.shape_cast %77 : vector<1x384x640xbf16> to vector<384x640xbf16>
    %cst_42 = arith.constant dense<0.000000e+00> : vector<80x640xf32>
    %79 = tpu.matmul %76, %78, %cst_42 {dimension_numbers = #tpu.dot_dimension_numbers<[1], [0], [0], [1], [0, 0, 1, 1], [], []>} : vector<80x384xbf16>, vector<384x640xbf16>, vector<80x640xf32> -> vector<80x640xf32>
    %80 = arith.addf %74, %79 : vector<80x640xf32>
    %c0_43 = arith.constant 0 : index
    %c0_44 = arith.constant 0 : index
    %81 = vector.load %arg6[%c0_43, %c0_44] : memref<1x640xf32, #tpu.memory_space<vmem>>, vector<1x640xf32>
    %82 = vector.broadcast %81 : vector<1x640xf32> to vector<80x640xf32>
    %83 = arith.addf %80, %82 : vector<80x640xf32>
    %cst_45 = arith.constant 0.000000e+00 : f32
    %84 = vector.broadcast %cst_45 : f32 to vector<80x640xf32>
    %85 = arith.maximumf %83, %84 : vector<80x640xf32>
    %86 = vector.extract_strided_slice %85 {offsets = [0, 0], sizes = [8, 640], strides = [1, 1]} : vector<80x640xf32> to vector<8x640xf32>
    %87 = vector.extract_strided_slice %85 {offsets = [8, 0], sizes = [8, 640], strides = [1, 1]} : vector<80x640xf32> to vector<8x640xf32>
    %88 = arith.addf %86, %87 : vector<8x640xf32>
    %89 = vector.extract_strided_slice %85 {offsets = [16, 0], sizes = [8, 640], strides = [1, 1]} : vector<80x640xf32> to vector<8x640xf32>
    %90 = arith.addf %88, %89 : vector<8x640xf32>
    %91 = vector.extract_strided_slice %85 {offsets = [24, 0], sizes = [8, 640], strides = [1, 1]} : vector<80x640xf32> to vector<8x640xf32>
    %92 = arith.addf %90, %91 : vector<8x640xf32>
    %93 = vector.extract_strided_slice %85 {offsets = [32, 0], sizes = [8, 640], strides = [1, 1]} : vector<80x640xf32> to vector<8x640xf32>
    %94 = arith.addf %92, %93 : vector<8x640xf32>
    %95 = vector.extract_strided_slice %85 {offsets = [40, 0], sizes = [8, 640], strides = [1, 1]} : vector<80x640xf32> to vector<8x640xf32>
    %96 = vector.extract_strided_slice %85 {offsets = [48, 0], sizes = [8, 640], strides = [1, 1]} : vector<80x640xf32> to vector<8x640xf32>
    %97 = arith.addf %95, %96 : vector<8x640xf32>
    %98 = vector.extract_strided_slice %85 {offsets = [56, 0], sizes = [8, 640], strides = [1, 1]} : vector<80x640xf32> to vector<8x640xf32>
    %99 = arith.addf %97, %98 : vector<8x640xf32>
    %100 = vector.extract_strided_slice %85 {offsets = [64, 0], sizes = [8, 640], strides = [1, 1]} : vector<80x640xf32> to vector<8x640xf32>
    %101 = arith.addf %99, %100 : vector<8x640xf32>
    %102 = vector.extract_strided_slice %85 {offsets = [72, 0], sizes = [8, 640], strides = [1, 1]} : vector<80x640xf32> to vector<8x640xf32>
    %103 = arith.addf %101, %102 : vector<8x640xf32>
    %104 = arith.truncf %94 : vector<8x640xf32> to vector<8x640xbf16>
    %c0_46 = arith.constant 0 : index
    %c0_47 = arith.constant 0 : index
    %105 = vector.load %arg7[%c0_46, %c0_47] : memref<640x256xbf16, #tpu.memory_space<vmem>>, vector<640x256xbf16>
    %cst_48 = arith.constant dense<0.000000e+00> : vector<8x256xf32>
    %106 = tpu.matmul %104, %105, %cst_48 {dimension_numbers = #tpu.dot_dimension_numbers<[1], [0], [0], [1], [0, 0, 1, 1], [], []>} : vector<8x640xbf16>, vector<640x256xbf16>, vector<8x256xf32> -> vector<8x256xf32>
    %107 = arith.truncf %103 : vector<8x640xf32> to vector<8x640xbf16>
    %c0_49 = arith.constant 0 : index
    %c0_50 = arith.constant 0 : index
    %108 = vector.load %arg8[%c0_49, %c0_50] : memref<640x256xbf16, #tpu.memory_space<vmem>>, vector<640x256xbf16>
    %cst_51 = arith.constant dense<0.000000e+00> : vector<8x256xf32>
    %109 = tpu.matmul %107, %108, %cst_51 {dimension_numbers = #tpu.dot_dimension_numbers<[1], [0], [0], [1], [0, 0, 1, 1], [], []>} : vector<8x640xbf16>, vector<640x256xbf16>, vector<8x256xf32> -> vector<8x256xf32>
    %110 = arith.addf %106, %109 : vector<8x256xf32>
    %c0_52 = arith.constant 0 : index
    %c0_53 = arith.constant 0 : index
    %111 = vector.load %arg9[%c0_52, %c0_53] : memref<1x256xf32, #tpu.memory_space<vmem>>, vector<1x256xf32>
    %112 = vector.broadcast %111 : vector<1x256xf32> to vector<8x256xf32>
    %113 = arith.addf %110, %112 : vector<8x256xf32>
    %cst_54 = arith.constant 0.000000e+00 : f32
    %114 = vector.broadcast %cst_54 : f32 to vector<8x256xf32>
    %115 = arith.maximumf %113, %114 : vector<8x256xf32>
    %c0_55 = arith.constant 0 : index
    %c0_56 = arith.constant 0 : index
    %116 = vector.load %arg10[%c0_55, %c0_56] : memref<8x256xf32, #tpu.memory_space<vmem>>, vector<8x256xf32>
    tpu.vector_store %arg10[%c0_55, %c0_56], %115 {strides = array<i32>} : memref<8x256xf32, #tpu.memory_space<vmem>>, vector<8x256xf32>,
    return
  }
  func.func @transform_0(%arg0: i32) -> (i32, i32, i32) {
    %c0_i32 = arith.constant 0 : i32
    %c0_i32_0 = arith.constant 0 : i32
    %c0_i32_1 = arith.constant 0 : i32
    return %arg0, %c0_i32, %c0_i32_0 : i32, i32, i32
  }
  func.func @transform_1(%arg0: i32) -> (i32, i32, i32) {
    %c0_i32 = arith.constant 0 : i32
    %c0_i32_0 = arith.constant 0 : i32
    %c0_i32_1 = arith.constant 0 : i32
    %c0_i32_2 = arith.constant 0 : i32
    return %c0_i32, %c0_i32_0, %c0_i32_1 : i32, i32, i32
  }
  func.func @transform_2(%arg0: i32) -> (i32, i32) {
    %c0_i32 = arith.constant 0 : i32
    %c0_i32_0 = arith.constant 0 : i32
    %c0_i32_1 = arith.constant 0 : i32
    return %c0_i32, %c0_i32_0 : i32, i32
  }
  func.func @transform_3(%arg0: i32) -> (i32, i32) {
    %c0_i32 = arith.constant 0 : i32
    %c0_i32_0 = arith.constant 0 : i32
    %c0_i32_1 = arith.constant 0 : i32
    return %c0_i32, %c0_i32_0 : i32, i32
  }
  func.func @transform_4(%arg0: i32) -> (i32, i32, i32) {
    %c0_i32 = arith.constant 0 : i32
    %c0_i32_0 = arith.constant 0 : i32
    %c0_i32_1 = arith.constant 0 : i32
    %c0_i32_2 = arith.constant 0 : i32
    return %c0_i32, %c0_i32_0, %c0_i32_1 : i32, i32, i32
  }
  func.func @transform_5(%arg0: i32) -> (i32, i32) {
    %c0_i32 = arith.constant 0 : i32
    %c0_i32_0 = arith.constant 0 : i32
    %c0_i32_1 = arith.constant 0 : i32
    return %c0_i32, %c0_i32_0 : i32, i32
  }
  func.func @transform_6(%arg0: i32) -> (i32, i32) {
    %c0_i32 = arith.constant 0 : i32
    %c0_i32_0 = arith.constant 0 : i32
    %c0_i32_1 = arith.constant 0 : i32
    return %c0_i32, %c0_i32_0 : i32, i32
  }
  func.func @transform_7(%arg0: i32) -> (i32, i32) {
    %c0_i32 = arith.constant 0 : i32
    %c0_i32_0 = arith.constant 0 : i32
    %c0_i32_1 = arith.constant 0 : i32
    return %c0_i32, %c0_i32_0 : i32, i32
  }
  func.func @transform_8(%arg0: i32) -> (i32, i32) {
    %c0_i32 = arith.constant 0 : i32
    %c0_i32_0 = arith.constant 0 : i32
    %c0_i32_1 = arith.constant 0 : i32
    return %c0_i32, %c0_i32_0 : i32, i32
  }
  func.func @transform_9(%arg0: i32) -> (i32, i32) {
    %c0_i32 = arith.constant 0 : i32
    %c0_i32_0 = arith.constant 0 : i32
    return %arg0, %c0_i32 : i32, i32
  }
}

</mosaic_0001>

<llo_original>
// kernel: forward.1
$region0: #{forward.1}
  #allocation0 [shape = 'u32[]', space=smem, size = 0x4, offset = 0x4, fixed_abs, tag = 'smem constant byte address 0x4 - core index']
  #allocation1 [shape = 'u32[72,128]{1,0:T(1,128)}', space=vmem, size = 0x9000, scoped, tag = 'internal scratch']
  %s0 = inlined_call_operand.vmem [shape: f32[2,224,28], index: 0, kind: input, shape index: {}]
  %s1 = inlined_call_operand.hbm [shape: bf16[5,28,768], index: 1, kind: input, shape index: {}]
  %s2 = inlined_call_operand.hbm [shape: f32[1,768], index: 2, kind: input, shape index: {}]
  %s3 = inlined_call_operand.hbm [shape: bf16[768,384], index: 3, kind: input, shape index: {}]
  %s4 = inlined_call_operand.hbm [shape: bf16[3,384,640], index: 4, kind: input, shape index: {}]
  %s5 = inlined_call_operand.hbm [shape: f32[1,640], index: 5, kind: input, shape index: {}]
  %s6 = inlined_call_operand.hbm [shape: bf16[640,256], index: 6, kind: input, shape index: {}]
  %s7 = inlined_call_operand.hbm [shape: bf16[640,256], index: 7, kind: input, shape index: {}]
  %s8 = inlined_call_operand.hbm [shape: f32[1,256], index: 8, kind: input, shape index: {}]
  %s9 = inlined_call_operand.vmem [shape: f32[16,256], index: 9, kind: output, shape index: {}]
  %s10 = sld [smem:[#allocation0]]
  $region101: #{forward.1} parent=0
    _
  %s12 = ssub.s32 1, %s10
  %s13 = scalar_select 0, %s12, %s10
  $region1: #{forward.1} parent=0
    #allocation2 [shape = 'u8[245760]{0}', space=vmem, size = 0x3c000, scoped, tag = 'input window, operand 1, single buffered']
    #allocation3 [shape = 's32[2]{0}', space=sflag, size = 0x8, scoped, tag = 'scoped memory for forward.1']
    #allocation4 [shape = 'u8[3072]{0}', space=vmem, size = 0xc00, scoped, tag = 'input window, operand 2, single buffered']
    #allocation5 [shape = 's32[1]{0}', space=sflag, size = 0x4, scoped, tag = 'scoped memory for forward.1']
    #allocation6 [shape = 'u8[589824]{0}', space=vmem, size = 0x90000, scoped, tag = 'input window, operand 3, single buffered']
    #allocation7 [shape = 'u8[1474560]{0}', space=vmem, size = 0x168000, scoped, tag = 'input window, operand 4, single buffered']
    #allocation8 [shape = 's32[1]{0}', space=sflag, size = 0x4, scoped, tag = 'scoped memory for forward.1']
    #allocation9 [shape = 'u8[2560]{0}', space=vmem, size = 0xc00, scoped, tag = 'input window, operand 5, single buffered']
    #allocation10 [shape = 'u8[327680]{0}', space=vmem, size = 0x50000, scoped, tag = 'input window, operand 6, single buffered']
    #allocation11 [shape = 's32[1]{0}', space=sflag, size = 0x4, scoped, tag = 'scoped memory for forward.1']
    #allocation12 [shape = 'u8[327680]{0}', space=vmem, size = 0x50000, scoped, tag = 'input window, operand 7, single buffered']
    #allocation13 [shape = 'u8[1024]{0}', space=vmem, size = 0x400, scoped, tag = 'input window, operand 8, single buffered']
    #allocation14 [shape = 's32[1]{0}', space=sflag, size = 0x4, scoped, tag = 'scoped memory for forward.1']
    %14 = vsyncpa [#allocation3], 0
    %15 = vsyncpa [#allocation5], 0
    %16 = vsyncpa [#allocation8], 0
    %17 = vsyncpa [#allocation11], 0
    %18 = vsyncpa [#allocation14], 0
    loop: start=0, step=1, limit=4
    $region2: #{forward.1} parent=1 // loop_pre_header
      _
    $region3: #{forward.1} parent=1 // loop_header
      %s20 = sphi 0, %s24
      %p21 = scmp.ge.s32.totalorder %s20, 4
      %s30 = sphi 0, %s32
      %s33 = sphi 0, %s30
      %s34 = sphi 0, %s33
      %s50 = sphi 0, %s34
      %s54 = sphi 0, %s54
      %s56 = sphi 0, %s54
      %s57 = sphi 0, %s56
      %s71 = sphi 0, %s57
      %s75 = sphi 0, %s75
      %s77 = sphi 0, %s75
      %s78 = sphi 0, %s77
      %s92 = sphi 0, %s78
      %s96 = sphi 0, %s96
      %s98 = sphi 0, %s96
      %s99 = sphi 0, %s98
      %s113 = sphi 0, %s99
      %s117 = sphi 0, %s117
      %s119 = sphi 0, %s117
      %s120 = sphi 0, %s119
      %s134 = sphi 0, %s120
      %s138 = sphi 0, %s138
      %s140 = sphi 0, %s138
      %s141 = sphi 0, %s140
      %s155 = sphi 0, %s141
      %s159 = sphi 0, %s159
      %s161 = sphi 0, %s159
      %s162 = sphi 0, %s161
      %s176 = sphi 0, %s162
      %s180 = sphi 0, %s180
      %s182 = sphi 0, %s180
      %s183 = sphi 0, %s182
      %s197 = sphi 0, %s183
      %s201 = sphi 0, %s201
      %s203 = sphi 0, %s201
      %s204 = sphi 0, %s203
      %s218 = sphi 0, %s204
      %s224 = sphi 0, %s226
      %s227 = sphi 0, %s224
      %s228 = sphi 0, %s227
      %s244 = sphi 0, %s228
    $region4: #{forward.1} parent=1 // loop_header_branch
      %23 = sbr.rel (%p21) target = $region8
    $region5: #{forward.1} parent=1 // loop_body
      %s25 = ssub.s32 %s20, 1
      %s26 = ssub.s32 %s20, 2
      %s27 = sadd.s32 %s20, 1
      %s28 = ssub.s32 %s20, %s27
      %p29 = scmp.eq.s32.totalorder %s28, 0
      %s31 = sadd.s32 %s30, 1
      %s32 = scalar_select %p29, %s30, %s31
      %p35 = pneg %p29
      %p36 = scmp.eq.s32.totalorder %s20, 1
      %p37 = por %p35, %p36
      %p38 = scmp.ne.s32.totalorder %s30, %s33
      %p39 = scmp.eq.s32.totalorder %s20, 0
      %p40 = por %p38, %p39
      %p41 = scmp.ne.s32.totalorder %s30, %s33
      %p42 = scmp.eq.s32.totalorder %s25, 1
      %p43 = por %p41, %p42
      %p44 = scmp.ne.s32.totalorder %s33, %s34
      %p45 = scmp.eq.s32.totalorder %s25, 0
      %p46 = por %p44, %p45
      %p47 = scmp.ne.s32.totalorder %s33, %s34
      %p48 = scmp.eq.s32.totalorder %s26, 1
      %p49 = por %p47, %p48
      %p51 = scmp.ne.s32.totalorder %s34, %s50
      %p52 = scmp.eq.s32.totalorder %s26, 0
      %p53 = por %p51, %p52
      %s55 = sadd.s32 %s54, 1
      %p58 = scmp.eq.s32.totalorder %s20, 1
      %p59 = scmp.ne.s32.totalorder %s54, %s56
      %p60 = scmp.eq.s32.totalorder %s20, 0
      %p61 = por %p59, %p60
      %p62 = scmp.ne.s32.totalorder %s54, %s56
      %p63 = scmp.eq.s32.totalorder %s25, 1
      %p64 = por %p62, %p63
      %p65 = scmp.ne.s32.totalorder %s56, %s57
      %p66 = scmp.eq.s32.totalorder %s25, 0
      %p67 = por %p65, %p66
      %p68 = scmp.ne.s32.totalorder %s56, %s57
      %p69 = scmp.eq.s32.totalorder %s26, 1
      %p70 = por %p68, %p69
      %p72 = scmp.ne.s32.totalorder %s57, %s71
      %p73 = scmp.eq.s32.totalorder %s26, 0
      %p74 = por %p72, %p73
      %s76 = sadd.s32 %s75, 1
      %p79 = scmp.eq.s32.totalorder %s20, 1
      %p80 = scmp.ne.s32.totalorder %s75, %s77
      %p81 = scmp.eq.s32.totalorder %s20, 0
      %p82 = por %p80, %p81
      %p83 = scmp.ne.s32.totalorder %s75, %s77
      %p84 = scmp.eq.s32.totalorder %s25, 1
      %p85 = por %p83, %p84
      %p86 = scmp.ne.s32.totalorder %s77, %s78
      %p87 = scmp.eq.s32.totalorder %s25, 0
      %p88 = por %p86, %p87
      %p89 = scmp.ne.s32.totalorder %s77, %s78
      %p90 = scmp.eq.s32.totalorder %s26, 1
      %p91 = por %p89, %p90
      %p93 = scmp.ne.s32.totalorder %s78, %s92
      %p94 = scmp.eq.s32.totalorder %s26, 0
      %p95 = por %p93, %p94
      %s97 = sadd.s32 %s96, 1
      %p100 = scmp.eq.s32.totalorder %s20, 1
      %p101 = scmp.ne.s32.totalorder %s96, %s98
      %p102 = scmp.eq.s32.totalorder %s20, 0
      %p103 = por %p101, %p102
      %p104 = scmp.ne.s32.totalorder %s96, %s98
      %p105 = scmp.eq.s32.totalorder %s25, 1
      %p106 = por %p104, %p105
      %p107 = scmp.ne.s32.totalorder %s98, %s99
      %p108 = scmp.eq.s32.totalorder %s25, 0
      %p109 = por %p107, %p108
      %p110 = scmp.ne.s32.totalorder %s98, %s99
      %p111 = scmp.eq.s32.totalorder %s26, 1
      %p112 = por %p110, %p111
      %p114 = scmp.ne.s32.totalorder %s99, %s113
      %p115 = scmp.eq.s32.totalorder %s26, 0
      %p116 = por %p114, %p115
      %s118 = sadd.s32 %s117, 1
      %p121 = scmp.eq.s32.totalorder %s20, 1
      %p122 = scmp.ne.s32.totalorder %s117, %s119
      %p123 = scmp.eq.s32.totalorder %s20, 0
      %p124 = por %p122, %p123
      %p125 = scmp.ne.s32.totalorder %s117, %s119
      %p126 = scmp.eq.s32.totalorder %s25, 1
      %p127 = por %p125, %p126
      %p128 = scmp.ne.s32.totalorder %s119, %s120
      %p129 = scmp.eq.s32.totalorder %s25, 0
      %p130 = por %p128, %p129
      %p131 = scmp.ne.s32.totalorder %s119, %s120
      %p132 = scmp.eq.s32.totalorder %s26, 1
      %p133 = por %p131, %p132
      %p135 = scmp.ne.s32.totalorder %s120, %s134
      %p136 = scmp.eq.s32.totalorder %s26, 0
      %p137 = por %p135, %p136
      %s139 = sadd.s32 %s138, 1
      %p142 = scmp.eq.s32.totalorder %s20, 1
      %p143 = scmp.ne.s32.totalorder %s138, %s140
      %p144 = scmp.eq.s32.totalorder %s20, 0
      %p145 = por %p143, %p144
      %p146 = scmp.ne.s32.totalorder %s138, %s140
      %p147 = scmp.eq.s32.totalorder %s25, 1
      %p148 = por %p146, %p147
      %p149 = scmp.ne.s32.totalorder %s140, %s141
      %p150 = scmp.eq.s32.totalorder %s25, 0
      %p151 = por %p149, %p150
      %p152 = scmp.ne.s32.totalorder %s140, %s141
      %p153 = scmp.eq.s32.totalorder %s26, 1
      %p154 = por %p152, %p153
      %p156 = scmp.ne.s32.totalorder %s141, %s155
      %p157 = scmp.eq.s32.totalorder %s26, 0
      %p158 = por %p156, %p157
      %s160 = sadd.s32 %s159, 1
      %p163 = scmp.eq.s32.totalorder %s20, 1
      %p164 = scmp.ne.s32.totalorder %s159, %s161
      %p165 = scmp.eq.s32.totalorder %s20, 0
      %p166 = por %p164, %p165
      %p167 = scmp.ne.s32.totalorder %s159, %s161
      %p168 = scmp.eq.s32.totalorder %s25, 1
      %p169 = por %p167, %p168
      %p170 = scmp.ne.s32.totalorder %s161, %s162
      %p171 = scmp.eq.s32.totalorder %s25, 0
      %p172 = por %p170, %p171
      %p173 = scmp.ne.s32.totalorder %s161, %s162
      %p174 = scmp.eq.s32.totalorder %s26, 1
      %p175 = por %p173, %p174
      %p177 = scmp.ne.s32.totalorder %s162, %s176
      %p178 = scmp.eq.s32.totalorder %s26, 0
      %p179 = por %p177, %p178
      %s181 = sadd.s32 %s180, 1
      %p184 = scmp.eq.s32.totalorder %s20, 1
      %p185 = scmp.ne.s32.totalorder %s180, %s182
      %p186 = scmp.eq.s32.totalorder %s20, 0
      %p187 = por %p185, %p186
      %p188 = scmp.ne.s32.totalorder %s180, %s182
      %p189 = scmp.eq.s32.totalorder %s25, 1
      %p190 = por %p188, %p189
      %p191 = scmp.ne.s32.totalorder %s182, %s183
      %p192 = scmp.eq.s32.totalorder %s25, 0
      %p193 = por %p191, %p192
      %p194 = scmp.ne.s32.totalorder %s182, %s183
      %p195 = scmp.eq.s32.totalorder %s26, 1
      %p196 = por %p194, %p195
      %p198 = scmp.ne.s32.totalorder %s183, %s197
      %p199 = scmp.eq.s32.totalorder %s26, 0
      %p200 = por %p198, %p199
      %s202 = sadd.s32 %s201, 1
      %p205 = scmp.eq.s32.totalorder %s20, 1
      %p206 = scmp.ne.s32.totalorder %s201, %s203
      %p207 = scmp.eq.s32.totalorder %s20, 0
      %p208 = por %p206, %p207
      %p209 = scmp.ne.s32.totalorder %s201, %s203
      %p210 = scmp.eq.s32.totalorder %s25, 1
      %p211 = por %p209, %p210
      %p212 = scmp.ne.s32.totalorder %s203, %s204
      %p213 = scmp.eq.s32.totalorder %s25, 0
      %p214 = por %p212, %p213
      %p215 = scmp.ne.s32.totalorder %s203, %s204
      %p216 = scmp.eq.s32.totalorder %s26, 1
      %p217 = por %p215, %p216
      %p219 = scmp.ne.s32.totalorder %s204, %s218
      %p220 = scmp.eq.s32.totalorder %s26, 0
      %p221 = por %p219, %p220
      %s222 = ssub.s32 %s20, %s27
      %p223 = scmp.eq.s32.totalorder %s222, 0
      %s225 = sadd.s32 %s224, 1
      %s226 = scalar_select %p223, %s224, %s225
      %p229 = pneg %p223
      %p230 = scmp.eq.s32.totalorder %s20, 1
      %p231 = por %p229, %p230
      %p232 = scmp.ne.s32.totalorder %s224, %s227
      %p233 = scmp.eq.s32.totalorder %s20, 0
      %p234 = por %p232, %p233
      %p235 = scmp.ne.s32.totalorder %s224, %s227
      %p236 = scmp.eq.s32.totalorder %s25, 1
      %p237 = por %p235, %p236
      %p238 = scmp.ne.s32.totalorder %s227, %s228
      %p239 = scmp.eq.s32.totalorder %s25, 0
      %p240 = por %p238, %p239
      %p241 = scmp.ne.s32.totalorder %s227, %s228
      %p242 = scmp.eq.s32.totalorder %s26, 1
      %p243 = por %p241, %p242
      %p245 = scmp.ne.s32.totalorder %s228, %s244
      %p246 = scmp.eq.s32.totalorder %s26, 0
      %p247 = por %p245, %p246
      %p248 = scmp.le.s32.totalorder 1, %s20
      %p249 = scmp.lt.s32.totalorder %s20, 3
      %p250 = pnand %p248, %p249
      %p251 = pneg %p250
      // Predicated region
      $region9: #{forward.1} parent=5 // pred_check
        _
      $region10: #{forward.1} parent=5 // pred_check_branch
        %253 = sbr.rel (%p250) target = $region12
      $region11: #{forward.1} parent=5 // pred_region
        %s254 = ssub.s32 %s20, 1
        // Predicated region
        $region13: #{forward.1} parent=11 // pred_check
          %p255 = pneg %p67
        $region14: #{forward.1} parent=11 // pred_check_branch
          %257 = sbr.rel (%p255) target = $region16
        $region15: #{forward.1} parent=11 // pred_region
          %259 = vsyncadd [#allocation3], 0
          %s260 = sshll.u32 %s1, 4
          %s261 = int_to_ptr.hbm [resolvable:$true] %s260
          %s262 = sshll.u32 [#allocation2], 4
          %s263 = int_to_ptr.vmem [resolvable:$true] %s262
          %268 = dma.hbm_to_vmem [thread:$0]  %s261, 7680, %s263, [#allocation3], 384, 384, 24
        $region16: #{forward.1} parent=11 // pred_fallthru
          _
        // Predicated region
        $region17: #{forward.1} parent=11 // pred_check
          %p269 = pneg %p88
        $region18: #{forward.1} parent=11 // pred_check_branch
          %271 = sbr.rel (%p269) target = $region20
        $region19: #{forward.1} parent=11 // pred_region
          %273 = vsyncadd [#allocation5], 0
          %s275 = sshll.u32 %s2, 4
          %s276 = int_to_ptr.hbm [resolvable:$true] %s275
          %s277 = sshll.u32 [#allocation4], 4
          %s278 = int_to_ptr.vmem [resolvable:$true] %s277
          %280 = dma.hbm_to_vmem [thread:$0]  %s276, 96, %s278, [#allocation5]
        $region20: #{forward.1} parent=11 // pred_fallthru
          _
        // Predicated region
        $region21: #{forward.1} parent=11 // pred_check
          %p281 = pneg %p109
        $region22: #{forward.1} parent=11 // pred_check_branch
          %283 = sbr.rel (%p281) target = $region24
        $region23: #{forward.1} parent=11 // pred_region
          %285 = vsyncadd [#allocation5], 0
          %s286 = sshll.u32 %s3, 4
          %s287 = int_to_ptr.hbm [resolvable:$true] %s286
          %s288 = sshll.u32 [#allocation6], 4
          %s289 = int_to_ptr.vmem [resolvable:$true] %s288
          %294 = dma.hbm_to_vmem [thread:$0]  %s287, 18432, %s289, [#allocation5], 192, 192, 12
        $region24: #{forward.1} parent=11 // pred_fallthru
          _
        // Predicated region
        $region25: #{forward.1} parent=11 // pred_check
          %p295 = pneg %p130
        $region26: #{forward.1} parent=11 // pred_check_branch
          %297 = sbr.rel (%p295) target = $region28
        $region27: #{forward.1} parent=11 // pred_region
          %299 = vsyncadd [#allocation8], 0
          %s300 = sshll.u32 %s4, 4
          %s301 = int_to_ptr.hbm [resolvable:$true] %s300
          %s302 = sshll.u32 [#allocation7], 4
          %s303 = int_to_ptr.vmem [resolvable:$true] %s302
          %308 = dma.hbm_to_vmem [thread:$0]  %s301, 46080, %s303, [#allocation8], 320, 320, 20
        $region28: #{forward.1} parent=11 // pred_fallthru
          _
        // Predicated region
        $region29: #{forward.1} parent=11 // pred_check
          %p309 = pneg %p151
        $region30: #{forward.1} parent=11 // pred_check_branch
          %311 = sbr.rel (%p309) target = $region32
        $region31: #{forward.1} parent=11 // pred_region
          %313 = vsyncadd [#allocation8], 0
          %s315 = sshll.u32 %s5, 4
          %s316 = int_to_ptr.hbm [resolvable:$true] %s315
          %s317 = sshll.u32 [#allocation9], 4
          %s318 = int_to_ptr.vmem [resolvable:$true] %s317
          %320 = dma.hbm_to_vmem [thread:$0]  %s316, 80, %s318, [#allocation8]
        $region32: #{forward.1} parent=11 // pred_fallthru
          _
        // Predicated region
        $region33: #{forward.1} parent=11 // pred_check
          %p321 = pneg %p172
        $region34: #{forward.1} parent=11 // pred_check_branch
          %323 = sbr.rel (%p321) target = $region36
        $region35: #{forward.1} parent=11 // pred_region
          %325 = vsyncadd [#allocation11], 0
          %s326 = sshll.u32 %s6, 4
          %s327 = int_to_ptr.hbm [resolvable:$true] %s326
          %s328 = sshll.u32 [#allocation10], 4
          %s329 = int_to_ptr.vmem [resolvable:$true] %s328
          %334 = dma.hbm_to_vmem [thread:$0]  %s327, 10240, %s329, [#allocation11], 128, 128, 8
        $region36: #{forward.1} parent=11 // pred_fallthru
          _
        // Predicated region
        $region37: #{forward.1} parent=11 // pred_check
          %p335 = pneg %p193
        $region38: #{forward.1} parent=11 // pred_check_branch
          %337 = sbr.rel (%p335) target = $region40
        $region39: #{forward.1} parent=11 // pred_region
          %339 = vsyncadd [#allocation11], 0
          %s340 = sshll.u32 %s7, 4
          %s341 = int_to_ptr.hbm [resolvable:$true] %s340
          %s342 = sshll.u32 [#allocation12], 4
          %s343 = int_to_ptr.vmem [resolvable:$true] %s342
          %348 = dma.hbm_to_vmem [thread:$0]  %s341, 10240, %s343, [#allocation11], 128, 128, 8
        $region40: #{forward.1} parent=11 // pred_fallthru
          _
        // Predicated region
        $region41: #{forward.1} parent=11 // pred_check
          %p349 = pneg %p214
        $region42: #{forward.1} parent=11 // pred_check_branch
          %351 = sbr.rel (%p349) target = $region44
        $region43: #{forward.1} parent=11 // pred_region
          %353 = vsyncadd [#allocation14], 0
          %s355 = sshll.u32 %s8, 4
          %s356 = int_to_ptr.hbm [resolvable:$true] %s355
          %s357 = sshll.u32 [#allocation13], 4
          %s358 = int_to_ptr.vmem [resolvable:$true] %s357
          %360 = dma.hbm_to_vmem [thread:$0]  %s356, 32, %s358, [#allocation14]
        $region44: #{forward.1} parent=11 // pred_fallthru
          _
      $region12: #{forward.1} parent=5 // pred_fallthru
        _
      %p361 = scmp.lt.s32.totalorder %s20, 2
      // Predicated region
      $region45: #{forward.1} parent=5 // pred_check
        %p362 = pneg %p361
      $region46: #{forward.1} parent=5 // pred_check_branch
        %364 = sbr.rel (%p362) target = $region48
      $region47: #{forward.1} parent=5 // pred_region
        // Predicated region
        $region49: #{forward.1} parent=47 // pred_check
          %p365 = pneg %p40
        $region50: #{forward.1} parent=47 // pred_check_branch
          %367 = sbr.rel (%p365) target = $region52
        $region51: #{forward.1} parent=47 // pred_region
          %p368 = scmp.lt.s32.totalorder %s20, 1
          %s369 = scalar_select %p368, %s20, 1
          %s370 = smul.addr %s369, 28
          %s371 = smul.addr %s370, 8
          %s372 = scalar_lea.vmem %s0, %s371
        $region52: #{forward.1} parent=47 // pred_fallthru
          _
      $region48: #{forward.1} parent=5 // pred_fallthru
        _
      %p373 = scmp.le.s32.totalorder 1, %s20
      %p374 = scmp.lt.s32.totalorder %s20, 3
      %p375 = pnand %p373, %p374
      %p376 = pneg %p375
      // Predicated region
      $region53: #{forward.1} parent=5 // pred_check
        _
      $region54: #{forward.1} parent=5 // pred_check_branch
        %378 = sbr.rel (%p375) target = $region56
      $region55: #{forward.1} parent=5 // pred_region
        %s379 = ssub.s32 %s20, 1
        // Predicated region
        $region57: #{forward.1} parent=55 // pred_check
          %p380 = pneg %p67
        $region58: #{forward.1} parent=55 // pred_check_branch
          %382 = sbr.rel (%p380) target = $region60
        $region59: #{forward.1} parent=55 // pred_region
          %384 = dma.done [#allocation3], 7680
        $region60: #{forward.1} parent=55 // pred_fallthru
          _
        // Predicated region
        $region61: #{forward.1} parent=55 // pred_check
          %p385 = pneg %p88
        $region62: #{forward.1} parent=55 // pred_check_branch
          %387 = sbr.rel (%p385) target = $region64
        $region63: #{forward.1} parent=55 // pred_region
          %389 = dma.done [#allocation5], 96
        $region64: #{forward.1} parent=55 // pred_fallthru
          _
        // Predicated region
        $region65: #{forward.1} parent=55 // pred_check
          %p390 = pneg %p109
        $region66: #{forward.1} parent=55 // pred_check_branch
          %392 = sbr.rel (%p390) target = $region68
        $region67: #{forward.1} parent=55 // pred_region
          %394 = dma.done [#allocation5], 18432
        $region68: #{forward.1} parent=55 // pred_fallthru
          _
        // Predicated region
        $region69: #{forward.1} parent=55 // pred_check
          %p395 = pneg %p130
        $region70: #{forward.1} parent=55 // pred_check_branch
          %397 = sbr.rel (%p395) target = $region72
        $region71: #{forward.1} parent=55 // pred_region
          %399 = dma.done [#allocation8], 46080
        $region72: #{forward.1} parent=55 // pred_fallthru
          _
        // Predicated region
        $region73: #{forward.1} parent=55 // pred_check
          %p400 = pneg %p151
        $region74: #{forward.1} parent=55 // pred_check_branch
          %402 = sbr.rel (%p400) target = $region76
        $region75: #{forward.1} parent=55 // pred_region
          %404 = dma.done [#allocation8], 80
        $region76: #{forward.1} parent=55 // pred_fallthru
          _
        // Predicated region
        $region77: #{forward.1} parent=55 // pred_check
          %p405 = pneg %p172
        $region78: #{forward.1} parent=55 // pred_check_branch
          %407 = sbr.rel (%p405) target = $region80
        $region79: #{forward.1} parent=55 // pred_region
          %409 = dma.done [#allocation11], 10240
        $region80: #{forward.1} parent=55 // pred_fallthru
          _
        // Predicated region
        $region81: #{forward.1} parent=55 // pred_check
          %p410 = pneg %p193
        $region82: #{forward.1} parent=55 // pred_check_branch
          %412 = sbr.rel (%p410) target = $region84
        $region83: #{forward.1} parent=55 // pred_region
          %414 = dma.done [#allocation11], 10240
        $region84: #{forward.1} parent=55 // pred_fallthru
          _
        // Predicated region
        $region85: #{forward.1} parent=55 // pred_check
          %p415 = pneg %p214
        $region86: #{forward.1} parent=55 // pred_check_branch
          %417 = sbr.rel (%p415) target = $region88
        $region87: #{forward.1} parent=55 // pred_region
          %419 = dma.done [#allocation14], 32
        $region88: #{forward.1} parent=55 // pred_fallthru
          _
        %p420 = scmp.lt.s32.totalorder %s25, 1
        %s421 = scalar_select %p420, %s25, 1
        %s422 = smul.addr %s421, 28
        %s423 = smul.addr %s422, 8
        %s424 = scalar_lea.vmem %s0, %s423
        %p425 = pneg %p46
        %p426 = pneg %p43
        %p427 = pneg %p67
        %p428 = pneg %p64
        %p429 = pneg %p88
        %p430 = pneg %p85
        %p431 = pneg %p109
        %p432 = pneg %p106
        %p433 = pneg %p130
        %p434 = pneg %p127
        %p435 = pneg %p151
        %p436 = pneg %p148
        %p437 = pneg %p172
        %p438 = pneg %p169
        %p439 = pneg %p193
        %p440 = pneg %p190
        %p441 = pneg %p214
        %p442 = pneg %p211
        %p443 = pneg %p240
        %p444 = pneg %p237
        %p445 = scmp.lt.s32.totalorder %s25, 1
        %s446 = scalar_select %p445, %s25, 1
        %s447 = smul.addr %s446, 2
        %s448 = smul.addr %s447, 8
        %s449 = scalar_lea.vmem %s9, %s448
        %p450 = scmp.lt.s32.totalorder %s25, 1
        %s451 = scalar_select %p450, %s25, 1
        %s452 = smul.addr %s451, 28
        %s453 = smul.addr %s452, 8
        %s454 = scalar_lea.vmem %s0, %s453
        %p455 = scmp.lt.s32.totalorder %s25, 1
        %s456 = scalar_select %p455, %s25, 1
        %s457 = smul.addr %s456, 2
        %s458 = smul.addr %s457, 8
        %s459 = scalar_lea.vmem %s9, %s458
        %v461 = vld [vmem:[%s454] sm:$0xff]
        %v462 = vld [vmem:[%s454 + $0x8] sm:$0xff]
        %v463 = vld [vmem:[%s454 + $0x10] sm:$0xff]
        %v464 = vld [vmem:[%s454 + $0x18] sm:$0xff]
        %v465 = vld [vmem:[%s454 + $0x20] sm:$0xff]
        %v466 = vld [vmem:[%s454 + $0x28] sm:$0xff]
        %v467 = vld [vmem:[%s454 + $0x30] sm:$0xff]
        %v468 = vld [vmem:[%s454 + $0x38] sm:$0xff]
        %v469 = vld [vmem:[%s454 + $0x40] sm:$0xff]
        %v470 = vld [vmem:[%s454 + $0x48] sm:$0xff]
        %v471 = vld [vmem:[%s454 + $0x50] sm:$0xff]
        %v472 = vld [vmem:[%s454 + $0x58] sm:$0xff]
        %v473 = vld [vmem:[%s454 + $0x60] sm:$0xff]
        %v474 = vld [vmem:[%s454 + $0x68] sm:$0xff]
        %v475 = vld [vmem:[%s454 + $0x70] sm:$0xff]
        %v476 = vld [vmem:[%s454 + $0x78] sm:$0xff]
        %v477 = vld [vmem:[%s454 + $0x80] sm:$0xff]
        %v478 = vld [vmem:[%s454 + $0x88] sm:$0xff]
        %v479 = vld [vmem:[%s454 + $0x90] sm:$0xff]
        %v480 = vld [vmem:[%s454 + $0x98] sm:$0xff]
        %v481 = vld [vmem:[%s454 + $0xa0] sm:$0xff]
        %v482 = vld [vmem:[%s454 + $0xa8] sm:$0xff]
        %v483 = vld [vmem:[%s454 + $0xb0] sm:$0xff]
        %v484 = vld [vmem:[%s454 + $0xb8] sm:$0xff]
        %v485 = vld [vmem:[%s454 + $0xc0] sm:$0xff]
        %v486 = vld [vmem:[%s454 + $0xc8] sm:$0xff]
        %v487 = vld [vmem:[%s454 + $0xd0] sm:$0xff]
        %v488 = vld [vmem:[%s454 + $0xd8] sm:$0xff]
        %v489 = vld [vmem:[#allocation2] sm:$0xff]
        %v490 = vld [vmem:[#allocation2 + $0x8] sm:$0xff]
        %v491 = vld [vmem:[#allocation2 + $0x10] sm:$0xff]
        %v492 = vld [vmem:[#allocation2 + $0x18] sm:$0xff]
        %v493 = vld [vmem:[#allocation2 + $0x20] sm:$0xff]
        %v494 = vld [vmem:[#allocation2 + $0x28] sm:$0xff]
        %v495 = vld [vmem:[#allocation2 + $0x30] sm:$0xff]
        %v496 = vld [vmem:[#allocation2 + $0x38] sm:$0xff]
        %v497 = vld [vmem:[#allocation2 + $0x40] sm:$0xff]
        %v498 = vld [vmem:[#allocation2 + $0x48] sm:$0x33]
        %v499 = vld [vmem:[#allocation2 + $0x50] sm:$0x33]
        %v500 = vld [vmem:[#allocation2 + $0x58] sm:$0x33]
        %v501 = vpack.c.bf16 %v462, %v461
        %v502 = vpack.c.bf16 %v464, %v463
        %v503 = vpack.c.bf16 %v466, %v465
        %v504 = vpack.c.bf16 %v468, %v467
        %v505 = vpack.c.bf16 %v470, %v469
        %v506 = vpack.c.bf16 %v472, %v471
        %v507 = vpack.c.bf16 %v476, %v475
        %v508 = vpack.c.bf16 %v478, %v477
        %v509 = vpack.c.bf16 %v480, %v479
        %v510 = vpack.c.bf16 %v482, %v481
        %v511 = vpack.c.bf16 %v484, %v483
        %v512 = vpack.c.bf16 %v486, %v485
        %s513 = scalar_lea.vmem [#allocation2], 96
        %v514 = vld [vmem:[%s513] sm:$0xff]
        %v515 = vld [vmem:[%s513 + $0x8] sm:$0xff]
        %v516 = vld [vmem:[%s513 + $0x10] sm:$0xff]
        %v517 = vld [vmem:[%s513 + $0x18] sm:$0xff]
        %v518 = vld [vmem:[%s513 + $0x20] sm:$0xff]
        %v519 = vld [vmem:[%s513 + $0x28] sm:$0xff]
        %v520 = vld [vmem:[%s513 + $0x30] sm:$0xff]
        %v521 = vld [vmem:[%s513 + $0x38] sm:$0xff]
        %v522 = vld [vmem:[%s513 + $0x40] sm:$0xff]
        %v523 = vld [vmem:[%s513 + $0x48] sm:$0x33]
        %v524 = vld [vmem:[%s513 + $0x50] sm:$0x33]
        %v525 = vld [vmem:[%s513 + $0x58] sm:$0x33]
        %v538 = vunpack.c.l.b16 %v514
        %v539 = vunpack.c.h.b16 %v514
        %v540 = vunpack.c.l.b16 %v515
        %v541 = vunpack.c.h.b16 %v515
        %v542 = vunpack.c.l.b16 %v516
        %v543 = vunpack.c.h.b16 %v516
        %v544 = vunpack.c.l.b16 %v517
        %v545 = vunpack.c.h.b16 %v517
        %v546 = vunpack.c.l.b16 %v518
        %v547 = vunpack.c.h.b16 %v518
        %v548 = vunpack.c.l.b16 %v519
        %v549 = vunpack.c.h.b16 %v519
        %v550 = vunpack.c.l.b16 %v520
        %v551 = vunpack.c.h.b16 %v520
        %v552 = vunpack.c.l.b16 %v521
        %v553 = vunpack.c.h.b16 %v521
        %v554 = vunpack.c.l.b16 %v522
        %v555 = vunpack.c.h.b16 %v522
        %v556 = vunpack.c.l.b16 %v523
        %v557 = vunpack.c.h.b16 %v523
        %v558 = vunpack.c.l.b16 %v524
        %v559 = vunpack.c.h.b16 %v524
        %v560 = vunpack.c.l.b16 %v525
        %v561 = vunpack.c.h.b16 %v525
        %v562 = vpack.c.b16 %v544, %v538
        %v563 = vpack.c.b16 %v545, %v539
        %v564 = vpack.c.b16 %v546, %v540
        %v565 = vpack.c.b16 %v547, %v541
        %v566 = vpack.c.b16 %v548, %v542
        %v567 = vpack.c.b16 %v549, %v543
        %v568 = vpack.c.b16 %v556, %v550
        %v569 = vpack.c.b16 %v557, %v551
        %v570 = vpack.c.b16 %v558, %v552
        %v571 = vpack.c.b16 %v559, %v553
        %v572 = vpack.c.b16 %v560, %v554
        %v573 = vpack.c.b16 %v561, %v555
        %vm580 = vcmask 228352
        %v582 = vsel %vm580, %v507, 0
        %v585 = vsel %vm580, %v508, 0
        %v588 = vsel %vm580, %v509, 0
        %v591 = vsel %vm580, %v510, 0
        %v594 = vsel %vm580, %v511, 0
        %v597 = vsel %vm580, %v512, 0
        %vm599 = vcmask 1045504
        %v601 = vsel %vm599, %v568, 0
        %v604 = vsel %vm599, %v569, 0
        %v607 = vsel %vm599, %v570, 0
        %v610 = vsel %vm599, %v571, 0
        %v613 = vsel %vm599, %v572, 0
        %v616 = vsel %vm599, %v573, 0
        %618 = vmatpush.bf16.msra.mxu0 0
        %619 = vmatpush.bf16.msra.mxu0 0
        %620 = vmatpush.bf16.msra.mxu0 0
        %621 = vmatpush.bf16.msra.mxu0 0
        %622 = vmatpush.bf16.msra.mxu0 0
        %623 = vmatpush.bf16.msra.mxu0 0
        %624 = vmatpush.bf16.msra.mxu0 %v601
        %625 = vmatpush.bf16.msra.mxu0 %v562
        %626 = vmatmul.bf16.gmra.mxu0 %v582
        %v627 = vpop.f32.mrf.mxu0
        %v628 = vadd.f32 0.0, %v627
        %v629 = vpop.f32.mrf.mxu0
        %v630 = vadd.f32 0.0, %v629
        %631 = vmatmul.bf16.gmra.mxu0 %v585
        %v632 = vpop.f32.mrf.mxu0
        %v633 = vadd.f32 0.0, %v632
        %v634 = vpop.f32.mrf.mxu0
        %v635 = vadd.f32 0.0, %v634
        %636 = vmatmul.bf16.gmra.mxu0 %v588
        %v637 = vpop.f32.mrf.mxu0
        %v638 = vadd.f32 0.0, %v637
        %v639 = vpop.f32.mrf.mxu0
        %v640 = vadd.f32 0.0, %v639
        %641 = vmatmul.bf16.gmra.mxu0 %v591
        %v642 = vpop.f32.mrf.mxu0
        %v643 = vadd.f32 0.0, %v642
        %v644 = vpop.f32.mrf.mxu0
        %v645 = vadd.f32 0.0, %v644
        %646 = vmatmul.bf16.gmra.mxu0 %v594
        %v647 = vpop.f32.mrf.mxu0
        %v648 = vadd.f32 0.0, %v647
        %v649 = vpop.f32.mrf.mxu0
        %v650 = vadd.f32 0.0, %v649
        %651 = vmatmul.bf16.gmra.mxu0 %v597
        %v652 = vpop.f32.mrf.mxu0
        %v653 = vadd.f32 0.0, %v652
        %v654 = vpop.f32.mrf.mxu0
        %v655 = vadd.f32 0.0, %v654
        %656 = vdwg.mxu0
        %657 = vmatpush.bf16.msra.mxu0 0
        %658 = vmatpush.bf16.msra.mxu0 0
        %659 = vmatpush.bf16.msra.mxu0 0
        %660 = vmatpush.bf16.msra.mxu0 0
        %661 = vmatpush.bf16.msra.mxu0 0
        %662 = vmatpush.bf16.msra.mxu0 0
        %663 = vmatpush.bf16.msra.mxu0 %v604
        %664 = vmatpush.bf16.msra.mxu0 %v563
        %665 = vmatmul.bf16.gmra.mxu0 %v582
        %v666 = vpop.f32.mrf.mxu0
        %v667 = vadd.f32 0.0, %v666
        %v668 = vpop.f32.mrf.mxu0
        %v669 = vadd.f32 0.0, %v668
        %670 = vmatmul.bf16.gmra.mxu0 %v585
        %v671 = vpop.f32.mrf.mxu0
        %v672 = vadd.f32 0.0, %v671
        %v673 = vpop.f32.mrf.mxu0
        %v674 = vadd.f32 0.0, %v673
        %675 = vmatmul.bf16.gmra.mxu0 %v588
        %v676 = vpop.f32.mrf.mxu0
        %v677 = vadd.f32 0.0, %v676
        %v678 = vpop.f32.mrf.mxu0
        %v679 = vadd.f32 0.0, %v678
        %680 = vmatmul.bf16.gmra.mxu0 %v591
        %v681 = vpop.f32.mrf.mxu0
        %v682 = vadd.f32 0.0, %v681
        %v683 = vpop.f32.mrf.mxu0
        %v684 = vadd.f32 0.0, %v683
        %685 = vmatmul.bf16.gmra.mxu0 %v594
        %v686 = vpop.f32.mrf.mxu0
        %v687 = vadd.f32 0.0, %v686
        %v688 = vpop.f32.mrf.mxu0
        %v689 = vadd.f32 0.0, %v688
        %690 = vmatmul.bf16.gmra.mxu0 %v597
        %v691 = vpop.f32.mrf.mxu0
        %v692 = vadd.f32 0.0, %v691
        %v693 = vpop.f32.mrf.mxu0
        %v694 = vadd.f32 0.0, %v693
        %695 = vdwg.mxu0
        %696 = vmatpush.bf16.msra.mxu0 0
        %697 = vmatpush.bf16.msra.mxu0 0
        %698 = vmatpush.bf16.msra.mxu0 0
        %699 = vmatpush.bf16.msra.mxu0 0
        %700 = vmatpush.bf16.msra.mxu0 0
        %701 = vmatpush.bf16.msra.mxu0 0
        %702 = vmatpush.bf16.msra.mxu0 %v607
        %703 = vmatpush.bf16.msra.mxu0 %v564
        %704 = vmatmul.bf16.gmra.mxu0 %v582
        %v705 = vpop.f32.mrf.mxu0
        %v706 = vadd.f32 0.0, %v705
        %v707 = vpop.f32.mrf.mxu0
        %v708 = vadd.f32 0.0, %v707
        %709 = vmatmul.bf16.gmra.mxu0 %v585
        %v710 = vpop.f32.mrf.mxu0
        %v711 = vadd.f32 0.0, %v710
        %v712 = vpop.f32.mrf.mxu0
        %v713 = vadd.f32 0.0, %v712
        %714 = vmatmul.bf16.gmra.mxu0 %v588
        %v715 = vpop.f32.mrf.mxu0
        %v716 = vadd.f32 0.0, %v715
        %v717 = vpop.f32.mrf.mxu0
        %v718 = vadd.f32 0.0, %v717
        %719 = vmatmul.bf16.gmra.mxu0 %v591
        %v720 = vpop.f32.mrf.mxu0
        %v721 = vadd.f32 0.0, %v720
        %v722 = vpop.f32.mrf.mxu0
        %v723 = vadd.f32 0.0, %v722
        %724 = vmatmul.bf16.gmra.mxu0 %v594
        %v725 = vpop.f32.mrf.mxu0
        %v726 = vadd.f32 0.0, %v725
        %v727 = vpop.f32.mrf.mxu0
        %v728 = vadd.f32 0.0, %v727
        %729 = vmatmul.bf16.gmra.mxu0 %v597
        %v730 = vpop.f32.mrf.mxu0
        %v731 = vadd.f32 0.0, %v730
        %v732 = vpop.f32.mrf.mxu0
        %v733 = vadd.f32 0.0, %v732
        %734 = vdwg.mxu0
        %735 = vmatpush.bf16.msra.mxu0 0
        %736 = vmatpush.bf16.msra.mxu0 0
        %737 = vmatpush.bf16.msra.mxu0 0
        %738 = vmatpush.bf16.msra.mxu0 0
        %739 = vmatpush.bf16.msra.mxu0 0
        %740 = vmatpush.bf16.msra.mxu0 0
        %741 = vmatpush.bf16.msra.mxu0 %v610
        %742 = vmatpush.bf16.msra.mxu0 %v565
        %743 = vmatmul.bf16.gmra.mxu0 %v582
        %v744 = vpop.f32.mrf.mxu0
        %v745 = vadd.f32 0.0, %v744
        %v746 = vpop.f32.mrf.mxu0
        %v747 = vadd.f32 0.0, %v746
        %748 = vmatmul.bf16.gmra.mxu0 %v585
        %v749 = vpop.f32.mrf.mxu0
        %v750 = vadd.f32 0.0, %v749
        %v751 = vpop.f32.mrf.mxu0
        %v752 = vadd.f32 0.0, %v751
        %753 = vmatmul.bf16.gmra.mxu0 %v588
        %v754 = vpop.f32.mrf.mxu0
        %v755 = vadd.f32 0.0, %v754
        %v756 = vpop.f32.mrf.mxu0
        %v757 = vadd.f32 0.0, %v756
        %758 = vmatmul.bf16.gmra.mxu0 %v591
        %v759 = vpop.f32.mrf.mxu0
        %v760 = vadd.f32 0.0, %v759
        %v761 = vpop.f32.mrf.mxu0
        %v762 = vadd.f32 0.0, %v761
        %763 = vmatmul.bf16.gmra.mxu0 %v594
        %v764 = vpop.f32.mrf.mxu0
        %v765 = vadd.f32 0.0, %v764
        %v766 = vpop.f32.mrf.mxu0
        %v767 = vadd.f32 0.0, %v766
        %768 = vmatmul.bf16.gmra.mxu0 %v597
        %v769 = vpop.f32.mrf.mxu0
        %v770 = vadd.f32 0.0, %v769
        %v771 = vpop.f32.mrf.mxu0
        %v772 = vadd.f32 0.0, %v771
        %773 = vdwg.mxu0
        %774 = vmatpush.bf16.msra.mxu0 0
        %775 = vmatpush.bf16.msra.mxu0 0
        %776 = vmatpush.bf16.msra.mxu0 0
        %777 = vmatpush.bf16.msra.mxu0 0
        %778 = vmatpush.bf16.msra.mxu0 0
        %779 = vmatpush.bf16.msra.mxu0 0
        %780 = vmatpush.bf16.msra.mxu0 %v613
        %781 = vmatpush.bf16.msra.mxu0 %v566
        %782 = vmatmul.bf16.gmra.mxu0 %v582
        %v783 = vpop.f32.mrf.mxu0
        %v784 = vadd.f32 0.0, %v783
        %v785 = vpop.f32.mrf.mxu0
        %v786 = vadd.f32 0.0, %v785
        %787 = vmatmul.bf16.gmra.mxu0 %v585
        %v788 = vpop.f32.mrf.mxu0
        %v789 = vadd.f32 0.0, %v788
        %v790 = vpop.f32.mrf.mxu0
        %v791 = vadd.f32 0.0, %v790
        %792 = vmatmul.bf16.gmra.mxu0 %v588
        %v793 = vpop.f32.mrf.mxu0
        %v794 = vadd.f32 0.0, %v793
        %v795 = vpop.f32.mrf.mxu0
        %v796 = vadd.f32 0.0, %v795
        %797 = vmatmul.bf16.gmra.mxu0 %v591
        %v798 = vpop.f32.mrf.mxu0
        %v799 = vadd.f32 0.0, %v798
        %v800 = vpop.f32.mrf.mxu0
        %v801 = vadd.f32 0.0, %v800
        %802 = vmatmul.bf16.gmra.mxu0 %v594
        %v803 = vpop.f32.mrf.mxu0
        %v804 = vadd.f32 0.0, %v803
        %v805 = vpop.f32.mrf.mxu0
        %v806 = vadd.f32 0.0, %v805
        %807 = vmatmul.bf16.gmra.mxu0 %v597
        %v808 = vpop.f32.mrf.mxu0
        %v809 = vadd.f32 0.0, %v808
        %v810 = vpop.f32.mrf.mxu0
        %v811 = vadd.f32 0.0, %v810
        %812 = vdwg.mxu0
        %813 = vmatpush.bf16.msra.mxu0 0
        %814 = vmatpush.bf16.msra.mxu0 0
        %815 = vmatpush.bf16.msra.mxu0 0
        %816 = vmatpush.bf16.msra.mxu0 0
        %817 = vmatpush.bf16.msra.mxu0 0
        %818 = vmatpush.bf16.msra.mxu0 0
        %819 = vmatpush.bf16.msra.mxu0 %v616
        %820 = vmatpush.bf16.msra.mxu0 %v567
        %821 = vmatmul.bf16.gmra.mxu0 %v582
        %v822 = vpop.f32.mrf.mxu0
        %v823 = vadd.f32 0.0, %v822
        %v824 = vpop.f32.mrf.mxu0
        %v825 = vadd.f32 0.0, %v824
        %826 = vmatmul.bf16.gmra.mxu0 %v585
        %v827 = vpop.f32.mrf.mxu0
        %v828 = vadd.f32 0.0, %v827
        %v829 = vpop.f32.mrf.mxu0
        %v830 = vadd.f32 0.0, %v829
        %831 = vmatmul.bf16.gmra.mxu0 %v588
        %v832 = vpop.f32.mrf.mxu0
        %v833 = vadd.f32 0.0, %v832
        %v834 = vpop.f32.mrf.mxu0
        %v835 = vadd.f32 0.0, %v834
        %836 = vmatmul.bf16.gmra.mxu0 %v591
        %v837 = vpop.f32.mrf.mxu0
        %v838 = vadd.f32 0.0, %v837
        %v839 = vpop.f32.mrf.mxu0
        %v840 = vadd.f32 0.0, %v839
        %841 = vmatmul.bf16.gmra.mxu0 %v594
        %v842 = vpop.f32.mrf.mxu0
        %v843 = vadd.f32 0.0, %v842
        %v844 = vpop.f32.mrf.mxu0
        %v845 = vadd.f32 0.0, %v844
        %846 = vmatmul.bf16.gmra.mxu0 %v597
        %v847 = vpop.f32.mrf.mxu0
        %v848 = vadd.f32 0.0, %v847
        %v849 = vpop.f32.mrf.mxu0
        %v850 = vadd.f32 0.0, %v849
        %851 = vdwg.mxu0
        %v852 = vpack.c.bf16 %v463, %v462
        %v853 = vpack.c.bf16 %v465, %v464
        %v854 = vpack.c.bf16 %v467, %v466
        %v855 = vpack.c.bf16 %v469, %v468
        %v856 = vpack.c.bf16 %v471, %v470
        %v857 = vpack.c.bf16 %v473, %v472
        %v859 = vsel %vm580, %v852, 0
        %v862 = vsel %vm580, %v853, 0
        %v865 = vsel %vm580, %v854, 0
        %v868 = vsel %vm580, %v855, 0
        %v871 = vsel %vm580, %v856, 0
        %v874 = vsel %vm580, %v857, 0
        %876 = vmatpush.bf16.msra.mxu0 0
        %877 = vmatpush.bf16.msra.mxu0 0
        %878 = vmatpush.bf16.msra.mxu0 0
        %879 = vmatpush.bf16.msra.mxu0 0
        %880 = vmatpush.bf16.msra.mxu0 0
        %881 = vmatpush.bf16.msra.mxu0 0
        %882 = vmatpush.bf16.msra.mxu0 %v601
        %883 = vmatpush.bf16.msra.mxu0 %v562
        %884 = vmatmul.bf16.gmra.mxu0 %v859
        %v885 = vpop.f32.mrf.mxu0
        %v886 = vadd.f32 0.0, %v885
        %v887 = vpop.f32.mrf.mxu0
        %v888 = vadd.f32 0.0, %v887
        %889 = vmatmul.bf16.gmra.mxu0 %v862
        %v890 = vpop.f32.mrf.mxu0
        %v891 = vadd.f32 0.0, %v890
        %v892 = vpop.f32.mrf.mxu0
        %v893 = vadd.f32 0.0, %v892
        %894 = vmatmul.bf16.gmra.mxu0 %v865
        %v895 = vpop.f32.mrf.mxu0
        %v896 = vadd.f32 0.0, %v895
        %v897 = vpop.f32.mrf.mxu0
        %v898 = vadd.f32 0.0, %v897
        %899 = vmatmul.bf16.gmra.mxu0 %v868
        %v900 = vpop.f32.mrf.mxu0
        %v901 = vadd.f32 0.0, %v900
        %v902 = vpop.f32.mrf.mxu0
        %v903 = vadd.f32 0.0, %v902
        %904 = vmatmul.bf16.gmra.mxu0 %v871
        %v905 = vpop.f32.mrf.mxu0
        %v906 = vadd.f32 0.0, %v905
        %v907 = vpop.f32.mrf.mxu0
        %v908 = vadd.f32 0.0, %v907
        %909 = vmatmul.bf16.gmra.mxu0 %v874
        %v910 = vpop.f32.mrf.mxu0
        %v911 = vadd.f32 0.0, %v910
        %v912 = vpop.f32.mrf.mxu0
        %v913 = vadd.f32 0.0, %v912
        %914 = vdwg.mxu0
        %915 = vmatpush.bf16.msra.mxu0 0
        %916 = vmatpush.bf16.msra.mxu0 0
        %917 = vmatpush.bf16.msra.mxu0 0
        %918 = vmatpush.bf16.msra.mxu0 0
        %919 = vmatpush.bf16.msra.mxu0 0
        %920 = vmatpush.bf16.msra.mxu0 0
        %921 = vmatpush.bf16.msra.mxu0 %v604
        %922 = vmatpush.bf16.msra.mxu0 %v563
        %923 = vmatmul.bf16.gmra.mxu0 %v859
        %v924 = vpop.f32.mrf.mxu0
        %v925 = vadd.f32 0.0, %v924
        %v926 = vpop.f32.mrf.mxu0
        %v927 = vadd.f32 0.0, %v926
        %928 = vmatmul.bf16.gmra.mxu0 %v862
        %v929 = vpop.f32.mrf.mxu0
        %v930 = vadd.f32 0.0, %v929
        %v931 = vpop.f32.mrf.mxu0
        %v932 = vadd.f32 0.0, %v931
        %933 = vmatmul.bf16.gmra.mxu0 %v865
        %v934 = vpop.f32.mrf.mxu0
        %v935 = vadd.f32 0.0, %v934
        %v936 = vpop.f32.mrf.mxu0
        %v937 = vadd.f32 0.0, %v936
        %938 = vmatmul.bf16.gmra.mxu0 %v868
        %v939 = vpop.f32.mrf.mxu0
        %v940 = vadd.f32 0.0, %v939
        %v941 = vpop.f32.mrf.mxu0
        %v942 = vadd.f32 0.0, %v941
        %943 = vmatmul.bf16.gmra.mxu0 %v871
        %v944 = vpop.f32.mrf.mxu0
        %v945 = vadd.f32 0.0, %v944
        %v946 = vpop.f32.mrf.mxu0
        %v947 = vadd.f32 0.0, %v946
        %948 = vmatmul.bf16.gmra.mxu0 %v874
        %v949 = vpop.f32.mrf.mxu0
        %v950 = vadd.f32 0.0, %v949
        %v951 = vpop.f32.mrf.mxu0
        %v952 = vadd.f32 0.0, %v951
        %953 = vdwg.mxu0
        %954 = vmatpush.bf16.msra.mxu0 0
        %955 = vmatpush.bf16.msra.mxu0 0
        %956 = vmatpush.bf16.msra.mxu0 0
        %957 = vmatpush.bf16.msra.mxu0 0
        %958 = vmatpush.bf16.msra.mxu0 0
        %959 = vmatpush.bf16.msra.mxu0 0
        %960 = vmatpush.bf16.msra.mxu0 %v607
        %961 = vmatpush.bf16.msra.mxu0 %v564
        %962 = vmatmul.bf16.gmra.mxu0 %v859
        %v963 = vpop.f32.mrf.mxu0
        %v964 = vadd.f32 0.0, %v963
        %v965 = vpop.f32.mrf.mxu0
        %v966 = vadd.f32 0.0, %v965
        %967 = vmatmul.bf16.gmra.mxu0 %v862
        %v968 = vpop.f32.mrf.mxu0
        %v969 = vadd.f32 0.0, %v968
        %v970 = vpop.f32.mrf.mxu0
        %v971 = vadd.f32 0.0, %v970
        %972 = vmatmul.bf16.gmra.mxu0 %v865
        %v973 = vpop.f32.mrf.mxu0
        %v974 = vadd.f32 0.0, %v973
        %v975 = vpop.f32.mrf.mxu0
        %v976 = vadd.f32 0.0, %v975
        %977 = vmatmul.bf16.gmra.mxu0 %v868
        %v978 = vpop.f32.mrf.mxu0
        %v979 = vadd.f32 0.0, %v978
        %v980 = vpop.f32.mrf.mxu0
        %v981 = vadd.f32 0.0, %v980
        %982 = vmatmul.bf16.gmra.mxu0 %v871
        %v983 = vpop.f32.mrf.mxu0
        %v984 = vadd.f32 0.0, %v983
        %v985 = vpop.f32.mrf.mxu0
        %v986 = vadd.f32 0.0, %v985
        %987 = vmatmul.bf16.gmra.mxu0 %v874
        %v988 = vpop.f32.mrf.mxu0
        %v989 = vadd.f32 0.0, %v988
        %v990 = vpop.f32.mrf.mxu0
        %v991 = vadd.f32 0.0, %v990
        %992 = vdwg.mxu0
        %993 = vmatpush.bf16.msra.mxu0 0
        %994 = vmatpush.bf16.msra.mxu0 0
        %995 = vmatpush.bf16.msra.mxu0 0
        %996 = vmatpush.bf16.msra.mxu0 0
        %997 = vmatpush.bf16.msra.mxu0 0
        %998 = vmatpush.bf16.msra.mxu0 0
        %999 = vmatpush.bf16.msra.mxu0 %v610
        %1000 = vmatpush.bf16.msra.mxu0 %v565
        %1001 = vmatmul.bf16.gmra.mxu0 %v859
        %v1002 = vpop.f32.mrf.mxu0
        %v1003 = vadd.f32 0.0, %v1002
        %v1004 = vpop.f32.mrf.mxu0
        %v1005 = vadd.f32 0.0, %v1004
        %1006 = vmatmul.bf16.gmra.mxu0 %v862
        %v1007 = vpop.f32.mrf.mxu0
        %v1008 = vadd.f32 0.0, %v1007
        %v1009 = vpop.f32.mrf.mxu0
        %v1010 = vadd.f32 0.0, %v1009
        %1011 = vmatmul.bf16.gmra.mxu0 %v865
        %v1012 = vpop.f32.mrf.mxu0
        %v1013 = vadd.f32 0.0, %v1012
        %v1014 = vpop.f32.mrf.mxu0
        %v1015 = vadd.f32 0.0, %v1014
        %1016 = vmatmul.bf16.gmra.mxu0 %v868
        %v1017 = vpop.f32.mrf.mxu0
        %v1018 = vadd.f32 0.0, %v1017
        %v1019 = vpop.f32.mrf.mxu0
        %v1020 = vadd.f32 0.0, %v1019
        %1021 = vmatmul.bf16.gmra.mxu0 %v871
        %v1022 = vpop.f32.mrf.mxu0
        %v1023 = vadd.f32 0.0, %v1022
        %v1024 = vpop.f32.mrf.mxu0
        %v1025 = vadd.f32 0.0, %v1024
        %1026 = vmatmul.bf16.gmra.mxu0 %v874
        %v1027 = vpop.f32.mrf.mxu0
        %v1028 = vadd.f32 0.0, %v1027
        %v1029 = vpop.f32.mrf.mxu0
        %v1030 = vadd.f32 0.0, %v1029
        %1031 = vdwg.mxu0
        %1032 = vmatpush.bf16.msra.mxu0 0
        %1033 = vmatpush.bf16.msra.mxu0 0
        %1034 = vmatpush.bf16.msra.mxu0 0
        %1035 = vmatpush.bf16.msra.mxu0 0
        %1036 = vmatpush.bf16.msra.mxu0 0
        %1037 = vmatpush.bf16.msra.mxu0 0
        %1038 = vmatpush.bf16.msra.mxu0 %v613
        %1039 = vmatpush.bf16.msra.mxu0 %v566
        %1040 = vmatmul.bf16.gmra.mxu0 %v859
        %v1041 = vpop.f32.mrf.mxu0
        %v1042 = vadd.f32 0.0, %v1041
        %v1043 = vpop.f32.mrf.mxu0
        %v1044 = vadd.f32 0.0, %v1043
        %1045 = vmatmul.bf16.gmra.mxu0 %v862
        %v1046 = vpop.f32.mrf.mxu0
        %v1047 = vadd.f32 0.0, %v1046
        %v1048 = vpop.f32.mrf.mxu0
        %v1049 = vadd.f32 0.0, %v1048
        %1050 = vmatmul.bf16.gmra.mxu0 %v865
        %v1051 = vpop.f32.mrf.mxu0
        %v1052 = vadd.f32 0.0, %v1051
        %v1053 = vpop.f32.mrf.mxu0
        %v1054 = vadd.f32 0.0, %v1053
        %1055 = vmatmul.bf16.gmra.mxu0 %v868
        %v1056 = vpop.f32.mrf.mxu0
        %v1057 = vadd.f32 0.0, %v1056
        %v1058 = vpop.f32.mrf.mxu0
        %v1059 = vadd.f32 0.0, %v1058
        %1060 = vmatmul.bf16.gmra.mxu0 %v871
        %v1061 = vpop.f32.mrf.mxu0
        %v1062 = vadd.f32 0.0, %v1061
        %v1063 = vpop.f32.mrf.mxu0
        %v1064 = vadd.f32 0.0, %v1063
        %1065 = vmatmul.bf16.gmra.mxu0 %v874
        %v1066 = vpop.f32.mrf.mxu0
        %v1067 = vadd.f32 0.0, %v1066
        %v1068 = vpop.f32.mrf.mxu0
        %v1069 = vadd.f32 0.0, %v1068
        %1070 = vdwg.mxu0
        %1071 = vmatpush.bf16.msra.mxu0 0
        %1072 = vmatpush.bf16.msra.mxu0 0
        %1073 = vmatpush.bf16.msra.mxu0 0
        %1074 = vmatpush.bf16.msra.mxu0 0
        %1075 = vmatpush.bf16.msra.mxu0 0
        %1076 = vmatpush.bf16.msra.mxu0 0
        %1077 = vmatpush.bf16.msra.mxu0 %v616
        %1078 = vmatpush.bf16.msra.mxu0 %v567
        %1079 = vmatmul.bf16.gmra.mxu0 %v859
        %v1080 = vpop.f32.mrf.mxu0
        %v1081 = vadd.f32 0.0, %v1080
        %v1082 = vpop.f32.mrf.mxu0
        %v1083 = vadd.f32 0.0, %v1082
        %1084 = vmatmul.bf16.gmra.mxu0 %v862
        %v1085 = vpop.f32.mrf.mxu0
        %v1086 = vadd.f32 0.0, %v1085
        %v1087 = vpop.f32.mrf.mxu0
        %v1088 = vadd.f32 0.0, %v1087
        %1089 = vmatmul.bf16.gmra.mxu0 %v865
        %v1090 = vpop.f32.mrf.mxu0
        %v1091 = vadd.f32 0.0, %v1090
        %v1092 = vpop.f32.mrf.mxu0
        %v1093 = vadd.f32 0.0, %v1092
        %1094 = vmatmul.bf16.gmra.mxu0 %v868
        %v1095 = vpop.f32.mrf.mxu0
        %v1096 = vadd.f32 0.0, %v1095
        %v1097 = vpop.f32.mrf.mxu0
        %v1098 = vadd.f32 0.0, %v1097
        %1099 = vmatmul.bf16.gmra.mxu0 %v871
        %v1100 = vpop.f32.mrf.mxu0
        %v1101 = vadd.f32 0.0, %v1100
        %v1102 = vpop.f32.mrf.mxu0
        %v1103 = vadd.f32 0.0, %v1102
        %1104 = vmatmul.bf16.gmra.mxu0 %v874
        %v1105 = vpop.f32.mrf.mxu0
        %v1106 = vadd.f32 0.0, %v1105
        %v1107 = vpop.f32.mrf.mxu0
        %v1108 = vadd.f32 0.0, %v1107
        %1109 = vdwg.mxu0
        %v1122 = vunpack.c.l.b16 %v489
        %v1123 = vunpack.c.h.b16 %v489
        %v1124 = vunpack.c.l.b16 %v490
        %v1125 = vunpack.c.h.b16 %v490
        %v1126 = vunpack.c.l.b16 %v491
        %v1127 = vunpack.c.h.b16 %v491
        %v1128 = vunpack.c.l.b16 %v492
        %v1129 = vunpack.c.h.b16 %v492
        %v1130 = vunpack.c.l.b16 %v493
        %v1131 = vunpack.c.h.b16 %v493
        %v1132 = vunpack.c.l.b16 %v494
        %v1133 = vunpack.c.h.b16 %v494
        %v1134 = vunpack.c.l.b16 %v495
        %v1135 = vunpack.c.h.b16 %v495
        %v1136 = vunpack.c.l.b16 %v496
        %v1137 = vunpack.c.h.b16 %v496
        %v1138 = vunpack.c.l.b16 %v497
        %v1139 = vunpack.c.h.b16 %v497
        %v1140 = vunpack.c.l.b16 %v498
        %v1141 = vunpack.c.h.b16 %v498
        %v1142 = vunpack.c.l.b16 %v499
        %v1143 = vunpack.c.h.b16 %v499
        %v1144 = vunpack.c.l.b16 %v500
        %v1145 = vunpack.c.h.b16 %v500
        %v1146 = vpack.c.b16 %v1128, %v1122
        %v1147 = vpack.c.b16 %v1129, %v1123
        %v1148 = vpack.c.b16 %v1130, %v1124
        %v1149 = vpack.c.b16 %v1131, %v1125
        %v1150 = vpack.c.b16 %v1132, %v1126
        %v1151 = vpack.c.b16 %v1133, %v1127
        %v1152 = vpack.c.b16 %v1140, %v1134
        %v1153 = vpack.c.b16 %v1141, %v1135
        %v1154 = vpack.c.b16 %v1142, %v1136
        %v1155 = vpack.c.b16 %v1143, %v1137
        %v1156 = vpack.c.b16 %v1144, %v1138
        %v1157 = vpack.c.b16 %v1145, %v1139
        %v1165 = vsel %vm580, %v501, 0
        %v1168 = vsel %vm580, %v502, 0
        %v1171 = vsel %vm580, %v503, 0
        %v1174 = vsel %vm580, %v504, 0
        %v1177 = vsel %vm580, %v505, 0
        %v1180 = vsel %vm580, %v506, 0
        %v1183 = vsel %vm599, %v1152, 0
        %v1186 = vsel %vm599, %v1153, 0
        %v1189 = vsel %vm599, %v1154, 0
        %v1192 = vsel %vm599, %v1155, 0
        %v1195 = vsel %vm599, %v1156, 0
        %v1198 = vsel %vm599, %v1157, 0
        %1200 = vmatpush.bf16.msra.mxu0 0
        %1201 = vmatpush.bf16.msra.mxu0 0
        %1202 = vmatpush.bf16.msra.mxu0 0
        %1203 = vmatpush.bf16.msra.mxu0 0
        %1204 = vmatpush.bf16.msra.mxu0 0
        %1205 = vmatpush.bf16.msra.mxu0 0
        %1206 = vmatpush.bf16.msra.mxu0 %v1183
        %1207 = vmatpush.bf16.msra.mxu0 %v1146
        %1208 = vmatmul.bf16.gmra.mxu0 %v1165
        %v1209 = vpop.f32.mrf.mxu0
        %v1210 = vadd.f32 %v628, %v1209
        %v1211 = vpop.f32.mrf.mxu0
        %v1212 = vadd.f32 %v630, %v1211
        %1213 = vmatmul.bf16.gmra.mxu0 %v1168
        %v1214 = vpop.f32.mrf.mxu0
        %v1215 = vadd.f32 %v633, %v1214
        %v1216 = vpop.f32.mrf.mxu0
        %v1217 = vadd.f32 %v635, %v1216
        %1218 = vmatmul.bf16.gmra.mxu0 %v1171
        %v1219 = vpop.f32.mrf.mxu0
        %v1220 = vadd.f32 %v638, %v1219
        %v1221 = vpop.f32.mrf.mxu0
        %v1222 = vadd.f32 %v640, %v1221
        %1223 = vmatmul.bf16.gmra.mxu0 %v1174
        %v1224 = vpop.f32.mrf.mxu0
        %v1225 = vadd.f32 %v643, %v1224
        %v1226 = vpop.f32.mrf.mxu0
        %v1227 = vadd.f32 %v645, %v1226
        %1228 = vmatmul.bf16.gmra.mxu0 %v1177
        %v1229 = vpop.f32.mrf.mxu0
        %v1230 = vadd.f32 %v648, %v1229
        %v1231 = vpop.f32.mrf.mxu0
        %v1232 = vadd.f32 %v650, %v1231
        %1233 = vmatmul.bf16.gmra.mxu0 %v1180
        %v1234 = vpop.f32.mrf.mxu0
        %v1235 = vadd.f32 %v653, %v1234
        %v1236 = vpop.f32.mrf.mxu0
        %v1237 = vadd.f32 %v655, %v1236
        %1238 = vdwg.mxu0
        %1239 = vmatpush.bf16.msra.mxu0 0
        %1240 = vmatpush.bf16.msra.mxu0 0
        %1241 = vmatpush.bf16.msra.mxu0 0
        %1242 = vmatpush.bf16.msra.mxu0 0
        %1243 = vmatpush.bf16.msra.mxu0 0
        %1244 = vmatpush.bf16.msra.mxu0 0
        %1245 = vmatpush.bf16.msra.mxu0 %v1186
        %1246 = vmatpush.bf16.msra.mxu0 %v1147
        %1247 = vmatmul.bf16.gmra.mxu0 %v1165
        %v1248 = vpop.f32.mrf.mxu0
        %v1249 = vadd.f32 %v667, %v1248
        %v1250 = vpop.f32.mrf.mxu0
        %v1251 = vadd.f32 %v669, %v1250
        %1252 = vmatmul.bf16.gmra.mxu0 %v1168
        %v1253 = vpop.f32.mrf.mxu0
        %v1254 = vadd.f32 %v672, %v1253
        %v1255 = vpop.f32.mrf.mxu0
        %v1256 = vadd.f32 %v674, %v1255
        %1257 = vmatmul.bf16.gmra.mxu0 %v1171
        %v1258 = vpop.f32.mrf.mxu0
        %v1259 = vadd.f32 %v677, %v1258
        %v1260 = vpop.f32.mrf.mxu0
        %v1261 = vadd.f32 %v679, %v1260
        %1262 = vmatmul.bf16.gmra.mxu0 %v1174
        %v1263 = vpop.f32.mrf.mxu0
        %v1264 = vadd.f32 %v682, %v1263
        %v1265 = vpop.f32.mrf.mxu0
        %v1266 = vadd.f32 %v684, %v1265
        %1267 = vmatmul.bf16.gmra.mxu0 %v1177
        %v1268 = vpop.f32.mrf.mxu0
        %v1269 = vadd.f32 %v687, %v1268
        %v1270 = vpop.f32.mrf.mxu0
        %v1271 = vadd.f32 %v689, %v1270
        %1272 = vmatmul.bf16.gmra.mxu0 %v1180
        %v1273 = vpop.f32.mrf.mxu0
        %v1274 = vadd.f32 %v692, %v1273
        %v1275 = vpop.f32.mrf.mxu0
        %v1276 = vadd.f32 %v694, %v1275
        %1277 = vdwg.mxu0
        %1278 = vmatpush.bf16.msra.mxu0 0
        %1279 = vmatpush.bf16.msra.mxu0 0
        %1280 = vmatpush.bf16.msra.mxu0 0
        %1281 = vmatpush.bf16.msra.mxu0 0
        %1282 = vmatpush.bf16.msra.mxu0 0
        %1283 = vmatpush.bf16.msra.mxu0 0
        %1284 = vmatpush.bf16.msra.mxu0 %v1189
        %1285 = vmatpush.bf16.msra.mxu0 %v1148
        %1286 = vmatmul.bf16.gmra.mxu0 %v1165
        %v1287 = vpop.f32.mrf.mxu0
        %v1288 = vadd.f32 %v706, %v1287
        %v1289 = vpop.f32.mrf.mxu0
        %v1290 = vadd.f32 %v708, %v1289
        %1291 = vmatmul.bf16.gmra.mxu0 %v1168
        %v1292 = vpop.f32.mrf.mxu0
        %v1293 = vadd.f32 %v711, %v1292
        %v1294 = vpop.f32.mrf.mxu0
        %v1295 = vadd.f32 %v713, %v1294
        %1296 = vmatmul.bf16.gmra.mxu0 %v1171
        %v1297 = vpop.f32.mrf.mxu0
        %v1298 = vadd.f32 %v716, %v1297
        %v1299 = vpop.f32.mrf.mxu0
        %v1300 = vadd.f32 %v718, %v1299
        %1301 = vmatmul.bf16.gmra.mxu0 %v1174
        %v1302 = vpop.f32.mrf.mxu0
        %v1303 = vadd.f32 %v721, %v1302
        %v1304 = vpop.f32.mrf.mxu0
        %v1305 = vadd.f32 %v723, %v1304
        %1306 = vmatmul.bf16.gmra.mxu0 %v1177
        %v1307 = vpop.f32.mrf.mxu0
        %v1308 = vadd.f32 %v726, %v1307
        %v1309 = vpop.f32.mrf.mxu0
        %v1310 = vadd.f32 %v728, %v1309
        %1311 = vmatmul.bf16.gmra.mxu0 %v1180
        %v1312 = vpop.f32.mrf.mxu0
        %v1313 = vadd.f32 %v731, %v1312
        %v1314 = vpop.f32.mrf.mxu0
        %v1315 = vadd.f32 %v733, %v1314
        %1316 = vdwg.mxu0
        %1317 = vmatpush.bf16.msra.mxu0 0
        %1318 = vmatpush.bf16.msra.mxu0 0
        %1319 = vmatpush.bf16.msra.mxu0 0
        %1320 = vmatpush.bf16.msra.mxu0 0
        %1321 = vmatpush.bf16.msra.mxu0 0
        %1322 = vmatpush.bf16.msra.mxu0 0
        %1323 = vmatpush.bf16.msra.mxu0 %v1192
        %1324 = vmatpush.bf16.msra.mxu0 %v1149
        %1325 = vmatmul.bf16.gmra.mxu0 %v1165
        %v1326 = vpop.f32.mrf.mxu0
        %v1327 = vadd.f32 %v745, %v1326
        %v1328 = vpop.f32.mrf.mxu0
        %v1329 = vadd.f32 %v747, %v1328
        %1330 = vmatmul.bf16.gmra.mxu0 %v1168
        %v1331 = vpop.f32.mrf.mxu0
        %v1332 = vadd.f32 %v750, %v1331
        %v1333 = vpop.f32.mrf.mxu0
        %v1334 = vadd.f32 %v752, %v1333
        %1335 = vmatmul.bf16.gmra.mxu0 %v1171
        %v1336 = vpop.f32.mrf.mxu0
        %v1337 = vadd.f32 %v755, %v1336
        %v1338 = vpop.f32.mrf.mxu0
        %v1339 = vadd.f32 %v757, %v1338
        %1340 = vmatmul.bf16.gmra.mxu0 %v1174
        %v1341 = vpop.f32.mrf.mxu0
        %v1342 = vadd.f32 %v760, %v1341
        %v1343 = vpop.f32.mrf.mxu0
        %v1344 = vadd.f32 %v762, %v1343
        %1345 = vmatmul.bf16.gmra.mxu0 %v1177
        %v1346 = vpop.f32.mrf.mxu0
        %v1347 = vadd.f32 %v765, %v1346
        %v1348 = vpop.f32.mrf.mxu0
        %v1349 = vadd.f32 %v767, %v1348
        %1350 = vmatmul.bf16.gmra.mxu0 %v1180
        %v1351 = vpop.f32.mrf.mxu0
        %v1352 = vadd.f32 %v770, %v1351
        %v1353 = vpop.f32.mrf.mxu0
        %v1354 = vadd.f32 %v772, %v1353
        %1355 = vdwg.mxu0
        %1356 = vmatpush.bf16.msra.mxu0 0
        %1357 = vmatpush.bf16.msra.mxu0 0
        %1358 = vmatpush.bf16.msra.mxu0 0
        %1359 = vmatpush.bf16.msra.mxu0 0
        %1360 = vmatpush.bf16.msra.mxu0 0
        %1361 = vmatpush.bf16.msra.mxu0 0
        %1362 = vmatpush.bf16.msra.mxu0 %v1195
        %1363 = vmatpush.bf16.msra.mxu0 %v1150
        %1364 = vmatmul.bf16.gmra.mxu0 %v1165
        %v1365 = vpop.f32.mrf.mxu0
        %v1366 = vadd.f32 %v784, %v1365
        %v1367 = vpop.f32.mrf.mxu0
        %v1368 = vadd.f32 %v786, %v1367
        %1369 = vmatmul.bf16.gmra.mxu0 %v1168
        %v1370 = vpop.f32.mrf.mxu0
        %v1371 = vadd.f32 %v789, %v1370
        %v1372 = vpop.f32.mrf.mxu0
        %v1373 = vadd.f32 %v791, %v1372
        %1374 = vmatmul.bf16.gmra.mxu0 %v1171
        %v1375 = vpop.f32.mrf.mxu0
        %v1376 = vadd.f32 %v794, %v1375
        %v1377 = vpop.f32.mrf.mxu0
        %v1378 = vadd.f32 %v796, %v1377
        %1379 = vmatmul.bf16.gmra.mxu0 %v1174
        %v1380 = vpop.f32.mrf.mxu0
        %v1381 = vadd.f32 %v799, %v1380
        %v1382 = vpop.f32.mrf.mxu0
        %v1383 = vadd.f32 %v801, %v1382
        %1384 = vmatmul.bf16.gmra.mxu0 %v1177
        %v1385 = vpop.f32.mrf.mxu0
        %v1386 = vadd.f32 %v804, %v1385
        %v1387 = vpop.f32.mrf.mxu0
        %v1388 = vadd.f32 %v806, %v1387
        %1389 = vmatmul.bf16.gmra.mxu0 %v1180
        %v1390 = vpop.f32.mrf.mxu0
        %v1391 = vadd.f32 %v809, %v1390
        %v1392 = vpop.f32.mrf.mxu0
        %v1393 = vadd.f32 %v811, %v1392
        %1394 = vdwg.mxu0
        %1395 = vmatpush.bf16.msra.mxu0 0
        %1396 = vmatpush.bf16.msra.mxu0 0
        %1397 = vmatpush.bf16.msra.mxu0 0
        %1398 = vmatpush.bf16.msra.mxu0 0
        %1399 = vmatpush.bf16.msra.mxu0 0
        %1400 = vmatpush.bf16.msra.mxu0 0
        %1401 = vmatpush.bf16.msra.mxu0 %v1198
        %1402 = vmatpush.bf16.msra.mxu0 %v1151
        %1403 = vmatmul.bf16.gmra.mxu0 %v1165
        %v1404 = vpop.f32.mrf.mxu0
        %v1405 = vadd.f32 %v823, %v1404
        %v1406 = vpop.f32.mrf.mxu0
        %v1407 = vadd.f32 %v825, %v1406
        %1408 = vmatmul.bf16.gmra.mxu0 %v1168
        %v1409 = vpop.f32.mrf.mxu0
        %v1410 = vadd.f32 %v828, %v1409
        %v1411 = vpop.f32.mrf.mxu0
        %v1412 = vadd.f32 %v830, %v1411
        %1413 = vmatmul.bf16.gmra.mxu0 %v1171
        %v1414 = vpop.f32.mrf.mxu0
        %v1415 = vadd.f32 %v833, %v1414
        %v1416 = vpop.f32.mrf.mxu0
        %v1417 = vadd.f32 %v835, %v1416
        %1418 = vmatmul.bf16.gmra.mxu0 %v1174
        %v1419 = vpop.f32.mrf.mxu0
        %v1420 = vadd.f32 %v838, %v1419
        %v1421 = vpop.f32.mrf.mxu0
        %v1422 = vadd.f32 %v840, %v1421
        %1423 = vmatmul.bf16.gmra.mxu0 %v1177
        %v1424 = vpop.f32.mrf.mxu0
        %v1425 = vadd.f32 %v843, %v1424
        %v1426 = vpop.f32.mrf.mxu0
        %v1427 = vadd.f32 %v845, %v1426
        %1428 = vmatmul.bf16.gmra.mxu0 %v1180
        %v1429 = vpop.f32.mrf.mxu0
        %v1430 = vadd.f32 %v848, %v1429
        %v1431 = vpop.f32.mrf.mxu0
        %v1432 = vadd.f32 %v850, %v1431
        %1433 = vdwg.mxu0
        %1434 = vmatpush.bf16.msra.mxu0 0
        %1435 = vmatpush.bf16.msra.mxu0 0
        %1436 = vmatpush.bf16.msra.mxu0 0
        %1437 = vmatpush.bf16.msra.mxu0 0
        %1438 = vmatpush.bf16.msra.mxu0 0
        %1439 = vmatpush.bf16.msra.mxu0 0
        %1440 = vmatpush.bf16.msra.mxu0 %v1183
        %1441 = vmatpush.bf16.msra.mxu0 %v1146
        %1442 = vmatmul.bf16.gmra.mxu0 %v582
        %v1443 = vpop.f32.mrf.mxu0
        %v1444 = vadd.f32 %v886, %v1443
        %v1445 = vpop.f32.mrf.mxu0
        %v1446 = vadd.f32 %v888, %v1445
        %1447 = vmatmul.bf16.gmra.mxu0 %v585
        %v1448 = vpop.f32.mrf.mxu0
        %v1449 = vadd.f32 %v891, %v1448
        %v1450 = vpop.f32.mrf.mxu0
        %v1451 = vadd.f32 %v893, %v1450
        %1452 = vmatmul.bf16.gmra.mxu0 %v588
        %v1453 = vpop.f32.mrf.mxu0
        %v1454 = vadd.f32 %v896, %v1453
        %v1455 = vpop.f32.mrf.mxu0
        %v1456 = vadd.f32 %v898, %v1455
        %1457 = vmatmul.bf16.gmra.mxu0 %v591
        %v1458 = vpop.f32.mrf.mxu0
        %v1459 = vadd.f32 %v901, %v1458
        %v1460 = vpop.f32.mrf.mxu0
        %v1461 = vadd.f32 %v903, %v1460
        %1462 = vmatmul.bf16.gmra.mxu0 %v594
        %v1463 = vpop.f32.mrf.mxu0
        %v1464 = vadd.f32 %v906, %v1463
        %v1465 = vpop.f32.mrf.mxu0
        %v1466 = vadd.f32 %v908, %v1465
        %1467 = vmatmul.bf16.gmra.mxu0 %v597
        %v1468 = vpop.f32.mrf.mxu0
        %v1469 = vadd.f32 %v911, %v1468
        %v1470 = vpop.f32.mrf.mxu0
        %v1471 = vadd.f32 %v913, %v1470
        %1472 = vdwg.mxu0
        %1473 = vmatpush.bf16.msra.mxu0 0
        %1474 = vmatpush.bf16.msra.mxu0 0
        %1475 = vmatpush.bf16.msra.mxu0 0
        %1476 = vmatpush.bf16.msra.mxu0 0
        %1477 = vmatpush.bf16.msra.mxu0 0
        %1478 = vmatpush.bf16.msra.mxu0 0
        %1479 = vmatpush.bf16.msra.mxu0 %v1186
        %1480 = vmatpush.bf16.msra.mxu0 %v1147
        %1481 = vmatmul.bf16.gmra.mxu0 %v582
        %v1482 = vpop.f32.mrf.mxu0
        %v1483 = vadd.f32 %v925, %v1482
        %v1484 = vpop.f32.mrf.mxu0
        %v1485 = vadd.f32 %v927, %v1484
        %1486 = vmatmul.bf16.gmra.mxu0 %v585
        %v1487 = vpop.f32.mrf.mxu0
        %v1488 = vadd.f32 %v930, %v1487
        %v1489 = vpop.f32.mrf.mxu0
        %v1490 = vadd.f32 %v932, %v1489
        %1491 = vmatmul.bf16.gmra.mxu0 %v588
        %v1492 = vpop.f32.mrf.mxu0
        %v1493 = vadd.f32 %v935, %v1492
        %v1494 = vpop.f32.mrf.mxu0
        %v1495 = vadd.f32 %v937, %v1494
        %1496 = vmatmul.bf16.gmra.mxu0 %v591
        %v1497 = vpop.f32.mrf.mxu0
        %v1498 = vadd.f32 %v940, %v1497
        %v1499 = vpop.f32.mrf.mxu0
        %v1500 = vadd.f32 %v942, %v1499
        %1501 = vmatmul.bf16.gmra.mxu0 %v594
        %v1502 = vpop.f32.mrf.mxu0
        %v1503 = vadd.f32 %v945, %v1502
        %v1504 = vpop.f32.mrf.mxu0
        %v1505 = vadd.f32 %v947, %v1504
        %1506 = vmatmul.bf16.gmra.mxu0 %v597
        %v1507 = vpop.f32.mrf.mxu0
        %v1508 = vadd.f32 %v950, %v1507
        %v1509 = vpop.f32.mrf.mxu0
        %v1510 = vadd.f32 %v952, %v1509
        %1511 = vdwg.mxu0
        %1512 = vmatpush.bf16.msra.mxu0 0
        %1513 = vmatpush.bf16.msra.mxu0 0
        %1514 = vmatpush.bf16.msra.mxu0 0
        %1515 = vmatpush.bf16.msra.mxu0 0
        %1516 = vmatpush.bf16.msra.mxu0 0
        %1517 = vmatpush.bf16.msra.mxu0 0
        %1518 = vmatpush.bf16.msra.mxu0 %v1189
        %1519 = vmatpush.bf16.msra.mxu0 %v1148
        %1520 = vmatmul.bf16.gmra.mxu0 %v582
        %v1521 = vpop.f32.mrf.mxu0
        %v1522 = vadd.f32 %v964, %v1521
        %v1523 = vpop.f32.mrf.mxu0
        %v1524 = vadd.f32 %v966, %v1523
        %1525 = vmatmul.bf16.gmra.mxu0 %v585
        %v1526 = vpop.f32.mrf.mxu0
        %v1527 = vadd.f32 %v969, %v1526
        %v1528 = vpop.f32.mrf.mxu0
        %v1529 = vadd.f32 %v971, %v1528
        %1530 = vmatmul.bf16.gmra.mxu0 %v588
        %v1531 = vpop.f32.mrf.mxu0
        %v1532 = vadd.f32 %v974, %v1531
        %v1533 = vpop.f32.mrf.mxu0
        %v1534 = vadd.f32 %v976, %v1533
        %1535 = vmatmul.bf16.gmra.mxu0 %v591
        %v1536 = vpop.f32.mrf.mxu0
        %v1537 = vadd.f32 %v979, %v1536
        %v1538 = vpop.f32.mrf.mxu0
        %v1539 = vadd.f32 %v981, %v1538
        %1540 = vmatmul.bf16.gmra.mxu0 %v594
        %v1541 = vpop.f32.mrf.mxu0
        %v1542 = vadd.f32 %v984, %v1541
        %v1543 = vpop.f32.mrf.mxu0
        %v1544 = vadd.f32 %v986, %v1543
        %1545 = vmatmul.bf16.gmra.mxu0 %v597
        %v1546 = vpop.f32.mrf.mxu0
        %v1547 = vadd.f32 %v989, %v1546
        %v1548 = vpop.f32.mrf.mxu0
        %v1549 = vadd.f32 %v991, %v1548
        %1550 = vdwg.mxu0
        %1551 = vmatpush.bf16.msra.mxu0 0
        %1552 = vmatpush.bf16.msra.mxu0 0
        %1553 = vmatpush.bf16.msra.mxu0 0
        %1554 = vmatpush.bf16.msra.mxu0 0
        %1555 = vmatpush.bf16.msra.mxu0 0
        %1556 = vmatpush.bf16.msra.mxu0 0
        %1557 = vmatpush.bf16.msra.mxu0 %v1192
        %1558 = vmatpush.bf16.msra.mxu0 %v1149
        %1559 = vmatmul.bf16.gmra.mxu0 %v582
        %v1560 = vpop.f32.mrf.mxu0
        %v1561 = vadd.f32 %v1003, %v1560
        %v1562 = vpop.f32.mrf.mxu0
        %v1563 = vadd.f32 %v1005, %v1562
        %1564 = vmatmul.bf16.gmra.mxu0 %v585
        %v1565 = vpop.f32.mrf.mxu0
        %v1566 = vadd.f32 %v1008, %v1565
        %v1567 = vpop.f32.mrf.mxu0
        %v1568 = vadd.f32 %v1010, %v1567
        %1569 = vmatmul.bf16.gmra.mxu0 %v588
        %v1570 = vpop.f32.mrf.mxu0
        %v1571 = vadd.f32 %v1013, %v1570
        %v1572 = vpop.f32.mrf.mxu0
        %v1573 = vadd.f32 %v1015, %v1572
        %1574 = vmatmul.bf16.gmra.mxu0 %v591
        %v1575 = vpop.f32.mrf.mxu0
        %v1576 = vadd.f32 %v1018, %v1575
        %v1577 = vpop.f32.mrf.mxu0
        %v1578 = vadd.f32 %v1020, %v1577
        %1579 = vmatmul.bf16.gmra.mxu0 %v594
        %v1580 = vpop.f32.mrf.mxu0
        %v1581 = vadd.f32 %v1023, %v1580
        %v1582 = vpop.f32.mrf.mxu0
        %v1583 = vadd.f32 %v1025, %v1582
        %1584 = vmatmul.bf16.gmra.mxu0 %v597
        %v1585 = vpop.f32.mrf.mxu0
        %v1586 = vadd.f32 %v1028, %v1585
        %v1587 = vpop.f32.mrf.mxu0
        %v1588 = vadd.f32 %v1030, %v1587
        %1589 = vdwg.mxu0
        %1590 = vmatpush.bf16.msra.mxu0 0
        %1591 = vmatpush.bf16.msra.mxu0 0
        %1592 = vmatpush.bf16.msra.mxu0 0
        %1593 = vmatpush.bf16.msra.mxu0 0
        %1594 = vmatpush.bf16.msra.mxu0 0
        %1595 = vmatpush.bf16.msra.mxu0 0
        %1596 = vmatpush.bf16.msra.mxu0 %v1195
        %1597 = vmatpush.bf16.msra.mxu0 %v1150
        %1598 = vmatmul.bf16.gmra.mxu0 %v582
        %v1599 = vpop.f32.mrf.mxu0
        %v1600 = vadd.f32 %v1042, %v1599
        %v1601 = vpop.f32.mrf.mxu0
        %v1602 = vadd.f32 %v1044, %v1601
        %1603 = vmatmul.bf16.gmra.mxu0 %v585
        %v1604 = vpop.f32.mrf.mxu0
        %v1605 = vadd.f32 %v1047, %v1604
        %v1606 = vpop.f32.mrf.mxu0
        %v1607 = vadd.f32 %v1049, %v1606
        %1608 = vmatmul.bf16.gmra.mxu0 %v588
        %v1609 = vpop.f32.mrf.mxu0
        %v1610 = vadd.f32 %v1052, %v1609
        %v1611 = vpop.f32.mrf.mxu0
        %v1612 = vadd.f32 %v1054, %v1611
        %1613 = vmatmul.bf16.gmra.mxu0 %v591
        %v1614 = vpop.f32.mrf.mxu0
        %v1615 = vadd.f32 %v1057, %v1614
        %v1616 = vpop.f32.mrf.mxu0
        %v1617 = vadd.f32 %v1059, %v1616
        %1618 = vmatmul.bf16.gmra.mxu0 %v594
        %v1619 = vpop.f32.mrf.mxu0
        %v1620 = vadd.f32 %v1062, %v1619
        %v1621 = vpop.f32.mrf.mxu0
        %v1622 = vadd.f32 %v1064, %v1621
        %1623 = vmatmul.bf16.gmra.mxu0 %v597
        %v1624 = vpop.f32.mrf.mxu0
        %v1625 = vadd.f32 %v1067, %v1624
        %v1626 = vpop.f32.mrf.mxu0
        %v1627 = vadd.f32 %v1069, %v1626
        %1628 = vdwg.mxu0
        %1629 = vmatpush.bf16.msra.mxu0 0
        %1630 = vmatpush.bf16.msra.mxu0 0
        %1631 = vmatpush.bf16.msra.mxu0 0
        %1632 = vmatpush.bf16.msra.mxu0 0
        %1633 = vmatpush.bf16.msra.mxu0 0
        %1634 = vmatpush.bf16.msra.mxu0 0
        %1635 = vmatpush.bf16.msra.mxu0 %v1198
        %1636 = vmatpush.bf16.msra.mxu0 %v1151
        %1637 = vmatmul.bf16.gmra.mxu0 %v582
        %v1638 = vpop.f32.mrf.mxu0
        %v1639 = vadd.f32 %v1081, %v1638
        %v1640 = vpop.f32.mrf.mxu0
        %v1641 = vadd.f32 %v1083, %v1640
        %1642 = vmatmul.bf16.gmra.mxu0 %v585
        %v1643 = vpop.f32.mrf.mxu0
        %v1644 = vadd.f32 %v1086, %v1643
        %v1645 = vpop.f32.mrf.mxu0
        %v1646 = vadd.f32 %v1088, %v1645
        %1647 = vmatmul.bf16.gmra.mxu0 %v588
        %v1648 = vpop.f32.mrf.mxu0
        %v1649 = vadd.f32 %v1091, %v1648
        %v1650 = vpop.f32.mrf.mxu0
        %v1651 = vadd.f32 %v1093, %v1650
        %1652 = vmatmul.bf16.gmra.mxu0 %v591
        %v1653 = vpop.f32.mrf.mxu0
        %v1654 = vadd.f32 %v1096, %v1653
        %v1655 = vpop.f32.mrf.mxu0
        %v1656 = vadd.f32 %v1098, %v1655
        %1657 = vmatmul.bf16.gmra.mxu0 %v594
        %v1658 = vpop.f32.mrf.mxu0
        %v1659 = vadd.f32 %v1101, %v1658
        %v1660 = vpop.f32.mrf.mxu0
        %v1661 = vadd.f32 %v1103, %v1660
        %1662 = vmatmul.bf16.gmra.mxu0 %v597
        %v1663 = vpop.f32.mrf.mxu0
        %v1664 = vadd.f32 %v1106, %v1663
        %v1665 = vpop.f32.mrf.mxu0
        %v1666 = vadd.f32 %v1108, %v1665
        %1667 = vdwg.mxu0
        %s1668 = scalar_lea.vmem [#allocation2], 192
        %v1669 = vld [vmem:[%s1668] sm:$0xff]
        %v1670 = vld [vmem:[%s1668 + $0x8] sm:$0xff]
        %v1671 = vld [vmem:[%s1668 + $0x10] sm:$0xff]
        %v1672 = vld [vmem:[%s1668 + $0x18] sm:$0xff]
        %v1673 = vld [vmem:[%s1668 + $0x20] sm:$0xff]
        %v1674 = vld [vmem:[%s1668 + $0x28] sm:$0xff]
        %v1675 = vld [vmem:[%s1668 + $0x30] sm:$0xff]
        %v1676 = vld [vmem:[%s1668 + $0x38] sm:$0xff]
        %v1677 = vld [vmem:[%s1668 + $0x40] sm:$0xff]
        %v1678 = vld [vmem:[%s1668 + $0x48] sm:$0x33]
        %v1679 = vld [vmem:[%s1668 + $0x50] sm:$0x33]
        %v1680 = vld [vmem:[%s1668 + $0x58] sm:$0x33]
        %v1693 = vunpack.c.l.b16 %v1669
        %v1694 = vunpack.c.h.b16 %v1669
        %v1695 = vunpack.c.l.b16 %v1670
        %v1696 = vunpack.c.h.b16 %v1670
        %v1697 = vunpack.c.l.b16 %v1671
        %v1698 = vunpack.c.h.b16 %v1671
        %v1699 = vunpack.c.l.b16 %v1672
        %v1700 = vunpack.c.h.b16 %v1672
        %v1701 = vunpack.c.l.b16 %v1673
        %v1702 = vunpack.c.h.b16 %v1673
        %v1703 = vunpack.c.l.b16 %v1674
        %v1704 = vunpack.c.h.b16 %v1674
        %v1705 = vunpack.c.l.b16 %v1675
        %v1706 = vunpack.c.h.b16 %v1675
        %v1707 = vunpack.c.l.b16 %v1676
        %v1708 = vunpack.c.h.b16 %v1676
        %v1709 = vunpack.c.l.b16 %v1677
        %v1710 = vunpack.c.h.b16 %v1677
        %v1711 = vunpack.c.l.b16 %v1678
        %v1712 = vunpack.c.h.b16 %v1678
        %v1713 = vunpack.c.l.b16 %v1679
        %v1714 = vunpack.c.h.b16 %v1679
        %v1715 = vunpack.c.l.b16 %v1680
        %v1716 = vunpack.c.h.b16 %v1680
        %v1717 = vpack.c.b16 %v1699, %v1693
        %v1718 = vpack.c.b16 %v1700, %v1694
        %v1719 = vpack.c.b16 %v1701, %v1695
        %v1720 = vpack.c.b16 %v1702, %v1696
        %v1721 = vpack.c.b16 %v1703, %v1697
        %v1722 = vpack.c.b16 %v1704, %v1698
        %v1723 = vpack.c.b16 %v1711, %v1705
        %v1724 = vpack.c.b16 %v1712, %v1706
        %v1725 = vpack.c.b16 %v1713, %v1707
        %v1726 = vpack.c.b16 %v1714, %v1708
        %v1727 = vpack.c.b16 %v1715, %v1709
        %v1728 = vpack.c.b16 %v1716, %v1710
        %v1736 = vsel %vm599, %v1723, 0
        %v1739 = vsel %vm599, %v1724, 0
        %v1742 = vsel %vm599, %v1725, 0
        %v1745 = vsel %vm599, %v1726, 0
        %v1748 = vsel %vm599, %v1727, 0
        %v1751 = vsel %vm599, %v1728, 0
        %1753 = vmatpush.bf16.msra.mxu0 0
        %1754 = vmatpush.bf16.msra.mxu0 0
        %1755 = vmatpush.bf16.msra.mxu0 0
        %1756 = vmatpush.bf16.msra.mxu0 0
        %1757 = vmatpush.bf16.msra.mxu0 0
        %1758 = vmatpush.bf16.msra.mxu0 0
        %1759 = vmatpush.bf16.msra.mxu0 %v1736
        %1760 = vmatpush.bf16.msra.mxu0 %v1717
        %1761 = vmatmul.bf16.gmra.mxu0 %v859
        %v1762 = vpop.f32.mrf.mxu0
        %v1763 = vadd.f32 0.0, %v1762
        %v1764 = vpop.f32.mrf.mxu0
        %v1765 = vadd.f32 0.0, %v1764
        %1766 = vmatmul.bf16.gmra.mxu0 %v862
        %v1767 = vpop.f32.mrf.mxu0
        %v1768 = vadd.f32 0.0, %v1767
        %v1769 = vpop.f32.mrf.mxu0
        %v1770 = vadd.f32 0.0, %v1769
        %1771 = vmatmul.bf16.gmra.mxu0 %v865
        %v1772 = vpop.f32.mrf.mxu0
        %v1773 = vadd.f32 0.0, %v1772
        %v1774 = vpop.f32.mrf.mxu0
        %v1775 = vadd.f32 0.0, %v1774
        %1776 = vmatmul.bf16.gmra.mxu0 %v868
        %v1777 = vpop.f32.mrf.mxu0
        %v1778 = vadd.f32 0.0, %v1777
        %v1779 = vpop.f32.mrf.mxu0
        %v1780 = vadd.f32 0.0, %v1779
        %1781 = vmatmul.bf16.gmra.mxu0 %v871
        %v1782 = vpop.f32.mrf.mxu0
        %v1783 = vadd.f32 0.0, %v1782
        %v1784 = vpop.f32.mrf.mxu0
        %v1785 = vadd.f32 0.0, %v1784
        %1786 = vmatmul.bf16.gmra.mxu0 %v874
        %v1787 = vpop.f32.mrf.mxu0
        %v1788 = vadd.f32 0.0, %v1787
        %v1789 = vpop.f32.mrf.mxu0
        %v1790 = vadd.f32 0.0, %v1789
        %1791 = vdwg.mxu0
        %1792 = vmatpush.bf16.msra.mxu0 0
        %1793 = vmatpush.bf16.msra.mxu0 0
        %1794 = vmatpush.bf16.msra.mxu0 0
        %1795 = vmatpush.bf16.msra.mxu0 0
        %1796 = vmatpush.bf16.msra.mxu0 0
        %1797 = vmatpush.bf16.msra.mxu0 0
        %1798 = vmatpush.bf16.msra.mxu0 %v1739
        %1799 = vmatpush.bf16.msra.mxu0 %v1718
        %1800 = vmatmul.bf16.gmra.mxu0 %v859
        %v1801 = vpop.f32.mrf.mxu0
        %v1802 = vadd.f32 0.0, %v1801
        %v1803 = vpop.f32.mrf.mxu0
        %v1804 = vadd.f32 0.0, %v1803
        %1805 = vmatmul.bf16.gmra.mxu0 %v862
        %v1806 = vpop.f32.mrf.mxu0
        %v1807 = vadd.f32 0.0, %v1806
        %v1808 = vpop.f32.mrf.mxu0
        %v1809 = vadd.f32 0.0, %v1808
        %1810 = vmatmul.bf16.gmra.mxu0 %v865
        %v1811 = vpop.f32.mrf.mxu0
        %v1812 = vadd.f32 0.0, %v1811
        %v1813 = vpop.f32.mrf.mxu0
        %v1814 = vadd.f32 0.0, %v1813
        %1815 = vmatmul.bf16.gmra.mxu0 %v868
        %v1816 = vpop.f32.mrf.mxu0
        %v1817 = vadd.f32 0.0, %v1816
        %v1818 = vpop.f32.mrf.mxu0
        %v1819 = vadd.f32 0.0, %v1818
        %1820 = vmatmul.bf16.gmra.mxu0 %v871
        %v1821 = vpop.f32.mrf.mxu0
        %v1822 = vadd.f32 0.0, %v1821
        %v1823 = vpop.f32.mrf.mxu0
        %v1824 = vadd.f32 0.0, %v1823
        %1825 = vmatmul.bf16.gmra.mxu0 %v874
        %v1826 = vpop.f32.mrf.mxu0
        %v1827 = vadd.f32 0.0, %v1826
        %v1828 = vpop.f32.mrf.mxu0
        %v1829 = vadd.f32 0.0, %v1828
        %1830 = vdwg.mxu0
        %1831 = vmatpush.bf16.msra.mxu0 0
        %1832 = vmatpush.bf16.msra.mxu0 0
        %1833 = vmatpush.bf16.msra.mxu0 0
        %1834 = vmatpush.bf16.msra.mxu0 0
        %1835 = vmatpush.bf16.msra.mxu0 0
        %1836 = vmatpush.bf16.msra.mxu0 0
        %1837 = vmatpush.bf16.msra.mxu0 %v1742
        %1838 = vmatpush.bf16.msra.mxu0 %v1719
        %1839 = vmatmul.bf16.gmra.mxu0 %v859
        %v1840 = vpop.f32.mrf.mxu0
        %v1841 = vadd.f32 0.0, %v1840
        %v1842 = vpop.f32.mrf.mxu0
        %v1843 = vadd.f32 0.0, %v1842
        %1844 = vmatmul.bf16.gmra.mxu0 %v862
        %v1845 = vpop.f32.mrf.mxu0
        %v1846 = vadd.f32 0.0, %v1845
        %v1847 = vpop.f32.mrf.mxu0
        %v1848 = vadd.f32 0.0, %v1847
        %1849 = vmatmul.bf16.gmra.mxu0 %v865
        %v1850 = vpop.f32.mrf.mxu0
        %v1851 = vadd.f32 0.0, %v1850
        %v1852 = vpop.f32.mrf.mxu0
        %v1853 = vadd.f32 0.0, %v1852
        %1854 = vmatmul.bf16.gmra.mxu0 %v868
        %v1855 = vpop.f32.mrf.mxu0
        %v1856 = vadd.f32 0.0, %v1855
        %v1857 = vpop.f32.mrf.mxu0
        %v1858 = vadd.f32 0.0, %v1857
        %1859 = vmatmul.bf16.gmra.mxu0 %v871
        %v1860 = vpop.f32.mrf.mxu0
        %v1861 = vadd.f32 0.0, %v1860
        %v1862 = vpop.f32.mrf.mxu0
        %v1863 = vadd.f32 0.0, %v1862
        %1864 = vmatmul.bf16.gmra.mxu0 %v874
        %v1865 = vpop.f32.mrf.mxu0
        %v1866 = vadd.f32 0.0, %v1865
        %v1867 = vpop.f32.mrf.mxu0
        %v1868 = vadd.f32 0.0, %v1867
        %1869 = vdwg.mxu0
        %1870 = vmatpush.bf16.msra.mxu0 0
        %1871 = vmatpush.bf16.msra.mxu0 0
        %1872 = vmatpush.bf16.msra.mxu0 0
        %1873 = vmatpush.bf16.msra.mxu0 0
        %1874 = vmatpush.bf16.msra.mxu0 0
        %1875 = vmatpush.bf16.msra.mxu0 0
        %1876 = vmatpush.bf16.msra.mxu0 %v1745
        %1877 = vmatpush.bf16.msra.mxu0 %v1720
        %1878 = vmatmul.bf16.gmra.mxu0 %v859
        %v1879 = vpop.f32.mrf.mxu0
        %v1880 = vadd.f32 0.0, %v1879
        %v1881 = vpop.f32.mrf.mxu0
        %v1882 = vadd.f32 0.0, %v1881
        %1883 = vmatmul.bf16.gmra.mxu0 %v862
        %v1884 = vpop.f32.mrf.mxu0
        %v1885 = vadd.f32 0.0, %v1884
        %v1886 = vpop.f32.mrf.mxu0
        %v1887 = vadd.f32 0.0, %v1886
        %1888 = vmatmul.bf16.gmra.mxu0 %v865
        %v1889 = vpop.f32.mrf.mxu0
        %v1890 = vadd.f32 0.0, %v1889
        %v1891 = vpop.f32.mrf.mxu0
        %v1892 = vadd.f32 0.0, %v1891
        %1893 = vmatmul.bf16.gmra.mxu0 %v868
        %v1894 = vpop.f32.mrf.mxu0
        %v1895 = vadd.f32 0.0, %v1894
        %v1896 = vpop.f32.mrf.mxu0
        %v1897 = vadd.f32 0.0, %v1896
        %1898 = vmatmul.bf16.gmra.mxu0 %v871
        %v1899 = vpop.f32.mrf.mxu0
        %v1900 = vadd.f32 0.0, %v1899
        %v1901 = vpop.f32.mrf.mxu0
        %v1902 = vadd.f32 0.0, %v1901
        %1903 = vmatmul.bf16.gmra.mxu0 %v874
        %v1904 = vpop.f32.mrf.mxu0
        %v1905 = vadd.f32 0.0, %v1904
        %v1906 = vpop.f32.mrf.mxu0
        %v1907 = vadd.f32 0.0, %v1906
        %1908 = vdwg.mxu0
        %1909 = vmatpush.bf16.msra.mxu0 0
        %1910 = vmatpush.bf16.msra.mxu0 0
        %1911 = vmatpush.bf16.msra.mxu0 0
        %1912 = vmatpush.bf16.msra.mxu0 0
        %1913 = vmatpush.bf16.msra.mxu0 0
        %1914 = vmatpush.bf16.msra.mxu0 0
        %1915 = vmatpush.bf16.msra.mxu0 %v1748
        %1916 = vmatpush.bf16.msra.mxu0 %v1721
        %1917 = vmatmul.bf16.gmra.mxu0 %v859
        %v1918 = vpop.f32.mrf.mxu0
        %v1919 = vadd.f32 0.0, %v1918
        %v1920 = vpop.f32.mrf.mxu0
        %v1921 = vadd.f32 0.0, %v1920
        %1922 = vmatmul.bf16.gmra.mxu0 %v862
        %v1923 = vpop.f32.mrf.mxu0
        %v1924 = vadd.f32 0.0, %v1923
        %v1925 = vpop.f32.mrf.mxu0
        %v1926 = vadd.f32 0.0, %v1925
        %1927 = vmatmul.bf16.gmra.mxu0 %v865
        %v1928 = vpop.f32.mrf.mxu0
        %v1929 = vadd.f32 0.0, %v1928
        %v1930 = vpop.f32.mrf.mxu0
        %v1931 = vadd.f32 0.0, %v1930
        %1932 = vmatmul.bf16.gmra.mxu0 %v868
        %v1933 = vpop.f32.mrf.mxu0
        %v1934 = vadd.f32 0.0, %v1933
        %v1935 = vpop.f32.mrf.mxu0
        %v1936 = vadd.f32 0.0, %v1935
        %1937 = vmatmul.bf16.gmra.mxu0 %v871
        %v1938 = vpop.f32.mrf.mxu0
        %v1939 = vadd.f32 0.0, %v1938
        %v1940 = vpop.f32.mrf.mxu0
        %v1941 = vadd.f32 0.0, %v1940
        %1942 = vmatmul.bf16.gmra.mxu0 %v874
        %v1943 = vpop.f32.mrf.mxu0
        %v1944 = vadd.f32 0.0, %v1943
        %v1945 = vpop.f32.mrf.mxu0
        %v1946 = vadd.f32 0.0, %v1945
        %1947 = vdwg.mxu0
        %1948 = vmatpush.bf16.msra.mxu0 0
        %1949 = vmatpush.bf16.msra.mxu0 0
        %1950 = vmatpush.bf16.msra.mxu0 0
        %1951 = vmatpush.bf16.msra.mxu0 0
        %1952 = vmatpush.bf16.msra.mxu0 0
        %1953 = vmatpush.bf16.msra.mxu0 0
        %1954 = vmatpush.bf16.msra.mxu0 %v1751
        %1955 = vmatpush.bf16.msra.mxu0 %v1722
        %1956 = vmatmul.bf16.gmra.mxu0 %v859
        %v1957 = vpop.f32.mrf.mxu0
        %v1958 = vadd.f32 0.0, %v1957
        %v1959 = vpop.f32.mrf.mxu0
        %v1960 = vadd.f32 0.0, %v1959
        %1961 = vmatmul.bf16.gmra.mxu0 %v862
        %v1962 = vpop.f32.mrf.mxu0
        %v1963 = vadd.f32 0.0, %v1962
        %v1964 = vpop.f32.mrf.mxu0
        %v1965 = vadd.f32 0.0, %v1964
        %1966 = vmatmul.bf16.gmra.mxu0 %v865
        %v1967 = vpop.f32.mrf.mxu0
        %v1968 = vadd.f32 0.0, %v1967
        %v1969 = vpop.f32.mrf.mxu0
        %v1970 = vadd.f32 0.0, %v1969
        %1971 = vmatmul.bf16.gmra.mxu0 %v868
        %v1972 = vpop.f32.mrf.mxu0
        %v1973 = vadd.f32 0.0, %v1972
        %v1974 = vpop.f32.mrf.mxu0
        %v1975 = vadd.f32 0.0, %v1974
        %1976 = vmatmul.bf16.gmra.mxu0 %v871
        %v1977 = vpop.f32.mrf.mxu0
        %v1978 = vadd.f32 0.0, %v1977
        %v1979 = vpop.f32.mrf.mxu0
        %v1980 = vadd.f32 0.0, %v1979
        %1981 = vmatmul.bf16.gmra.mxu0 %v874
        %v1982 = vpop.f32.mrf.mxu0
        %v1983 = vadd.f32 0.0, %v1982
        %v1984 = vpop.f32.mrf.mxu0
        %v1985 = vadd.f32 0.0, %v1984
        %1986 = vdwg.mxu0
        %v1987 = vpack.c.bf16 %v477, %v476
        %v1988 = vpack.c.bf16 %v479, %v478
        %v1989 = vpack.c.bf16 %v481, %v480
        %v1990 = vpack.c.bf16 %v483, %v482
        %v1991 = vpack.c.bf16 %v485, %v484
        %v1992 = vpack.c.bf16 %v487, %v486
        %v1994 = vsel %vm580, %v1987, 0
        %v1997 = vsel %vm580, %v1988, 0
        %v2000 = vsel %vm580, %v1989, 0
        %v2003 = vsel %vm580, %v1990, 0
        %v2006 = vsel %vm580, %v1991, 0
        %v2009 = vsel %vm580, %v1992, 0
        %2011 = vmatpush.bf16.msra.mxu0 0
        %2012 = vmatpush.bf16.msra.mxu0 0
        %2013 = vmatpush.bf16.msra.mxu0 0
        %2014 = vmatpush.bf16.msra.mxu0 0
        %2015 = vmatpush.bf16.msra.mxu0 0
        %2016 = vmatpush.bf16.msra.mxu0 0
        %2017 = vmatpush.bf16.msra.mxu0 %v1736
        %2018 = vmatpush.bf16.msra.mxu0 %v1717
        %2019 = vmatmul.bf16.gmra.mxu0 %v1994
        %v2020 = vpop.f32.mrf.mxu0
        %v2021 = vadd.f32 0.0, %v2020
        %v2022 = vpop.f32.mrf.mxu0
        %v2023 = vadd.f32 0.0, %v2022
        %2024 = vmatmul.bf16.gmra.mxu0 %v1997
        %v2025 = vpop.f32.mrf.mxu0
        %v2026 = vadd.f32 0.0, %v2025
        %v2027 = vpop.f32.mrf.mxu0
        %v2028 = vadd.f32 0.0, %v2027
        %2029 = vmatmul.bf16.gmra.mxu0 %v2000
        %v2030 = vpop.f32.mrf.mxu0
        %v2031 = vadd.f32 0.0, %v2030
        %v2032 = vpop.f32.mrf.mxu0
        %v2033 = vadd.f32 0.0, %v2032
        %2034 = vmatmul.bf16.gmra.mxu0 %v2003
        %v2035 = vpop.f32.mrf.mxu0
        %v2036 = vadd.f32 0.0, %v2035
        %v2037 = vpop.f32.mrf.mxu0
        %v2038 = vadd.f32 0.0, %v2037
        %2039 = vmatmul.bf16.gmra.mxu0 %v2006
        %v2040 = vpop.f32.mrf.mxu0
        %v2041 = vadd.f32 0.0, %v2040
        %v2042 = vpop.f32.mrf.mxu0
        %v2043 = vadd.f32 0.0, %v2042
        %2044 = vmatmul.bf16.gmra.mxu0 %v2009
        %v2045 = vpop.f32.mrf.mxu0
        %v2046 = vadd.f32 0.0, %v2045
        %v2047 = vpop.f32.mrf.mxu0
        %v2048 = vadd.f32 0.0, %v2047
        %2049 = vdwg.mxu0
        %2050 = vmatpush.bf16.msra.mxu0 0
        %2051 = vmatpush.bf16.msra.mxu0 0
        %2052 = vmatpush.bf16.msra.mxu0 0
        %2053 = vmatpush.bf16.msra.mxu0 0
        %2054 = vmatpush.bf16.msra.mxu0 0
        %2055 = vmatpush.bf16.msra.mxu0 0
        %2056 = vmatpush.bf16.msra.mxu0 %v1739
        %2057 = vmatpush.bf16.msra.mxu0 %v1718
        %2058 = vmatmul.bf16.gmra.mxu0 %v1994
        %v2059 = vpop.f32.mrf.mxu0
        %v2060 = vadd.f32 0.0, %v2059
        %v2061 = vpop.f32.mrf.mxu0
        %v2062 = vadd.f32 0.0, %v2061
        %2063 = vmatmul.bf16.gmra.mxu0 %v1997
        %v2064 = vpop.f32.mrf.mxu0
        %v2065 = vadd.f32 0.0, %v2064
        %v2066 = vpop.f32.mrf.mxu0
        %v2067 = vadd.f32 0.0, %v2066
        %2068 = vmatmul.bf16.gmra.mxu0 %v2000
        %v2069 = vpop.f32.mrf.mxu0
        %v2070 = vadd.f32 0.0, %v2069
        %v2071 = vpop.f32.mrf.mxu0
        %v2072 = vadd.f32 0.0, %v2071
        %2073 = vmatmul.bf16.gmra.mxu0 %v2003
        %v2074 = vpop.f32.mrf.mxu0
        %v2075 = vadd.f32 0.0, %v2074
        %v2076 = vpop.f32.mrf.mxu0
        %v2077 = vadd.f32 0.0, %v2076
        %2078 = vmatmul.bf16.gmra.mxu0 %v2006
        %v2079 = vpop.f32.mrf.mxu0
        %v2080 = vadd.f32 0.0, %v2079
        %v2081 = vpop.f32.mrf.mxu0
        %v2082 = vadd.f32 0.0, %v2081
        %2083 = vmatmul.bf16.gmra.mxu0 %v2009
        %v2084 = vpop.f32.mrf.mxu0
        %v2085 = vadd.f32 0.0, %v2084
        %v2086 = vpop.f32.mrf.mxu0
        %v2087 = vadd.f32 0.0, %v2086
        %2088 = vdwg.mxu0
        %2089 = vmatpush.bf16.msra.mxu0 0
        %2090 = vmatpush.bf16.msra.mxu0 0
        %2091 = vmatpush.bf16.msra.mxu0 0
        %2092 = vmatpush.bf16.msra.mxu0 0
        %2093 = vmatpush.bf16.msra.mxu0 0
        %2094 = vmatpush.bf16.msra.mxu0 0
        %2095 = vmatpush.bf16.msra.mxu0 %v1742
        %2096 = vmatpush.bf16.msra.mxu0 %v1719
        %2097 = vmatmul.bf16.gmra.mxu0 %v1994
        %v2098 = vpop.f32.mrf.mxu0
        %v2099 = vadd.f32 0.0, %v2098
        %v2100 = vpop.f32.mrf.mxu0
        %v2101 = vadd.f32 0.0, %v2100
        %2102 = vmatmul.bf16.gmra.mxu0 %v1997
        %v2103 = vpop.f32.mrf.mxu0
        %v2104 = vadd.f32 0.0, %v2103
        %v2105 = vpop.f32.mrf.mxu0
        %v2106 = vadd.f32 0.0, %v2105
        %2107 = vmatmul.bf16.gmra.mxu0 %v2000
        %v2108 = vpop.f32.mrf.mxu0
        %v2109 = vadd.f32 0.0, %v2108
        %v2110 = vpop.f32.mrf.mxu0
        %v2111 = vadd.f32 0.0, %v2110
        %2112 = vmatmul.bf16.gmra.mxu0 %v2003
        %v2113 = vpop.f32.mrf.mxu0
        %v2114 = vadd.f32 0.0, %v2113
        %v2115 = vpop.f32.mrf.mxu0
        %v2116 = vadd.f32 0.0, %v2115
        %2117 = vmatmul.bf16.gmra.mxu0 %v2006
        %v2118 = vpop.f32.mrf.mxu0
        %v2119 = vadd.f32 0.0, %v2118
        %v2120 = vpop.f32.mrf.mxu0
        %v2121 = vadd.f32 0.0, %v2120
        %2122 = vmatmul.bf16.gmra.mxu0 %v2009
        %v2123 = vpop.f32.mrf.mxu0
        %v2124 = vadd.f32 0.0, %v2123
        %v2125 = vpop.f32.mrf.mxu0
        %v2126 = vadd.f32 0.0, %v2125
        %2127 = vdwg.mxu0
        %2128 = vmatpush.bf16.msra.mxu0 0
        %2129 = vmatpush.bf16.msra.mxu0 0
        %2130 = vmatpush.bf16.msra.mxu0 0
        %2131 = vmatpush.bf16.msra.mxu0 0
        %2132 = vmatpush.bf16.msra.mxu0 0
        %2133 = vmatpush.bf16.msra.mxu0 0
        %2134 = vmatpush.bf16.msra.mxu0 %v1745
        %2135 = vmatpush.bf16.msra.mxu0 %v1720
        %2136 = vmatmul.bf16.gmra.mxu0 %v1994
        %v2137 = vpop.f32.mrf.mxu0
        %v2138 = vadd.f32 0.0, %v2137
        %v2139 = vpop.f32.mrf.mxu0
        %v2140 = vadd.f32 0.0, %v2139
        %2141 = vmatmul.bf16.gmra.mxu0 %v1997
        %v2142 = vpop.f32.mrf.mxu0
        %v2143 = vadd.f32 0.0, %v2142
        %v2144 = vpop.f32.mrf.mxu0
        %v2145 = vadd.f32 0.0, %v2144
        %2146 = vmatmul.bf16.gmra.mxu0 %v2000
        %v2147 = vpop.f32.mrf.mxu0
        %v2148 = vadd.f32 0.0, %v2147
        %v2149 = vpop.f32.mrf.mxu0
        %v2150 = vadd.f32 0.0, %v2149
        %2151 = vmatmul.bf16.gmra.mxu0 %v2003
        %v2152 = vpop.f32.mrf.mxu0
        %v2153 = vadd.f32 0.0, %v2152
        %v2154 = vpop.f32.mrf.mxu0
        %v2155 = vadd.f32 0.0, %v2154
        %2156 = vmatmul.bf16.gmra.mxu0 %v2006
        %v2157 = vpop.f32.mrf.mxu0
        %v2158 = vadd.f32 0.0, %v2157
        %v2159 = vpop.f32.mrf.mxu0
        %v2160 = vadd.f32 0.0, %v2159
        %2161 = vmatmul.bf16.gmra.mxu0 %v2009
        %v2162 = vpop.f32.mrf.mxu0
        %v2163 = vadd.f32 0.0, %v2162
        %v2164 = vpop.f32.mrf.mxu0
        %v2165 = vadd.f32 0.0, %v2164
        %2166 = vdwg.mxu0
        %2167 = vmatpush.bf16.msra.mxu0 0
        %2168 = vmatpush.bf16.msra.mxu0 0
        %2169 = vmatpush.bf16.msra.mxu0 0
        %2170 = vmatpush.bf16.msra.mxu0 0
        %2171 = vmatpush.bf16.msra.mxu0 0
        %2172 = vmatpush.bf16.msra.mxu0 0
        %2173 = vmatpush.bf16.msra.mxu0 %v1748
        %2174 = vmatpush.bf16.msra.mxu0 %v1721
        %2175 = vmatmul.bf16.gmra.mxu0 %v1994
        %v2176 = vpop.f32.mrf.mxu0
        %v2177 = vadd.f32 0.0, %v2176
        %v2178 = vpop.f32.mrf.mxu0
        %v2179 = vadd.f32 0.0, %v2178
        %2180 = vmatmul.bf16.gmra.mxu0 %v1997
        %v2181 = vpop.f32.mrf.mxu0
        %v2182 = vadd.f32 0.0, %v2181
        %v2183 = vpop.f32.mrf.mxu0
        %v2184 = vadd.f32 0.0, %v2183
        %2185 = vmatmul.bf16.gmra.mxu0 %v2000
        %v2186 = vpop.f32.mrf.mxu0
        %v2187 = vadd.f32 0.0, %v2186
        %v2188 = vpop.f32.mrf.mxu0
        %v2189 = vadd.f32 0.0, %v2188
        %2190 = vmatmul.bf16.gmra.mxu0 %v2003
        %v2191 = vpop.f32.mrf.mxu0
        %v2192 = vadd.f32 0.0, %v2191
        %v2193 = vpop.f32.mrf.mxu0
        %v2194 = vadd.f32 0.0, %v2193
        %2195 = vmatmul.bf16.gmra.mxu0 %v2006
        %v2196 = vpop.f32.mrf.mxu0
        %v2197 = vadd.f32 0.0, %v2196
        %v2198 = vpop.f32.mrf.mxu0
        %v2199 = vadd.f32 0.0, %v2198
        %2200 = vmatmul.bf16.gmra.mxu0 %v2009
        %v2201 = vpop.f32.mrf.mxu0
        %v2202 = vadd.f32 0.0, %v2201
        %v2203 = vpop.f32.mrf.mxu0
        %v2204 = vadd.f32 0.0, %v2203
        %2205 = vdwg.mxu0
        %2206 = vmatpush.bf16.msra.mxu0 0
        %2207 = vmatpush.bf16.msra.mxu0 0
        %2208 = vmatpush.bf16.msra.mxu0 0
        %2209 = vmatpush.bf16.msra.mxu0 0
        %2210 = vmatpush.bf16.msra.mxu0 0
        %2211 = vmatpush.bf16.msra.mxu0 0
        %2212 = vmatpush.bf16.msra.mxu0 %v1751
        %2213 = vmatpush.bf16.msra.mxu0 %v1722
        %2214 = vmatmul.bf16.gmra.mxu0 %v1994
        %v2215 = vpop.f32.mrf.mxu0
        %v2216 = vadd.f32 0.0, %v2215
        %v2217 = vpop.f32.mrf.mxu0
        %v2218 = vadd.f32 0.0, %v2217
        %2219 = vmatmul.bf16.gmra.mxu0 %v1997
        %v2220 = vpop.f32.mrf.mxu0
        %v2221 = vadd.f32 0.0, %v2220
        %v2222 = vpop.f32.mrf.mxu0
        %v2223 = vadd.f32 0.0, %v2222
        %2224 = vmatmul.bf16.gmra.mxu0 %v2000
        %v2225 = vpop.f32.mrf.mxu0
        %v2226 = vadd.f32 0.0, %v2225
        %v2227 = vpop.f32.mrf.mxu0
        %v2228 = vadd.f32 0.0, %v2227
        %2229 = vmatmul.bf16.gmra.mxu0 %v2003
        %v2230 = vpop.f32.mrf.mxu0
        %v2231 = vadd.f32 0.0, %v2230
        %v2232 = vpop.f32.mrf.mxu0
        %v2233 = vadd.f32 0.0, %v2232
        %2234 = vmatmul.bf16.gmra.mxu0 %v2006
        %v2235 = vpop.f32.mrf.mxu0
        %v2236 = vadd.f32 0.0, %v2235
        %v2237 = vpop.f32.mrf.mxu0
        %v2238 = vadd.f32 0.0, %v2237
        %2239 = vmatmul.bf16.gmra.mxu0 %v2009
        %v2240 = vpop.f32.mrf.mxu0
        %v2241 = vadd.f32 0.0, %v2240
        %v2242 = vpop.f32.mrf.mxu0
        %v2243 = vadd.f32 0.0, %v2242
        %2244 = vdwg.mxu0
        %v2245 = vadd.f32 %v1210, %v1763
        %v2246 = vadd.f32 %v1249, %v1802
        %v2247 = vadd.f32 %v1288, %v1841
        %v2248 = vadd.f32 %v1327, %v1880
        %v2249 = vadd.f32 %v1366, %v1919
        %v2250 = vadd.f32 %v1405, %v1958
        %v2251 = vadd.f32 %v1212, %v1765
        %v2252 = vadd.f32 %v1251, %v1804
        %v2253 = vadd.f32 %v1290, %v1843
        %v2254 = vadd.f32 %v1329, %v1882
        %v2255 = vadd.f32 %v1368, %v1921
        %v2256 = vadd.f32 %v1407, %v1960
        %v2257 = vadd.f32 %v1215, %v1768
        %v2258 = vadd.f32 %v1254, %v1807
        %v2259 = vadd.f32 %v1293, %v1846
        %v2260 = vadd.f32 %v1332, %v1885
        %v2261 = vadd.f32 %v1371, %v1924
        %v2262 = vadd.f32 %v1410, %v1963
        %v2263 = vadd.f32 %v1217, %v1770
        %v2264 = vadd.f32 %v1256, %v1809
        %v2265 = vadd.f32 %v1295, %v1848
        %v2266 = vadd.f32 %v1334, %v1887
        %v2267 = vadd.f32 %v1373, %v1926
        %v2268 = vadd.f32 %v1412, %v1965
        %v2269 = vadd.f32 %v1220, %v1773
        %v2270 = vadd.f32 %v1259, %v1812
        %v2271 = vadd.f32 %v1298, %v1851
        %v2272 = vadd.f32 %v1337, %v1890
        %v2273 = vadd.f32 %v1376, %v1929
        %v2274 = vadd.f32 %v1415, %v1968
        %v2275 = vadd.f32 %v1222, %v1775
        %v2276 = vadd.f32 %v1261, %v1814
        %v2277 = vadd.f32 %v1300, %v1853
        %v2278 = vadd.f32 %v1339, %v1892
        %v2279 = vadd.f32 %v1378, %v1931
        %v2280 = vadd.f32 %v1417, %v1970
        %v2281 = vadd.f32 %v1225, %v1778
        %v2282 = vadd.f32 %v1264, %v1817
        %v2283 = vadd.f32 %v1303, %v1856
        %v2284 = vadd.f32 %v1342, %v1895
        %v2285 = vadd.f32 %v1381, %v1934
        %v2286 = vadd.f32 %v1420, %v1973
        %v2287 = vadd.f32 %v1227, %v1780
        %v2288 = vadd.f32 %v1266, %v1819
        %v2289 = vadd.f32 %v1305, %v1858
        %v2290 = vadd.f32 %v1344, %v1897
        %v2291 = vadd.f32 %v1383, %v1936
        %v2292 = vadd.f32 %v1422, %v1975
        %v2293 = vadd.f32 %v1230, %v1783
        %v2294 = vadd.f32 %v1269, %v1822
        %v2295 = vadd.f32 %v1308, %v1861
        %v2296 = vadd.f32 %v1347, %v1900
        %v2297 = vadd.f32 %v1386, %v1939
        %v2298 = vadd.f32 %v1425, %v1978
        %v2299 = vadd.f32 %v1232, %v1785
        %v2300 = vadd.f32 %v1271, %v1824
        %v2301 = vadd.f32 %v1310, %v1863
        %v2302 = vadd.f32 %v1349, %v1902
        %v2303 = vadd.f32 %v1388, %v1941
        %v2304 = vadd.f32 %v1427, %v1980
        %v2305 = vadd.f32 %v1235, %v1788
        %v2306 = vadd.f32 %v1274, %v1827
        %v2307 = vadd.f32 %v1313, %v1866
        %v2308 = vadd.f32 %v1352, %v1905
        %v2309 = vadd.f32 %v1391, %v1944
        %v2310 = vadd.f32 %v1430, %v1983
        %v2311 = vadd.f32 %v1237, %v1790
        %v2312 = vadd.f32 %v1276, %v1829
        %v2313 = vadd.f32 %v1315, %v1868
        %v2314 = vadd.f32 %v1354, %v1907
        %v2315 = vadd.f32 %v1393, %v1946
        %v2316 = vadd.f32 %v1432, %v1985
        %v2317 = vadd.f32 %v1444, %v2021
        %v2318 = vadd.f32 %v1483, %v2060
        %v2319 = vadd.f32 %v1522, %v2099
        %v2320 = vadd.f32 %v1561, %v2138
        %v2321 = vadd.f32 %v1600, %v2177
        %v2322 = vadd.f32 %v1639, %v2216
        %v2323 = vadd.f32 %v1446, %v2023
        %v2324 = vadd.f32 %v1485, %v2062
        %v2325 = vadd.f32 %v1524, %v2101
        %v2326 = vadd.f32 %v1563, %v2140
        %v2327 = vadd.f32 %v1602, %v2179
        %v2328 = vadd.f32 %v1641, %v2218
        %v2329 = vadd.f32 %v1449, %v2026
        %v2330 = vadd.f32 %v1488, %v2065
        %v2331 = vadd.f32 %v1527, %v2104
        %v2332 = vadd.f32 %v1566, %v2143
        %v2333 = vadd.f32 %v1605, %v2182
        %v2334 = vadd.f32 %v1644, %v2221
        %v2335 = vadd.f32 %v1451, %v2028
        %v2336 = vadd.f32 %v1490, %v2067
        %v2337 = vadd.f32 %v1529, %v2106
        %v2338 = vadd.f32 %v1568, %v2145
        %v2339 = vadd.f32 %v1607, %v2184
        %v2340 = vadd.f32 %v1646, %v2223
        %v2341 = vadd.f32 %v1454, %v2031
        %v2342 = vadd.f32 %v1493, %v2070
        %v2343 = vadd.f32 %v1532, %v2109
        %v2344 = vadd.f32 %v1571, %v2148
        %v2345 = vadd.f32 %v1610, %v2187
        %v2346 = vadd.f32 %v1649, %v2226
        %v2347 = vadd.f32 %v1456, %v2033
        %v2348 = vadd.f32 %v1495, %v2072
        %v2349 = vadd.f32 %v1534, %v2111
        %v2350 = vadd.f32 %v1573, %v2150
        %v2351 = vadd.f32 %v1612, %v2189
        %v2352 = vadd.f32 %v1651, %v2228
        %v2353 = vadd.f32 %v1459, %v2036
        %v2354 = vadd.f32 %v1498, %v2075
        %v2355 = vadd.f32 %v1537, %v2114
        %v2356 = vadd.f32 %v1576, %v2153
        %v2357 = vadd.f32 %v1615, %v2192
        %v2358 = vadd.f32 %v1654, %v2231
        %v2359 = vadd.f32 %v1461, %v2038
        %v2360 = vadd.f32 %v1500, %v2077
        %v2361 = vadd.f32 %v1539, %v2116
        %v2362 = vadd.f32 %v1578, %v2155
        %v2363 = vadd.f32 %v1617, %v2194
        %v2364 = vadd.f32 %v1656, %v2233
        %v2365 = vadd.f32 %v1464, %v2041
        %v2366 = vadd.f32 %v1503, %v2080
        %v2367 = vadd.f32 %v1542, %v2119
        %v2368 = vadd.f32 %v1581, %v2158
        %v2369 = vadd.f32 %v1620, %v2197
        %v2370 = vadd.f32 %v1659, %v2236
        %v2371 = vadd.f32 %v1466, %v2043
        %v2372 = vadd.f32 %v1505, %v2082
        %v2373 = vadd.f32 %v1544, %v2121
        %v2374 = vadd.f32 %v1583, %v2160
        %v2375 = vadd.f32 %v1622, %v2199
        %v2376 = vadd.f32 %v1661, %v2238
        %v2377 = vadd.f32 %v1469, %v2046
        %v2378 = vadd.f32 %v1508, %v2085
        %v2379 = vadd.f32 %v1547, %v2124
        %v2380 = vadd.f32 %v1586, %v2163
        %v2381 = vadd.f32 %v1625, %v2202
        %v2382 = vadd.f32 %v1664, %v2241
        %v2383 = vadd.f32 %v1471, %v2048
        %v2384 = vadd.f32 %v1510, %v2087
        %v2385 = vadd.f32 %v1549, %v2126
        %v2386 = vadd.f32 %v1588, %v2165
        %v2387 = vadd.f32 %v1627, %v2204
        %v2388 = vadd.f32 %v1666, %v2243
        %s2389 = scalar_lea.vmem [#allocation2], 288
        %v2390 = vld [vmem:[%s2389] sm:$0xff]
        %v2391 = vld [vmem:[%s2389 + $0x8] sm:$0xff]
        %v2392 = vld [vmem:[%s2389 + $0x10] sm:$0xff]
        %v2393 = vld [vmem:[%s2389 + $0x18] sm:$0xff]
        %v2394 = vld [vmem:[%s2389 + $0x20] sm:$0xff]
        %v2395 = vld [vmem:[%s2389 + $0x28] sm:$0xff]
        %v2396 = vld [vmem:[%s2389 + $0x30] sm:$0xff]
        %v2397 = vld [vmem:[%s2389 + $0x38] sm:$0xff]
        %v2398 = vld [vmem:[%s2389 + $0x40] sm:$0xff]
        %v2399 = vld [vmem:[%s2389 + $0x48] sm:$0x33]
        %v2400 = vld [vmem:[%s2389 + $0x50] sm:$0x33]
        %v2401 = vld [vmem:[%s2389 + $0x58] sm:$0x33]
        %v2414 = vunpack.c.l.b16 %v2390
        %v2415 = vunpack.c.h.b16 %v2390
        %v2416 = vunpack.c.l.b16 %v2391
        %v2417 = vunpack.c.h.b16 %v2391
        %v2418 = vunpack.c.l.b16 %v2392
        %v2419 = vunpack.c.h.b16 %v2392
        %v2420 = vunpack.c.l.b16 %v2393
        %v2421 = vunpack.c.h.b16 %v2393
        %v2422 = vunpack.c.l.b16 %v2394
        %v2423 = vunpack.c.h.b16 %v2394
        %v2424 = vunpack.c.l.b16 %v2395
        %v2425 = vunpack.c.h.b16 %v2395
        %v2426 = vunpack.c.l.b16 %v2396
        %v2427 = vunpack.c.h.b16 %v2396
        %v2428 = vunpack.c.l.b16 %v2397
        %v2429 = vunpack.c.h.b16 %v2397
        %v2430 = vunpack.c.l.b16 %v2398
        %v2431 = vunpack.c.h.b16 %v2398
        %v2432 = vunpack.c.l.b16 %v2399
        %v2433 = vunpack.c.h.b16 %v2399
        %v2434 = vunpack.c.l.b16 %v2400
        %v2435 = vunpack.c.h.b16 %v2400
        %v2436 = vunpack.c.l.b16 %v2401
        %v2437 = vunpack.c.h.b16 %v2401
        %v2438 = vpack.c.b16 %v2420, %v2414
        %v2439 = vpack.c.b16 %v2421, %v2415
        %v2440 = vpack.c.b16 %v2422, %v2416
        %v2441 = vpack.c.b16 %v2423, %v2417
        %v2442 = vpack.c.b16 %v2424, %v2418
        %v2443 = vpack.c.b16 %v2425, %v2419
        %v2444 = vpack.c.b16 %v2432, %v2426
        %v2445 = vpack.c.b16 %v2433, %v2427
        %v2446 = vpack.c.b16 %v2434, %v2428
        %v2447 = vpack.c.b16 %v2435, %v2429
        %v2448 = vpack.c.b16 %v2436, %v2430
        %v2449 = vpack.c.b16 %v2437, %v2431
        %v2457 = vsel %vm599, %v2444, 0
        %v2460 = vsel %vm599, %v2445, 0
        %v2463 = vsel %vm599, %v2446, 0
        %v2466 = vsel %vm599, %v2447, 0
        %v2469 = vsel %vm599, %v2448, 0
        %v2472 = vsel %vm599, %v2449, 0
        %2474 = vmatpush.bf16.msra.mxu0 0
        %2475 = vmatpush.bf16.msra.mxu0 0
        %2476 = vmatpush.bf16.msra.mxu0 0
        %2477 = vmatpush.bf16.msra.mxu0 0
        %2478 = vmatpush.bf16.msra.mxu0 0
        %2479 = vmatpush.bf16.msra.mxu0 0
        %2480 = vmatpush.bf16.msra.mxu0 %v2457
        %2481 = vmatpush.bf16.msra.mxu0 %v2438
        %2482 = vmatmul.bf16.gmra.mxu0 %v1994
        %v2483 = vpop.f32.mrf.mxu0
        %v2484 = vadd.f32 0.0, %v2483
        %v2485 = vpop.f32.mrf.mxu0
        %v2486 = vadd.f32 0.0, %v2485
        %2487 = vmatmul.bf16.gmra.mxu0 %v1997
        %v2488 = vpop.f32.mrf.mxu0
        %v2489 = vadd.f32 0.0, %v2488
        %v2490 = vpop.f32.mrf.mxu0
        %v2491 = vadd.f32 0.0, %v2490
        %2492 = vmatmul.bf16.gmra.mxu0 %v2000
        %v2493 = vpop.f32.mrf.mxu0
        %v2494 = vadd.f32 0.0, %v2493
        %v2495 = vpop.f32.mrf.mxu0
        %v2496 = vadd.f32 0.0, %v2495
        %2497 = vmatmul.bf16.gmra.mxu0 %v2003
        %v2498 = vpop.f32.mrf.mxu0
        %v2499 = vadd.f32 0.0, %v2498
        %v2500 = vpop.f32.mrf.mxu0
        %v2501 = vadd.f32 0.0, %v2500
        %2502 = vmatmul.bf16.gmra.mxu0 %v2006
        %v2503 = vpop.f32.mrf.mxu0
        %v2504 = vadd.f32 0.0, %v2503
        %v2505 = vpop.f32.mrf.mxu0
        %v2506 = vadd.f32 0.0, %v2505
        %2507 = vmatmul.bf16.gmra.mxu0 %v2009
        %v2508 = vpop.f32.mrf.mxu0
        %v2509 = vadd.f32 0.0, %v2508
        %v2510 = vpop.f32.mrf.mxu0
        %v2511 = vadd.f32 0.0, %v2510
        %2512 = vdwg.mxu0
        %2513 = vmatpush.bf16.msra.mxu0 0
        %2514 = vmatpush.bf16.msra.mxu0 0
        %2515 = vmatpush.bf16.msra.mxu0 0
        %2516 = vmatpush.bf16.msra.mxu0 0
        %2517 = vmatpush.bf16.msra.mxu0 0
        %2518 = vmatpush.bf16.msra.mxu0 0
        %2519 = vmatpush.bf16.msra.mxu0 %v2460
        %2520 = vmatpush.bf16.msra.mxu0 %v2439
        %2521 = vmatmul.bf16.gmra.mxu0 %v1994
        %v2522 = vpop.f32.mrf.mxu0
        %v2523 = vadd.f32 0.0, %v2522
        %v2524 = vpop.f32.mrf.mxu0
        %v2525 = vadd.f32 0.0, %v2524
        %2526 = vmatmul.bf16.gmra.mxu0 %v1997
        %v2527 = vpop.f32.mrf.mxu0
        %v2528 = vadd.f32 0.0, %v2527
        %v2529 = vpop.f32.mrf.mxu0
        %v2530 = vadd.f32 0.0, %v2529
        %2531 = vmatmul.bf16.gmra.mxu0 %v2000
        %v2532 = vpop.f32.mrf.mxu0
        %v2533 = vadd.f32 0.0, %v2532
        %v2534 = vpop.f32.mrf.mxu0
        %v2535 = vadd.f32 0.0, %v2534
        %2536 = vmatmul.bf16.gmra.mxu0 %v2003
        %v2537 = vpop.f32.mrf.mxu0
        %v2538 = vadd.f32 0.0, %v2537
        %v2539 = vpop.f32.mrf.mxu0
        %v2540 = vadd.f32 0.0, %v2539
        %2541 = vmatmul.bf16.gmra.mxu0 %v2006
        %v2542 = vpop.f32.mrf.mxu0
        %v2543 = vadd.f32 0.0, %v2542
        %v2544 = vpop.f32.mrf.mxu0
        %v2545 = vadd.f32 0.0, %v2544
        %2546 = vmatmul.bf16.gmra.mxu0 %v2009
        %v2547 = vpop.f32.mrf.mxu0
        %v2548 = vadd.f32 0.0, %v2547
        %v2549 = vpop.f32.mrf.mxu0
        %v2550 = vadd.f32 0.0, %v2549
        %2551 = vdwg.mxu0
        %2552 = vmatpush.bf16.msra.mxu0 0
        %2553 = vmatpush.bf16.msra.mxu0 0
        %2554 = vmatpush.bf16.msra.mxu0 0
        %2555 = vmatpush.bf16.msra.mxu0 0
        %2556 = vmatpush.bf16.msra.mxu0 0
        %2557 = vmatpush.bf16.msra.mxu0 0
        %2558 = vmatpush.bf16.msra.mxu0 %v2463
        %2559 = vmatpush.bf16.msra.mxu0 %v2440
        %2560 = vmatmul.bf16.gmra.mxu0 %v1994
        %v2561 = vpop.f32.mrf.mxu0
        %v2562 = vadd.f32 0.0, %v2561
        %v2563 = vpop.f32.mrf.mxu0
        %v2564 = vadd.f32 0.0, %v2563
        %2565 = vmatmul.bf16.gmra.mxu0 %v1997
        %v2566 = vpop.f32.mrf.mxu0
        %v2567 = vadd.f32 0.0, %v2566
        %v2568 = vpop.f32.mrf.mxu0
        %v2569 = vadd.f32 0.0, %v2568
        %2570 = vmatmul.bf16.gmra.mxu0 %v2000
        %v2571 = vpop.f32.mrf.mxu0
        %v2572 = vadd.f32 0.0, %v2571
        %v2573 = vpop.f32.mrf.mxu0
        %v2574 = vadd.f32 0.0, %v2573
        %2575 = vmatmul.bf16.gmra.mxu0 %v2003
        %v2576 = vpop.f32.mrf.mxu0
        %v2577 = vadd.f32 0.0, %v2576
        %v2578 = vpop.f32.mrf.mxu0
        %v2579 = vadd.f32 0.0, %v2578
        %2580 = vmatmul.bf16.gmra.mxu0 %v2006
        %v2581 = vpop.f32.mrf.mxu0
        %v2582 = vadd.f32 0.0, %v2581
        %v2583 = vpop.f32.mrf.mxu0
        %v2584 = vadd.f32 0.0, %v2583
        %2585 = vmatmul.bf16.gmra.mxu0 %v2009
        %v2586 = vpop.f32.mrf.mxu0
        %v2587 = vadd.f32 0.0, %v2586
        %v2588 = vpop.f32.mrf.mxu0
        %v2589 = vadd.f32 0.0, %v2588
        %2590 = vdwg.mxu0
        %2591 = vmatpush.bf16.msra.mxu0 0
        %2592 = vmatpush.bf16.msra.mxu0 0
        %2593 = vmatpush.bf16.msra.mxu0 0
        %2594 = vmatpush.bf16.msra.mxu0 0
        %2595 = vmatpush.bf16.msra.mxu0 0
        %2596 = vmatpush.bf16.msra.mxu0 0
        %2597 = vmatpush.bf16.msra.mxu0 %v2466
        %2598 = vmatpush.bf16.msra.mxu0 %v2441
        %2599 = vmatmul.bf16.gmra.mxu0 %v1994
        %v2600 = vpop.f32.mrf.mxu0
        %v2601 = vadd.f32 0.0, %v2600
        %v2602 = vpop.f32.mrf.mxu0
        %v2603 = vadd.f32 0.0, %v2602
        %2604 = vmatmul.bf16.gmra.mxu0 %v1997
        %v2605 = vpop.f32.mrf.mxu0
        %v2606 = vadd.f32 0.0, %v2605
        %v2607 = vpop.f32.mrf.mxu0
        %v2608 = vadd.f32 0.0, %v2607
        %2609 = vmatmul.bf16.gmra.mxu0 %v2000
        %v2610 = vpop.f32.mrf.mxu0
        %v2611 = vadd.f32 0.0, %v2610
        %v2612 = vpop.f32.mrf.mxu0
        %v2613 = vadd.f32 0.0, %v2612
        %2614 = vmatmul.bf16.gmra.mxu0 %v2003
        %v2615 = vpop.f32.mrf.mxu0
        %v2616 = vadd.f32 0.0, %v2615
        %v2617 = vpop.f32.mrf.mxu0
        %v2618 = vadd.f32 0.0, %v2617
        %2619 = vmatmul.bf16.gmra.mxu0 %v2006
        %v2620 = vpop.f32.mrf.mxu0
        %v2621 = vadd.f32 0.0, %v2620
        %v2622 = vpop.f32.mrf.mxu0
        %v2623 = vadd.f32 0.0, %v2622
        %2624 = vmatmul.bf16.gmra.mxu0 %v2009
        %v2625 = vpop.f32.mrf.mxu0
        %v2626 = vadd.f32 0.0, %v2625
        %v2627 = vpop.f32.mrf.mxu0
        %v2628 = vadd.f32 0.0, %v2627
        %2629 = vdwg.mxu0
        %2630 = vmatpush.bf16.msra.mxu0 0
        %2631 = vmatpush.bf16.msra.mxu0 0
        %2632 = vmatpush.bf16.msra.mxu0 0
        %2633 = vmatpush.bf16.msra.mxu0 0
        %2634 = vmatpush.bf16.msra.mxu0 0
        %2635 = vmatpush.bf16.msra.mxu0 0
        %2636 = vmatpush.bf16.msra.mxu0 %v2469
        %2637 = vmatpush.bf16.msra.mxu0 %v2442
        %2638 = vmatmul.bf16.gmra.mxu0 %v1994
        %v2639 = vpop.f32.mrf.mxu0
        %v2640 = vadd.f32 0.0, %v2639
        %v2641 = vpop.f32.mrf.mxu0
        %v2642 = vadd.f32 0.0, %v2641
        %2643 = vmatmul.bf16.gmra.mxu0 %v1997
        %v2644 = vpop.f32.mrf.mxu0
        %v2645 = vadd.f32 0.0, %v2644
        %v2646 = vpop.f32.mrf.mxu0
        %v2647 = vadd.f32 0.0, %v2646
        %2648 = vmatmul.bf16.gmra.mxu0 %v2000
        %v2649 = vpop.f32.mrf.mxu0
        %v2650 = vadd.f32 0.0, %v2649
        %v2651 = vpop.f32.mrf.mxu0
        %v2652 = vadd.f32 0.0, %v2651
        %2653 = vmatmul.bf16.gmra.mxu0 %v2003
        %v2654 = vpop.f32.mrf.mxu0
        %v2655 = vadd.f32 0.0, %v2654
        %v2656 = vpop.f32.mrf.mxu0
        %v2657 = vadd.f32 0.0, %v2656
        %2658 = vmatmul.bf16.gmra.mxu0 %v2006
        %v2659 = vpop.f32.mrf.mxu0
        %v2660 = vadd.f32 0.0, %v2659
        %v2661 = vpop.f32.mrf.mxu0
        %v2662 = vadd.f32 0.0, %v2661
        %2663 = vmatmul.bf16.gmra.mxu0 %v2009
        %v2664 = vpop.f32.mrf.mxu0
        %v2665 = vadd.f32 0.0, %v2664
        %v2666 = vpop.f32.mrf.mxu0
        %v2667 = vadd.f32 0.0, %v2666
        %2668 = vdwg.mxu0
        %2669 = vmatpush.bf16.msra.mxu0 0
        %2670 = vmatpush.bf16.msra.mxu0 0
        %2671 = vmatpush.bf16.msra.mxu0 0
        %2672 = vmatpush.bf16.msra.mxu0 0
        %2673 = vmatpush.bf16.msra.mxu0 0
        %2674 = vmatpush.bf16.msra.mxu0 0
        %2675 = vmatpush.bf16.msra.mxu0 %v2472
        %2676 = vmatpush.bf16.msra.mxu0 %v2443
        %2677 = vmatmul.bf16.gmra.mxu0 %v1994
        %v2678 = vpop.f32.mrf.mxu0
        %v2679 = vadd.f32 0.0, %v2678
        %v2680 = vpop.f32.mrf.mxu0
        %v2681 = vadd.f32 0.0, %v2680
        %2682 = vmatmul.bf16.gmra.mxu0 %v1997
        %v2683 = vpop.f32.mrf.mxu0
        %v2684 = vadd.f32 0.0, %v2683
        %v2685 = vpop.f32.mrf.mxu0
        %v2686 = vadd.f32 0.0, %v2685
        %2687 = vmatmul.bf16.gmra.mxu0 %v2000
        %v2688 = vpop.f32.mrf.mxu0
        %v2689 = vadd.f32 0.0, %v2688
        %v2690 = vpop.f32.mrf.mxu0
        %v2691 = vadd.f32 0.0, %v2690
        %2692 = vmatmul.bf16.gmra.mxu0 %v2003
        %v2693 = vpop.f32.mrf.mxu0
        %v2694 = vadd.f32 0.0, %v2693
        %v2695 = vpop.f32.mrf.mxu0
        %v2696 = vadd.f32 0.0, %v2695
        %2697 = vmatmul.bf16.gmra.mxu0 %v2006
        %v2698 = vpop.f32.mrf.mxu0
        %v2699 = vadd.f32 0.0, %v2698
        %v2700 = vpop.f32.mrf.mxu0
        %v2701 = vadd.f32 0.0, %v2700
        %2702 = vmatmul.bf16.gmra.mxu0 %v2009
        %v2703 = vpop.f32.mrf.mxu0
        %v2704 = vadd.f32 0.0, %v2703
        %v2705 = vpop.f32.mrf.mxu0
        %v2706 = vadd.f32 0.0, %v2705
        %2707 = vdwg.mxu0
        %v2708 = vpack.c.bf16 %v474, %v473
        %v2710 = vsel %vm580, %v2708, 0
        %2712 = vmatpush.bf16.msra.mxu0 0
        %2713 = vmatpush.bf16.msra.mxu0 0
        %2714 = vmatpush.bf16.msra.mxu0 0
        %2715 = vmatpush.bf16.msra.mxu0 0
        %2716 = vmatpush.bf16.msra.mxu0 0
        %2717 = vmatpush.bf16.msra.mxu0 0
        %2718 = vmatpush.bf16.msra.mxu0 %v2457
        %2719 = vmatpush.bf16.msra.mxu0 %v2438
        %2720 = vmatmul.bf16.gmra.mxu0 %v1168
        %v2721 = vpop.f32.mrf.mxu0
        %v2722 = vadd.f32 0.0, %v2721
        %v2723 = vpop.f32.mrf.mxu0
        %v2724 = vadd.f32 0.0, %v2723
        %2725 = vmatmul.bf16.gmra.mxu0 %v1171
        %v2726 = vpop.f32.mrf.mxu0
        %v2727 = vadd.f32 0.0, %v2726
        %v2728 = vpop.f32.mrf.mxu0
        %v2729 = vadd.f32 0.0, %v2728
        %2730 = vmatmul.bf16.gmra.mxu0 %v1174
        %v2731 = vpop.f32.mrf.mxu0
        %v2732 = vadd.f32 0.0, %v2731
        %v2733 = vpop.f32.mrf.mxu0
        %v2734 = vadd.f32 0.0, %v2733
        %2735 = vmatmul.bf16.gmra.mxu0 %v1177
        %v2736 = vpop.f32.mrf.mxu0
        %v2737 = vadd.f32 0.0, %v2736
        %v2738 = vpop.f32.mrf.mxu0
        %v2739 = vadd.f32 0.0, %v2738
        %2740 = vmatmul.bf16.gmra.mxu0 %v1180
        %v2741 = vpop.f32.mrf.mxu0
        %v2742 = vadd.f32 0.0, %v2741
        %v2743 = vpop.f32.mrf.mxu0
        %v2744 = vadd.f32 0.0, %v2743
        %2745 = vmatmul.bf16.gmra.mxu0 %v2710
        %v2746 = vpop.f32.mrf.mxu0
        %v2747 = vadd.f32 0.0, %v2746
        %v2748 = vpop.f32.mrf.mxu0
        %v2749 = vadd.f32 0.0, %v2748
        %2750 = vdwg.mxu0
        %2751 = vmatpush.bf16.msra.mxu0 0
        %2752 = vmatpush.bf16.msra.mxu0 0
        %2753 = vmatpush.bf16.msra.mxu0 0
        %2754 = vmatpush.bf16.msra.mxu0 0
        %2755 = vmatpush.bf16.msra.mxu0 0
        %2756 = vmatpush.bf16.msra.mxu0 0
        %2757 = vmatpush.bf16.msra.mxu0 %v2460
        %2758 = vmatpush.bf16.msra.mxu0 %v2439
        %2759 = vmatmul.bf16.gmra.mxu0 %v1168
        %v2760 = vpop.f32.mrf.mxu0
        %v2761 = vadd.f32 0.0, %v2760
        %v2762 = vpop.f32.mrf.mxu0
        %v2763 = vadd.f32 0.0, %v2762
        %2764 = vmatmul.bf16.gmra.mxu0 %v1171
        %v2765 = vpop.f32.mrf.mxu0
        %v2766 = vadd.f32 0.0, %v2765
        %v2767 = vpop.f32.mrf.mxu0
        %v2768 = vadd.f32 0.0, %v2767
        %2769 = vmatmul.bf16.gmra.mxu0 %v1174
        %v2770 = vpop.f32.mrf.mxu0
        %v2771 = vadd.f32 0.0, %v2770
        %v2772 = vpop.f32.mrf.mxu0
        %v2773 = vadd.f32 0.0, %v2772
        %2774 = vmatmul.bf16.gmra.mxu0 %v1177
        %v2775 = vpop.f32.mrf.mxu0
        %v2776 = vadd.f32 0.0, %v2775
        %v2777 = vpop.f32.mrf.mxu0
        %v2778 = vadd.f32 0.0, %v2777
        %2779 = vmatmul.bf16.gmra.mxu0 %v1180
        %v2780 = vpop.f32.mrf.mxu0
        %v2781 = vadd.f32 0.0, %v2780
        %v2782 = vpop.f32.mrf.mxu0
        %v2783 = vadd.f32 0.0, %v2782
        %2784 = vmatmul.bf16.gmra.mxu0 %v2710
        %v2785 = vpop.f32.mrf.mxu0
        %v2786 = vadd.f32 0.0, %v2785
        %v2787 = vpop.f32.mrf.mxu0
        %v2788 = vadd.f32 0.0, %v2787
        %2789 = vdwg.mxu0
        %2790 = vmatpush.bf16.msra.mxu0 0
        %2791 = vmatpush.bf16.msra.mxu0 0
        %2792 = vmatpush.bf16.msra.mxu0 0
        %2793 = vmatpush.bf16.msra.mxu0 0
        %2794 = vmatpush.bf16.msra.mxu0 0
        %2795 = vmatpush.bf16.msra.mxu0 0
        %2796 = vmatpush.bf16.msra.mxu0 %v2463
        %2797 = vmatpush.bf16.msra.mxu0 %v2440
        %2798 = vmatmul.bf16.gmra.mxu0 %v1168
        %v2799 = vpop.f32.mrf.mxu0
        %v2800 = vadd.f32 0.0, %v2799
        %v2801 = vpop.f32.mrf.mxu0
        %v2802 = vadd.f32 0.0, %v2801
        %2803 = vmatmul.bf16.gmra.mxu0 %v1171
        %v2804 = vpop.f32.mrf.mxu0
        %v2805 = vadd.f32 0.0, %v2804
        %v2806 = vpop.f32.mrf.mxu0
        %v2807 = vadd.f32 0.0, %v2806
        %2808 = vmatmul.bf16.gmra.mxu0 %v1174
        %v2809 = vpop.f32.mrf.mxu0
        %v2810 = vadd.f32 0.0, %v2809
        %v2811 = vpop.f32.mrf.mxu0
        %v2812 = vadd.f32 0.0, %v2811
        %2813 = vmatmul.bf16.gmra.mxu0 %v1177
        %v2814 = vpop.f32.mrf.mxu0
        %v2815 = vadd.f32 0.0, %v2814
        %v2816 = vpop.f32.mrf.mxu0
        %v2817 = vadd.f32 0.0, %v2816
        %2818 = vmatmul.bf16.gmra.mxu0 %v1180
        %v2819 = vpop.f32.mrf.mxu0
        %v2820 = vadd.f32 0.0, %v2819
        %v2821 = vpop.f32.mrf.mxu0
        %v2822 = vadd.f32 0.0, %v2821
        %2823 = vmatmul.bf16.gmra.mxu0 %v2710
        %v2824 = vpop.f32.mrf.mxu0
        %v2825 = vadd.f32 0.0, %v2824
        %v2826 = vpop.f32.mrf.mxu0
        %v2827 = vadd.f32 0.0, %v2826
        %2828 = vdwg.mxu0
        %2829 = vmatpush.bf16.msra.mxu0 0
        %2830 = vmatpush.bf16.msra.mxu0 0
        %2831 = vmatpush.bf16.msra.mxu0 0
        %2832 = vmatpush.bf16.msra.mxu0 0
        %2833 = vmatpush.bf16.msra.mxu0 0
        %2834 = vmatpush.bf16.msra.mxu0 0
        %2835 = vmatpush.bf16.msra.mxu0 %v2466
        %2836 = vmatpush.bf16.msra.mxu0 %v2441
        %2837 = vmatmul.bf16.gmra.mxu0 %v1168
        %v2838 = vpop.f32.mrf.mxu0
        %v2839 = vadd.f32 0.0, %v2838
        %v2840 = vpop.f32.mrf.mxu0
        %v2841 = vadd.f32 0.0, %v2840
        %2842 = vmatmul.bf16.gmra.mxu0 %v1171
        %v2843 = vpop.f32.mrf.mxu0
        %v2844 = vadd.f32 0.0, %v2843
        %v2845 = vpop.f32.mrf.mxu0
        %v2846 = vadd.f32 0.0, %v2845
        %2847 = vmatmul.bf16.gmra.mxu0 %v1174
        %v2848 = vpop.f32.mrf.mxu0
        %v2849 = vadd.f32 0.0, %v2848
        %v2850 = vpop.f32.mrf.mxu0
        %v2851 = vadd.f32 0.0, %v2850
        %2852 = vmatmul.bf16.gmra.mxu0 %v1177
        %v2853 = vpop.f32.mrf.mxu0
        %v2854 = vadd.f32 0.0, %v2853
        %v2855 = vpop.f32.mrf.mxu0
        %v2856 = vadd.f32 0.0, %v2855
        %2857 = vmatmul.bf16.gmra.mxu0 %v1180
        %v2858 = vpop.f32.mrf.mxu0
        %v2859 = vadd.f32 0.0, %v2858
        %v2860 = vpop.f32.mrf.mxu0
        %v2861 = vadd.f32 0.0, %v2860
        %2862 = vmatmul.bf16.gmra.mxu0 %v2710
        %v2863 = vpop.f32.mrf.mxu0
        %v2864 = vadd.f32 0.0, %v2863
        %v2865 = vpop.f32.mrf.mxu0
        %v2866 = vadd.f32 0.0, %v2865
        %2867 = vdwg.mxu0
        %2868 = vmatpush.bf16.msra.mxu0 0
        %2869 = vmatpush.bf16.msra.mxu0 0
        %2870 = vmatpush.bf16.msra.mxu0 0
        %2871 = vmatpush.bf16.msra.mxu0 0
        %2872 = vmatpush.bf16.msra.mxu0 0
        %2873 = vmatpush.bf16.msra.mxu0 0
        %2874 = vmatpush.bf16.msra.mxu0 %v2469
        %2875 = vmatpush.bf16.msra.mxu0 %v2442
        %2876 = vmatmul.bf16.gmra.mxu0 %v1168
        %v2877 = vpop.f32.mrf.mxu0
        %v2878 = vadd.f32 0.0, %v2877
        %v2879 = vpop.f32.mrf.mxu0
        %v2880 = vadd.f32 0.0, %v2879
        %2881 = vmatmul.bf16.gmra.mxu0 %v1171
        %v2882 = vpop.f32.mrf.mxu0
        %v2883 = vadd.f32 0.0, %v2882
        %v2884 = vpop.f32.mrf.mxu0
        %v2885 = vadd.f32 0.0, %v2884
        %2886 = vmatmul.bf16.gmra.mxu0 %v1174
        %v2887 = vpop.f32.mrf.mxu0
        %v2888 = vadd.f32 0.0, %v2887
        %v2889 = vpop.f32.mrf.mxu0
        %v2890 = vadd.f32 0.0, %v2889
        %2891 = vmatmul.bf16.gmra.mxu0 %v1177
        %v2892 = vpop.f32.mrf.mxu0
        %v2893 = vadd.f32 0.0, %v2892
        %v2894 = vpop.f32.mrf.mxu0
        %v2895 = vadd.f32 0.0, %v2894
        %2896 = vmatmul.bf16.gmra.mxu0 %v1180
        %v2897 = vpop.f32.mrf.mxu0
        %v2898 = vadd.f32 0.0, %v2897
        %v2899 = vpop.f32.mrf.mxu0
        %v2900 = vadd.f32 0.0, %v2899
        %2901 = vmatmul.bf16.gmra.mxu0 %v2710
        %v2902 = vpop.f32.mrf.mxu0
        %v2903 = vadd.f32 0.0, %v2902
        %v2904 = vpop.f32.mrf.mxu0
        %v2905 = vadd.f32 0.0, %v2904
        %2906 = vdwg.mxu0
        %2907 = vmatpush.bf16.msra.mxu0 0
        %2908 = vmatpush.bf16.msra.mxu0 0
        %2909 = vmatpush.bf16.msra.mxu0 0
        %2910 = vmatpush.bf16.msra.mxu0 0
        %2911 = vmatpush.bf16.msra.mxu0 0
        %2912 = vmatpush.bf16.msra.mxu0 0
        %2913 = vmatpush.bf16.msra.mxu0 %v2472
        %2914 = vmatpush.bf16.msra.mxu0 %v2443
        %2915 = vmatmul.bf16.gmra.mxu0 %v1168
        %v2916 = vpop.f32.mrf.mxu0
        %v2917 = vadd.f32 0.0, %v2916
        %v2918 = vpop.f32.mrf.mxu0
        %v2919 = vadd.f32 0.0, %v2918
        %2920 = vmatmul.bf16.gmra.mxu0 %v1171
        %v2921 = vpop.f32.mrf.mxu0
        %v2922 = vadd.f32 0.0, %v2921
        %v2923 = vpop.f32.mrf.mxu0
        %v2924 = vadd.f32 0.0, %v2923
        %2925 = vmatmul.bf16.gmra.mxu0 %v1174
        %v2926 = vpop.f32.mrf.mxu0
        %v2927 = vadd.f32 0.0, %v2926
        %v2928 = vpop.f32.mrf.mxu0
        %v2929 = vadd.f32 0.0, %v2928
        %2930 = vmatmul.bf16.gmra.mxu0 %v1177
        %v2931 = vpop.f32.mrf.mxu0
        %v2932 = vadd.f32 0.0, %v2931
        %v2933 = vpop.f32.mrf.mxu0
        %v2934 = vadd.f32 0.0, %v2933
        %2935 = vmatmul.bf16.gmra.mxu0 %v1180
        %v2936 = vpop.f32.mrf.mxu0
        %v2937 = vadd.f32 0.0, %v2936
        %v2938 = vpop.f32.mrf.mxu0
        %v2939 = vadd.f32 0.0, %v2938
        %2940 = vmatmul.bf16.gmra.mxu0 %v2710
        %v2941 = vpop.f32.mrf.mxu0
        %v2942 = vadd.f32 0.0, %v2941
        %v2943 = vpop.f32.mrf.mxu0
        %v2944 = vadd.f32 0.0, %v2943
        %2945 = vdwg.mxu0
        %v2946 = vadd.f32 %v2245, %v2484
        %v2947 = vadd.f32 %v2246, %v2523
        %v2948 = vadd.f32 %v2247, %v2562
        %v2949 = vadd.f32 %v2248, %v2601
        %v2950 = vadd.f32 %v2249, %v2640
        %v2951 = vadd.f32 %v2250, %v2679
        %v2952 = vadd.f32 %v2251, %v2486
        %v2953 = vadd.f32 %v2252, %v2525
        %v2954 = vadd.f32 %v2253, %v2564
        %v2955 = vadd.f32 %v2254, %v2603
        %v2956 = vadd.f32 %v2255, %v2642
        %v2957 = vadd.f32 %v2256, %v2681
        %v2958 = vadd.f32 %v2257, %v2489
        %v2959 = vadd.f32 %v2258, %v2528
        %v2960 = vadd.f32 %v2259, %v2567
        %v2961 = vadd.f32 %v2260, %v2606
        %v2962 = vadd.f32 %v2261, %v2645
        %v2963 = vadd.f32 %v2262, %v2684
        %v2964 = vadd.f32 %v2263, %v2491
        %v2965 = vadd.f32 %v2264, %v2530
        %v2966 = vadd.f32 %v2265, %v2569
        %v2967 = vadd.f32 %v2266, %v2608
        %v2968 = vadd.f32 %v2267, %v2647
        %v2969 = vadd.f32 %v2268, %v2686
        %v2970 = vadd.f32 %v2269, %v2494
        %v2971 = vadd.f32 %v2270, %v2533
        %v2972 = vadd.f32 %v2271, %v2572
        %v2973 = vadd.f32 %v2272, %v2611
        %v2974 = vadd.f32 %v2273, %v2650
        %v2975 = vadd.f32 %v2274, %v2689
        %v2976 = vadd.f32 %v2275, %v2496
        %v2977 = vadd.f32 %v2276, %v2535
        %v2978 = vadd.f32 %v2277, %v2574
        %v2979 = vadd.f32 %v2278, %v2613
        %v2980 = vadd.f32 %v2279, %v2652
        %v2981 = vadd.f32 %v2280, %v2691
        %v2982 = vadd.f32 %v2281, %v2499
        %v2983 = vadd.f32 %v2282, %v2538
        %v2984 = vadd.f32 %v2283, %v2577
        %v2985 = vadd.f32 %v2284, %v2616
        %v2986 = vadd.f32 %v2285, %v2655
        %v2987 = vadd.f32 %v2286, %v2694
        %v2988 = vadd.f32 %v2287, %v2501
        %v2989 = vadd.f32 %v2288, %v2540
        %v2990 = vadd.f32 %v2289, %v2579
        %v2991 = vadd.f32 %v2290, %v2618
        %v2992 = vadd.f32 %v2291, %v2657
        %v2993 = vadd.f32 %v2292, %v2696
        %v2994 = vadd.f32 %v2293, %v2504
        %v2995 = vadd.f32 %v2294, %v2543
        %v2996 = vadd.f32 %v2295, %v2582
        %v2997 = vadd.f32 %v2296, %v2621
        %v2998 = vadd.f32 %v2297, %v2660
        %v2999 = vadd.f32 %v2298, %v2699
        %v3000 = vadd.f32 %v2299, %v2506
        %v3001 = vadd.f32 %v2300, %v2545
        %v3002 = vadd.f32 %v2301, %v2584
        %v3003 = vadd.f32 %v2302, %v2623
        %v3004 = vadd.f32 %v2303, %v2662
        %v3005 = vadd.f32 %v2304, %v2701
        %v3006 = vadd.f32 %v2305, %v2509
        %v3007 = vadd.f32 %v2306, %v2548
        %v3008 = vadd.f32 %v2307, %v2587
        %v3009 = vadd.f32 %v2308, %v2626
        %v3010 = vadd.f32 %v2309, %v2665
        %v3011 = vadd.f32 %v2310, %v2704
        %v3012 = vadd.f32 %v2311, %v2511
        %v3013 = vadd.f32 %v2312, %v2550
        %v3014 = vadd.f32 %v2313, %v2589
        %v3015 = vadd.f32 %v2314, %v2628
        %v3016 = vadd.f32 %v2315, %v2667
        %v3017 = vadd.f32 %v2316, %v2706
        %v3018 = vadd.f32 %v2317, %v2722
        %v3019 = vadd.f32 %v2318, %v2761
        %v3020 = vadd.f32 %v2319, %v2800
        %v3021 = vadd.f32 %v2320, %v2839
        %v3022 = vadd.f32 %v2321, %v2878
        %v3023 = vadd.f32 %v2322, %v2917
        %v3024 = vadd.f32 %v2323, %v2724
        %v3025 = vadd.f32 %v2324, %v2763
        %v3026 = vadd.f32 %v2325, %v2802
        %v3027 = vadd.f32 %v2326, %v2841
        %v3028 = vadd.f32 %v2327, %v2880
        %v3029 = vadd.f32 %v2328, %v2919
        %v3030 = vadd.f32 %v2329, %v2727
        %v3031 = vadd.f32 %v2330, %v2766
        %v3032 = vadd.f32 %v2331, %v2805
        %v3033 = vadd.f32 %v2332, %v2844
        %v3034 = vadd.f32 %v2333, %v2883
        %v3035 = vadd.f32 %v2334, %v2922
        %v3036 = vadd.f32 %v2335, %v2729
        %v3037 = vadd.f32 %v2336, %v2768
        %v3038 = vadd.f32 %v2337, %v2807
        %v3039 = vadd.f32 %v2338, %v2846
        %v3040 = vadd.f32 %v2339, %v2885
        %v3041 = vadd.f32 %v2340, %v2924
        %v3042 = vadd.f32 %v2341, %v2732
        %v3043 = vadd.f32 %v2342, %v2771
        %v3044 = vadd.f32 %v2343, %v2810
        %v3045 = vadd.f32 %v2344, %v2849
        %v3046 = vadd.f32 %v2345, %v2888
        %v3047 = vadd.f32 %v2346, %v2927
        %v3048 = vadd.f32 %v2347, %v2734
        %v3049 = vadd.f32 %v2348, %v2773
        %v3050 = vadd.f32 %v2349, %v2812
        %v3051 = vadd.f32 %v2350, %v2851
        %v3052 = vadd.f32 %v2351, %v2890
        %v3053 = vadd.f32 %v2352, %v2929
        %v3054 = vadd.f32 %v2353, %v2737
        %v3055 = vadd.f32 %v2354, %v2776
        %v3056 = vadd.f32 %v2355, %v2815
        %v3057 = vadd.f32 %v2356, %v2854
        %v3058 = vadd.f32 %v2357, %v2893
        %v3059 = vadd.f32 %v2358, %v2932
        %v3060 = vadd.f32 %v2359, %v2739
        %v3061 = vadd.f32 %v2360, %v2778
        %v3062 = vadd.f32 %v2361, %v2817
        %v3063 = vadd.f32 %v2362, %v2856
        %v3064 = vadd.f32 %v2363, %v2895
        %v3065 = vadd.f32 %v2364, %v2934
        %v3066 = vadd.f32 %v2365, %v2742
        %v3067 = vadd.f32 %v2366, %v2781
        %v3068 = vadd.f32 %v2367, %v2820
        %v3069 = vadd.f32 %v2368, %v2859
        %v3070 = vadd.f32 %v2369, %v2898
        %v3071 = vadd.f32 %v2370, %v2937
        %v3072 = vadd.f32 %v2371, %v2744
        %v3073 = vadd.f32 %v2372, %v2783
        %v3074 = vadd.f32 %v2373, %v2822
        %v3075 = vadd.f32 %v2374, %v2861
        %v3076 = vadd.f32 %v2375, %v2900
        %v3077 = vadd.f32 %v2376, %v2939
        %v3078 = vadd.f32 %v2377, %v2747
        %v3079 = vadd.f32 %v2378, %v2786
        %v3080 = vadd.f32 %v2379, %v2825
        %v3081 = vadd.f32 %v2380, %v2864
        %v3082 = vadd.f32 %v2381, %v2903
        %v3083 = vadd.f32 %v2382, %v2942
        %v3084 = vadd.f32 %v2383, %v2749
        %v3085 = vadd.f32 %v2384, %v2788
        %v3086 = vadd.f32 %v2385, %v2827
        %v3087 = vadd.f32 %v2386, %v2866
        %v3088 = vadd.f32 %v2387, %v2905
        %v3089 = vadd.f32 %v2388, %v2944
        %s3090 = scalar_lea.vmem [#allocation2], 384
        %v3091 = vld [vmem:[%s3090] sm:$0xff]
        %v3092 = vld [vmem:[%s3090 + $0x8] sm:$0xff]
        %v3093 = vld [vmem:[%s3090 + $0x10] sm:$0xff]
        %v3094 = vld [vmem:[%s3090 + $0x18] sm:$0xff]
        %v3095 = vld [vmem:[%s3090 + $0x20] sm:$0xff]
        %v3096 = vld [vmem:[%s3090 + $0x28] sm:$0xff]
        %v3097 = vld [vmem:[%s3090 + $0x30] sm:$0xff]
        %v3098 = vld [vmem:[%s3090 + $0x38] sm:$0xff]
        %v3099 = vld [vmem:[%s3090 + $0x40] sm:$0xff]
        %v3100 = vld [vmem:[%s3090 + $0x48] sm:$0x33]
        %v3101 = vld [vmem:[%s3090 + $0x50] sm:$0x33]
        %v3102 = vld [vmem:[%s3090 + $0x58] sm:$0x33]
        %v3115 = vunpack.c.l.b16 %v3091
        %v3116 = vunpack.c.h.b16 %v3091
        %v3117 = vunpack.c.l.b16 %v3092
        %v3118 = vunpack.c.h.b16 %v3092
        %v3119 = vunpack.c.l.b16 %v3093
        %v3120 = vunpack.c.h.b16 %v3093
        %v3121 = vunpack.c.l.b16 %v3094
        %v3122 = vunpack.c.h.b16 %v3094
        %v3123 = vunpack.c.l.b16 %v3095
        %v3124 = vunpack.c.h.b16 %v3095
        %v3125 = vunpack.c.l.b16 %v3096
        %v3126 = vunpack.c.h.b16 %v3096
        %v3127 = vunpack.c.l.b16 %v3097
        %v3128 = vunpack.c.h.b16 %v3097
        %v3129 = vunpack.c.l.b16 %v3098
        %v3130 = vunpack.c.h.b16 %v3098
        %v3131 = vunpack.c.l.b16 %v3099
        %v3132 = vunpack.c.h.b16 %v3099
        %v3133 = vunpack.c.l.b16 %v3100
        %v3134 = vunpack.c.h.b16 %v3100
        %v3135 = vunpack.c.l.b16 %v3101
        %v3136 = vunpack.c.h.b16 %v3101
        %v3137 = vunpack.c.l.b16 %v3102
        %v3138 = vunpack.c.h.b16 %v3102
        %v3139 = vpack.c.b16 %v3121, %v3115
        %v3140 = vpack.c.b16 %v3122, %v3116
        %v3141 = vpack.c.b16 %v3123, %v3117
        %v3142 = vpack.c.b16 %v3124, %v3118
        %v3143 = vpack.c.b16 %v3125, %v3119
        %v3144 = vpack.c.b16 %v3126, %v3120
        %v3145 = vpack.c.b16 %v3133, %v3127
        %v3146 = vpack.c.b16 %v3134, %v3128
        %v3147 = vpack.c.b16 %v3135, %v3129
        %v3148 = vpack.c.b16 %v3136, %v3130
        %v3149 = vpack.c.b16 %v3137, %v3131
        %v3150 = vpack.c.b16 %v3138, %v3132
        %v3158 = vsel %vm599, %v3145, 0
        %v3161 = vsel %vm599, %v3146, 0
        %v3164 = vsel %vm599, %v3147, 0
        %v3167 = vsel %vm599, %v3148, 0
        %v3170 = vsel %vm599, %v3149, 0
        %v3173 = vsel %vm599, %v3150, 0
        %3175 = vmatpush.bf16.msra.mxu0 0
        %3176 = vmatpush.bf16.msra.mxu0 0
        %3177 = vmatpush.bf16.msra.mxu0 0
        %3178 = vmatpush.bf16.msra.mxu0 0
        %3179 = vmatpush.bf16.msra.mxu0 0
        %3180 = vmatpush.bf16.msra.mxu0 0
        %3181 = vmatpush.bf16.msra.mxu0 %v3158
        %3182 = vmatpush.bf16.msra.mxu0 %v3139
        %3183 = vmatmul.bf16.gmra.mxu0 %v1168
        %v3184 = vpop.f32.mrf.mxu0
        %v3185 = vadd.f32 0.0, %v3184
        %v3186 = vpop.f32.mrf.mxu0
        %v3187 = vadd.f32 0.0, %v3186
        %3188 = vmatmul.bf16.gmra.mxu0 %v1171
        %v3189 = vpop.f32.mrf.mxu0
        %v3190 = vadd.f32 0.0, %v3189
        %v3191 = vpop.f32.mrf.mxu0
        %v3192 = vadd.f32 0.0, %v3191
        %3193 = vmatmul.bf16.gmra.mxu0 %v1174
        %v3194 = vpop.f32.mrf.mxu0
        %v3195 = vadd.f32 0.0, %v3194
        %v3196 = vpop.f32.mrf.mxu0
        %v3197 = vadd.f32 0.0, %v3196
        %3198 = vmatmul.bf16.gmra.mxu0 %v1177
        %v3199 = vpop.f32.mrf.mxu0
        %v3200 = vadd.f32 0.0, %v3199
        %v3201 = vpop.f32.mrf.mxu0
        %v3202 = vadd.f32 0.0, %v3201
        %3203 = vmatmul.bf16.gmra.mxu0 %v1180
        %v3204 = vpop.f32.mrf.mxu0
        %v3205 = vadd.f32 0.0, %v3204
        %v3206 = vpop.f32.mrf.mxu0
        %v3207 = vadd.f32 0.0, %v3206
        %3208 = vmatmul.bf16.gmra.mxu0 %v2710
        %v3209 = vpop.f32.mrf.mxu0
        %v3210 = vadd.f32 0.0, %v3209
        %v3211 = vpop.f32.mrf.mxu0
        %v3212 = vadd.f32 0.0, %v3211
        %3213 = vdwg.mxu0
        %3214 = vmatpush.bf16.msra.mxu0 0
        %3215 = vmatpush.bf16.msra.mxu0 0
        %3216 = vmatpush.bf16.msra.mxu0 0
        %3217 = vmatpush.bf16.msra.mxu0 0
        %3218 = vmatpush.bf16.msra.mxu0 0
        %3219 = vmatpush.bf16.msra.mxu0 0
        %3220 = vmatpush.bf16.msra.mxu0 %v3161
        %3221 = vmatpush.bf16.msra.mxu0 %v3140
        %3222 = vmatmul.bf16.gmra.mxu0 %v1168
        %v3223 = vpop.f32.mrf.mxu0
        %v3224 = vadd.f32 0.0, %v3223
        %v3225 = vpop.f32.mrf.mxu0
        %v3226 = vadd.f32 0.0, %v3225
        %3227 = vmatmul.bf16.gmra.mxu0 %v1171
        %v3228 = vpop.f32.mrf.mxu0
        %v3229 = vadd.f32 0.0, %v3228
        %v3230 = vpop.f32.mrf.mxu0
        %v3231 = vadd.f32 0.0, %v3230
        %3232 = vmatmul.bf16.gmra.mxu0 %v1174
        %v3233 = vpop.f32.mrf.mxu0
        %v3234 = vadd.f32 0.0, %v3233
        %v3235 = vpop.f32.mrf.mxu0
        %v3236 = vadd.f32 0.0, %v3235
        %3237 = vmatmul.bf16.gmra.mxu0 %v1177
        %v3238 = vpop.f32.mrf.mxu0
        %v3239 = vadd.f32 0.0, %v3238
        %v3240 = vpop.f32.mrf.mxu0
        %v3241 = vadd.f32 0.0, %v3240
        %3242 = vmatmul.bf16.gmra.mxu0 %v1180
        %v3243 = vpop.f32.mrf.mxu0
        %v3244 = vadd.f32 0.0, %v3243
        %v3245 = vpop.f32.mrf.mxu0
        %v3246 = vadd.f32 0.0, %v3245
        %3247 = vmatmul.bf16.gmra.mxu0 %v2710
        %v3248 = vpop.f32.mrf.mxu0
        %v3249 = vadd.f32 0.0, %v3248
        %v3250 = vpop.f32.mrf.mxu0
        %v3251 = vadd.f32 0.0, %v3250
        %3252 = vdwg.mxu0
        %3253 = vmatpush.bf16.msra.mxu0 0
        %3254 = vmatpush.bf16.msra.mxu0 0
        %3255 = vmatpush.bf16.msra.mxu0 0
        %3256 = vmatpush.bf16.msra.mxu0 0
        %3257 = vmatpush.bf16.msra.mxu0 0
        %3258 = vmatpush.bf16.msra.mxu0 0
        %3259 = vmatpush.bf16.msra.mxu0 %v3164
        %3260 = vmatpush.bf16.msra.mxu0 %v3141
        %3261 = vmatmul.bf16.gmra.mxu0 %v1168
        %v3262 = vpop.f32.mrf.mxu0
        %v3263 = vadd.f32 0.0, %v3262
        %v3264 = vpop.f32.mrf.mxu0
        %v3265 = vadd.f32 0.0, %v3264
        %3266 = vmatmul.bf16.gmra.mxu0 %v1171
        %v3267 = vpop.f32.mrf.mxu0
        %v3268 = vadd.f32 0.0, %v3267
        %v3269 = vpop.f32.mrf.mxu0
        %v3270 = vadd.f32 0.0, %v3269
        %3271 = vmatmul.bf16.gmra.mxu0 %v1174
        %v3272 = vpop.f32.mrf.mxu0
        %v3273 = vadd.f32 0.0, %v3272
        %v3274 = vpop.f32.mrf.mxu0
        %v3275 = vadd.f32 0.0, %v3274
        %3276 = vmatmul.bf16.gmra.mxu0 %v1177
        %v3277 = vpop.f32.mrf.mxu0
        %v3278 = vadd.f32 0.0, %v3277
        %v3279 = vpop.f32.mrf.mxu0
        %v3280 = vadd.f32 0.0, %v3279
        %3281 = vmatmul.bf16.gmra.mxu0 %v1180
        %v3282 = vpop.f32.mrf.mxu0
        %v3283 = vadd.f32 0.0, %v3282
        %v3284 = vpop.f32.mrf.mxu0
        %v3285 = vadd.f32 0.0, %v3284
        %3286 = vmatmul.bf16.gmra.mxu0 %v2710
        %v3287 = vpop.f32.mrf.mxu0
        %v3288 = vadd.f32 0.0, %v3287
        %v3289 = vpop.f32.mrf.mxu0
        %v3290 = vadd.f32 0.0, %v3289
        %3291 = vdwg.mxu0
        %3292 = vmatpush.bf16.msra.mxu0 0
        %3293 = vmatpush.bf16.msra.mxu0 0
        %3294 = vmatpush.bf16.msra.mxu0 0
        %3295 = vmatpush.bf16.msra.mxu0 0
        %3296 = vmatpush.bf16.msra.mxu0 0
        %3297 = vmatpush.bf16.msra.mxu0 0
        %3298 = vmatpush.bf16.msra.mxu0 %v3167
        %3299 = vmatpush.bf16.msra.mxu0 %v3142
        %3300 = vmatmul.bf16.gmra.mxu0 %v1168
        %v3301 = vpop.f32.mrf.mxu0
        %v3302 = vadd.f32 0.0, %v3301
        %v3303 = vpop.f32.mrf.mxu0
        %v3304 = vadd.f32 0.0, %v3303
        %3305 = vmatmul.bf16.gmra.mxu0 %v1171
        %v3306 = vpop.f32.mrf.mxu0
        %v3307 = vadd.f32 0.0, %v3306
        %v3308 = vpop.f32.mrf.mxu0
        %v3309 = vadd.f32 0.0, %v3308
        %3310 = vmatmul.bf16.gmra.mxu0 %v1174
        %v3311 = vpop.f32.mrf.mxu0
        %v3312 = vadd.f32 0.0, %v3311
        %v3313 = vpop.f32.mrf.mxu0
        %v3314 = vadd.f32 0.0, %v3313
        %3315 = vmatmul.bf16.gmra.mxu0 %v1177
        %v3316 = vpop.f32.mrf.mxu0
        %v3317 = vadd.f32 0.0, %v3316
        %v3318 = vpop.f32.mrf.mxu0
        %v3319 = vadd.f32 0.0, %v3318
        %3320 = vmatmul.bf16.gmra.mxu0 %v1180
        %v3321 = vpop.f32.mrf.mxu0
        %v3322 = vadd.f32 0.0, %v3321
        %v3323 = vpop.f32.mrf.mxu0
        %v3324 = vadd.f32 0.0, %v3323
        %3325 = vmatmul.bf16.gmra.mxu0 %v2710
        %v3326 = vpop.f32.mrf.mxu0
        %v3327 = vadd.f32 0.0, %v3326
        %v3328 = vpop.f32.mrf.mxu0
        %v3329 = vadd.f32 0.0, %v3328
        %3330 = vdwg.mxu0
        %3331 = vmatpush.bf16.msra.mxu0 0
        %3332 = vmatpush.bf16.msra.mxu0 0
        %3333 = vmatpush.bf16.msra.mxu0 0
        %3334 = vmatpush.bf16.msra.mxu0 0
        %3335 = vmatpush.bf16.msra.mxu0 0
        %3336 = vmatpush.bf16.msra.mxu0 0
        %3337 = vmatpush.bf16.msra.mxu0 %v3170
        %3338 = vmatpush.bf16.msra.mxu0 %v3143
        %3339 = vmatmul.bf16.gmra.mxu0 %v1168
        %v3340 = vpop.f32.mrf.mxu0
        %v3341 = vadd.f32 0.0, %v3340
        %v3342 = vpop.f32.mrf.mxu0
        %v3343 = vadd.f32 0.0, %v3342
        %3344 = vmatmul.bf16.gmra.mxu0 %v1171
        %v3345 = vpop.f32.mrf.mxu0
        %v3346 = vadd.f32 0.0, %v3345
        %v3347 = vpop.f32.mrf.mxu0
        %v3348 = vadd.f32 0.0, %v3347
        %3349 = vmatmul.bf16.gmra.mxu0 %v1174
        %v3350 = vpop.f32.mrf.mxu0
        %v3351 = vadd.f32 0.0, %v3350
        %v3352 = vpop.f32.mrf.mxu0
        %v3353 = vadd.f32 0.0, %v3352
        %3354 = vmatmul.bf16.gmra.mxu0 %v1177
        %v3355 = vpop.f32.mrf.mxu0
        %v3356 = vadd.f32 0.0, %v3355
        %v3357 = vpop.f32.mrf.mxu0
        %v3358 = vadd.f32 0.0, %v3357
        %3359 = vmatmul.bf16.gmra.mxu0 %v1180
        %v3360 = vpop.f32.mrf.mxu0
        %v3361 = vadd.f32 0.0, %v3360
        %v3362 = vpop.f32.mrf.mxu0
        %v3363 = vadd.f32 0.0, %v3362
        %3364 = vmatmul.bf16.gmra.mxu0 %v2710
        %v3365 = vpop.f32.mrf.mxu0
        %v3366 = vadd.f32 0.0, %v3365
        %v3367 = vpop.f32.mrf.mxu0
        %v3368 = vadd.f32 0.0, %v3367
        %3369 = vdwg.mxu0
        %3370 = vmatpush.bf16.msra.mxu0 0
        %3371 = vmatpush.bf16.msra.mxu0 0
        %3372 = vmatpush.bf16.msra.mxu0 0
        %3373 = vmatpush.bf16.msra.mxu0 0
        %3374 = vmatpush.bf16.msra.mxu0 0
        %3375 = vmatpush.bf16.msra.mxu0 0
        %3376 = vmatpush.bf16.msra.mxu0 %v3173
        %3377 = vmatpush.bf16.msra.mxu0 %v3144
        %3378 = vmatmul.bf16.gmra.mxu0 %v1168
        %v3379 = vpop.f32.mrf.mxu0
        %v3380 = vadd.f32 0.0, %v3379
        %v3381 = vpop.f32.mrf.mxu0
        %v3382 = vadd.f32 0.0, %v3381
        %3383 = vmatmul.bf16.gmra.mxu0 %v1171
        %v3384 = vpop.f32.mrf.mxu0
        %v3385 = vadd.f32 0.0, %v3384
        %v3386 = vpop.f32.mrf.mxu0
        %v3387 = vadd.f32 0.0, %v3386
        %3388 = vmatmul.bf16.gmra.mxu0 %v1174
        %v3389 = vpop.f32.mrf.mxu0
        %v3390 = vadd.f32 0.0, %v3389
        %v3391 = vpop.f32.mrf.mxu0
        %v3392 = vadd.f32 0.0, %v3391
        %3393 = vmatmul.bf16.gmra.mxu0 %v1177
        %v3394 = vpop.f32.mrf.mxu0
        %v3395 = vadd.f32 0.0, %v3394
        %v3396 = vpop.f32.mrf.mxu0
        %v3397 = vadd.f32 0.0, %v3396
        %3398 = vmatmul.bf16.gmra.mxu0 %v1180
        %v3399 = vpop.f32.mrf.mxu0
        %v3400 = vadd.f32 0.0, %v3399
        %v3401 = vpop.f32.mrf.mxu0
        %v3402 = vadd.f32 0.0, %v3401
        %3403 = vmatmul.bf16.gmra.mxu0 %v2710
        %v3404 = vpop.f32.mrf.mxu0
        %v3405 = vadd.f32 0.0, %v3404
        %v3406 = vpop.f32.mrf.mxu0
        %v3407 = vadd.f32 0.0, %v3406
        %3408 = vdwg.mxu0
        %v3409 = vpack.c.bf16 %v488, %v487
        %v3411 = vsel %vm580, %v3409, 0
        %3413 = vmatpush.bf16.msra.mxu0 0
        %3414 = vmatpush.bf16.msra.mxu0 0
        %3415 = vmatpush.bf16.msra.mxu0 0
        %3416 = vmatpush.bf16.msra.mxu0 0
        %3417 = vmatpush.bf16.msra.mxu0 0
        %3418 = vmatpush.bf16.msra.mxu0 0
        %3419 = vmatpush.bf16.msra.mxu0 %v3158
        %3420 = vmatpush.bf16.msra.mxu0 %v3139
        %3421 = vmatmul.bf16.gmra.mxu0 %v585
        %v3422 = vpop.f32.mrf.mxu0
        %v3423 = vadd.f32 0.0, %v3422
        %v3424 = vpop.f32.mrf.mxu0
        %v3425 = vadd.f32 0.0, %v3424
        %3426 = vmatmul.bf16.gmra.mxu0 %v588
        %v3427 = vpop.f32.mrf.mxu0
        %v3428 = vadd.f32 0.0, %v3427
        %v3429 = vpop.f32.mrf.mxu0
        %v3430 = vadd.f32 0.0, %v3429
        %3431 = vmatmul.bf16.gmra.mxu0 %v591
        %v3432 = vpop.f32.mrf.mxu0
        %v3433 = vadd.f32 0.0, %v3432
        %v3434 = vpop.f32.mrf.mxu0
        %v3435 = vadd.f32 0.0, %v3434
        %3436 = vmatmul.bf16.gmra.mxu0 %v594
        %v3437 = vpop.f32.mrf.mxu0
        %v3438 = vadd.f32 0.0, %v3437
        %v3439 = vpop.f32.mrf.mxu0
        %v3440 = vadd.f32 0.0, %v3439
        %3441 = vmatmul.bf16.gmra.mxu0 %v597
        %v3442 = vpop.f32.mrf.mxu0
        %v3443 = vadd.f32 0.0, %v3442
        %v3444 = vpop.f32.mrf.mxu0
        %v3445 = vadd.f32 0.0, %v3444
        %3446 = vmatmul.bf16.gmra.mxu0 %v3411
        %v3447 = vpop.f32.mrf.mxu0
        %v3448 = vadd.f32 0.0, %v3447
        %v3449 = vpop.f32.mrf.mxu0
        %v3450 = vadd.f32 0.0, %v3449
        %3451 = vdwg.mxu0
        %3452 = vmatpush.bf16.msra.mxu0 0
        %3453 = vmatpush.bf16.msra.mxu0 0
        %3454 = vmatpush.bf16.msra.mxu0 0
        %3455 = vmatpush.bf16.msra.mxu0 0
        %3456 = vmatpush.bf16.msra.mxu0 0
        %3457 = vmatpush.bf16.msra.mxu0 0
        %3458 = vmatpush.bf16.msra.mxu0 %v3161
        %3459 = vmatpush.bf16.msra.mxu0 %v3140
        %3460 = vmatmul.bf16.gmra.mxu0 %v585
        %v3461 = vpop.f32.mrf.mxu0
        %v3462 = vadd.f32 0.0, %v3461
        %v3463 = vpop.f32.mrf.mxu0
        %v3464 = vadd.f32 0.0, %v3463
        %3465 = vmatmul.bf16.gmra.mxu0 %v588
        %v3466 = vpop.f32.mrf.mxu0
        %v3467 = vadd.f32 0.0, %v3466
        %v3468 = vpop.f32.mrf.mxu0
        %v3469 = vadd.f32 0.0, %v3468
        %3470 = vmatmul.bf16.gmra.mxu0 %v591
        %v3471 = vpop.f32.mrf.mxu0
        %v3472 = vadd.f32 0.0, %v3471
        %v3473 = vpop.f32.mrf.mxu0
        %v3474 = vadd.f32 0.0, %v3473
        %3475 = vmatmul.bf16.gmra.mxu0 %v594
        %v3476 = vpop.f32.mrf.mxu0
        %v3477 = vadd.f32 0.0, %v3476
        %v3478 = vpop.f32.mrf.mxu0
        %v3479 = vadd.f32 0.0, %v3478
        %3480 = vmatmul.bf16.gmra.mxu0 %v597
        %v3481 = vpop.f32.mrf.mxu0
        %v3482 = vadd.f32 0.0, %v3481
        %v3483 = vpop.f32.mrf.mxu0
        %v3484 = vadd.f32 0.0, %v3483
        %3485 = vmatmul.bf16.gmra.mxu0 %v3411
        %v3486 = vpop.f32.mrf.mxu0
        %v3487 = vadd.f32 0.0, %v3486
        %v3488 = vpop.f32.mrf.mxu0
        %v3489 = vadd.f32 0.0, %v3488
        %3490 = vdwg.mxu0
        %3491 = vmatpush.bf16.msra.mxu0 0
        %3492 = vmatpush.bf16.msra.mxu0 0
        %3493 = vmatpush.bf16.msra.mxu0 0
        %3494 = vmatpush.bf16.msra.mxu0 0
        %3495 = vmatpush.bf16.msra.mxu0 0
        %3496 = vmatpush.bf16.msra.mxu0 0
        %3497 = vmatpush.bf16.msra.mxu0 %v3164
        %3498 = vmatpush.bf16.msra.mxu0 %v3141
        %3499 = vmatmul.bf16.gmra.mxu0 %v585
        %v3500 = vpop.f32.mrf.mxu0
        %v3501 = vadd.f32 0.0, %v3500
        %v3502 = vpop.f32.mrf.mxu0
        %v3503 = vadd.f32 0.0, %v3502
        %3504 = vmatmul.bf16.gmra.mxu0 %v588
        %v3505 = vpop.f32.mrf.mxu0
        %v3506 = vadd.f32 0.0, %v3505
        %v3507 = vpop.f32.mrf.mxu0
        %v3508 = vadd.f32 0.0, %v3507
        %3509 = vmatmul.bf16.gmra.mxu0 %v591
        %v3510 = vpop.f32.mrf.mxu0
        %v3511 = vadd.f32 0.0, %v3510
        %v3512 = vpop.f32.mrf.mxu0
        %v3513 = vadd.f32 0.0, %v3512
        %3514 = vmatmul.bf16.gmra.mxu0 %v594
        %v3515 = vpop.f32.mrf.mxu0
        %v3516 = vadd.f32 0.0, %v3515
        %v3517 = vpop.f32.mrf.mxu0
        %v3518 = vadd.f32 0.0, %v3517
        %3519 = vmatmul.bf16.gmra.mxu0 %v597
        %v3520 = vpop.f32.mrf.mxu0
        %v3521 = vadd.f32 0.0, %v3520
        %v3522 = vpop.f32.mrf.mxu0
        %v3523 = vadd.f32 0.0, %v3522
        %3524 = vmatmul.bf16.gmra.mxu0 %v3411
        %v3525 = vpop.f32.mrf.mxu0
        %v3526 = vadd.f32 0.0, %v3525
        %v3527 = vpop.f32.mrf.mxu0
        %v3528 = vadd.f32 0.0, %v3527
        %3529 = vdwg.mxu0
        %3530 = vmatpush.bf16.msra.mxu0 0
        %3531 = vmatpush.bf16.msra.mxu0 0
        %3532 = vmatpush.bf16.msra.mxu0 0
        %3533 = vmatpush.bf16.msra.mxu0 0
        %3534 = vmatpush.bf16.msra.mxu0 0
        %3535 = vmatpush.bf16.msra.mxu0 0
        %3536 = vmatpush.bf16.msra.mxu0 %v3167
        %3537 = vmatpush.bf16.msra.mxu0 %v3142
        %3538 = vmatmul.bf16.gmra.mxu0 %v585
        %v3539 = vpop.f32.mrf.mxu0
        %v3540 = vadd.f32 0.0, %v3539
        %v3541 = vpop.f32.mrf.mxu0
        %v3542 = vadd.f32 0.0, %v3541
        %3543 = vmatmul.bf16.gmra.mxu0 %v588
        %v3544 = vpop.f32.mrf.mxu0
        %v3545 = vadd.f32 0.0, %v3544
        %v3546 = vpop.f32.mrf.mxu0
        %v3547 = vadd.f32 0.0, %v3546
        %3548 = vmatmul.bf16.gmra.mxu0 %v591
        %v3549 = vpop.f32.mrf.mxu0
        %v3550 = vadd.f32 0.0, %v3549
        %v3551 = vpop.f32.mrf.mxu0
        %v3552 = vadd.f32 0.0, %v3551
        %3553 = vmatmul.bf16.gmra.mxu0 %v594
        %v3554 = vpop.f32.mrf.mxu0
        %v3555 = vadd.f32 0.0, %v3554
        %v3556 = vpop.f32.mrf.mxu0
        %v3557 = vadd.f32 0.0, %v3556
        %3558 = vmatmul.bf16.gmra.mxu0 %v597
        %v3559 = vpop.f32.mrf.mxu0
        %v3560 = vadd.f32 0.0, %v3559
        %v3561 = vpop.f32.mrf.mxu0
        %v3562 = vadd.f32 0.0, %v3561
        %3563 = vmatmul.bf16.gmra.mxu0 %v3411
        %v3564 = vpop.f32.mrf.mxu0
        %v3565 = vadd.f32 0.0, %v3564
        %v3566 = vpop.f32.mrf.mxu0
        %v3567 = vadd.f32 0.0, %v3566
        %3568 = vdwg.mxu0
        %3569 = vmatpush.bf16.msra.mxu0 0
        %3570 = vmatpush.bf16.msra.mxu0 0
        %3571 = vmatpush.bf16.msra.mxu0 0
        %3572 = vmatpush.bf16.msra.mxu0 0
        %3573 = vmatpush.bf16.msra.mxu0 0
        %3574 = vmatpush.bf16.msra.mxu0 0
        %3575 = vmatpush.bf16.msra.mxu0 %v3170
        %3576 = vmatpush.bf16.msra.mxu0 %v3143
        %3577 = vmatmul.bf16.gmra.mxu0 %v585
        %v3578 = vpop.f32.mrf.mxu0
        %v3579 = vadd.f32 0.0, %v3578
        %v3580 = vpop.f32.mrf.mxu0
        %v3581 = vadd.f32 0.0, %v3580
        %3582 = vmatmul.bf16.gmra.mxu0 %v588
        %v3583 = vpop.f32.mrf.mxu0
        %v3584 = vadd.f32 0.0, %v3583
        %v3585 = vpop.f32.mrf.mxu0
        %v3586 = vadd.f32 0.0, %v3585
        %3587 = vmatmul.bf16.gmra.mxu0 %v591
        %v3588 = vpop.f32.mrf.mxu0
        %v3589 = vadd.f32 0.0, %v3588
        %v3590 = vpop.f32.mrf.mxu0
        %v3591 = vadd.f32 0.0, %v3590
        %3592 = vmatmul.bf16.gmra.mxu0 %v594
        %v3593 = vpop.f32.mrf.mxu0
        %v3594 = vadd.f32 0.0, %v3593
        %v3595 = vpop.f32.mrf.mxu0
        %v3596 = vadd.f32 0.0, %v3595
        %3597 = vmatmul.bf16.gmra.mxu0 %v597
        %v3598 = vpop.f32.mrf.mxu0
        %v3599 = vadd.f32 0.0, %v3598
        %v3600 = vpop.f32.mrf.mxu0
        %v3601 = vadd.f32 0.0, %v3600
        %3602 = vmatmul.bf16.gmra.mxu0 %v3411
        %v3603 = vpop.f32.mrf.mxu0
        %v3604 = vadd.f32 0.0, %v3603
        %v3605 = vpop.f32.mrf.mxu0
        %v3606 = vadd.f32 0.0, %v3605
        %3607 = vdwg.mxu0
        %3608 = vmatpush.bf16.msra.mxu0 0
        %3609 = vmatpush.bf16.msra.mxu0 0
        %3610 = vmatpush.bf16.msra.mxu0 0
        %3611 = vmatpush.bf16.msra.mxu0 0
        %3612 = vmatpush.bf16.msra.mxu0 0
        %3613 = vmatpush.bf16.msra.mxu0 0
        %3614 = vmatpush.bf16.msra.mxu0 %v3173
        %3615 = vmatpush.bf16.msra.mxu0 %v3144
        %3616 = vmatmul.bf16.gmra.mxu0 %v585
        %v3617 = vpop.f32.mrf.mxu0
        %v3618 = vadd.f32 0.0, %v3617
        %v3619 = vpop.f32.mrf.mxu0
        %v3620 = vadd.f32 0.0, %v3619
        %3621 = vmatmul.bf16.gmra.mxu0 %v588
        %v3622 = vpop.f32.mrf.mxu0
        %v3623 = vadd.f32 0.0, %v3622
        %v3624 = vpop.f32.mrf.mxu0
        %v3625 = vadd.f32 0.0, %v3624
        %3626 = vmatmul.bf16.gmra.mxu0 %v591
        %v3627 = vpop.f32.mrf.mxu0
        %v3628 = vadd.f32 0.0, %v3627
        %v3629 = vpop.f32.mrf.mxu0
        %v3630 = vadd.f32 0.0, %v3629
        %3631 = vmatmul.bf16.gmra.mxu0 %v594
        %v3632 = vpop.f32.mrf.mxu0
        %v3633 = vadd.f32 0.0, %v3632
        %v3634 = vpop.f32.mrf.mxu0
        %v3635 = vadd.f32 0.0, %v3634
        %3636 = vmatmul.bf16.gmra.mxu0 %v597
        %v3637 = vpop.f32.mrf.mxu0
        %v3638 = vadd.f32 0.0, %v3637
        %v3639 = vpop.f32.mrf.mxu0
        %v3640 = vadd.f32 0.0, %v3639
        %3641 = vmatmul.bf16.gmra.mxu0 %v3411
        %v3642 = vpop.f32.mrf.mxu0
        %v3643 = vadd.f32 0.0, %v3642
        %v3644 = vpop.f32.mrf.mxu0
        %v3645 = vadd.f32 0.0, %v3644
        %3646 = vdwg.mxu0
        %v3647 = vadd.f32 %v2946, %v3185
        %v3648 = vadd.f32 %v2947, %v3224
        %v3649 = vadd.f32 %v2948, %v3263
        %v3650 = vadd.f32 %v2949, %v3302
        %v3651 = vadd.f32 %v2950, %v3341
        %v3652 = vadd.f32 %v2951, %v3380
        %v3653 = vadd.f32 %v2952, %v3187
        %v3654 = vadd.f32 %v2953, %v3226
        %v3655 = vadd.f32 %v2954, %v3265
        %v3656 = vadd.f32 %v2955, %v3304
        %v3657 = vadd.f32 %v2956, %v3343
        %v3658 = vadd.f32 %v2957, %v3382
        %v3659 = vadd.f32 %v2958, %v3190
        %v3660 = vadd.f32 %v2959, %v3229
        %v3661 = vadd.f32 %v2960, %v3268
        %v3662 = vadd.f32 %v2961, %v3307
        %v3663 = vadd.f32 %v2962, %v3346
        %v3664 = vadd.f32 %v2963, %v3385
        %v3665 = vadd.f32 %v2964, %v3192
        %v3666 = vadd.f32 %v2965, %v3231
        %v3667 = vadd.f32 %v2966, %v3270
        %v3668 = vadd.f32 %v2967, %v3309
        %v3669 = vadd.f32 %v2968, %v3348
        %v3670 = vadd.f32 %v2969, %v3387
        %v3671 = vadd.f32 %v2970, %v3195
        %v3672 = vadd.f32 %v2971, %v3234
        %v3673 = vadd.f32 %v2972, %v3273
        %v3674 = vadd.f32 %v2973, %v3312
        %v3675 = vadd.f32 %v2974, %v3351
        %v3676 = vadd.f32 %v2975, %v3390
        %v3677 = vadd.f32 %v2976, %v3197
        %v3678 = vadd.f32 %v2977, %v3236
        %v3679 = vadd.f32 %v2978, %v3275
        %v3680 = vadd.f32 %v2979, %v3314
        %v3681 = vadd.f32 %v2980, %v3353
        %v3682 = vadd.f32 %v2981, %v3392
        %v3683 = vadd.f32 %v2982, %v3200
        %v3684 = vadd.f32 %v2983, %v3239
        %v3685 = vadd.f32 %v2984, %v3278
        %v3686 = vadd.f32 %v2985, %v3317
        %v3687 = vadd.f32 %v2986, %v3356
        %v3688 = vadd.f32 %v2987, %v3395
        %v3689 = vadd.f32 %v2988, %v3202
        %v3690 = vadd.f32 %v2989, %v3241
        %v3691 = vadd.f32 %v2990, %v3280
        %v3692 = vadd.f32 %v2991, %v3319
        %v3693 = vadd.f32 %v2992, %v3358
        %v3694 = vadd.f32 %v2993, %v3397
        %v3695 = vadd.f32 %v2994, %v3205
        %v3696 = vadd.f32 %v2995, %v3244
        %v3697 = vadd.f32 %v2996, %v3283
        %v3698 = vadd.f32 %v2997, %v3322
        %v3699 = vadd.f32 %v2998, %v3361
        %v3700 = vadd.f32 %v2999, %v3400
        %v3701 = vadd.f32 %v3000, %v3207
        %v3702 = vadd.f32 %v3001, %v3246
        %v3703 = vadd.f32 %v3002, %v3285
        %v3704 = vadd.f32 %v3003, %v3324
        %v3705 = vadd.f32 %v3004, %v3363
        %v3706 = vadd.f32 %v3005, %v3402
        %v3707 = vadd.f32 %v3006, %v3210
        %v3708 = vadd.f32 %v3007, %v3249
        %v3709 = vadd.f32 %v3008, %v3288
        %v3710 = vadd.f32 %v3009, %v3327
        %v3711 = vadd.f32 %v3010, %v3366
        %v3712 = vadd.f32 %v3011, %v3405
        %v3713 = vadd.f32 %v3012, %v3212
        %v3714 = vadd.f32 %v3013, %v3251
        %v3715 = vadd.f32 %v3014, %v3290
        %v3716 = vadd.f32 %v3015, %v3329
        %v3717 = vadd.f32 %v3016, %v3368
        %v3718 = vadd.f32 %v3017, %v3407
        %v3719 = vadd.f32 %v3018, %v3423
        %v3720 = vadd.f32 %v3019, %v3462
        %v3721 = vadd.f32 %v3020, %v3501
        %v3722 = vadd.f32 %v3021, %v3540
        %v3723 = vadd.f32 %v3022, %v3579
        %v3724 = vadd.f32 %v3023, %v3618
        %v3725 = vadd.f32 %v3024, %v3425
        %v3726 = vadd.f32 %v3025, %v3464
        %v3727 = vadd.f32 %v3026, %v3503
        %v3728 = vadd.f32 %v3027, %v3542
        %v3729 = vadd.f32 %v3028, %v3581
        %v3730 = vadd.f32 %v3029, %v3620
        %v3731 = vadd.f32 %v3030, %v3428
        %v3732 = vadd.f32 %v3031, %v3467
        %v3733 = vadd.f32 %v3032, %v3506
        %v3734 = vadd.f32 %v3033, %v3545
        %v3735 = vadd.f32 %v3034, %v3584
        %v3736 = vadd.f32 %v3035, %v3623
        %v3737 = vadd.f32 %v3036, %v3430
        %v3738 = vadd.f32 %v3037, %v3469
        %v3739 = vadd.f32 %v3038, %v3508
        %v3740 = vadd.f32 %v3039, %v3547
        %v3741 = vadd.f32 %v3040, %v3586
        %v3742 = vadd.f32 %v3041, %v3625
        %v3743 = vadd.f32 %v3042, %v3433
        %v3744 = vadd.f32 %v3043, %v3472
        %v3745 = vadd.f32 %v3044, %v3511
        %v3746 = vadd.f32 %v3045, %v3550
        %v3747 = vadd.f32 %v3046, %v3589
        %v3748 = vadd.f32 %v3047, %v3628
        %v3749 = vadd.f32 %v3048, %v3435
        %v3750 = vadd.f32 %v3049, %v3474
        %v3751 = vadd.f32 %v3050, %v3513
        %v3752 = vadd.f32 %v3051, %v3552
        %v3753 = vadd.f32 %v3052, %v3591
        %v3754 = vadd.f32 %v3053, %v3630
        %v3755 = vadd.f32 %v3054, %v3438
        %v3756 = vadd.f32 %v3055, %v3477
        %v3757 = vadd.f32 %v3056, %v3516
        %v3758 = vadd.f32 %v3057, %v3555
        %v3759 = vadd.f32 %v3058, %v3594
        %v3760 = vadd.f32 %v3059, %v3633
        %v3761 = vadd.f32 %v3060, %v3440
        %v3762 = vadd.f32 %v3061, %v3479
        %v3763 = vadd.f32 %v3062, %v3518
        %v3764 = vadd.f32 %v3063, %v3557
        %v3765 = vadd.f32 %v3064, %v3596
        %v3766 = vadd.f32 %v3065, %v3635
        %v3767 = vadd.f32 %v3066, %v3443
        %v3768 = vadd.f32 %v3067, %v3482
        %v3769 = vadd.f32 %v3068, %v3521
        %v3770 = vadd.f32 %v3069, %v3560
        %v3771 = vadd.f32 %v3070, %v3599
        %v3772 = vadd.f32 %v3071, %v3638
        %v3773 = vadd.f32 %v3072, %v3445
        %v3774 = vadd.f32 %v3073, %v3484
        %v3775 = vadd.f32 %v3074, %v3523
        %v3776 = vadd.f32 %v3075, %v3562
        %v3777 = vadd.f32 %v3076, %v3601
        %v3778 = vadd.f32 %v3077, %v3640
        %v3779 = vadd.f32 %v3078, %v3448
        %v3780 = vadd.f32 %v3079, %v3487
        %v3781 = vadd.f32 %v3080, %v3526
        %v3782 = vadd.f32 %v3081, %v3565
        %v3783 = vadd.f32 %v3082, %v3604
        %v3784 = vadd.f32 %v3083, %v3643
        %v3785 = vadd.f32 %v3084, %v3450
        %v3786 = vadd.f32 %v3085, %v3489
        %v3787 = vadd.f32 %v3086, %v3528
        %v3788 = vadd.f32 %v3087, %v3567
        %v3789 = vadd.f32 %v3088, %v3606
        %v3790 = vadd.f32 %v3089, %v3645
        %v3791 = vld [vmem:[#allocation4] sm:$0x3f]
        %v3793 = vperm.slane %v3791, 0
        %v3794 = vperm.slane %v3791, 1
        %v3795 = vperm.slane %v3791, 2
        %v3796 = vperm.slane %v3791, 3
        %v3797 = vperm.slane %v3791, 4
        %v3798 = vperm.slane %v3791, 5
        %v3805 = vadd.f32 %v3647, %v3793
        %v3806 = vadd.f32 %v3648, %v3794
        %v3807 = vadd.f32 %v3649, %v3795
        %v3808 = vadd.f32 %v3650, %v3796
        %v3809 = vadd.f32 %v3651, %v3797
        %v3810 = vadd.f32 %v3652, %v3798
        %v3811 = vadd.f32 %v3653, %v3793
        %v3812 = vadd.f32 %v3654, %v3794
        %v3813 = vadd.f32 %v3655, %v3795
        %v3814 = vadd.f32 %v3656, %v3796
        %v3815 = vadd.f32 %v3657, %v3797
        %v3816 = vadd.f32 %v3658, %v3798
        %v3817 = vadd.f32 %v3659, %v3793
        %v3818 = vadd.f32 %v3660, %v3794
        %v3819 = vadd.f32 %v3661, %v3795
        %v3820 = vadd.f32 %v3662, %v3796
        %v3821 = vadd.f32 %v3663, %v3797
        %v3822 = vadd.f32 %v3664, %v3798
        %v3823 = vadd.f32 %v3665, %v3793
        %v3824 = vadd.f32 %v3666, %v3794
        %v3825 = vadd.f32 %v3667, %v3795
        %v3826 = vadd.f32 %v3668, %v3796
        %v3827 = vadd.f32 %v3669, %v3797
        %v3828 = vadd.f32 %v3670, %v3798
        %v3829 = vadd.f32 %v3671, %v3793
        %v3830 = vadd.f32 %v3672, %v3794
        %v3831 = vadd.f32 %v3673, %v3795
        %v3832 = vadd.f32 %v3674, %v3796
        %v3833 = vadd.f32 %v3675, %v3797
        %v3834 = vadd.f32 %v3676, %v3798
        %v3835 = vadd.f32 %v3677, %v3793
        %v3836 = vadd.f32 %v3678, %v3794
        %v3837 = vadd.f32 %v3679, %v3795
        %v3838 = vadd.f32 %v3680, %v3796
        %v3839 = vadd.f32 %v3681, %v3797
        %v3840 = vadd.f32 %v3682, %v3798
        %v3841 = vadd.f32 %v3683, %v3793
        %v3842 = vadd.f32 %v3684, %v3794
        %v3843 = vadd.f32 %v3685, %v3795
        %v3844 = vadd.f32 %v3686, %v3796
        %v3845 = vadd.f32 %v3687, %v3797
        %v3846 = vadd.f32 %v3688, %v3798
        %v3847 = vadd.f32 %v3689, %v3793
        %v3848 = vadd.f32 %v3690, %v3794
        %v3849 = vadd.f32 %v3691, %v3795
        %v3850 = vadd.f32 %v3692, %v3796
        %v3851 = vadd.f32 %v3693, %v3797
        %v3852 = vadd.f32 %v3694, %v3798
        %v3853 = vadd.f32 %v3695, %v3793
        %v3854 = vadd.f32 %v3696, %v3794
        %v3855 = vadd.f32 %v3697, %v3795
        %v3856 = vadd.f32 %v3698, %v3796
        %v3857 = vadd.f32 %v3699, %v3797
        %v3858 = vadd.f32 %v3700, %v3798
        %v3859 = vadd.f32 %v3701, %v3793
        %v3860 = vadd.f32 %v3702, %v3794
        %v3861 = vadd.f32 %v3703, %v3795
        %v3862 = vadd.f32 %v3704, %v3796
        %v3863 = vadd.f32 %v3705, %v3797
        %v3864 = vadd.f32 %v3706, %v3798
        %v3865 = vadd.f32 %v3707, %v3793
        %v3866 = vadd.f32 %v3708, %v3794
        %v3867 = vadd.f32 %v3709, %v3795
        %v3868 = vadd.f32 %v3710, %v3796
        %v3869 = vadd.f32 %v3711, %v3797
        %v3870 = vadd.f32 %v3712, %v3798
        %v3871 = vadd.f32 %v3713, %v3793
        %v3872 = vadd.f32 %v3714, %v3794
        %v3873 = vadd.f32 %v3715, %v3795
        %v3874 = vadd.f32 %v3716, %v3796
        %v3875 = vadd.f32 %v3717, %v3797
        %v3876 = vadd.f32 %v3718, %v3798
        %v3877 = vmax.f32 %v3805, 0.0
        %v3878 = vmax.f32 %v3806, 0.0
        %v3879 = vmax.f32 %v3807, 0.0
        %v3880 = vmax.f32 %v3808, 0.0
        %v3881 = vmax.f32 %v3809, 0.0
        %v3882 = vmax.f32 %v3810, 0.0
        %v3883 = vmax.f32 %v3811, 0.0
        %v3884 = vmax.f32 %v3812, 0.0
        %v3885 = vmax.f32 %v3813, 0.0
        %v3886 = vmax.f32 %v3814, 0.0
        %v3887 = vmax.f32 %v3815, 0.0
        %v3888 = vmax.f32 %v3816, 0.0
        %v3889 = vmax.f32 %v3817, 0.0
        %v3890 = vmax.f32 %v3818, 0.0
        %v3891 = vmax.f32 %v3819, 0.0
        %v3892 = vmax.f32 %v3820, 0.0
        %v3893 = vmax.f32 %v3821, 0.0
        %v3894 = vmax.f32 %v3822, 0.0
        %v3895 = vmax.f32 %v3823, 0.0
        %v3896 = vmax.f32 %v3824, 0.0
        %v3897 = vmax.f32 %v3825, 0.0
        %v3898 = vmax.f32 %v3826, 0.0
        %v3899 = vmax.f32 %v3827, 0.0
        %v3900 = vmax.f32 %v3828, 0.0
        %v3901 = vmax.f32 %v3829, 0.0
        %v3902 = vmax.f32 %v3830, 0.0
        %v3903 = vmax.f32 %v3831, 0.0
        %v3904 = vmax.f32 %v3832, 0.0
        %v3905 = vmax.f32 %v3833, 0.0
        %v3906 = vmax.f32 %v3834, 0.0
        %v3907 = vmax.f32 %v3835, 0.0
        %v3908 = vmax.f32 %v3836, 0.0
        %v3909 = vmax.f32 %v3837, 0.0
        %v3910 = vmax.f32 %v3838, 0.0
        %v3911 = vmax.f32 %v3839, 0.0
        %v3912 = vmax.f32 %v3840, 0.0
        %v3913 = vmax.f32 %v3841, 0.0
        %v3914 = vmax.f32 %v3842, 0.0
        %v3915 = vmax.f32 %v3843, 0.0
        %v3916 = vmax.f32 %v3844, 0.0
        %v3917 = vmax.f32 %v3845, 0.0
        %v3918 = vmax.f32 %v3846, 0.0
        %v3919 = vmax.f32 %v3847, 0.0
        %v3920 = vmax.f32 %v3848, 0.0
        %v3921 = vmax.f32 %v3849, 0.0
        %v3922 = vmax.f32 %v3850, 0.0
        %v3923 = vmax.f32 %v3851, 0.0
        %v3924 = vmax.f32 %v3852, 0.0
        %v3925 = vmax.f32 %v3853, 0.0
        %v3926 = vmax.f32 %v3854, 0.0
        %v3927 = vmax.f32 %v3855, 0.0
        %v3928 = vmax.f32 %v3856, 0.0
        %v3929 = vmax.f32 %v3857, 0.0
        %v3930 = vmax.f32 %v3858, 0.0
        %v3931 = vmax.f32 %v3859, 0.0
        %v3932 = vmax.f32 %v3860, 0.0
        %v3933 = vmax.f32 %v3861, 0.0
        %v3934 = vmax.f32 %v3862, 0.0
        %v3935 = vmax.f32 %v3863, 0.0
        %v3936 = vmax.f32 %v3864, 0.0
        %v3937 = vmax.f32 %v3865, 0.0
        %v3938 = vmax.f32 %v3866, 0.0
        %v3939 = vmax.f32 %v3867, 0.0
        %v3940 = vmax.f32 %v3868, 0.0
        %v3941 = vmax.f32 %v3869, 0.0
        %v3942 = vmax.f32 %v3870, 0.0
        %v3943 = vmax.f32 %v3871, 0.0
        %v3944 = vmax.f32 %v3872, 0.0
        %v3945 = vmax.f32 %v3873, 0.0
        %v3946 = vmax.f32 %v3874, 0.0
        %v3947 = vmax.f32 %v3875, 0.0
        %v3948 = vmax.f32 %v3876, 0.0
        %v3949 = vadd.f32 %v3719, %v3793
        %v3950 = vadd.f32 %v3720, %v3794
        %v3951 = vadd.f32 %v3721, %v3795
        %v3952 = vadd.f32 %v3722, %v3796
        %v3953 = vadd.f32 %v3723, %v3797
        %v3954 = vadd.f32 %v3724, %v3798
        %v3955 = vadd.f32 %v3725, %v3793
        %v3956 = vadd.f32 %v3726, %v3794
        %v3957 = vadd.f32 %v3727, %v3795
        %v3958 = vadd.f32 %v3728, %v3796
        %v3959 = vadd.f32 %v3729, %v3797
        %v3960 = vadd.f32 %v3730, %v3798
        %v3961 = vadd.f32 %v3731, %v3793
        %v3962 = vadd.f32 %v3732, %v3794
        %v3963 = vadd.f32 %v3733, %v3795
        %v3964 = vadd.f32 %v3734, %v3796
        %v3965 = vadd.f32 %v3735, %v3797
        %v3966 = vadd.f32 %v3736, %v3798
        %v3967 = vadd.f32 %v3737, %v3793
        %v3968 = vadd.f32 %v3738, %v3794
        %v3969 = vadd.f32 %v3739, %v3795
        %v3970 = vadd.f32 %v3740, %v3796
        %v3971 = vadd.f32 %v3741, %v3797
        %v3972 = vadd.f32 %v3742, %v3798
        %v3973 = vadd.f32 %v3743, %v3793
        %v3974 = vadd.f32 %v3744, %v3794
        %v3975 = vadd.f32 %v3745, %v3795
        %v3976 = vadd.f32 %v3746, %v3796
        %v3977 = vadd.f32 %v3747, %v3797
        %v3978 = vadd.f32 %v3748, %v3798
        %v3979 = vadd.f32 %v3749, %v3793
        %v3980 = vadd.f32 %v3750, %v3794
        %v3981 = vadd.f32 %v3751, %v3795
        %v3982 = vadd.f32 %v3752, %v3796
        %v3983 = vadd.f32 %v3753, %v3797
        %v3984 = vadd.f32 %v3754, %v3798
        %v3985 = vadd.f32 %v3755, %v3793
        %v3986 = vadd.f32 %v3756, %v3794
        %v3987 = vadd.f32 %v3757, %v3795
        %v3988 = vadd.f32 %v3758, %v3796
        %v3989 = vadd.f32 %v3759, %v3797
        %v3990 = vadd.f32 %v3760, %v3798
        %v3991 = vadd.f32 %v3761, %v3793
        %v3992 = vadd.f32 %v3762, %v3794
        %v3993 = vadd.f32 %v3763, %v3795
        %v3994 = vadd.f32 %v3764, %v3796
        %v3995 = vadd.f32 %v3765, %v3797
        %v3996 = vadd.f32 %v3766, %v3798
        %v3997 = vadd.f32 %v3767, %v3793
        %v3998 = vadd.f32 %v3768, %v3794
        %v3999 = vadd.f32 %v3769, %v3795
        %v4000 = vadd.f32 %v3770, %v3796
        %v4001 = vadd.f32 %v3771, %v3797
        %v4002 = vadd.f32 %v3772, %v3798
        %v4003 = vadd.f32 %v3773, %v3793
        %v4004 = vadd.f32 %v3774, %v3794
        %v4005 = vadd.f32 %v3775, %v3795
        %v4006 = vadd.f32 %v3776, %v3796
        %v4007 = vadd.f32 %v3777, %v3797
        %v4008 = vadd.f32 %v3778, %v3798
        %v4009 = vadd.f32 %v3779, %v3793
        %v4010 = vadd.f32 %v3780, %v3794
        %v4011 = vadd.f32 %v3781, %v3795
        %v4012 = vadd.f32 %v3782, %v3796
        %v4013 = vadd.f32 %v3783, %v3797
        %v4014 = vadd.f32 %v3784, %v3798
        %v4015 = vadd.f32 %v3785, %v3793
        %v4016 = vadd.f32 %v3786, %v3794
        %v4017 = vadd.f32 %v3787, %v3795
        %v4018 = vadd.f32 %v3788, %v3796
        %v4019 = vadd.f32 %v3789, %v3797
        %v4020 = vadd.f32 %v3790, %v3798
        %v4021 = vmax.f32 %v3949, 0.0
        %v4022 = vmax.f32 %v3950, 0.0
        %v4023 = vmax.f32 %v3951, 0.0
        %v4024 = vmax.f32 %v3952, 0.0
        %v4025 = vmax.f32 %v3953, 0.0
        %v4026 = vmax.f32 %v3954, 0.0
        %v4027 = vmax.f32 %v3955, 0.0
        %v4028 = vmax.f32 %v3956, 0.0
        %v4029 = vmax.f32 %v3957, 0.0
        %v4030 = vmax.f32 %v3958, 0.0
        %v4031 = vmax.f32 %v3959, 0.0
        %v4032 = vmax.f32 %v3960, 0.0
        %v4033 = vmax.f32 %v3961, 0.0
        %v4034 = vmax.f32 %v3962, 0.0
        %v4035 = vmax.f32 %v3963, 0.0
        %v4036 = vmax.f32 %v3964, 0.0
        %v4037 = vmax.f32 %v3965, 0.0
        %v4038 = vmax.f32 %v3966, 0.0
        %v4039 = vmax.f32 %v3967, 0.0
        %v4040 = vmax.f32 %v3968, 0.0
        %v4041 = vmax.f32 %v3969, 0.0
        %v4042 = vmax.f32 %v3970, 0.0
        %v4043 = vmax.f32 %v3971, 0.0
        %v4044 = vmax.f32 %v3972, 0.0
        %v4045 = vmax.f32 %v3973, 0.0
        %v4046 = vmax.f32 %v3974, 0.0
        %v4047 = vmax.f32 %v3975, 0.0
        %v4048 = vmax.f32 %v3976, 0.0
        %v4049 = vmax.f32 %v3977, 0.0
        %v4050 = vmax.f32 %v3978, 0.0
        %v4051 = vmax.f32 %v3979, 0.0
        %v4052 = vmax.f32 %v3980, 0.0
        %v4053 = vmax.f32 %v3981, 0.0
        %v4054 = vmax.f32 %v3982, 0.0
        %v4055 = vmax.f32 %v3983, 0.0
        %v4056 = vmax.f32 %v3984, 0.0
        %v4057 = vmax.f32 %v3985, 0.0
        %v4058 = vmax.f32 %v3986, 0.0
        %v4059 = vmax.f32 %v3987, 0.0
        %v4060 = vmax.f32 %v3988, 0.0
        %v4061 = vmax.f32 %v3989, 0.0
        %v4062 = vmax.f32 %v3990, 0.0
        %v4063 = vmax.f32 %v3991, 0.0
        %v4064 = vmax.f32 %v3992, 0.0
        %v4065 = vmax.f32 %v3993, 0.0
        %v4066 = vmax.f32 %v3994, 0.0
        %v4067 = vmax.f32 %v3995, 0.0
        %v4068 = vmax.f32 %v3996, 0.0
        %v4069 = vmax.f32 %v3997, 0.0
        %v4070 = vmax.f32 %v3998, 0.0
        %v4071 = vmax.f32 %v3999, 0.0
        %v4072 = vmax.f32 %v4000, 0.0
        %v4073 = vmax.f32 %v4001, 0.0
        %v4074 = vmax.f32 %v4002, 0.0
        %v4075 = vmax.f32 %v4003, 0.0
        %v4076 = vmax.f32 %v4004, 0.0
        %v4077 = vmax.f32 %v4005, 0.0
        %v4078 = vmax.f32 %v4006, 0.0
        %v4079 = vmax.f32 %v4007, 0.0
        %v4080 = vmax.f32 %v4008, 0.0
        %v4081 = vmax.f32 %v4009, 0.0
        %v4082 = vmax.f32 %v4010, 0.0
        %v4083 = vmax.f32 %v4011, 0.0
        %v4084 = vmax.f32 %v4012, 0.0
        %v4085 = vmax.f32 %v4013, 0.0
        %v4086 = vmax.f32 %v4014, 0.0
        %v4087 = vmax.f32 %v4015, 0.0
        %v4088 = vmax.f32 %v4016, 0.0
        %v4089 = vmax.f32 %v4017, 0.0
        %v4090 = vmax.f32 %v4018, 0.0
        %v4091 = vmax.f32 %v4019, 0.0
        %v4092 = vmax.f32 %v4020, 0.0
        %v4093 = vadd.f32 %v3877, %v4021
        %v4094 = vadd.f32 %v3878, %v4022
        %v4095 = vadd.f32 %v3879, %v4023
        %v4096 = vadd.f32 %v3880, %v4024
        %v4097 = vadd.f32 %v3881, %v4025
        %v4098 = vadd.f32 %v3882, %v4026
        %v4099 = vadd.f32 %v3883, %v4027
        %v4100 = vadd.f32 %v3884, %v4028
        %v4101 = vadd.f32 %v3885, %v4029
        %v4102 = vadd.f32 %v3886, %v4030
        %v4103 = vadd.f32 %v3887, %v4031
        %v4104 = vadd.f32 %v3888, %v4032
        %v4105 = vadd.f32 %v3889, %v4033
        %v4106 = vadd.f32 %v3890, %v4034
        %v4107 = vadd.f32 %v3891, %v4035
        %v4108 = vadd.f32 %v3892, %v4036
        %v4109 = vadd.f32 %v3893, %v4037
        %v4110 = vadd.f32 %v3894, %v4038
        %v4111 = vadd.f32 %v3895, %v4039
        %v4112 = vadd.f32 %v3896, %v4040
        %v4113 = vadd.f32 %v3897, %v4041
        %v4114 = vadd.f32 %v3898, %v4042
        %v4115 = vadd.f32 %v3899, %v4043
        %v4116 = vadd.f32 %v3900, %v4044
        %v4117 = vadd.f32 %v3901, %v4045
        %v4118 = vadd.f32 %v3902, %v4046
        %v4119 = vadd.f32 %v3903, %v4047
        %v4120 = vadd.f32 %v3904, %v4048
        %v4121 = vadd.f32 %v3905, %v4049
        %v4122 = vadd.f32 %v3906, %v4050
        %v4123 = vadd.f32 %v3907, %v4051
        %v4124 = vadd.f32 %v3908, %v4052
        %v4125 = vadd.f32 %v3909, %v4053
        %v4126 = vadd.f32 %v3910, %v4054
        %v4127 = vadd.f32 %v3911, %v4055
        %v4128 = vadd.f32 %v3912, %v4056
        %v4129 = vadd.f32 %v3913, %v4057
        %v4130 = vadd.f32 %v3914, %v4058
        %v4131 = vadd.f32 %v3915, %v4059
        %v4132 = vadd.f32 %v3916, %v4060
        %v4133 = vadd.f32 %v3917, %v4061
        %v4134 = vadd.f32 %v3918, %v4062
        %v4135 = vadd.f32 %v3919, %v4063
        %v4136 = vadd.f32 %v3920, %v4064
        %v4137 = vadd.f32 %v3921, %v4065
        %v4138 = vadd.f32 %v3922, %v4066
        %v4139 = vadd.f32 %v3923, %v4067
        %v4140 = vadd.f32 %v3924, %v4068
        %v4141 = vadd.f32 %v3925, %v4069
        %v4142 = vadd.f32 %v3926, %v4070
        %v4143 = vadd.f32 %v3927, %v4071
        %v4144 = vadd.f32 %v3928, %v4072
        %v4145 = vadd.f32 %v3929, %v4073
        %v4146 = vadd.f32 %v3930, %v4074
        %v4147 = vadd.f32 %v3931, %v4075
        %v4148 = vadd.f32 %v3932, %v4076
        %v4149 = vadd.f32 %v3933, %v4077
        %v4150 = vadd.f32 %v3934, %v4078
        %v4151 = vadd.f32 %v3935, %v4079
        %v4152 = vadd.f32 %v3936, %v4080
        %v4153 = vadd.f32 %v3937, %v4081
        %v4154 = vadd.f32 %v3938, %v4082
        %v4155 = vadd.f32 %v3939, %v4083
        %v4156 = vadd.f32 %v3940, %v4084
        %v4157 = vadd.f32 %v3941, %v4085
        %v4158 = vadd.f32 %v3942, %v4086
        %v4159 = vadd.f32 %v3943, %v4087
        %v4160 = vadd.f32 %v3944, %v4088
        %v4161 = vadd.f32 %v3945, %v4089
        %v4162 = vadd.f32 %v3946, %v4090
        %v4163 = vadd.f32 %v3947, %v4091
        %v4164 = vadd.f32 %v3948, %v4092
        %v4165 = vpack.c.bf16 %v4099, %v4093
        %v4166 = vpack.c.bf16 %v4100, %v4094
        %v4167 = vpack.c.bf16 %v4101, %v4095
        %v4168 = vpack.c.bf16 %v4102, %v4096
        %v4169 = vpack.c.bf16 %v4103, %v4097
        %v4170 = vpack.c.bf16 %v4104, %v4098
        %v4171 = vpack.c.bf16 %v4111, %v4105
        %v4172 = vpack.c.bf16 %v4112, %v4106
        %v4173 = vpack.c.bf16 %v4113, %v4107
        %v4174 = vpack.c.bf16 %v4114, %v4108
        %v4175 = vpack.c.bf16 %v4115, %v4109
        %v4176 = vpack.c.bf16 %v4116, %v4110
        %v4177 = vpack.c.bf16 %v4123, %v4117
        %v4178 = vpack.c.bf16 %v4124, %v4118
        %v4179 = vpack.c.bf16 %v4125, %v4119
        %v4180 = vpack.c.bf16 %v4126, %v4120
        %v4181 = vpack.c.bf16 %v4127, %v4121
        %v4182 = vpack.c.bf16 %v4128, %v4122
        %v4183 = vpack.c.bf16 %v4135, %v4129
        %v4184 = vpack.c.bf16 %v4136, %v4130
        %v4185 = vpack.c.bf16 %v4137, %v4131
        %v4186 = vpack.c.bf16 %v4138, %v4132
        %v4187 = vpack.c.bf16 %v4139, %v4133
        %v4188 = vpack.c.bf16 %v4140, %v4134
        %v4189 = vpack.c.bf16 %v4147, %v4141
        %v4190 = vpack.c.bf16 %v4148, %v4142
        %v4191 = vpack.c.bf16 %v4149, %v4143
        %v4192 = vpack.c.bf16 %v4150, %v4144
        %v4193 = vpack.c.bf16 %v4151, %v4145
        %v4194 = vpack.c.bf16 %v4152, %v4146
        %v4195 = vpack.c.bf16 %v4159, %v4153
        %v4196 = vpack.c.bf16 %v4160, %v4154
        %v4197 = vpack.c.bf16 %v4161, %v4155
        %v4198 = vpack.c.bf16 %v4162, %v4156
        %v4199 = vpack.c.bf16 %v4163, %v4157
        %v4200 = vpack.c.bf16 %v4164, %v4158
        %v4201 = vld [vmem:[#allocation6] sm:$0xff]
        %v4202 = vld [vmem:[#allocation6 + $0x8] sm:$0xf]
        %v4203 = vld [vmem:[#allocation6 + $0xc] sm:$0xff]
        %v4204 = vld [vmem:[#allocation6 + $0x14] sm:$0xf]
        %v4205 = vld [vmem:[#allocation6 + $0x18] sm:$0xff]
        %v4206 = vld [vmem:[#allocation6 + $0x20] sm:$0xf]
        %v4207 = vld [vmem:[#allocation6 + $0x24] sm:$0xff]
        %v4208 = vld [vmem:[#allocation6 + $0x2c] sm:$0xf]
        %v4209 = vld [vmem:[#allocation6 + $0x30] sm:$0xff]
        %v4210 = vld [vmem:[#allocation6 + $0x38] sm:$0xf]
        %v4211 = vld [vmem:[#allocation6 + $0x3c] sm:$0xff]
        %v4212 = vld [vmem:[#allocation6 + $0x44] sm:$0xf]
        %v4213 = vld [vmem:[#allocation6 + $0x48] sm:$0xff]
        %v4214 = vld [vmem:[#allocation6 + $0x50] sm:$0xf]
        %v4215 = vld [vmem:[#allocation6 + $0x54] sm:$0xff]
        %v4216 = vld [vmem:[#allocation6 + $0x5c] sm:$0xf]
        %v4217 = vld [vmem:[#allocation6 + $0x60] sm:$0xff]
        %v4218 = vld [vmem:[#allocation6 + $0x68] sm:$0xf]
        %v4219 = vld [vmem:[#allocation6 + $0x6c] sm:$0xff]
        %v4220 = vld [vmem:[#allocation6 + $0x74] sm:$0xf]
        %v4221 = vld [vmem:[#allocation6 + $0x78] sm:$0xff]
        %v4222 = vld [vmem:[#allocation6 + $0x80] sm:$0xf]
        %v4223 = vld [vmem:[#allocation6 + $0x84] sm:$0xff]
        %v4224 = vld [vmem:[#allocation6 + $0x8c] sm:$0xf]
        %v4225 = vld [vmem:[#allocation6 + $0x90] sm:$0xff]
        %v4226 = vld [vmem:[#allocation6 + $0x98] sm:$0xf]
        %v4227 = vld [vmem:[#allocation6 + $0x9c] sm:$0xff]
        %v4228 = vld [vmem:[#allocation6 + $0xa4] sm:$0xf]
        %v4229 = vld [vmem:[#allocation6 + $0xa8] sm:$0xff]
        %v4230 = vld [vmem:[#allocation6 + $0xb0] sm:$0xf]
        %v4231 = vld [vmem:[#allocation6 + $0xb4] sm:$0xff]
        %v4232 = vld [vmem:[#allocation6 + $0xbc] sm:$0xf]
        %v4233 = vld [vmem:[#allocation6 + $0xc0] sm:$0xff]
        %v4234 = vld [vmem:[#allocation6 + $0xc8] sm:$0xf]
        %v4235 = vld [vmem:[#allocation6 + $0xcc] sm:$0xff]
        %v4236 = vld [vmem:[#allocation6 + $0xd4] sm:$0xf]
        %v4237 = vld [vmem:[#allocation6 + $0xd8] sm:$0xff]
        %v4238 = vld [vmem:[#allocation6 + $0xe0] sm:$0xf]
        %v4239 = vld [vmem:[#allocation6 + $0xe4] sm:$0xff]
        %v4240 = vld [vmem:[#allocation6 + $0xec] sm:$0xf]
        %v4241 = vld [vmem:[#allocation6 + $0xf0] sm:$0xff]
        %v4242 = vld [vmem:[#allocation6 + $0xf8] sm:$0xf]
        %v4243 = vld [vmem:[#allocation6 + $0xfc] sm:$0xff]
        %v4244 = vld [vmem:[#allocation6 + $0x104] sm:$0xf]
        %v4245 = vld [vmem:[#allocation6 + $0x108] sm:$0xff]
        %v4246 = vld [vmem:[#allocation6 + $0x110] sm:$0xf]
        %v4247 = vld [vmem:[#allocation6 + $0x114] sm:$0xff]
        %v4248 = vld [vmem:[#allocation6 + $0x11c] sm:$0xf]
        %v4249 = vld [vmem:[#allocation6 + $0x120] sm:$0xff]
        %v4250 = vld [vmem:[#allocation6 + $0x128] sm:$0xf]
        %v4251 = vld [vmem:[#allocation6 + $0x12c] sm:$0xff]
        %v4252 = vld [vmem:[#allocation6 + $0x134] sm:$0xf]
        %v4253 = vld [vmem:[#allocation6 + $0x138] sm:$0xff]
        %v4254 = vld [vmem:[#allocation6 + $0x140] sm:$0xf]
        %v4255 = vld [vmem:[#allocation6 + $0x144] sm:$0xff]
        %v4256 = vld [vmem:[#allocation6 + $0x14c] sm:$0xf]
        %v4257 = vld [vmem:[#allocation6 + $0x150] sm:$0xff]
        %v4258 = vld [vmem:[#allocation6 + $0x158] sm:$0xf]
        %v4259 = vld [vmem:[#allocation6 + $0x15c] sm:$0xff]
        %v4260 = vld [vmem:[#allocation6 + $0x164] sm:$0xf]
        %v4261 = vld [vmem:[#allocation6 + $0x168] sm:$0xff]
        %v4262 = vld [vmem:[#allocation6 + $0x170] sm:$0xf]
        %v4263 = vld [vmem:[#allocation6 + $0x174] sm:$0xff]
        %v4264 = vld [vmem:[#allocation6 + $0x17c] sm:$0xf]
        %v4265 = vld [vmem:[#allocation6 + $0x180] sm:$0xff]
        %v4266 = vld [vmem:[#allocation6 + $0x188] sm:$0xf]
        %v4267 = vld [vmem:[#allocation6 + $0x18c] sm:$0xff]
        %v4268 = vld [vmem:[#allocation6 + $0x194] sm:$0xf]
        %v4269 = vld [vmem:[#allocation6 + $0x198] sm:$0xff]
        %v4270 = vld [vmem:[#allocation6 + $0x1a0] sm:$0xf]
        %v4271 = vld [vmem:[#allocation6 + $0x1a4] sm:$0xff]
        %v4272 = vld [vmem:[#allocation6 + $0x1ac] sm:$0xf]
        %v4273 = vld [vmem:[#allocation6 + $0x1b0] sm:$0xff]
        %v4274 = vld [vmem:[#allocation6 + $0x1b8] sm:$0xf]
        %v4275 = vld [vmem:[#allocation6 + $0x1bc] sm:$0xff]
        %v4276 = vld [vmem:[#allocation6 + $0x1c4] sm:$0xf]
        %v4277 = vld [vmem:[#allocation6 + $0x1c8] sm:$0xff]
        %v4278 = vld [vmem:[#allocation6 + $0x1d0] sm:$0xf]
        %v4279 = vld [vmem:[#allocation6 + $0x1d4] sm:$0xff]
        %v4280 = vld [vmem:[#allocation6 + $0x1dc] sm:$0xf]
        %v4281 = vld [vmem:[#allocation6 + $0x1e0] sm:$0xff]
        %v4282 = vld [vmem:[#allocation6 + $0x1e8] sm:$0xf]
        %v4283 = vld [vmem:[#allocation6 + $0x1ec] sm:$0xff]
        %v4284 = vld [vmem:[#allocation6 + $0x1f4] sm:$0xf]
        %v4285 = vld [vmem:[#allocation6 + $0x1f8] sm:$0xff]
        %v4286 = vld [vmem:[#allocation6 + $0x200] sm:$0xf]
        %v4287 = vld [vmem:[#allocation6 + $0x204] sm:$0xff]
        %v4288 = vld [vmem:[#allocation6 + $0x20c] sm:$0xf]
        %v4289 = vld [vmem:[#allocation6 + $0x210] sm:$0xff]
        %v4290 = vld [vmem:[#allocation6 + $0x218] sm:$0xf]
        %v4291 = vld [vmem:[#allocation6 + $0x21c] sm:$0xff]
        %v4292 = vld [vmem:[#allocation6 + $0x224] sm:$0xf]
        %v4293 = vld [vmem:[#allocation6 + $0x228] sm:$0xff]
        %v4294 = vld [vmem:[#allocation6 + $0x230] sm:$0xf]
        %v4295 = vld [vmem:[#allocation6 + $0x234] sm:$0xff]
        %v4296 = vld [vmem:[#allocation6 + $0x23c] sm:$0xf]
        %v4297 = vld [vmem:[#allocation6 + $0x240] sm:$0xff]
        %v4298 = vld [vmem:[#allocation6 + $0x248] sm:$0xf]
        %v4299 = vld [vmem:[#allocation6 + $0x24c] sm:$0xff]
        %v4300 = vld [vmem:[#allocation6 + $0x254] sm:$0xf]
        %v4301 = vld [vmem:[#allocation6 + $0x258] sm:$0xff]
        %v4302 = vld [vmem:[#allocation6 + $0x260] sm:$0xf]
        %v4303 = vld [vmem:[#allocation6 + $0x264] sm:$0xff]
        %v4304 = vld [vmem:[#allocation6 + $0x26c] sm:$0xf]
        %v4305 = vld [vmem:[#allocation6 + $0x270] sm:$0xff]
        %v4306 = vld [vmem:[#allocation6 + $0x278] sm:$0xf]
        %v4307 = vld [vmem:[#allocation6 + $0x27c] sm:$0xff]
        %v4308 = vld [vmem:[#allocation6 + $0x284] sm:$0xf]
        %v4309 = vld [vmem:[#allocation6 + $0x288] sm:$0xff]
        %v4310 = vld [vmem:[#allocation6 + $0x290] sm:$0xf]
        %v4311 = vld [vmem:[#allocation6 + $0x294] sm:$0xff]
        %v4312 = vld [vmem:[#allocation6 + $0x29c] sm:$0xf]
        %v4313 = vld [vmem:[#allocation6 + $0x2a0] sm:$0xff]
        %v4314 = vld [vmem:[#allocation6 + $0x2a8] sm:$0xf]
        %v4315 = vld [vmem:[#allocation6 + $0x2ac] sm:$0xff]
        %v4316 = vld [vmem:[#allocation6 + $0x2b4] sm:$0xf]
        %v4317 = vld [vmem:[#allocation6 + $0x2b8] sm:$0xff]
        %v4318 = vld [vmem:[#allocation6 + $0x2c0] sm:$0xf]
        %v4319 = vld [vmem:[#allocation6 + $0x2c4] sm:$0xff]
        %v4320 = vld [vmem:[#allocation6 + $0x2cc] sm:$0xf]
        %v4321 = vld [vmem:[#allocation6 + $0x2d0] sm:$0xff]
        %v4322 = vld [vmem:[#allocation6 + $0x2d8] sm:$0xf]
        %v4323 = vld [vmem:[#allocation6 + $0x2dc] sm:$0xff]
        %v4324 = vld [vmem:[#allocation6 + $0x2e4] sm:$0xf]
        %v4325 = vld [vmem:[#allocation6 + $0x2e8] sm:$0xff]
        %v4326 = vld [vmem:[#allocation6 + $0x2f0] sm:$0xf]
        %v4327 = vld [vmem:[#allocation6 + $0x2f4] sm:$0xff]
        %v4328 = vld [vmem:[#allocation6 + $0x2fc] sm:$0xf]
        %v4329 = vld [vmem:[#allocation6 + $0x300] sm:$0xff]
        %v4330 = vld [vmem:[#allocation6 + $0x308] sm:$0xf]
        %v4331 = vld [vmem:[#allocation6 + $0x30c] sm:$0xff]
        %v4332 = vld [vmem:[#allocation6 + $0x314] sm:$0xf]
        %v4333 = vld [vmem:[#allocation6 + $0x318] sm:$0xff]
        %v4334 = vld [vmem:[#allocation6 + $0x320] sm:$0xf]
        %v4335 = vld [vmem:[#allocation6 + $0x324] sm:$0xff]
        %v4336 = vld [vmem:[#allocation6 + $0x32c] sm:$0xf]
        %v4337 = vld [vmem:[#allocation6 + $0x330] sm:$0xff]
        %v4338 = vld [vmem:[#allocation6 + $0x338] sm:$0xf]
        %v4339 = vld [vmem:[#allocation6 + $0x33c] sm:$0xff]
        %v4340 = vld [vmem:[#allocation6 + $0x344] sm:$0xf]
        %v4341 = vld [vmem:[#allocation6 + $0x348] sm:$0xff]
        %v4342 = vld [vmem:[#allocation6 + $0x350] sm:$0xf]
        %v4343 = vld [vmem:[#allocation6 + $0x354] sm:$0xff]
        %v4344 = vld [vmem:[#allocation6 + $0x35c] sm:$0xf]
        %v4345 = vld [vmem:[#allocation6 + $0x360] sm:$0xff]
        %v4346 = vld [vmem:[#allocation6 + $0x368] sm:$0xf]
        %v4347 = vld [vmem:[#allocation6 + $0x36c] sm:$0xff]
        %v4348 = vld [vmem:[#allocation6 + $0x374] sm:$0xf]
        %v4349 = vld [vmem:[#allocation6 + $0x378] sm:$0xff]
        %v4350 = vld [vmem:[#allocation6 + $0x380] sm:$0xf]
        %v4351 = vld [vmem:[#allocation6 + $0x384] sm:$0xff]
        %v4352 = vld [vmem:[#allocation6 + $0x38c] sm:$0xf]
        %v4353 = vld [vmem:[#allocation6 + $0x390] sm:$0xff]
        %v4354 = vld [vmem:[#allocation6 + $0x398] sm:$0xf]
        %v4355 = vld [vmem:[#allocation6 + $0x39c] sm:$0xff]
        %v4356 = vld [vmem:[#allocation6 + $0x3a4] sm:$0xf]
        %v4357 = vld [vmem:[#allocation6 + $0x3a8] sm:$0xff]
        %v4358 = vld [vmem:[#allocation6 + $0x3b0] sm:$0xf]
        %v4359 = vld [vmem:[#allocation6 + $0x3b4] sm:$0xff]
        %v4360 = vld [vmem:[#allocation6 + $0x3bc] sm:$0xf]
        %v4361 = vld [vmem:[#allocation6 + $0x3c0] sm:$0xff]
        %v4362 = vld [vmem:[#allocation6 + $0x3c8] sm:$0xf]
        %v4363 = vld [vmem:[#allocation6 + $0x3cc] sm:$0xff]
        %v4364 = vld [vmem:[#allocation6 + $0x3d4] sm:$0xf]
        %v4365 = vld [vmem:[#allocation6 + $0x3d8] sm:$0xff]
        %v4366 = vld [vmem:[#allocation6 + $0x3e0] sm:$0xf]
        %v4367 = vld [vmem:[#allocation6 + $0x3e4] sm:$0xff]
        %v4368 = vld [vmem:[#allocation6 + $0x3ec] sm:$0xf]
        %v4369 = vld [vmem:[#allocation6 + $0x3f0] sm:$0xff]
        %v4370 = vld [vmem:[#allocation6 + $0x3f8] sm:$0xf]
        %v4371 = vld [vmem:[#allocation6 + $0x3fc] sm:$0xff]
        %v4372 = vld [vmem:[#allocation6 + $0x404] sm:$0xf]
        %v4373 = vld [vmem:[#allocation6 + $0x408] sm:$0xff]
        %v4374 = vld [vmem:[#allocation6 + $0x410] sm:$0xf]
        %v4375 = vld [vmem:[#allocation6 + $0x414] sm:$0xff]
        %v4376 = vld [vmem:[#allocation6 + $0x41c] sm:$0xf]
        %v4377 = vld [vmem:[#allocation6 + $0x420] sm:$0xff]
        %v4378 = vld [vmem:[#allocation6 + $0x428] sm:$0xf]
        %v4379 = vld [vmem:[#allocation6 + $0x42c] sm:$0xff]
        %v4380 = vld [vmem:[#allocation6 + $0x434] sm:$0xf]
        %v4381 = vld [vmem:[#allocation6 + $0x438] sm:$0xff]
        %v4382 = vld [vmem:[#allocation6 + $0x440] sm:$0xf]
        %v4383 = vld [vmem:[#allocation6 + $0x444] sm:$0xff]
        %v4384 = vld [vmem:[#allocation6 + $0x44c] sm:$0xf]
        %v4385 = vld [vmem:[#allocation6 + $0x450] sm:$0xff]
        %v4386 = vld [vmem:[#allocation6 + $0x458] sm:$0xf]
        %v4387 = vld [vmem:[#allocation6 + $0x45c] sm:$0xff]
        %v4388 = vld [vmem:[#allocation6 + $0x464] sm:$0xf]
        %v4389 = vld [vmem:[#allocation6 + $0x468] sm:$0xff]
        %v4390 = vld [vmem:[#allocation6 + $0x470] sm:$0xf]
        %v4391 = vld [vmem:[#allocation6 + $0x474] sm:$0xff]
        %v4392 = vld [vmem:[#allocation6 + $0x47c] sm:$0xf]
        %v4585 = vunpack.c.l.b16 %v4201
        %v4586 = vunpack.c.h.b16 %v4201
        %v4587 = vunpack.c.l.b16 %v4202
        %v4588 = vunpack.c.l.b16 %v4203
        %v4589 = vunpack.c.h.b16 %v4203
        %v4590 = vunpack.c.l.b16 %v4204
        %v4591 = vunpack.c.l.b16 %v4205
        %v4592 = vunpack.c.h.b16 %v4205
        %v4593 = vunpack.c.l.b16 %v4206
        %v4594 = vunpack.c.l.b16 %v4207
        %v4595 = vunpack.c.h.b16 %v4207
        %v4596 = vunpack.c.l.b16 %v4208
        %v4597 = vunpack.c.l.b16 %v4209
        %v4598 = vunpack.c.h.b16 %v4209
        %v4599 = vunpack.c.l.b16 %v4210
        %v4600 = vunpack.c.l.b16 %v4211
        %v4601 = vunpack.c.h.b16 %v4211
        %v4602 = vunpack.c.l.b16 %v4212
        %v4603 = vunpack.c.l.b16 %v4213
        %v4604 = vunpack.c.h.b16 %v4213
        %v4605 = vunpack.c.l.b16 %v4214
        %v4606 = vunpack.c.l.b16 %v4215
        %v4607 = vunpack.c.h.b16 %v4215
        %v4608 = vunpack.c.l.b16 %v4216
        %v4609 = vunpack.c.l.b16 %v4217
        %v4610 = vunpack.c.h.b16 %v4217
        %v4611 = vunpack.c.l.b16 %v4218
        %v4612 = vunpack.c.l.b16 %v4219
        %v4613 = vunpack.c.h.b16 %v4219
        %v4614 = vunpack.c.l.b16 %v4220
        %v4615 = vunpack.c.l.b16 %v4221
        %v4616 = vunpack.c.h.b16 %v4221
        %v4617 = vunpack.c.l.b16 %v4222
        %v4618 = vunpack.c.l.b16 %v4223
        %v4619 = vunpack.c.h.b16 %v4223
        %v4620 = vunpack.c.l.b16 %v4224
        %v4621 = vunpack.c.l.b16 %v4225
        %v4622 = vunpack.c.h.b16 %v4225
        %v4623 = vunpack.c.l.b16 %v4226
        %v4624 = vunpack.c.l.b16 %v4227
        %v4625 = vunpack.c.h.b16 %v4227
        %v4626 = vunpack.c.l.b16 %v4228
        %v4627 = vunpack.c.l.b16 %v4229
        %v4628 = vunpack.c.h.b16 %v4229
        %v4629 = vunpack.c.l.b16 %v4230
        %v4630 = vunpack.c.l.b16 %v4231
        %v4631 = vunpack.c.h.b16 %v4231
        %v4632 = vunpack.c.l.b16 %v4232
        %v4633 = vunpack.c.l.b16 %v4233
        %v4634 = vunpack.c.h.b16 %v4233
        %v4635 = vunpack.c.l.b16 %v4234
        %v4636 = vunpack.c.l.b16 %v4235
        %v4637 = vunpack.c.h.b16 %v4235
        %v4638 = vunpack.c.l.b16 %v4236
        %v4639 = vunpack.c.l.b16 %v4237
        %v4640 = vunpack.c.h.b16 %v4237
        %v4641 = vunpack.c.l.b16 %v4238
        %v4642 = vunpack.c.l.b16 %v4239
        %v4643 = vunpack.c.h.b16 %v4239
        %v4644 = vunpack.c.l.b16 %v4240
        %v4645 = vunpack.c.l.b16 %v4241
        %v4646 = vunpack.c.h.b16 %v4241
        %v4647 = vunpack.c.l.b16 %v4242
        %v4648 = vunpack.c.l.b16 %v4243
        %v4649 = vunpack.c.h.b16 %v4243
        %v4650 = vunpack.c.l.b16 %v4244
        %v4651 = vunpack.c.l.b16 %v4245
        %v4652 = vunpack.c.h.b16 %v4245
        %v4653 = vunpack.c.l.b16 %v4246
        %v4654 = vunpack.c.l.b16 %v4247
        %v4655 = vunpack.c.h.b16 %v4247
        %v4656 = vunpack.c.l.b16 %v4248
        %v4657 = vunpack.c.l.b16 %v4249
        %v4658 = vunpack.c.h.b16 %v4249
        %v4659 = vunpack.c.l.b16 %v4250
        %v4660 = vunpack.c.l.b16 %v4251
        %v4661 = vunpack.c.h.b16 %v4251
        %v4662 = vunpack.c.l.b16 %v4252
        %v4663 = vunpack.c.l.b16 %v4253
        %v4664 = vunpack.c.h.b16 %v4253
        %v4665 = vunpack.c.l.b16 %v4254
        %v4666 = vunpack.c.l.b16 %v4255
        %v4667 = vunpack.c.h.b16 %v4255
        %v4668 = vunpack.c.l.b16 %v4256
        %v4669 = vunpack.c.l.b16 %v4257
        %v4670 = vunpack.c.h.b16 %v4257
        %v4671 = vunpack.c.l.b16 %v4258
        %v4672 = vunpack.c.l.b16 %v4259
        %v4673 = vunpack.c.h.b16 %v4259
        %v4674 = vunpack.c.l.b16 %v4260
        %v4675 = vunpack.c.l.b16 %v4261
        %v4676 = vunpack.c.h.b16 %v4261
        %v4677 = vunpack.c.l.b16 %v4262
        %v4678 = vunpack.c.l.b16 %v4263
        %v4679 = vunpack.c.h.b16 %v4263
        %v4680 = vunpack.c.l.b16 %v4264
        %v4681 = vunpack.c.l.b16 %v4265
        %v4682 = vunpack.c.h.b16 %v4265
        %v4683 = vunpack.c.l.b16 %v4266
        %v4684 = vunpack.c.l.b16 %v4267
        %v4685 = vunpack.c.h.b16 %v4267
        %v4686 = vunpack.c.l.b16 %v4268
        %v4687 = vunpack.c.l.b16 %v4269
        %v4688 = vunpack.c.h.b16 %v4269
        %v4689 = vunpack.c.l.b16 %v4270
        %v4690 = vunpack.c.l.b16 %v4271
        %v4691 = vunpack.c.h.b16 %v4271
        %v4692 = vunpack.c.l.b16 %v4272
        %v4693 = vunpack.c.l.b16 %v4273
        %v4694 = vunpack.c.h.b16 %v4273
        %v4695 = vunpack.c.l.b16 %v4274
        %v4696 = vunpack.c.l.b16 %v4275
        %v4697 = vunpack.c.h.b16 %v4275
        %v4698 = vunpack.c.l.b16 %v4276
        %v4699 = vunpack.c.l.b16 %v4277
        %v4700 = vunpack.c.h.b16 %v4277
        %v4701 = vunpack.c.l.b16 %v4278
        %v4702 = vunpack.c.l.b16 %v4279
        %v4703 = vunpack.c.h.b16 %v4279
        %v4704 = vunpack.c.l.b16 %v4280
        %v4705 = vunpack.c.l.b16 %v4281
        %v4706 = vunpack.c.h.b16 %v4281
        %v4707 = vunpack.c.l.b16 %v4282
        %v4708 = vunpack.c.l.b16 %v4283
        %v4709 = vunpack.c.h.b16 %v4283
        %v4710 = vunpack.c.l.b16 %v4284
        %v4711 = vunpack.c.l.b16 %v4285
        %v4712 = vunpack.c.h.b16 %v4285
        %v4713 = vunpack.c.l.b16 %v4286
        %v4714 = vunpack.c.l.b16 %v4287
        %v4715 = vunpack.c.h.b16 %v4287
        %v4716 = vunpack.c.l.b16 %v4288
        %v4717 = vunpack.c.l.b16 %v4289
        %v4718 = vunpack.c.h.b16 %v4289
        %v4719 = vunpack.c.l.b16 %v4290
        %v4720 = vunpack.c.l.b16 %v4291
        %v4721 = vunpack.c.h.b16 %v4291
        %v4722 = vunpack.c.l.b16 %v4292
        %v4723 = vunpack.c.l.b16 %v4293
        %v4724 = vunpack.c.h.b16 %v4293
        %v4725 = vunpack.c.l.b16 %v4294
        %v4726 = vunpack.c.l.b16 %v4295
        %v4727 = vunpack.c.h.b16 %v4295
        %v4728 = vunpack.c.l.b16 %v4296
        %v4729 = vunpack.c.l.b16 %v4297
        %v4730 = vunpack.c.h.b16 %v4297
        %v4731 = vunpack.c.l.b16 %v4298
        %v4732 = vunpack.c.l.b16 %v4299
        %v4733 = vunpack.c.h.b16 %v4299
        %v4734 = vunpack.c.l.b16 %v4300
        %v4735 = vunpack.c.l.b16 %v4301
        %v4736 = vunpack.c.h.b16 %v4301
        %v4737 = vunpack.c.l.b16 %v4302
        %v4738 = vunpack.c.l.b16 %v4303
        %v4739 = vunpack.c.h.b16 %v4303
        %v4740 = vunpack.c.l.b16 %v4304
        %v4741 = vunpack.c.l.b16 %v4305
        %v4742 = vunpack.c.h.b16 %v4305
        %v4743 = vunpack.c.l.b16 %v4306
        %v4744 = vunpack.c.l.b16 %v4307
        %v4745 = vunpack.c.h.b16 %v4307
        %v4746 = vunpack.c.l.b16 %v4308
        %v4747 = vunpack.c.l.b16 %v4309
        %v4748 = vunpack.c.h.b16 %v4309
        %v4749 = vunpack.c.l.b16 %v4310
        %v4750 = vunpack.c.l.b16 %v4311
        %v4751 = vunpack.c.h.b16 %v4311
        %v4752 = vunpack.c.l.b16 %v4312
        %v4753 = vunpack.c.l.b16 %v4313
        %v4754 = vunpack.c.h.b16 %v4313
        %v4755 = vunpack.c.l.b16 %v4314
        %v4756 = vunpack.c.l.b16 %v4315
        %v4757 = vunpack.c.h.b16 %v4315
        %v4758 = vunpack.c.l.b16 %v4316
        %v4759 = vunpack.c.l.b16 %v4317
        %v4760 = vunpack.c.h.b16 %v4317
        %v4761 = vunpack.c.l.b16 %v4318
        %v4762 = vunpack.c.l.b16 %v4319
        %v4763 = vunpack.c.h.b16 %v4319
        %v4764 = vunpack.c.l.b16 %v4320
        %v4765 = vunpack.c.l.b16 %v4321
        %v4766 = vunpack.c.h.b16 %v4321
        %v4767 = vunpack.c.l.b16 %v4322
        %v4768 = vunpack.c.l.b16 %v4323
        %v4769 = vunpack.c.h.b16 %v4323
        %v4770 = vunpack.c.l.b16 %v4324
        %v4771 = vunpack.c.l.b16 %v4325
        %v4772 = vunpack.c.h.b16 %v4325
        %v4773 = vunpack.c.l.b16 %v4326
        %v4774 = vunpack.c.l.b16 %v4327
        %v4775 = vunpack.c.h.b16 %v4327
        %v4776 = vunpack.c.l.b16 %v4328
        %v4777 = vunpack.c.l.b16 %v4329
        %v4778 = vunpack.c.h.b16 %v4329
        %v4779 = vunpack.c.l.b16 %v4330
        %v4780 = vunpack.c.l.b16 %v4331
        %v4781 = vunpack.c.h.b16 %v4331
        %v4782 = vunpack.c.l.b16 %v4332
        %v4783 = vunpack.c.l.b16 %v4333
        %v4784 = vunpack.c.h.b16 %v4333
        %v4785 = vunpack.c.l.b16 %v4334
        %v4786 = vunpack.c.l.b16 %v4335
        %v4787 = vunpack.c.h.b16 %v4335
        %v4788 = vunpack.c.l.b16 %v4336
        %v4789 = vunpack.c.l.b16 %v4337
        %v4790 = vunpack.c.h.b16 %v4337
        %v4791 = vunpack.c.l.b16 %v4338
        %v4792 = vunpack.c.l.b16 %v4339
        %v4793 = vunpack.c.h.b16 %v4339
        %v4794 = vunpack.c.l.b16 %v4340
        %v4795 = vunpack.c.l.b16 %v4341
        %v4796 = vunpack.c.h.b16 %v4341
        %v4797 = vunpack.c.l.b16 %v4342
        %v4798 = vunpack.c.l.b16 %v4343
        %v4799 = vunpack.c.h.b16 %v4343
        %v4800 = vunpack.c.l.b16 %v4344
        %v4801 = vunpack.c.l.b16 %v4345
        %v4802 = vunpack.c.h.b16 %v4345
        %v4803 = vunpack.c.l.b16 %v4346
        %v4804 = vunpack.c.l.b16 %v4347
        %v4805 = vunpack.c.h.b16 %v4347
        %v4806 = vunpack.c.l.b16 %v4348
        %v4807 = vunpack.c.l.b16 %v4349
        %v4808 = vunpack.c.h.b16 %v4349
        %v4809 = vunpack.c.l.b16 %v4350
        %v4810 = vunpack.c.l.b16 %v4351
        %v4811 = vunpack.c.h.b16 %v4351
        %v4812 = vunpack.c.l.b16 %v4352
        %v4813 = vunpack.c.l.b16 %v4353
        %v4814 = vunpack.c.h.b16 %v4353
        %v4815 = vunpack.c.l.b16 %v4354
        %v4816 = vunpack.c.l.b16 %v4355
        %v4817 = vunpack.c.h.b16 %v4355
        %v4818 = vunpack.c.l.b16 %v4356
        %v4819 = vunpack.c.l.b16 %v4357
        %v4820 = vunpack.c.h.b16 %v4357
        %v4821 = vunpack.c.l.b16 %v4358
        %v4822 = vunpack.c.l.b16 %v4359
        %v4823 = vunpack.c.h.b16 %v4359
        %v4824 = vunpack.c.l.b16 %v4360
        %v4825 = vunpack.c.l.b16 %v4361
        %v4826 = vunpack.c.h.b16 %v4361
        %v4827 = vunpack.c.l.b16 %v4362
        %v4828 = vunpack.c.l.b16 %v4363
        %v4829 = vunpack.c.h.b16 %v4363
        %v4830 = vunpack.c.l.b16 %v4364
        %v4831 = vunpack.c.l.b16 %v4365
        %v4832 = vunpack.c.h.b16 %v4365
        %v4833 = vunpack.c.l.b16 %v4366
        %v4834 = vunpack.c.l.b16 %v4367
        %v4835 = vunpack.c.h.b16 %v4367
        %v4836 = vunpack.c.l.b16 %v4368
        %v4837 = vunpack.c.l.b16 %v4369
        %v4838 = vunpack.c.h.b16 %v4369
        %v4839 = vunpack.c.l.b16 %v4370
        %v4840 = vunpack.c.l.b16 %v4371
        %v4841 = vunpack.c.h.b16 %v4371
        %v4842 = vunpack.c.l.b16 %v4372
        %v4843 = vunpack.c.l.b16 %v4373
        %v4844 = vunpack.c.h.b16 %v4373
        %v4845 = vunpack.c.l.b16 %v4374
        %v4846 = vunpack.c.l.b16 %v4375
        %v4847 = vunpack.c.h.b16 %v4375
        %v4848 = vunpack.c.l.b16 %v4376
        %v4849 = vunpack.c.l.b16 %v4377
        %v4850 = vunpack.c.h.b16 %v4377
        %v4851 = vunpack.c.l.b16 %v4378
        %v4852 = vunpack.c.l.b16 %v4379
        %v4853 = vunpack.c.h.b16 %v4379
        %v4854 = vunpack.c.l.b16 %v4380
        %v4855 = vunpack.c.l.b16 %v4381
        %v4856 = vunpack.c.h.b16 %v4381
        %v4857 = vunpack.c.l.b16 %v4382
        %v4858 = vunpack.c.l.b16 %v4383
        %v4859 = vunpack.c.h.b16 %v4383
        %v4860 = vunpack.c.l.b16 %v4384
        %v4861 = vunpack.c.l.b16 %v4385
        %v4862 = vunpack.c.h.b16 %v4385
        %v4863 = vunpack.c.l.b16 %v4386
        %v4864 = vunpack.c.l.b16 %v4387
        %v4865 = vunpack.c.h.b16 %v4387
        %v4866 = vunpack.c.l.b16 %v4388
        %v4867 = vunpack.c.l.b16 %v4389
        %v4868 = vunpack.c.h.b16 %v4389
        %v4869 = vunpack.c.l.b16 %v4390
        %v4870 = vunpack.c.l.b16 %v4391
        %v4871 = vunpack.c.h.b16 %v4391
        %v4872 = vunpack.c.l.b16 %v4392
        %v4873 = vpack.c.b16 %v4588, %v4585
        %v4874 = vpack.c.b16 %v4589, %v4586
        %v4875 = vpack.c.b16 %v4590, %v4587
        %v4876 = vpack.c.b16 %v4594, %v4591
        %v4877 = vpack.c.b16 %v4595, %v4592
        %v4878 = vpack.c.b16 %v4596, %v4593
        %v4879 = vpack.c.b16 %v4600, %v4597
        %v4880 = vpack.c.b16 %v4601, %v4598
        %v4881 = vpack.c.b16 %v4602, %v4599
        %v4882 = vpack.c.b16 %v4606, %v4603
        %v4883 = vpack.c.b16 %v4607, %v4604
        %v4884 = vpack.c.b16 %v4608, %v4605
        %v4885 = vpack.c.b16 %v4612, %v4609
        %v4886 = vpack.c.b16 %v4613, %v4610
        %v4887 = vpack.c.b16 %v4614, %v4611
        %v4888 = vpack.c.b16 %v4618, %v4615
        %v4889 = vpack.c.b16 %v4619, %v4616
        %v4890 = vpack.c.b16 %v4620, %v4617
        %v4891 = vpack.c.b16 %v4624, %v4621
        %v4892 = vpack.c.b16 %v4625, %v4622
        %v4893 = vpack.c.b16 %v4626, %v4623
        %v4894 = vpack.c.b16 %v4630, %v4627
        %v4895 = vpack.c.b16 %v4631, %v4628
        %v4896 = vpack.c.b16 %v4632, %v4629
        %v4897 = vpack.c.b16 %v4636, %v4633
        %v4898 = vpack.c.b16 %v4637, %v4634
        %v4899 = vpack.c.b16 %v4638, %v4635
        %v4900 = vpack.c.b16 %v4642, %v4639
        %v4901 = vpack.c.b16 %v4643, %v4640
        %v4902 = vpack.c.b16 %v4644, %v4641
        %v4903 = vpack.c.b16 %v4648, %v4645
        %v4904 = vpack.c.b16 %v4649, %v4646
        %v4905 = vpack.c.b16 %v4650, %v4647
        %v4906 = vpack.c.b16 %v4654, %v4651
        %v4907 = vpack.c.b16 %v4655, %v4652
        %v4908 = vpack.c.b16 %v4656, %v4653
        %v4909 = vpack.c.b16 %v4660, %v4657
        %v4910 = vpack.c.b16 %v4661, %v4658
        %v4911 = vpack.c.b16 %v4662, %v4659
        %v4912 = vpack.c.b16 %v4666, %v4663
        %v4913 = vpack.c.b16 %v4667, %v4664
        %v4914 = vpack.c.b16 %v4668, %v4665
        %v4915 = vpack.c.b16 %v4672, %v4669
        %v4916 = vpack.c.b16 %v4673, %v4670
        %v4917 = vpack.c.b16 %v4674, %v4671
        %v4918 = vpack.c.b16 %v4678, %v4675
        %v4919 = vpack.c.b16 %v4679, %v4676
        %v4920 = vpack.c.b16 %v4680, %v4677
        %v4921 = vpack.c.b16 %v4684, %v4681
        %v4922 = vpack.c.b16 %v4685, %v4682
        %v4923 = vpack.c.b16 %v4686, %v4683
        %v4924 = vpack.c.b16 %v4690, %v4687
        %v4925 = vpack.c.b16 %v4691, %v4688
        %v4926 = vpack.c.b16 %v4692, %v4689
        %v4927 = vpack.c.b16 %v4696, %v4693
        %v4928 = vpack.c.b16 %v4697, %v4694
        %v4929 = vpack.c.b16 %v4698, %v4695
        %v4930 = vpack.c.b16 %v4702, %v4699
        %v4931 = vpack.c.b16 %v4703, %v4700
        %v4932 = vpack.c.b16 %v4704, %v4701
        %v4933 = vpack.c.b16 %v4708, %v4705
        %v4934 = vpack.c.b16 %v4709, %v4706
        %v4935 = vpack.c.b16 %v4710, %v4707
        %v4936 = vpack.c.b16 %v4714, %v4711
        %v4937 = vpack.c.b16 %v4715, %v4712
        %v4938 = vpack.c.b16 %v4716, %v4713
        %v4939 = vpack.c.b16 %v4720, %v4717
        %v4940 = vpack.c.b16 %v4721, %v4718
        %v4941 = vpack.c.b16 %v4722, %v4719
        %v4942 = vpack.c.b16 %v4726, %v4723
        %v4943 = vpack.c.b16 %v4727, %v4724
        %v4944 = vpack.c.b16 %v4728, %v4725
        %v4945 = vpack.c.b16 %v4732, %v4729
        %v4946 = vpack.c.b16 %v4733, %v4730
        %v4947 = vpack.c.b16 %v4734, %v4731
        %v4948 = vpack.c.b16 %v4738, %v4735
        %v4949 = vpack.c.b16 %v4739, %v4736
        %v4950 = vpack.c.b16 %v4740, %v4737
        %v4951 = vpack.c.b16 %v4744, %v4741
        %v4952 = vpack.c.b16 %v4745, %v4742
        %v4953 = vpack.c.b16 %v4746, %v4743
        %v4954 = vpack.c.b16 %v4750, %v4747
        %v4955 = vpack.c.b16 %v4751, %v4748
        %v4956 = vpack.c.b16 %v4752, %v4749
        %v4957 = vpack.c.b16 %v4756, %v4753
        %v4958 = vpack.c.b16 %v4757, %v4754
        %v4959 = vpack.c.b16 %v4758, %v4755
        %v4960 = vpack.c.b16 %v4762, %v4759
        %v4961 = vpack.c.b16 %v4763, %v4760
        %v4962 = vpack.c.b16 %v4764, %v4761
        %v4963 = vpack.c.b16 %v4768, %v4765
        %v4964 = vpack.c.b16 %v4769, %v4766
        %v4965 = vpack.c.b16 %v4770, %v4767
        %v4966 = vpack.c.b16 %v4774, %v4771
        %v4967 = vpack.c.b16 %v4775, %v4772
        %v4968 = vpack.c.b16 %v4776, %v4773
        %v4969 = vpack.c.b16 %v4780, %v4777
        %v4970 = vpack.c.b16 %v4781, %v4778
        %v4971 = vpack.c.b16 %v4782, %v4779
        %v4972 = vpack.c.b16 %v4786, %v4783
        %v4973 = vpack.c.b16 %v4787, %v4784
        %v4974 = vpack.c.b16 %v4788, %v4785
        %v4975 = vpack.c.b16 %v4792, %v4789
        %v4976 = vpack.c.b16 %v4793, %v4790
        %v4977 = vpack.c.b16 %v4794, %v4791
        %v4978 = vpack.c.b16 %v4798, %v4795
        %v4979 = vpack.c.b16 %v4799, %v4796
        %v4980 = vpack.c.b16 %v4800, %v4797
        %v4981 = vpack.c.b16 %v4804, %v4801
        %v4982 = vpack.c.b16 %v4805, %v4802
        %v4983 = vpack.c.b16 %v4806, %v4803
        %v4984 = vpack.c.b16 %v4810, %v4807
        %v4985 = vpack.c.b16 %v4811, %v4808
        %v4986 = vpack.c.b16 %v4812, %v4809
        %v4987 = vpack.c.b16 %v4816, %v4813
        %v4988 = vpack.c.b16 %v4817, %v4814
        %v4989 = vpack.c.b16 %v4818, %v4815
        %v4990 = vpack.c.b16 %v4822, %v4819
        %v4991 = vpack.c.b16 %v4823, %v4820
        %v4992 = vpack.c.b16 %v4824, %v4821
        %v4993 = vpack.c.b16 %v4828, %v4825
        %v4994 = vpack.c.b16 %v4829, %v4826
        %v4995 = vpack.c.b16 %v4830, %v4827
        %v4996 = vpack.c.b16 %v4834, %v4831
        %v4997 = vpack.c.b16 %v4835, %v4832
        %v4998 = vpack.c.b16 %v4836, %v4833
        %v4999 = vpack.c.b16 %v4840, %v4837
        %v5000 = vpack.c.b16 %v4841, %v4838
        %v5001 = vpack.c.b16 %v4842, %v4839
        %v5002 = vpack.c.b16 %v4846, %v4843
        %v5003 = vpack.c.b16 %v4847, %v4844
        %v5004 = vpack.c.b16 %v4848, %v4845
        %v5005 = vpack.c.b16 %v4852, %v4849
        %v5006 = vpack.c.b16 %v4853, %v4850
        %v5007 = vpack.c.b16 %v4854, %v4851
        %v5008 = vpack.c.b16 %v4858, %v4855
        %v5009 = vpack.c.b16 %v4859, %v4856
        %v5010 = vpack.c.b16 %v4860, %v4857
        %v5011 = vpack.c.b16 %v4864, %v4861
        %v5012 = vpack.c.b16 %v4865, %v4862
        %v5013 = vpack.c.b16 %v4866, %v4863
        %v5014 = vpack.c.b16 %v4870, %v4867
        %v5015 = vpack.c.b16 %v4871, %v4868
        %v5016 = vpack.c.b16 %v4872, %v4869
        %5161 = vmatpush.bf16.msra.mxu0 %v4894
        %5162 = vmatpush.bf16.msra.mxu0 %v4891
        %5163 = vmatpush.bf16.msra.mxu0 %v4888
        %5164 = vmatpush.bf16.msra.mxu0 %v4885
        %5165 = vmatpush.bf16.msra.mxu0 %v4882
        %5166 = vmatpush.bf16.msra.mxu0 %v4879
        %5167 = vmatpush.bf16.msra.mxu0 %v4876
        %5168 = vmatpush.bf16.msra.mxu0 %v4873
        %5169 = vmatmul.bf16.gmra.mxu0 %v4165
        %v5170 = vpop.f32.mrf.mxu0
        %v5171 = vadd.f32 0.0, %v5170
        %v5172 = vpop.f32.mrf.mxu0
        %v5173 = vadd.f32 0.0, %v5172
        %5174 = vmatmul.bf16.gmra.mxu0 %v4171
        %v5175 = vpop.f32.mrf.mxu0
        %v5176 = vadd.f32 0.0, %v5175
        %v5177 = vpop.f32.mrf.mxu0
        %v5178 = vadd.f32 0.0, %v5177
        %5179 = vmatmul.bf16.gmra.mxu0 %v4177
        %v5180 = vpop.f32.mrf.mxu0
        %v5181 = vadd.f32 0.0, %v5180
        %v5182 = vpop.f32.mrf.mxu0
        %v5183 = vadd.f32 0.0, %v5182
        %5184 = vmatmul.bf16.gmra.mxu0 %v4183
        %v5185 = vpop.f32.mrf.mxu0
        %v5186 = vadd.f32 0.0, %v5185
        %v5187 = vpop.f32.mrf.mxu0
        %v5188 = vadd.f32 0.0, %v5187
        %5189 = vmatmul.bf16.gmra.mxu0 %v4189
        %v5190 = vpop.f32.mrf.mxu0
        %v5191 = vadd.f32 0.0, %v5190
        %v5192 = vpop.f32.mrf.mxu0
        %v5193 = vadd.f32 0.0, %v5192
        %5194 = vmatmul.bf16.gmra.mxu0 %v4195
        %v5195 = vpop.f32.mrf.mxu0
        %v5196 = vadd.f32 0.0, %v5195
        %v5197 = vpop.f32.mrf.mxu0
        %v5198 = vadd.f32 0.0, %v5197
        %5199 = vdwg.mxu0
        %5200 = vmatpush.bf16.msra.mxu0 %v4918
        %5201 = vmatpush.bf16.msra.mxu0 %v4915
        %5202 = vmatpush.bf16.msra.mxu0 %v4912
        %5203 = vmatpush.bf16.msra.mxu0 %v4909
        %5204 = vmatpush.bf16.msra.mxu0 %v4906
        %5205 = vmatpush.bf16.msra.mxu0 %v4903
        %5206 = vmatpush.bf16.msra.mxu0 %v4900
        %5207 = vmatpush.bf16.msra.mxu0 %v4897
        %5208 = vmatmul.bf16.gmra.mxu0 %v4166
        %v5209 = vpop.f32.mrf.mxu0
        %v5210 = vadd.f32 %v5171, %v5209
        %v5211 = vpop.f32.mrf.mxu0
        %v5212 = vadd.f32 %v5173, %v5211
        %5213 = vmatmul.bf16.gmra.mxu0 %v4172
        %v5214 = vpop.f32.mrf.mxu0
        %v5215 = vadd.f32 %v5176, %v5214
        %v5216 = vpop.f32.mrf.mxu0
        %v5217 = vadd.f32 %v5178, %v5216
        %5218 = vmatmul.bf16.gmra.mxu0 %v4178
        %v5219 = vpop.f32.mrf.mxu0
        %v5220 = vadd.f32 %v5181, %v5219
        %v5221 = vpop.f32.mrf.mxu0
        %v5222 = vadd.f32 %v5183, %v5221
        %5223 = vmatmul.bf16.gmra.mxu0 %v4184
        %v5224 = vpop.f32.mrf.mxu0
        %v5225 = vadd.f32 %v5186, %v5224
        %v5226 = vpop.f32.mrf.mxu0
        %v5227 = vadd.f32 %v5188, %v5226
        %5228 = vmatmul.bf16.gmra.mxu0 %v4190
        %v5229 = vpop.f32.mrf.mxu0
        %v5230 = vadd.f32 %v5191, %v5229
        %v5231 = vpop.f32.mrf.mxu0
        %v5232 = vadd.f32 %v5193, %v5231
        %5233 = vmatmul.bf16.gmra.mxu0 %v4196
        %v5234 = vpop.f32.mrf.mxu0
        %v5235 = vadd.f32 %v5196, %v5234
        %v5236 = vpop.f32.mrf.mxu0
        %v5237 = vadd.f32 %v5198, %v5236
        %5238 = vdwg.mxu0
        %5239 = vmatpush.bf16.msra.mxu0 %v4942
        %5240 = vmatpush.bf16.msra.mxu0 %v4939
        %5241 = vmatpush.bf16.msra.mxu0 %v4936
        %5242 = vmatpush.bf16.msra.mxu0 %v4933
        %5243 = vmatpush.bf16.msra.mxu0 %v4930
        %5244 = vmatpush.bf16.msra.mxu0 %v4927
        %5245 = vmatpush.bf16.msra.mxu0 %v4924
        %5246 = vmatpush.bf16.msra.mxu0 %v4921
        %5247 = vmatmul.bf16.gmra.mxu0 %v4167
        %v5248 = vpop.f32.mrf.mxu0
        %v5249 = vadd.f32 %v5210, %v5248
        %v5250 = vpop.f32.mrf.mxu0
        %v5251 = vadd.f32 %v5212, %v5250
        %5252 = vmatmul.bf16.gmra.mxu0 %v4173
        %v5253 = vpop.f32.mrf.mxu0
        %v5254 = vadd.f32 %v5215, %v5253
        %v5255 = vpop.f32.mrf.mxu0
        %v5256 = vadd.f32 %v5217, %v5255
        %5257 = vmatmul.bf16.gmra.mxu0 %v4179
        %v5258 = vpop.f32.mrf.mxu0
        %v5259 = vadd.f32 %v5220, %v5258
        %v5260 = vpop.f32.mrf.mxu0
        %v5261 = vadd.f32 %v5222, %v5260
        %5262 = vmatmul.bf16.gmra.mxu0 %v4185
        %v5263 = vpop.f32.mrf.mxu0
        %v5264 = vadd.f32 %v5225, %v5263
        %v5265 = vpop.f32.mrf.mxu0
        %v5266 = vadd.f32 %v5227, %v5265
        %5267 = vmatmul.bf16.gmra.mxu0 %v4191
        %v5268 = vpop.f32.mrf.mxu0
        %v5269 = vadd.f32 %v5230, %v5268
        %v5270 = vpop.f32.mrf.mxu0
        %v5271 = vadd.f32 %v5232, %v5270
        %5272 = vmatmul.bf16.gmra.mxu0 %v4197
        %v5273 = vpop.f32.mrf.mxu0
        %v5274 = vadd.f32 %v5235, %v5273
        %v5275 = vpop.f32.mrf.mxu0
        %v5276 = vadd.f32 %v5237, %v5275
        %5277 = vdwg.mxu0
        %5278 = vmatpush.bf16.msra.mxu0 %v4966
        %5279 = vmatpush.bf16.msra.mxu0 %v4963
        %5280 = vmatpush.bf16.msra.mxu0 %v4960
        %5281 = vmatpush.bf16.msra.mxu0 %v4957
        %5282 = vmatpush.bf16.msra.mxu0 %v4954
        %5283 = vmatpush.bf16.msra.mxu0 %v4951
        %5284 = vmatpush.bf16.msra.mxu0 %v4948
        %5285 = vmatpush.bf16.msra.mxu0 %v4945
        %5286 = vmatmul.bf16.gmra.mxu0 %v4168
        %v5287 = vpop.f32.mrf.mxu0
        %v5288 = vadd.f32 %v5249, %v5287
        %v5289 = vpop.f32.mrf.mxu0
        %v5290 = vadd.f32 %v5251, %v5289
        %5291 = vmatmul.bf16.gmra.mxu0 %v4174
        %v5292 = vpop.f32.mrf.mxu0
        %v5293 = vadd.f32 %v5254, %v5292
        %v5294 = vpop.f32.mrf.mxu0
        %v5295 = vadd.f32 %v5256, %v5294
        %5296 = vmatmul.bf16.gmra.mxu0 %v4180
        %v5297 = vpop.f32.mrf.mxu0
        %v5298 = vadd.f32 %v5259, %v5297
        %v5299 = vpop.f32.mrf.mxu0
        %v5300 = vadd.f32 %v5261, %v5299
        %5301 = vmatmul.bf16.gmra.mxu0 %v4186
        %v5302 = vpop.f32.mrf.mxu0
        %v5303 = vadd.f32 %v5264, %v5302
        %v5304 = vpop.f32.mrf.mxu0
        %v5305 = vadd.f32 %v5266, %v5304
        %5306 = vmatmul.bf16.gmra.mxu0 %v4192
        %v5307 = vpop.f32.mrf.mxu0
        %v5308 = vadd.f32 %v5269, %v5307
        %v5309 = vpop.f32.mrf.mxu0
        %v5310 = vadd.f32 %v5271, %v5309
        %5311 = vmatmul.bf16.gmra.mxu0 %v4198
        %v5312 = vpop.f32.mrf.mxu0
        %v5313 = vadd.f32 %v5274, %v5312
        %v5314 = vpop.f32.mrf.mxu0
        %v5315 = vadd.f32 %v5276, %v5314
        %5316 = vdwg.mxu0
        %5317 = vmatpush.bf16.msra.mxu0 %v4990
        %5318 = vmatpush.bf16.msra.mxu0 %v4987
        %5319 = vmatpush.bf16.msra.mxu0 %v4984
        %5320 = vmatpush.bf16.msra.mxu0 %v4981
        %5321 = vmatpush.bf16.msra.mxu0 %v4978
        %5322 = vmatpush.bf16.msra.mxu0 %v4975
        %5323 = vmatpush.bf16.msra.mxu0 %v4972
        %5324 = vmatpush.bf16.msra.mxu0 %v4969
        %5325 = vmatmul.bf16.gmra.mxu0 %v4169
        %v5326 = vpop.f32.mrf.mxu0
        %v5327 = vadd.f32 %v5288, %v5326
        %v5328 = vpop.f32.mrf.mxu0
        %v5329 = vadd.f32 %v5290, %v5328
        %5330 = vmatmul.bf16.gmra.mxu0 %v4175
        %v5331 = vpop.f32.mrf.mxu0
        %v5332 = vadd.f32 %v5293, %v5331
        %v5333 = vpop.f32.mrf.mxu0
        %v5334 = vadd.f32 %v5295, %v5333
        %5335 = vmatmul.bf16.gmra.mxu0 %v4181
        %v5336 = vpop.f32.mrf.mxu0
        %v5337 = vadd.f32 %v5298, %v5336
        %v5338 = vpop.f32.mrf.mxu0
        %v5339 = vadd.f32 %v5300, %v5338
        %5340 = vmatmul.bf16.gmra.mxu0 %v4187
        %v5341 = vpop.f32.mrf.mxu0
        %v5342 = vadd.f32 %v5303, %v5341
        %v5343 = vpop.f32.mrf.mxu0
        %v5344 = vadd.f32 %v5305, %v5343
        %5345 = vmatmul.bf16.gmra.mxu0 %v4193
        %v5346 = vpop.f32.mrf.mxu0
        %v5347 = vadd.f32 %v5308, %v5346
        %v5348 = vpop.f32.mrf.mxu0
        %v5349 = vadd.f32 %v5310, %v5348
        %5350 = vmatmul.bf16.gmra.mxu0 %v4199
        %v5351 = vpop.f32.mrf.mxu0
        %v5352 = vadd.f32 %v5313, %v5351
        %v5353 = vpop.f32.mrf.mxu0
        %v5354 = vadd.f32 %v5315, %v5353
        %5355 = vdwg.mxu0
        %5356 = vmatpush.bf16.msra.mxu0 %v5014
        %5357 = vmatpush.bf16.msra.mxu0 %v5011
        %5358 = vmatpush.bf16.msra.mxu0 %v5008
        %5359 = vmatpush.bf16.msra.mxu0 %v5005
        %5360 = vmatpush.bf16.msra.mxu0 %v5002
        %5361 = vmatpush.bf16.msra.mxu0 %v4999
        %5362 = vmatpush.bf16.msra.mxu0 %v4996
        %5363 = vmatpush.bf16.msra.mxu0 %v4993
        %5364 = vmatmul.bf16.gmra.mxu0 %v4170
        %v5365 = vpop.f32.mrf.mxu0
        %v5366 = vadd.f32 %v5327, %v5365
        %v5367 = vpop.f32.mrf.mxu0
        %v5368 = vadd.f32 %v5329, %v5367
        %5369 = vmatmul.bf16.gmra.mxu0 %v4176
        %v5370 = vpop.f32.mrf.mxu0
        %v5371 = vadd.f32 %v5332, %v5370
        %v5372 = vpop.f32.mrf.mxu0
        %v5373 = vadd.f32 %v5334, %v5372
        %5374 = vmatmul.bf16.gmra.mxu0 %v4182
        %v5375 = vpop.f32.mrf.mxu0
        %v5376 = vadd.f32 %v5337, %v5375
        %v5377 = vpop.f32.mrf.mxu0
        %v5378 = vadd.f32 %v5339, %v5377
        %5379 = vmatmul.bf16.gmra.mxu0 %v4188
        %v5380 = vpop.f32.mrf.mxu0
        %v5381 = vadd.f32 %v5342, %v5380
        %v5382 = vpop.f32.mrf.mxu0
        %v5383 = vadd.f32 %v5344, %v5382
        %5384 = vmatmul.bf16.gmra.mxu0 %v4194
        %v5385 = vpop.f32.mrf.mxu0
        %v5386 = vadd.f32 %v5347, %v5385
        %v5387 = vpop.f32.mrf.mxu0
        %v5388 = vadd.f32 %v5349, %v5387
        %5389 = vmatmul.bf16.gmra.mxu0 %v4200
        %v5390 = vpop.f32.mrf.mxu0
        %v5391 = vadd.f32 %v5352, %v5390
        %v5392 = vpop.f32.mrf.mxu0
        %v5393 = vadd.f32 %v5354, %v5392
        %5394 = vdwg.mxu0
        %5395 = vmatpush.bf16.msra.mxu0 %v4895
        %5396 = vmatpush.bf16.msra.mxu0 %v4892
        %5397 = vmatpush.bf16.msra.mxu0 %v4889
        %5398 = vmatpush.bf16.msra.mxu0 %v4886
        %5399 = vmatpush.bf16.msra.mxu0 %v4883
        %5400 = vmatpush.bf16.msra.mxu0 %v4880
        %5401 = vmatpush.bf16.msra.mxu0 %v4877
        %5402 = vmatpush.bf16.msra.mxu0 %v4874
        %5403 = vmatmul.bf16.gmra.mxu0 %v4165
        %v5404 = vpop.f32.mrf.mxu0
        %v5405 = vadd.f32 0.0, %v5404
        %v5406 = vpop.f32.mrf.mxu0
        %v5407 = vadd.f32 0.0, %v5406
        %5408 = vmatmul.bf16.gmra.mxu0 %v4171
        %v5409 = vpop.f32.mrf.mxu0
        %v5410 = vadd.f32 0.0, %v5409
        %v5411 = vpop.f32.mrf.mxu0
        %v5412 = vadd.f32 0.0, %v5411
        %5413 = vmatmul.bf16.gmra.mxu0 %v4177
        %v5414 = vpop.f32.mrf.mxu0
        %v5415 = vadd.f32 0.0, %v5414
        %v5416 = vpop.f32.mrf.mxu0
        %v5417 = vadd.f32 0.0, %v5416
        %5418 = vmatmul.bf16.gmra.mxu0 %v4183
        %v5419 = vpop.f32.mrf.mxu0
        %v5420 = vadd.f32 0.0, %v5419
        %v5421 = vpop.f32.mrf.mxu0
        %v5422 = vadd.f32 0.0, %v5421
        %5423 = vmatmul.bf16.gmra.mxu0 %v4189
        %v5424 = vpop.f32.mrf.mxu0
        %v5425 = vadd.f32 0.0, %v5424
        %v5426 = vpop.f32.mrf.mxu0
        %v5427 = vadd.f32 0.0, %v5426
        %5428 = vmatmul.bf16.gmra.mxu0 %v4195
        %v5429 = vpop.f32.mrf.mxu0
        %v5430 = vadd.f32 0.0, %v5429
        %v5431 = vpop.f32.mrf.mxu0
        %v5432 = vadd.f32 0.0, %v5431
        %5433 = vdwg.mxu0
        %5434 = vmatpush.bf16.msra.mxu0 %v4919
        %5435 = vmatpush.bf16.msra.mxu0 %v4916
        %5436 = vmatpush.bf16.msra.mxu0 %v4913
        %5437 = vmatpush.bf16.msra.mxu0 %v4910
        %5438 = vmatpush.bf16.msra.mxu0 %v4907
        %5439 = vmatpush.bf16.msra.mxu0 %v4904
        %5440 = vmatpush.bf16.msra.mxu0 %v4901
        %5441 = vmatpush.bf16.msra.mxu0 %v4898
        %5442 = vmatmul.bf16.gmra.mxu0 %v4166
        %v5443 = vpop.f32.mrf.mxu0
        %v5444 = vadd.f32 %v5405, %v5443
        %v5445 = vpop.f32.mrf.mxu0
        %v5446 = vadd.f32 %v5407, %v5445
        %5447 = vmatmul.bf16.gmra.mxu0 %v4172
        %v5448 = vpop.f32.mrf.mxu0
        %v5449 = vadd.f32 %v5410, %v5448
        %v5450 = vpop.f32.mrf.mxu0
        %v5451 = vadd.f32 %v5412, %v5450
        %5452 = vmatmul.bf16.gmra.mxu0 %v4178
        %v5453 = vpop.f32.mrf.mxu0
        %v5454 = vadd.f32 %v5415, %v5453
        %v5455 = vpop.f32.mrf.mxu0
        %v5456 = vadd.f32 %v5417, %v5455
        %5457 = vmatmul.bf16.gmra.mxu0 %v4184
        %v5458 = vpop.f32.mrf.mxu0
        %v5459 = vadd.f32 %v5420, %v5458
        %v5460 = vpop.f32.mrf.mxu0
        %v5461 = vadd.f32 %v5422, %v5460
        %5462 = vmatmul.bf16.gmra.mxu0 %v4190
        %v5463 = vpop.f32.mrf.mxu0
        %v5464 = vadd.f32 %v5425, %v5463
        %v5465 = vpop.f32.mrf.mxu0
        %v5466 = vadd.f32 %v5427, %v5465
        %5467 = vmatmul.bf16.gmra.mxu0 %v4196
        %v5468 = vpop.f32.mrf.mxu0
        %v5469 = vadd.f32 %v5430, %v5468
        %v5470 = vpop.f32.mrf.mxu0
        %v5471 = vadd.f32 %v5432, %v5470
        %5472 = vdwg.mxu0
        %5473 = vmatpush.bf16.msra.mxu0 %v4943
        %5474 = vmatpush.bf16.msra.mxu0 %v4940
        %5475 = vmatpush.bf16.msra.mxu0 %v4937
        %5476 = vmatpush.bf16.msra.mxu0 %v4934
        %5477 = vmatpush.bf16.msra.mxu0 %v4931
        %5478 = vmatpush.bf16.msra.mxu0 %v4928
        %5479 = vmatpush.bf16.msra.mxu0 %v4925
        %5480 = vmatpush.bf16.msra.mxu0 %v4922
        %5481 = vmatmul.bf16.gmra.mxu0 %v4167
        %v5482 = vpop.f32.mrf.mxu0
        %v5483 = vadd.f32 %v5444, %v5482
        %v5484 = vpop.f32.mrf.mxu0
        %v5485 = vadd.f32 %v5446, %v5484
        %5486 = vmatmul.bf16.gmra.mxu0 %v4173
        %v5487 = vpop.f32.mrf.mxu0
        %v5488 = vadd.f32 %v5449, %v5487
        %v5489 = vpop.f32.mrf.mxu0
        %v5490 = vadd.f32 %v5451, %v5489
        %5491 = vmatmul.bf16.gmra.mxu0 %v4179
        %v5492 = vpop.f32.mrf.mxu0
        %v5493 = vadd.f32 %v5454, %v5492
        %v5494 = vpop.f32.mrf.mxu0
        %v5495 = vadd.f32 %v5456, %v5494
        %5496 = vmatmul.bf16.gmra.mxu0 %v4185
        %v5497 = vpop.f32.mrf.mxu0
        %v5498 = vadd.f32 %v5459, %v5497
        %v5499 = vpop.f32.mrf.mxu0
        %v5500 = vadd.f32 %v5461, %v5499
        %5501 = vmatmul.bf16.gmra.mxu0 %v4191
        %v5502 = vpop.f32.mrf.mxu0
        %v5503 = vadd.f32 %v5464, %v5502
        %v5504 = vpop.f32.mrf.mxu0
        %v5505 = vadd.f32 %v5466, %v5504
        %5506 = vmatmul.bf16.gmra.mxu0 %v4197
        %v5507 = vpop.f32.mrf.mxu0
        %v5508 = vadd.f32 %v5469, %v5507
        %v5509 = vpop.f32.mrf.mxu0
        %v5510 = vadd.f32 %v5471, %v5509
        %5511 = vdwg.mxu0
        %5512 = vmatpush.bf16.msra.mxu0 %v4967
        %5513 = vmatpush.bf16.msra.mxu0 %v4964
        %5514 = vmatpush.bf16.msra.mxu0 %v4961
        %5515 = vmatpush.bf16.msra.mxu0 %v4958
        %5516 = vmatpush.bf16.msra.mxu0 %v4955
        %5517 = vmatpush.bf16.msra.mxu0 %v4952
        %5518 = vmatpush.bf16.msra.mxu0 %v4949
        %5519 = vmatpush.bf16.msra.mxu0 %v4946
        %5520 = vmatmul.bf16.gmra.mxu0 %v4168
        %v5521 = vpop.f32.mrf.mxu0
        %v5522 = vadd.f32 %v5483, %v5521
        %v5523 = vpop.f32.mrf.mxu0
        %v5524 = vadd.f32 %v5485, %v5523
        %5525 = vmatmul.bf16.gmra.mxu0 %v4174
        %v5526 = vpop.f32.mrf.mxu0
        %v5527 = vadd.f32 %v5488, %v5526
        %v5528 = vpop.f32.mrf.mxu0
        %v5529 = vadd.f32 %v5490, %v5528
        %5530 = vmatmul.bf16.gmra.mxu0 %v4180
        %v5531 = vpop.f32.mrf.mxu0
        %v5532 = vadd.f32 %v5493, %v5531
        %v5533 = vpop.f32.mrf.mxu0
        %v5534 = vadd.f32 %v5495, %v5533
        %5535 = vmatmul.bf16.gmra.mxu0 %v4186
        %v5536 = vpop.f32.mrf.mxu0
        %v5537 = vadd.f32 %v5498, %v5536
        %v5538 = vpop.f32.mrf.mxu0
        %v5539 = vadd.f32 %v5500, %v5538
        %5540 = vmatmul.bf16.gmra.mxu0 %v4192
        %v5541 = vpop.f32.mrf.mxu0
        %v5542 = vadd.f32 %v5503, %v5541
        %v5543 = vpop.f32.mrf.mxu0
        %v5544 = vadd.f32 %v5505, %v5543
        %5545 = vmatmul.bf16.gmra.mxu0 %v4198
        %v5546 = vpop.f32.mrf.mxu0
        %v5547 = vadd.f32 %v5508, %v5546
        %v5548 = vpop.f32.mrf.mxu0
        %v5549 = vadd.f32 %v5510, %v5548
        %5550 = vdwg.mxu0
        %5551 = vmatpush.bf16.msra.mxu0 %v4991
        %5552 = vmatpush.bf16.msra.mxu0 %v4988
        %5553 = vmatpush.bf16.msra.mxu0 %v4985
        %5554 = vmatpush.bf16.msra.mxu0 %v4982
        %5555 = vmatpush.bf16.msra.mxu0 %v4979
        %5556 = vmatpush.bf16.msra.mxu0 %v4976
        %5557 = vmatpush.bf16.msra.mxu0 %v4973
        %5558 = vmatpush.bf16.msra.mxu0 %v4970
        %5559 = vmatmul.bf16.gmra.mxu0 %v4169
        %v5560 = vpop.f32.mrf.mxu0
        %v5561 = vadd.f32 %v5522, %v5560
        %v5562 = vpop.f32.mrf.mxu0
        %v5563 = vadd.f32 %v5524, %v5562
        %5564 = vmatmul.bf16.gmra.mxu0 %v4175
        %v5565 = vpop.f32.mrf.mxu0
        %v5566 = vadd.f32 %v5527, %v5565
        %v5567 = vpop.f32.mrf.mxu0
        %v5568 = vadd.f32 %v5529, %v5567
        %5569 = vmatmul.bf16.gmra.mxu0 %v4181
        %v5570 = vpop.f32.mrf.mxu0
        %v5571 = vadd.f32 %v5532, %v5570
        %v5572 = vpop.f32.mrf.mxu0
        %v5573 = vadd.f32 %v5534, %v5572
        %5574 = vmatmul.bf16.gmra.mxu0 %v4187
        %v5575 = vpop.f32.mrf.mxu0
        %v5576 = vadd.f32 %v5537, %v5575
        %v5577 = vpop.f32.mrf.mxu0
        %v5578 = vadd.f32 %v5539, %v5577
        %5579 = vmatmul.bf16.gmra.mxu0 %v4193
        %v5580 = vpop.f32.mrf.mxu0
        %v5581 = vadd.f32 %v5542, %v5580
        %v5582 = vpop.f32.mrf.mxu0
        %v5583 = vadd.f32 %v5544, %v5582
        %5584 = vmatmul.bf16.gmra.mxu0 %v4199
        %v5585 = vpop.f32.mrf.mxu0
        %v5586 = vadd.f32 %v5547, %v5585
        %v5587 = vpop.f32.mrf.mxu0
        %v5588 = vadd.f32 %v5549, %v5587
        %5589 = vdwg.mxu0
        %5590 = vmatpush.bf16.msra.mxu0 %v5015
        %5591 = vmatpush.bf16.msra.mxu0 %v5012
        %5592 = vmatpush.bf16.msra.mxu0 %v5009
        %5593 = vmatpush.bf16.msra.mxu0 %v5006
        %5594 = vmatpush.bf16.msra.mxu0 %v5003
        %5595 = vmatpush.bf16.msra.mxu0 %v5000
        %5596 = vmatpush.bf16.msra.mxu0 %v4997
        %5597 = vmatpush.bf16.msra.mxu0 %v4994
        %5598 = vmatmul.bf16.gmra.mxu0 %v4170
        %v5599 = vpop.f32.mrf.mxu0
        %v5600 = vadd.f32 %v5561, %v5599
        %v5601 = vpop.f32.mrf.mxu0
        %v5602 = vadd.f32 %v5563, %v5601
        %5603 = vmatmul.bf16.gmra.mxu0 %v4176
        %v5604 = vpop.f32.mrf.mxu0
        %v5605 = vadd.f32 %v5566, %v5604
        %v5606 = vpop.f32.mrf.mxu0
        %v5607 = vadd.f32 %v5568, %v5606
        %5608 = vmatmul.bf16.gmra.mxu0 %v4182
        %v5609 = vpop.f32.mrf.mxu0
        %v5610 = vadd.f32 %v5571, %v5609
        %v5611 = vpop.f32.mrf.mxu0
        %v5612 = vadd.f32 %v5573, %v5611
        %5613 = vmatmul.bf16.gmra.mxu0 %v4188
        %v5614 = vpop.f32.mrf.mxu0
        %v5615 = vadd.f32 %v5576, %v5614
        %v5616 = vpop.f32.mrf.mxu0
        %v5617 = vadd.f32 %v5578, %v5616
        %5618 = vmatmul.bf16.gmra.mxu0 %v4194
        %v5619 = vpop.f32.mrf.mxu0
        %v5620 = vadd.f32 %v5581, %v5619
        %v5621 = vpop.f32.mrf.mxu0
        %v5622 = vadd.f32 %v5583, %v5621
        %5623 = vmatmul.bf16.gmra.mxu0 %v4200
        %v5624 = vpop.f32.mrf.mxu0
        %v5625 = vadd.f32 %v5586, %v5624
        %v5626 = vpop.f32.mrf.mxu0
        %v5627 = vadd.f32 %v5588, %v5626
        %5628 = vdwg.mxu0
        %5629 = vmatpush.bf16.msra.mxu0 %v4896
        %5630 = vmatpush.bf16.msra.mxu0 %v4893
        %5631 = vmatpush.bf16.msra.mxu0 %v4890
        %5632 = vmatpush.bf16.msra.mxu0 %v4887
        %5633 = vmatpush.bf16.msra.mxu0 %v4884
        %5634 = vmatpush.bf16.msra.mxu0 %v4881
        %5635 = vmatpush.bf16.msra.mxu0 %v4878
        %5636 = vmatpush.bf16.msra.mxu0 %v4875
        %5637 = vmatmul.bf16.gmra.mxu0 %v4165
        %v5638 = vpop.f32.mrf.mxu0
        %v5639 = vadd.f32 0.0, %v5638
        %v5640 = vpop.f32.mrf.mxu0
        %v5641 = vadd.f32 0.0, %v5640
        %5642 = vmatmul.bf16.gmra.mxu0 %v4171
        %v5643 = vpop.f32.mrf.mxu0
        %v5644 = vadd.f32 0.0, %v5643
        %v5645 = vpop.f32.mrf.mxu0
        %v5646 = vadd.f32 0.0, %v5645
        %5647 = vmatmul.bf16.gmra.mxu0 %v4177
        %v5648 = vpop.f32.mrf.mxu0
        %v5649 = vadd.f32 0.0, %v5648
        %v5650 = vpop.f32.mrf.mxu0
        %v5651 = vadd.f32 0.0, %v5650
        %5652 = vmatmul.bf16.gmra.mxu0 %v4183
        %v5653 = vpop.f32.mrf.mxu0
        %v5654 = vadd.f32 0.0, %v5653
        %v5655 = vpop.f32.mrf.mxu0
        %v5656 = vadd.f32 0.0, %v5655
        %5657 = vmatmul.bf16.gmra.mxu0 %v4189
        %v5658 = vpop.f32.mrf.mxu0
        %v5659 = vadd.f32 0.0, %v5658
        %v5660 = vpop.f32.mrf.mxu0
        %v5661 = vadd.f32 0.0, %v5660
        %5662 = vmatmul.bf16.gmra.mxu0 %v4195
        %v5663 = vpop.f32.mrf.mxu0
        %v5664 = vadd.f32 0.0, %v5663
        %v5665 = vpop.f32.mrf.mxu0
        %v5666 = vadd.f32 0.0, %v5665
        %5667 = vdwg.mxu0
        %5668 = vmatpush.bf16.msra.mxu0 %v4920
        %5669 = vmatpush.bf16.msra.mxu0 %v4917
        %5670 = vmatpush.bf16.msra.mxu0 %v4914
        %5671 = vmatpush.bf16.msra.mxu0 %v4911
        %5672 = vmatpush.bf16.msra.mxu0 %v4908
        %5673 = vmatpush.bf16.msra.mxu0 %v4905
        %5674 = vmatpush.bf16.msra.mxu0 %v4902
        %5675 = vmatpush.bf16.msra.mxu0 %v4899
        %5676 = vmatmul.bf16.gmra.mxu0 %v4166
        %v5677 = vpop.f32.mrf.mxu0
        %v5678 = vadd.f32 %v5639, %v5677
        %v5679 = vpop.f32.mrf.mxu0
        %v5680 = vadd.f32 %v5641, %v5679
        %5681 = vmatmul.bf16.gmra.mxu0 %v4172
        %v5682 = vpop.f32.mrf.mxu0
        %v5683 = vadd.f32 %v5644, %v5682
        %v5684 = vpop.f32.mrf.mxu0
        %v5685 = vadd.f32 %v5646, %v5684
        %5686 = vmatmul.bf16.gmra.mxu0 %v4178
        %v5687 = vpop.f32.mrf.mxu0
        %v5688 = vadd.f32 %v5649, %v5687
        %v5689 = vpop.f32.mrf.mxu0
        %v5690 = vadd.f32 %v5651, %v5689
        %5691 = vmatmul.bf16.gmra.mxu0 %v4184
        %v5692 = vpop.f32.mrf.mxu0
        %v5693 = vadd.f32 %v5654, %v5692
        %v5694 = vpop.f32.mrf.mxu0
        %v5695 = vadd.f32 %v5656, %v5694
        %5696 = vmatmul.bf16.gmra.mxu0 %v4190
        %v5697 = vpop.f32.mrf.mxu0
        %v5698 = vadd.f32 %v5659, %v5697
        %v5699 = vpop.f32.mrf.mxu0
        %v5700 = vadd.f32 %v5661, %v5699
        %5701 = vmatmul.bf16.gmra.mxu0 %v4196
        %v5702 = vpop.f32.mrf.mxu0
        %v5703 = vadd.f32 %v5664, %v5702
        %v5704 = vpop.f32.mrf.mxu0
        %v5705 = vadd.f32 %v5666, %v5704
        %5706 = vdwg.mxu0
        %5707 = vmatpush.bf16.msra.mxu0 %v4944
        %5708 = vmatpush.bf16.msra.mxu0 %v4941
        %5709 = vmatpush.bf16.msra.mxu0 %v4938
        %5710 = vmatpush.bf16.msra.mxu0 %v4935
        %5711 = vmatpush.bf16.msra.mxu0 %v4932
        %5712 = vmatpush.bf16.msra.mxu0 %v4929
        %5713 = vmatpush.bf16.msra.mxu0 %v4926
        %5714 = vmatpush.bf16.msra.mxu0 %v4923
        %5715 = vmatmul.bf16.gmra.mxu0 %v4167
        %v5716 = vpop.f32.mrf.mxu0
        %v5717 = vadd.f32 %v5678, %v5716
        %v5718 = vpop.f32.mrf.mxu0
        %v5719 = vadd.f32 %v5680, %v5718
        %5720 = vmatmul.bf16.gmra.mxu0 %v4173
        %v5721 = vpop.f32.mrf.mxu0
        %v5722 = vadd.f32 %v5683, %v5721
        %v5723 = vpop.f32.mrf.mxu0
        %v5724 = vadd.f32 %v5685, %v5723
        %5725 = vmatmul.bf16.gmra.mxu0 %v4179
        %v5726 = vpop.f32.mrf.mxu0
        %v5727 = vadd.f32 %v5688, %v5726
        %v5728 = vpop.f32.mrf.mxu0
        %v5729 = vadd.f32 %v5690, %v5728
        %5730 = vmatmul.bf16.gmra.mxu0 %v4185
        %v5731 = vpop.f32.mrf.mxu0
        %v5732 = vadd.f32 %v5693, %v5731
        %v5733 = vpop.f32.mrf.mxu0
        %v5734 = vadd.f32 %v5695, %v5733
        %5735 = vmatmul.bf16.gmra.mxu0 %v4191
        %v5736 = vpop.f32.mrf.mxu0
        %v5737 = vadd.f32 %v5698, %v5736
        %v5738 = vpop.f32.mrf.mxu0
        %v5739 = vadd.f32 %v5700, %v5738
        %5740 = vmatmul.bf16.gmra.mxu0 %v4197
        %v5741 = vpop.f32.mrf.mxu0
        %v5742 = vadd.f32 %v5703, %v5741
        %v5743 = vpop.f32.mrf.mxu0
        %v5744 = vadd.f32 %v5705, %v5743
        %5745 = vdwg.mxu0
        %5746 = vmatpush.bf16.msra.mxu0 %v4968
        %5747 = vmatpush.bf16.msra.mxu0 %v4965
        %5748 = vmatpush.bf16.msra.mxu0 %v4962
        %5749 = vmatpush.bf16.msra.mxu0 %v4959
        %5750 = vmatpush.bf16.msra.mxu0 %v4956
        %5751 = vmatpush.bf16.msra.mxu0 %v4953
        %5752 = vmatpush.bf16.msra.mxu0 %v4950
        %5753 = vmatpush.bf16.msra.mxu0 %v4947
        %5754 = vmatmul.bf16.gmra.mxu0 %v4168
        %v5755 = vpop.f32.mrf.mxu0
        %v5756 = vadd.f32 %v5717, %v5755
        %v5757 = vpop.f32.mrf.mxu0
        %v5758 = vadd.f32 %v5719, %v5757
        %5759 = vmatmul.bf16.gmra.mxu0 %v4174
        %v5760 = vpop.f32.mrf.mxu0
        %v5761 = vadd.f32 %v5722, %v5760
        %v5762 = vpop.f32.mrf.mxu0
        %v5763 = vadd.f32 %v5724, %v5762
        %5764 = vmatmul.bf16.gmra.mxu0 %v4180
        %v5765 = vpop.f32.mrf.mxu0
        %v5766 = vadd.f32 %v5727, %v5765
        %v5767 = vpop.f32.mrf.mxu0
        %v5768 = vadd.f32 %v5729, %v5767
        %5769 = vmatmul.bf16.gmra.mxu0 %v4186
        %v5770 = vpop.f32.mrf.mxu0
        %v5771 = vadd.f32 %v5732, %v5770
        %v5772 = vpop.f32.mrf.mxu0
        %v5773 = vadd.f32 %v5734, %v5772
        %5774 = vmatmul.bf16.gmra.mxu0 %v4192
        %v5775 = vpop.f32.mrf.mxu0
        %v5776 = vadd.f32 %v5737, %v5775
        %v5777 = vpop.f32.mrf.mxu0
        %v5778 = vadd.f32 %v5739, %v5777
        %5779 = vmatmul.bf16.gmra.mxu0 %v4198
        %v5780 = vpop.f32.mrf.mxu0
        %v5781 = vadd.f32 %v5742, %v5780
        %v5782 = vpop.f32.mrf.mxu0
        %v5783 = vadd.f32 %v5744, %v5782
        %5784 = vdwg.mxu0
        %5785 = vmatpush.bf16.msra.mxu0 %v4992
        %5786 = vmatpush.bf16.msra.mxu0 %v4989
        %5787 = vmatpush.bf16.msra.mxu0 %v4986
        %5788 = vmatpush.bf16.msra.mxu0 %v4983
        %5789 = vmatpush.bf16.msra.mxu0 %v4980
        %5790 = vmatpush.bf16.msra.mxu0 %v4977
        %5791 = vmatpush.bf16.msra.mxu0 %v4974
        %5792 = vmatpush.bf16.msra.mxu0 %v4971
        %5793 = vmatmul.bf16.gmra.mxu0 %v4169
        %v5794 = vpop.f32.mrf.mxu0
        %v5795 = vadd.f32 %v5756, %v5794
        %v5796 = vpop.f32.mrf.mxu0
        %v5797 = vadd.f32 %v5758, %v5796
        %5798 = vmatmul.bf16.gmra.mxu0 %v4175
        %v5799 = vpop.f32.mrf.mxu0
        %v5800 = vadd.f32 %v5761, %v5799
        %v5801 = vpop.f32.mrf.mxu0
        %v5802 = vadd.f32 %v5763, %v5801
        %5803 = vmatmul.bf16.gmra.mxu0 %v4181
        %v5804 = vpop.f32.mrf.mxu0
        %v5805 = vadd.f32 %v5766, %v5804
        %v5806 = vpop.f32.mrf.mxu0
        %v5807 = vadd.f32 %v5768, %v5806
        %5808 = vmatmul.bf16.gmra.mxu0 %v4187
        %v5809 = vpop.f32.mrf.mxu0
        %v5810 = vadd.f32 %v5771, %v5809
        %v5811 = vpop.f32.mrf.mxu0
        %v5812 = vadd.f32 %v5773, %v5811
        %5813 = vmatmul.bf16.gmra.mxu0 %v4193
        %v5814 = vpop.f32.mrf.mxu0
        %v5815 = vadd.f32 %v5776, %v5814
        %v5816 = vpop.f32.mrf.mxu0
        %v5817 = vadd.f32 %v5778, %v5816
        %5818 = vmatmul.bf16.gmra.mxu0 %v4199
        %v5819 = vpop.f32.mrf.mxu0
        %v5820 = vadd.f32 %v5781, %v5819
        %v5821 = vpop.f32.mrf.mxu0
        %v5822 = vadd.f32 %v5783, %v5821
        %5823 = vdwg.mxu0
        %5824 = vmatpush.bf16.msra.mxu0 %v5016
        %5825 = vmatpush.bf16.msra.mxu0 %v5013
        %5826 = vmatpush.bf16.msra.mxu0 %v5010
        %5827 = vmatpush.bf16.msra.mxu0 %v5007
        %5828 = vmatpush.bf16.msra.mxu0 %v5004
        %5829 = vmatpush.bf16.msra.mxu0 %v5001
        %5830 = vmatpush.bf16.msra.mxu0 %v4998
        %5831 = vmatpush.bf16.msra.mxu0 %v4995
        %5832 = vmatmul.bf16.gmra.mxu0 %v4170
        %v5833 = vpop.f32.mrf.mxu0
        %v5834 = vadd.f32 %v5795, %v5833
        %v5835 = vpop.f32.mrf.mxu0
        %v5836 = vadd.f32 %v5797, %v5835
        %5837 = vmatmul.bf16.gmra.mxu0 %v4176
        %v5838 = vpop.f32.mrf.mxu0
        %v5839 = vadd.f32 %v5800, %v5838
        %v5840 = vpop.f32.mrf.mxu0
        %v5841 = vadd.f32 %v5802, %v5840
        %5842 = vmatmul.bf16.gmra.mxu0 %v4182
        %v5843 = vpop.f32.mrf.mxu0
        %v5844 = vadd.f32 %v5805, %v5843
        %v5845 = vpop.f32.mrf.mxu0
        %v5846 = vadd.f32 %v5807, %v5845
        %5847 = vmatmul.bf16.gmra.mxu0 %v4188
        %v5848 = vpop.f32.mrf.mxu0
        %v5849 = vadd.f32 %v5810, %v5848
        %v5850 = vpop.f32.mrf.mxu0
        %v5851 = vadd.f32 %v5812, %v5850
        %5852 = vmatmul.bf16.gmra.mxu0 %v4194
        %v5853 = vpop.f32.mrf.mxu0
        %v5854 = vadd.f32 %v5815, %v5853
        %v5855 = vpop.f32.mrf.mxu0
        %v5856 = vadd.f32 %v5817, %v5855
        %5857 = vmatmul.bf16.gmra.mxu0 %v4200
        %v5858 = vpop.f32.mrf.mxu0
        %v5859 = vadd.f32 %v5820, %v5858
        %v5860 = vpop.f32.mrf.mxu0
        %v5861 = vadd.f32 %v5822, %v5860
        %5862 = vdwg.mxu0
        %v5863 = vpack.c.bf16 %v5368, %v5366
        %v5864 = vpack.c.bf16 %v5602, %v5600
        %v5865 = vpack.c.bf16 %v5836, %v5834
        %v5866 = vpack.c.bf16 %v5373, %v5371
        %v5867 = vpack.c.bf16 %v5607, %v5605
        %v5868 = vpack.c.bf16 %v5841, %v5839
        %v5869 = vpack.c.bf16 %v5378, %v5376
        %v5870 = vpack.c.bf16 %v5612, %v5610
        %v5871 = vpack.c.bf16 %v5846, %v5844
        %v5872 = vpack.c.bf16 %v5383, %v5381
        %v5873 = vpack.c.bf16 %v5617, %v5615
        %v5874 = vpack.c.bf16 %v5851, %v5849
        %v5875 = vpack.c.bf16 %v5388, %v5386
        %v5876 = vpack.c.bf16 %v5622, %v5620
        %v5877 = vpack.c.bf16 %v5856, %v5854
        %v5878 = vld [vmem:[#allocation7] sm:$0xff]
        %v5879 = vld [vmem:[#allocation7 + $0x8] sm:$0xff]
        %v5880 = vld [vmem:[#allocation7 + $0x10] sm:$0xf]
        %v5881 = vld [vmem:[#allocation7 + $0x14] sm:$0xff]
        %v5882 = vld [vmem:[#allocation7 + $0x1c] sm:$0xff]
        %v5883 = vld [vmem:[#allocation7 + $0x24] sm:$0xf]
        %v5884 = vld [vmem:[#allocation7 + $0x28] sm:$0xff]
        %v5885 = vld [vmem:[#allocation7 + $0x30] sm:$0xff]
        %v5886 = vld [vmem:[#allocation7 + $0x38] sm:$0xf]
        %v5887 = vld [vmem:[#allocation7 + $0x3c] sm:$0xff]
        %v5888 = vld [vmem:[#allocation7 + $0x44] sm:$0xff]
        %v5889 = vld [vmem:[#allocation7 + $0x4c] sm:$0xf]
        %v5890 = vld [vmem:[#allocation7 + $0x50] sm:$0xff]
        %v5891 = vld [vmem:[#allocation7 + $0x58] sm:$0xff]
        %v5892 = vld [vmem:[#allocation7 + $0x60] sm:$0xf]
        %v5893 = vld [vmem:[#allocation7 + $0x64] sm:$0xff]
        %v5894 = vld [vmem:[#allocation7 + $0x6c] sm:$0xff]
        %v5895 = vld [vmem:[#allocation7 + $0x74] sm:$0xf]
        %v5896 = vld [vmem:[#allocation7 + $0x78] sm:$0xff]
        %v5897 = vld [vmem:[#allocation7 + $0x80] sm:$0xff]
        %v5898 = vld [vmem:[#allocation7 + $0x88] sm:$0xf]
        %v5899 = vld [vmem:[#allocation7 + $0x8c] sm:$0xff]
        %v5900 = vld [vmem:[#allocation7 + $0x94] sm:$0xff]
        %v5901 = vld [vmem:[#allocation7 + $0x9c] sm:$0xf]
        %v5902 = vld [vmem:[#allocation7 + $0xa0] sm:$0xff]
        %v5903 = vld [vmem:[#allocation7 + $0xa8] sm:$0xff]
        %v5904 = vld [vmem:[#allocation7 + $0xb0] sm:$0xf]
        %v5905 = vld [vmem:[#allocation7 + $0xb4] sm:$0xff]
        %v5906 = vld [vmem:[#allocation7 + $0xbc] sm:$0xff]
        %v5907 = vld [vmem:[#allocation7 + $0xc4] sm:$0xf]
        %v5908 = vld [vmem:[#allocation7 + $0xc8] sm:$0xff]
        %v5909 = vld [vmem:[#allocation7 + $0xd0] sm:$0xff]
        %v5910 = vld [vmem:[#allocation7 + $0xd8] sm:$0xf]
        %v5911 = vld [vmem:[#allocation7 + $0xdc] sm:$0xff]
        %v5912 = vld [vmem:[#allocation7 + $0xe4] sm:$0xff]
        %v5913 = vld [vmem:[#allocation7 + $0xec] sm:$0xf]
        %v5914 = vld [vmem:[#allocation7 + $0xf0] sm:$0xff]
        %v5915 = vld [vmem:[#allocation7 + $0xf8] sm:$0xff]
        %v5916 = vld [vmem:[#allocation7 + $0x100] sm:$0xf]
        %v5917 = vld [vmem:[#allocation7 + $0x104] sm:$0xff]
        %v5918 = vld [vmem:[#allocation7 + $0x10c] sm:$0xff]
        %v5919 = vld [vmem:[#allocation7 + $0x114] sm:$0xf]
        %v5920 = vld [vmem:[#allocation7 + $0x118] sm:$0xff]
        %v5921 = vld [vmem:[#allocation7 + $0x120] sm:$0xff]
        %v5922 = vld [vmem:[#allocation7 + $0x128] sm:$0xf]
        %v5923 = vld [vmem:[#allocation7 + $0x12c] sm:$0xff]
        %v5924 = vld [vmem:[#allocation7 + $0x134] sm:$0xff]
        %v5925 = vld [vmem:[#allocation7 + $0x13c] sm:$0xf]
        %v5926 = vld [vmem:[#allocation7 + $0x140] sm:$0xff]
        %v5927 = vld [vmem:[#allocation7 + $0x148] sm:$0xff]
        %v5928 = vld [vmem:[#allocation7 + $0x150] sm:$0xf]
        %v5929 = vld [vmem:[#allocation7 + $0x154] sm:$0xff]
        %v5930 = vld [vmem:[#allocation7 + $0x15c] sm:$0xff]
        %v5931 = vld [vmem:[#allocation7 + $0x164] sm:$0xf]
        %v5932 = vld [vmem:[#allocation7 + $0x168] sm:$0xff]
        %v5933 = vld [vmem:[#allocation7 + $0x170] sm:$0xff]
        %v5934 = vld [vmem:[#allocation7 + $0x178] sm:$0xf]
        %v5935 = vld [vmem:[#allocation7 + $0x17c] sm:$0xff]
        %v5936 = vld [vmem:[#allocation7 + $0x184] sm:$0xff]
        %v5937 = vld [vmem:[#allocation7 + $0x18c] sm:$0xf]
        %v5938 = vld [vmem:[#allocation7 + $0x190] sm:$0xff]
        %v5939 = vld [vmem:[#allocation7 + $0x198] sm:$0xff]
        %v5940 = vld [vmem:[#allocation7 + $0x1a0] sm:$0xf]
        %v5941 = vld [vmem:[#allocation7 + $0x1a4] sm:$0xff]
        %v5942 = vld [vmem:[#allocation7 + $0x1ac] sm:$0xff]
        %v5943 = vld [vmem:[#allocation7 + $0x1b4] sm:$0xf]
        %v5944 = vld [vmem:[#allocation7 + $0x1b8] sm:$0xff]
        %v5945 = vld [vmem:[#allocation7 + $0x1c0] sm:$0xff]
        %v5946 = vld [vmem:[#allocation7 + $0x1c8] sm:$0xf]
        %v5947 = vld [vmem:[#allocation7 + $0x1cc] sm:$0xff]
        %v5948 = vld [vmem:[#allocation7 + $0x1d4] sm:$0xff]
        %v5949 = vld [vmem:[#allocation7 + $0x1dc] sm:$0xf]
        %v5950 = vld [vmem:[#allocation7 + $0x1e0] sm:$0xff]
        %v5951 = vld [vmem:[#allocation7 + $0x1e8] sm:$0xff]
        %v5952 = vld [vmem:[#allocation7 + $0x1f0] sm:$0xf]
        %v5953 = vld [vmem:[#allocation7 + $0x1f4] sm:$0xff]
        %v5954 = vld [vmem:[#allocation7 + $0x1fc] sm:$0xff]
        %v5955 = vld [vmem:[#allocation7 + $0x204] sm:$0xf]
        %v5956 = vld [vmem:[#allocation7 + $0x208] sm:$0xff]
        %v5957 = vld [vmem:[#allocation7 + $0x210] sm:$0xff]
        %v5958 = vld [vmem:[#allocation7 + $0x218] sm:$0xf]
        %v5959 = vld [vmem:[#allocation7 + $0x21c] sm:$0xff]
        %v5960 = vld [vmem:[#allocation7 + $0x224] sm:$0xff]
        %v5961 = vld [vmem:[#allocation7 + $0x22c] sm:$0xf]
        %v5962 = vld [vmem:[#allocation7 + $0x230] sm:$0xff]
        %v5963 = vld [vmem:[#allocation7 + $0x238] sm:$0xff]
        %v5964 = vld [vmem:[#allocation7 + $0x240] sm:$0xf]
        %v5965 = vld [vmem:[#allocation7 + $0x244] sm:$0xff]
        %v5966 = vld [vmem:[#allocation7 + $0x24c] sm:$0xff]
        %v5967 = vld [vmem:[#allocation7 + $0x254] sm:$0xf]
        %v5968 = vld [vmem:[#allocation7 + $0x258] sm:$0xff]
        %v5969 = vld [vmem:[#allocation7 + $0x260] sm:$0xff]
        %v5970 = vld [vmem:[#allocation7 + $0x268] sm:$0xf]
        %v5971 = vld [vmem:[#allocation7 + $0x26c] sm:$0xff]
        %v5972 = vld [vmem:[#allocation7 + $0x274] sm:$0xff]
        %v5973 = vld [vmem:[#allocation7 + $0x27c] sm:$0xf]
        %v5974 = vld [vmem:[#allocation7 + $0x280] sm:$0xff]
        %v5975 = vld [vmem:[#allocation7 + $0x288] sm:$0xff]
        %v5976 = vld [vmem:[#allocation7 + $0x290] sm:$0xf]
        %v5977 = vld [vmem:[#allocation7 + $0x294] sm:$0xff]
        %v5978 = vld [vmem:[#allocation7 + $0x29c] sm:$0xff]
        %v5979 = vld [vmem:[#allocation7 + $0x2a4] sm:$0xf]
        %v5980 = vld [vmem:[#allocation7 + $0x2a8] sm:$0xff]
        %v5981 = vld [vmem:[#allocation7 + $0x2b0] sm:$0xff]
        %v5982 = vld [vmem:[#allocation7 + $0x2b8] sm:$0xf]
        %v5983 = vld [vmem:[#allocation7 + $0x2bc] sm:$0xff]
        %v5984 = vld [vmem:[#allocation7 + $0x2c4] sm:$0xff]
        %v5985 = vld [vmem:[#allocation7 + $0x2cc] sm:$0xf]
        %v5986 = vld [vmem:[#allocation7 + $0x2d0] sm:$0xff]
        %v5987 = vld [vmem:[#allocation7 + $0x2d8] sm:$0xff]
        %v5988 = vld [vmem:[#allocation7 + $0x2e0] sm:$0xf]
        %v5989 = vld [vmem:[#allocation7 + $0x2e4] sm:$0xff]
        %v5990 = vld [vmem:[#allocation7 + $0x2ec] sm:$0xff]
        %v5991 = vld [vmem:[#allocation7 + $0x2f4] sm:$0xf]
        %v5992 = vld [vmem:[#allocation7 + $0x2f8] sm:$0xff]
        %v5993 = vld [vmem:[#allocation7 + $0x300] sm:$0xff]
        %v5994 = vld [vmem:[#allocation7 + $0x308] sm:$0xf]
        %v5995 = vld [vmem:[#allocation7 + $0x30c] sm:$0xff]
        %v5996 = vld [vmem:[#allocation7 + $0x314] sm:$0xff]
        %v5997 = vld [vmem:[#allocation7 + $0x31c] sm:$0xf]
        %v5998 = vld [vmem:[#allocation7 + $0x320] sm:$0xff]
        %v5999 = vld [vmem:[#allocation7 + $0x328] sm:$0xff]
        %v6000 = vld [vmem:[#allocation7 + $0x330] sm:$0xf]
        %v6001 = vld [vmem:[#allocation7 + $0x334] sm:$0xff]
        %v6002 = vld [vmem:[#allocation7 + $0x33c] sm:$0xff]
        %v6003 = vld [vmem:[#allocation7 + $0x344] sm:$0xf]
        %v6004 = vld [vmem:[#allocation7 + $0x348] sm:$0xff]
        %v6005 = vld [vmem:[#allocation7 + $0x350] sm:$0xff]
        %v6006 = vld [vmem:[#allocation7 + $0x358] sm:$0xf]
        %v6007 = vld [vmem:[#allocation7 + $0x35c] sm:$0xff]
        %v6008 = vld [vmem:[#allocation7 + $0x364] sm:$0xff]
        %v6009 = vld [vmem:[#allocation7 + $0x36c] sm:$0xf]
        %v6010 = vld [vmem:[#allocation7 + $0x370] sm:$0xff]
        %v6011 = vld [vmem:[#allocation7 + $0x378] sm:$0xff]
        %v6012 = vld [vmem:[#allocation7 + $0x380] sm:$0xf]
        %v6013 = vld [vmem:[#allocation7 + $0x384] sm:$0xff]
        %v6014 = vld [vmem:[#allocation7 + $0x38c] sm:$0xff]
        %v6015 = vld [vmem:[#allocation7 + $0x394] sm:$0xf]
        %v6016 = vld [vmem:[#allocation7 + $0x398] sm:$0xff]
        %v6017 = vld [vmem:[#allocation7 + $0x3a0] sm:$0xff]
        %v6018 = vld [vmem:[#allocation7 + $0x3a8] sm:$0xf]
        %v6019 = vld [vmem:[#allocation7 + $0x3ac] sm:$0xff]
        %v6020 = vld [vmem:[#allocation7 + $0x3b4] sm:$0xff]
        %v6021 = vld [vmem:[#allocation7 + $0x3bc] sm:$0xf]
        %v6022 = vpack.c.bf16 %v5371, %v5368
        %v6023 = vpack.c.bf16 %v5605, %v5602
        %v6024 = vpack.c.bf16 %v5839, %v5836
        %v6025 = vpack.c.bf16 %v5376, %v5373
        %v6026 = vpack.c.bf16 %v5610, %v5607
        %v6027 = vpack.c.bf16 %v5844, %v5841
        %v6028 = vpack.c.bf16 %v5381, %v5378
        %v6029 = vpack.c.bf16 %v5615, %v5612
        %v6030 = vpack.c.bf16 %v5849, %v5846
        %v6031 = vpack.c.bf16 %v5386, %v5383
        %v6032 = vpack.c.bf16 %v5620, %v5617
        %v6033 = vpack.c.bf16 %v5854, %v5851
        %v6034 = vpack.c.bf16 %v5391, %v5388
        %v6035 = vpack.c.bf16 %v5625, %v5622
        %v6036 = vpack.c.bf16 %v5859, %v5856
        %s6037 = scalar_lea.vmem [#allocation7], 960
        %v6038 = vld [vmem:[%s6037] sm:$0xff]
        %v6039 = vld [vmem:[%s6037 + $0x8] sm:$0xff]
        %v6040 = vld [vmem:[%s6037 + $0x10] sm:$0xf]
        %v6041 = vld [vmem:[%s6037 + $0x14] sm:$0xff]
        %v6042 = vld [vmem:[%s6037 + $0x1c] sm:$0xff]
        %v6043 = vld [vmem:[%s6037 + $0x24] sm:$0xf]
        %v6044 = vld [vmem:[%s6037 + $0x28] sm:$0xff]
        %v6045 = vld [vmem:[%s6037 + $0x30] sm:$0xff]
        %v6046 = vld [vmem:[%s6037 + $0x38] sm:$0xf]
        %v6047 = vld [vmem:[%s6037 + $0x3c] sm:$0xff]
        %v6048 = vld [vmem:[%s6037 + $0x44] sm:$0xff]
        %v6049 = vld [vmem:[%s6037 + $0x4c] sm:$0xf]
        %v6050 = vld [vmem:[%s6037 + $0x50] sm:$0xff]
        %v6051 = vld [vmem:[%s6037 + $0x58] sm:$0xff]
        %v6052 = vld [vmem:[%s6037 + $0x60] sm:$0xf]
        %v6053 = vld [vmem:[%s6037 + $0x64] sm:$0xff]
        %v6054 = vld [vmem:[%s6037 + $0x6c] sm:$0xff]
        %v6055 = vld [vmem:[%s6037 + $0x74] sm:$0xf]
        %v6056 = vld [vmem:[%s6037 + $0x78] sm:$0xff]
        %v6057 = vld [vmem:[%s6037 + $0x80] sm:$0xff]
        %v6058 = vld [vmem:[%s6037 + $0x88] sm:$0xf]
        %v6059 = vld [vmem:[%s6037 + $0x8c] sm:$0xff]
        %v6060 = vld [vmem:[%s6037 + $0x94] sm:$0xff]
        %v6061 = vld [vmem:[%s6037 + $0x9c] sm:$0xf]
        %v6062 = vld [vmem:[%s6037 + $0xa0] sm:$0xff]
        %v6063 = vld [vmem:[%s6037 + $0xa8] sm:$0xff]
        %v6064 = vld [vmem:[%s6037 + $0xb0] sm:$0xf]
        %v6065 = vld [vmem:[%s6037 + $0xb4] sm:$0xff]
        %v6066 = vld [vmem:[%s6037 + $0xbc] sm:$0xff]
        %v6067 = vld [vmem:[%s6037 + $0xc4] sm:$0xf]
        %v6068 = vld [vmem:[%s6037 + $0xc8] sm:$0xff]
        %v6069 = vld [vmem:[%s6037 + $0xd0] sm:$0xff]
        %v6070 = vld [vmem:[%s6037 + $0xd8] sm:$0xf]
        %v6071 = vld [vmem:[%s6037 + $0xdc] sm:$0xff]
        %v6072 = vld [vmem:[%s6037 + $0xe4] sm:$0xff]
        %v6073 = vld [vmem:[%s6037 + $0xec] sm:$0xf]
        %v6074 = vld [vmem:[%s6037 + $0xf0] sm:$0xff]
        %v6075 = vld [vmem:[%s6037 + $0xf8] sm:$0xff]
        %v6076 = vld [vmem:[%s6037 + $0x100] sm:$0xf]
        %v6077 = vld [vmem:[%s6037 + $0x104] sm:$0xff]
        %v6078 = vld [vmem:[%s6037 + $0x10c] sm:$0xff]
        %v6079 = vld [vmem:[%s6037 + $0x114] sm:$0xf]
        %v6080 = vld [vmem:[%s6037 + $0x118] sm:$0xff]
        %v6081 = vld [vmem:[%s6037 + $0x120] sm:$0xff]
        %v6082 = vld [vmem:[%s6037 + $0x128] sm:$0xf]
        %v6083 = vld [vmem:[%s6037 + $0x12c] sm:$0xff]
        %v6084 = vld [vmem:[%s6037 + $0x134] sm:$0xff]
        %v6085 = vld [vmem:[%s6037 + $0x13c] sm:$0xf]
        %v6086 = vld [vmem:[%s6037 + $0x140] sm:$0xff]
        %v6087 = vld [vmem:[%s6037 + $0x148] sm:$0xff]
        %v6088 = vld [vmem:[%s6037 + $0x150] sm:$0xf]
        %v6089 = vld [vmem:[%s6037 + $0x154] sm:$0xff]
        %v6090 = vld [vmem:[%s6037 + $0x15c] sm:$0xff]
        %v6091 = vld [vmem:[%s6037 + $0x164] sm:$0xf]
        %v6092 = vld [vmem:[%s6037 + $0x168] sm:$0xff]
        %v6093 = vld [vmem:[%s6037 + $0x170] sm:$0xff]
        %v6094 = vld [vmem:[%s6037 + $0x178] sm:$0xf]
        %v6095 = vld [vmem:[%s6037 + $0x17c] sm:$0xff]
        %v6096 = vld [vmem:[%s6037 + $0x184] sm:$0xff]
        %v6097 = vld [vmem:[%s6037 + $0x18c] sm:$0xf]
        %v6098 = vld [vmem:[%s6037 + $0x190] sm:$0xff]
        %v6099 = vld [vmem:[%s6037 + $0x198] sm:$0xff]
        %v6100 = vld [vmem:[%s6037 + $0x1a0] sm:$0xf]
        %v6101 = vld [vmem:[%s6037 + $0x1a4] sm:$0xff]
        %v6102 = vld [vmem:[%s6037 + $0x1ac] sm:$0xff]
        %v6103 = vld [vmem:[%s6037 + $0x1b4] sm:$0xf]
        %v6104 = vld [vmem:[%s6037 + $0x1b8] sm:$0xff]
        %v6105 = vld [vmem:[%s6037 + $0x1c0] sm:$0xff]
        %v6106 = vld [vmem:[%s6037 + $0x1c8] sm:$0xf]
        %v6107 = vld [vmem:[%s6037 + $0x1cc] sm:$0xff]
        %v6108 = vld [vmem:[%s6037 + $0x1d4] sm:$0xff]
        %v6109 = vld [vmem:[%s6037 + $0x1dc] sm:$0xf]
        %v6110 = vld [vmem:[%s6037 + $0x1e0] sm:$0xff]
        %v6111 = vld [vmem:[%s6037 + $0x1e8] sm:$0xff]
        %v6112 = vld [vmem:[%s6037 + $0x1f0] sm:$0xf]
        %v6113 = vld [vmem:[%s6037 + $0x1f4] sm:$0xff]
        %v6114 = vld [vmem:[%s6037 + $0x1fc] sm:$0xff]
        %v6115 = vld [vmem:[%s6037 + $0x204] sm:$0xf]
        %v6116 = vld [vmem:[%s6037 + $0x208] sm:$0xff]
        %v6117 = vld [vmem:[%s6037 + $0x210] sm:$0xff]
        %v6118 = vld [vmem:[%s6037 + $0x218] sm:$0xf]
        %v6119 = vld [vmem:[%s6037 + $0x21c] sm:$0xff]
        %v6120 = vld [vmem:[%s6037 + $0x224] sm:$0xff]
        %v6121 = vld [vmem:[%s6037 + $0x22c] sm:$0xf]
        %v6122 = vld [vmem:[%s6037 + $0x230] sm:$0xff]
        %v6123 = vld [vmem:[%s6037 + $0x238] sm:$0xff]
        %v6124 = vld [vmem:[%s6037 + $0x240] sm:$0xf]
        %v6125 = vld [vmem:[%s6037 + $0x244] sm:$0xff]
        %v6126 = vld [vmem:[%s6037 + $0x24c] sm:$0xff]
        %v6127 = vld [vmem:[%s6037 + $0x254] sm:$0xf]
        %v6128 = vld [vmem:[%s6037 + $0x258] sm:$0xff]
        %v6129 = vld [vmem:[%s6037 + $0x260] sm:$0xff]
        %v6130 = vld [vmem:[%s6037 + $0x268] sm:$0xf]
        %v6131 = vld [vmem:[%s6037 + $0x26c] sm:$0xff]
        %v6132 = vld [vmem:[%s6037 + $0x274] sm:$0xff]
        %v6133 = vld [vmem:[%s6037 + $0x27c] sm:$0xf]
        %v6134 = vld [vmem:[%s6037 + $0x280] sm:$0xff]
        %v6135 = vld [vmem:[%s6037 + $0x288] sm:$0xff]
        %v6136 = vld [vmem:[%s6037 + $0x290] sm:$0xf]
        %v6137 = vld [vmem:[%s6037 + $0x294] sm:$0xff]
        %v6138 = vld [vmem:[%s6037 + $0x29c] sm:$0xff]
        %v6139 = vld [vmem:[%s6037 + $0x2a4] sm:$0xf]
        %v6140 = vld [vmem:[%s6037 + $0x2a8] sm:$0xff]
        %v6141 = vld [vmem:[%s6037 + $0x2b0] sm:$0xff]
        %v6142 = vld [vmem:[%s6037 + $0x2b8] sm:$0xf]
        %v6143 = vld [vmem:[%s6037 + $0x2bc] sm:$0xff]
        %v6144 = vld [vmem:[%s6037 + $0x2c4] sm:$0xff]
        %v6145 = vld [vmem:[%s6037 + $0x2cc] sm:$0xf]
        %v6146 = vld [vmem:[%s6037 + $0x2d0] sm:$0xff]
        %v6147 = vld [vmem:[%s6037 + $0x2d8] sm:$0xff]
        %v6148 = vld [vmem:[%s6037 + $0x2e0] sm:$0xf]
        %v6149 = vld [vmem:[%s6037 + $0x2e4] sm:$0xff]
        %v6150 = vld [vmem:[%s6037 + $0x2ec] sm:$0xff]
        %v6151 = vld [vmem:[%s6037 + $0x2f4] sm:$0xf]
        %v6152 = vld [vmem:[%s6037 + $0x2f8] sm:$0xff]
        %v6153 = vld [vmem:[%s6037 + $0x300] sm:$0xff]
        %v6154 = vld [vmem:[%s6037 + $0x308] sm:$0xf]
        %v6155 = vld [vmem:[%s6037 + $0x30c] sm:$0xff]
        %v6156 = vld [vmem:[%s6037 + $0x314] sm:$0xff]
        %v6157 = vld [vmem:[%s6037 + $0x31c] sm:$0xf]
        %v6158 = vld [vmem:[%s6037 + $0x320] sm:$0xff]
        %v6159 = vld [vmem:[%s6037 + $0x328] sm:$0xff]
        %v6160 = vld [vmem:[%s6037 + $0x330] sm:$0xf]
        %v6161 = vld [vmem:[%s6037 + $0x334] sm:$0xff]
        %v6162 = vld [vmem:[%s6037 + $0x33c] sm:$0xff]
        %v6163 = vld [vmem:[%s6037 + $0x344] sm:$0xf]
        %v6164 = vld [vmem:[%s6037 + $0x348] sm:$0xff]
        %v6165 = vld [vmem:[%s6037 + $0x350] sm:$0xff]
        %v6166 = vld [vmem:[%s6037 + $0x358] sm:$0xf]
        %v6167 = vld [vmem:[%s6037 + $0x35c] sm:$0xff]
        %v6168 = vld [vmem:[%s6037 + $0x364] sm:$0xff]
        %v6169 = vld [vmem:[%s6037 + $0x36c] sm:$0xf]
        %v6170 = vld [vmem:[%s6037 + $0x370] sm:$0xff]
        %v6171 = vld [vmem:[%s6037 + $0x378] sm:$0xff]
        %v6172 = vld [vmem:[%s6037 + $0x380] sm:$0xf]
        %v6173 = vld [vmem:[%s6037 + $0x384] sm:$0xff]
        %v6174 = vld [vmem:[%s6037 + $0x38c] sm:$0xff]
        %v6175 = vld [vmem:[%s6037 + $0x394] sm:$0xf]
        %v6176 = vld [vmem:[%s6037 + $0x398] sm:$0xff]
        %v6177 = vld [vmem:[%s6037 + $0x3a0] sm:$0xff]
        %v6178 = vld [vmem:[%s6037 + $0x3a8] sm:$0xf]
        %v6179 = vld [vmem:[%s6037 + $0x3ac] sm:$0xff]
        %v6180 = vld [vmem:[%s6037 + $0x3b4] sm:$0xff]
        %v6181 = vld [vmem:[%s6037 + $0x3bc] sm:$0xf]
        %v6326 = vunpack.c.l.b16 %v6038
        %v6327 = vunpack.c.h.b16 %v6038
        %v6328 = vunpack.c.l.b16 %v6039
        %v6329 = vunpack.c.h.b16 %v6039
        %v6330 = vunpack.c.l.b16 %v6040
        %v6331 = vunpack.c.l.b16 %v6041
        %v6332 = vunpack.c.h.b16 %v6041
        %v6333 = vunpack.c.l.b16 %v6042
        %v6334 = vunpack.c.h.b16 %v6042
        %v6335 = vunpack.c.l.b16 %v6043
        %v6336 = vunpack.c.l.b16 %v6044
        %v6337 = vunpack.c.h.b16 %v6044
        %v6338 = vunpack.c.l.b16 %v6045
        %v6339 = vunpack.c.h.b16 %v6045
        %v6340 = vunpack.c.l.b16 %v6046
        %v6341 = vunpack.c.l.b16 %v6047
        %v6342 = vunpack.c.h.b16 %v6047
        %v6343 = vunpack.c.l.b16 %v6048
        %v6344 = vunpack.c.h.b16 %v6048
        %v6345 = vunpack.c.l.b16 %v6049
        %v6346 = vunpack.c.l.b16 %v6050
        %v6347 = vunpack.c.h.b16 %v6050
        %v6348 = vunpack.c.l.b16 %v6051
        %v6349 = vunpack.c.h.b16 %v6051
        %v6350 = vunpack.c.l.b16 %v6052
        %v6351 = vunpack.c.l.b16 %v6053
        %v6352 = vunpack.c.h.b16 %v6053
        %v6353 = vunpack.c.l.b16 %v6054
        %v6354 = vunpack.c.h.b16 %v6054
        %v6355 = vunpack.c.l.b16 %v6055
        %v6356 = vunpack.c.l.b16 %v6056
        %v6357 = vunpack.c.h.b16 %v6056
        %v6358 = vunpack.c.l.b16 %v6057
        %v6359 = vunpack.c.h.b16 %v6057
        %v6360 = vunpack.c.l.b16 %v6058
        %v6361 = vunpack.c.l.b16 %v6059
        %v6362 = vunpack.c.h.b16 %v6059
        %v6363 = vunpack.c.l.b16 %v6060
        %v6364 = vunpack.c.h.b16 %v6060
        %v6365 = vunpack.c.l.b16 %v6061
        %v6366 = vunpack.c.l.b16 %v6062
        %v6367 = vunpack.c.h.b16 %v6062
        %v6368 = vunpack.c.l.b16 %v6063
        %v6369 = vunpack.c.h.b16 %v6063
        %v6370 = vunpack.c.l.b16 %v6064
        %v6371 = vunpack.c.l.b16 %v6065
        %v6372 = vunpack.c.h.b16 %v6065
        %v6373 = vunpack.c.l.b16 %v6066
        %v6374 = vunpack.c.h.b16 %v6066
        %v6375 = vunpack.c.l.b16 %v6067
        %v6376 = vunpack.c.l.b16 %v6068
        %v6377 = vunpack.c.h.b16 %v6068
        %v6378 = vunpack.c.l.b16 %v6069
        %v6379 = vunpack.c.h.b16 %v6069
        %v6380 = vunpack.c.l.b16 %v6070
        %v6381 = vunpack.c.l.b16 %v6071
        %v6382 = vunpack.c.h.b16 %v6071
        %v6383 = vunpack.c.l.b16 %v6072
        %v6384 = vunpack.c.h.b16 %v6072
        %v6385 = vunpack.c.l.b16 %v6073
        %v6386 = vunpack.c.l.b16 %v6074
        %v6387 = vunpack.c.h.b16 %v6074
        %v6388 = vunpack.c.l.b16 %v6075
        %v6389 = vunpack.c.h.b16 %v6075
        %v6390 = vunpack.c.l.b16 %v6076
        %v6391 = vunpack.c.l.b16 %v6077
        %v6392 = vunpack.c.h.b16 %v6077
        %v6393 = vunpack.c.l.b16 %v6078
        %v6394 = vunpack.c.h.b16 %v6078
        %v6395 = vunpack.c.l.b16 %v6079
        %v6396 = vunpack.c.l.b16 %v6080
        %v6397 = vunpack.c.h.b16 %v6080
        %v6398 = vunpack.c.l.b16 %v6081
        %v6399 = vunpack.c.h.b16 %v6081
        %v6400 = vunpack.c.l.b16 %v6082
        %v6401 = vunpack.c.l.b16 %v6083
        %v6402 = vunpack.c.h.b16 %v6083
        %v6403 = vunpack.c.l.b16 %v6084
        %v6404 = vunpack.c.h.b16 %v6084
        %v6405 = vunpack.c.l.b16 %v6085
        %v6406 = vunpack.c.l.b16 %v6086
        %v6407 = vunpack.c.h.b16 %v6086
        %v6408 = vunpack.c.l.b16 %v6087
        %v6409 = vunpack.c.h.b16 %v6087
        %v6410 = vunpack.c.l.b16 %v6088
        %v6411 = vunpack.c.l.b16 %v6089
        %v6412 = vunpack.c.h.b16 %v6089
        %v6413 = vunpack.c.l.b16 %v6090
        %v6414 = vunpack.c.h.b16 %v6090
        %v6415 = vunpack.c.l.b16 %v6091
        %v6416 = vunpack.c.l.b16 %v6092
        %v6417 = vunpack.c.h.b16 %v6092
        %v6418 = vunpack.c.l.b16 %v6093
        %v6419 = vunpack.c.h.b16 %v6093
        %v6420 = vunpack.c.l.b16 %v6094
        %v6421 = vunpack.c.l.b16 %v6095
        %v6422 = vunpack.c.h.b16 %v6095
        %v6423 = vunpack.c.l.b16 %v6096
        %v6424 = vunpack.c.h.b16 %v6096
        %v6425 = vunpack.c.l.b16 %v6097
        %v6426 = vunpack.c.l.b16 %v6098
        %v6427 = vunpack.c.h.b16 %v6098
        %v6428 = vunpack.c.l.b16 %v6099
        %v6429 = vunpack.c.h.b16 %v6099
        %v6430 = vunpack.c.l.b16 %v6100
        %v6431 = vunpack.c.l.b16 %v6101
        %v6432 = vunpack.c.h.b16 %v6101
        %v6433 = vunpack.c.l.b16 %v6102
        %v6434 = vunpack.c.h.b16 %v6102
        %v6435 = vunpack.c.l.b16 %v6103
        %v6436 = vunpack.c.l.b16 %v6104
        %v6437 = vunpack.c.h.b16 %v6104
        %v6438 = vunpack.c.l.b16 %v6105
        %v6439 = vunpack.c.h.b16 %v6105
        %v6440 = vunpack.c.l.b16 %v6106
        %v6441 = vunpack.c.l.b16 %v6107
        %v6442 = vunpack.c.h.b16 %v6107
        %v6443 = vunpack.c.l.b16 %v6108
        %v6444 = vunpack.c.h.b16 %v6108
        %v6445 = vunpack.c.l.b16 %v6109
        %v6446 = vunpack.c.l.b16 %v6110
        %v6447 = vunpack.c.h.b16 %v6110
        %v6448 = vunpack.c.l.b16 %v6111
        %v6449 = vunpack.c.h.b16 %v6111
        %v6450 = vunpack.c.l.b16 %v6112
        %v6451 = vunpack.c.l.b16 %v6113
        %v6452 = vunpack.c.h.b16 %v6113
        %v6453 = vunpack.c.l.b16 %v6114
        %v6454 = vunpack.c.h.b16 %v6114
        %v6455 = vunpack.c.l.b16 %v6115
        %v6456 = vunpack.c.l.b16 %v6116
        %v6457 = vunpack.c.h.b16 %v6116
        %v6458 = vunpack.c.l.b16 %v6117
        %v6459 = vunpack.c.h.b16 %v6117
        %v6460 = vunpack.c.l.b16 %v6118
        %v6461 = vunpack.c.l.b16 %v6119
        %v6462 = vunpack.c.h.b16 %v6119
        %v6463 = vunpack.c.l.b16 %v6120
        %v6464 = vunpack.c.h.b16 %v6120
        %v6465 = vunpack.c.l.b16 %v6121
        %v6466 = vunpack.c.l.b16 %v6122
        %v6467 = vunpack.c.h.b16 %v6122
        %v6468 = vunpack.c.l.b16 %v6123
        %v6469 = vunpack.c.h.b16 %v6123
        %v6470 = vunpack.c.l.b16 %v6124
        %v6471 = vunpack.c.l.b16 %v6125
        %v6472 = vunpack.c.h.b16 %v6125
        %v6473 = vunpack.c.l.b16 %v6126
        %v6474 = vunpack.c.h.b16 %v6126
        %v6475 = vunpack.c.l.b16 %v6127
        %v6476 = vunpack.c.l.b16 %v6128
        %v6477 = vunpack.c.h.b16 %v6128
        %v6478 = vunpack.c.l.b16 %v6129
        %v6479 = vunpack.c.h.b16 %v6129
        %v6480 = vunpack.c.l.b16 %v6130
        %v6481 = vunpack.c.l.b16 %v6131
        %v6482 = vunpack.c.h.b16 %v6131
        %v6483 = vunpack.c.l.b16 %v6132
        %v6484 = vunpack.c.h.b16 %v6132
        %v6485 = vunpack.c.l.b16 %v6133
        %v6486 = vunpack.c.l.b16 %v6134
        %v6487 = vunpack.c.h.b16 %v6134
        %v6488 = vunpack.c.l.b16 %v6135
        %v6489 = vunpack.c.h.b16 %v6135
        %v6490 = vunpack.c.l.b16 %v6136
        %v6491 = vunpack.c.l.b16 %v6137
        %v6492 = vunpack.c.h.b16 %v6137
        %v6493 = vunpack.c.l.b16 %v6138
        %v6494 = vunpack.c.h.b16 %v6138
        %v6495 = vunpack.c.l.b16 %v6139
        %v6496 = vunpack.c.l.b16 %v6140
        %v6497 = vunpack.c.h.b16 %v6140
        %v6498 = vunpack.c.l.b16 %v6141
        %v6499 = vunpack.c.h.b16 %v6141
        %v6500 = vunpack.c.l.b16 %v6142
        %v6501 = vunpack.c.l.b16 %v6143
        %v6502 = vunpack.c.h.b16 %v6143
        %v6503 = vunpack.c.l.b16 %v6144
        %v6504 = vunpack.c.h.b16 %v6144
        %v6505 = vunpack.c.l.b16 %v6145
        %v6506 = vunpack.c.l.b16 %v6146
        %v6507 = vunpack.c.h.b16 %v6146
        %v6508 = vunpack.c.l.b16 %v6147
        %v6509 = vunpack.c.h.b16 %v6147
        %v6510 = vunpack.c.l.b16 %v6148
        %v6511 = vunpack.c.l.b16 %v6149
        %v6512 = vunpack.c.h.b16 %v6149
        %v6513 = vunpack.c.l.b16 %v6150
        %v6514 = vunpack.c.h.b16 %v6150
        %v6515 = vunpack.c.l.b16 %v6151
        %v6516 = vunpack.c.l.b16 %v6152
        %v6517 = vunpack.c.h.b16 %v6152
        %v6518 = vunpack.c.l.b16 %v6153
        %v6519 = vunpack.c.h.b16 %v6153
        %v6520 = vunpack.c.l.b16 %v6154
        %v6521 = vunpack.c.l.b16 %v6155
        %v6522 = vunpack.c.h.b16 %v6155
        %v6523 = vunpack.c.l.b16 %v6156
        %v6524 = vunpack.c.h.b16 %v6156
        %v6525 = vunpack.c.l.b16 %v6157
        %v6526 = vunpack.c.l.b16 %v6158
        %v6527 = vunpack.c.h.b16 %v6158
        %v6528 = vunpack.c.l.b16 %v6159
        %v6529 = vunpack.c.h.b16 %v6159
        %v6530 = vunpack.c.l.b16 %v6160
        %v6531 = vunpack.c.l.b16 %v6161
        %v6532 = vunpack.c.h.b16 %v6161
        %v6533 = vunpack.c.l.b16 %v6162
        %v6534 = vunpack.c.h.b16 %v6162
        %v6535 = vunpack.c.l.b16 %v6163
        %v6536 = vunpack.c.l.b16 %v6164
        %v6537 = vunpack.c.h.b16 %v6164
        %v6538 = vunpack.c.l.b16 %v6165
        %v6539 = vunpack.c.h.b16 %v6165
        %v6540 = vunpack.c.l.b16 %v6166
        %v6541 = vunpack.c.l.b16 %v6167
        %v6542 = vunpack.c.h.b16 %v6167
        %v6543 = vunpack.c.l.b16 %v6168
        %v6544 = vunpack.c.h.b16 %v6168
        %v6545 = vunpack.c.l.b16 %v6169
        %v6546 = vunpack.c.l.b16 %v6170
        %v6547 = vunpack.c.h.b16 %v6170
        %v6548 = vunpack.c.l.b16 %v6171
        %v6549 = vunpack.c.h.b16 %v6171
        %v6550 = vunpack.c.l.b16 %v6172
        %v6551 = vunpack.c.l.b16 %v6173
        %v6552 = vunpack.c.h.b16 %v6173
        %v6553 = vunpack.c.l.b16 %v6174
        %v6554 = vunpack.c.h.b16 %v6174
        %v6555 = vunpack.c.l.b16 %v6175
        %v6556 = vunpack.c.l.b16 %v6176
        %v6557 = vunpack.c.h.b16 %v6176
        %v6558 = vunpack.c.l.b16 %v6177
        %v6559 = vunpack.c.h.b16 %v6177
        %v6560 = vunpack.c.l.b16 %v6178
        %v6561 = vunpack.c.l.b16 %v6179
        %v6562 = vunpack.c.h.b16 %v6179
        %v6563 = vunpack.c.l.b16 %v6180
        %v6564 = vunpack.c.h.b16 %v6180
        %v6565 = vunpack.c.l.b16 %v6181
        %v6566 = vpack.c.b16 %v6331, %v6326
        %v6567 = vpack.c.b16 %v6332, %v6327
        %v6568 = vpack.c.b16 %v6333, %v6328
        %v6569 = vpack.c.b16 %v6334, %v6329
        %v6570 = vpack.c.b16 %v6335, %v6330
        %v6571 = vpack.c.b16 %v6341, %v6336
        %v6572 = vpack.c.b16 %v6342, %v6337
        %v6573 = vpack.c.b16 %v6343, %v6338
        %v6574 = vpack.c.b16 %v6344, %v6339
        %v6575 = vpack.c.b16 %v6345, %v6340
        %v6576 = vpack.c.b16 %v6351, %v6346
        %v6577 = vpack.c.b16 %v6352, %v6347
        %v6578 = vpack.c.b16 %v6353, %v6348
        %v6579 = vpack.c.b16 %v6354, %v6349
        %v6580 = vpack.c.b16 %v6355, %v6350
        %v6581 = vpack.c.b16 %v6361, %v6356
        %v6582 = vpack.c.b16 %v6362, %v6357
        %v6583 = vpack.c.b16 %v6363, %v6358
        %v6584 = vpack.c.b16 %v6364, %v6359
        %v6585 = vpack.c.b16 %v6365, %v6360
        %v6586 = vpack.c.b16 %v6371, %v6366
        %v6587 = vpack.c.b16 %v6372, %v6367
        %v6588 = vpack.c.b16 %v6373, %v6368
        %v6589 = vpack.c.b16 %v6374, %v6369
        %v6590 = vpack.c.b16 %v6375, %v6370
        %v6591 = vpack.c.b16 %v6381, %v6376
        %v6592 = vpack.c.b16 %v6382, %v6377
        %v6593 = vpack.c.b16 %v6383, %v6378
        %v6594 = vpack.c.b16 %v6384, %v6379
        %v6595 = vpack.c.b16 %v6385, %v6380
        %v6596 = vpack.c.b16 %v6391, %v6386
        %v6597 = vpack.c.b16 %v6392, %v6387
        %v6598 = vpack.c.b16 %v6393, %v6388
        %v6599 = vpack.c.b16 %v6394, %v6389
        %v6600 = vpack.c.b16 %v6395, %v6390
        %v6601 = vpack.c.b16 %v6401, %v6396
        %v6602 = vpack.c.b16 %v6402, %v6397
        %v6603 = vpack.c.b16 %v6403, %v6398
        %v6604 = vpack.c.b16 %v6404, %v6399
        %v6605 = vpack.c.b16 %v6405, %v6400
        %v6606 = vpack.c.b16 %v6411, %v6406
        %v6607 = vpack.c.b16 %v6412, %v6407
        %v6608 = vpack.c.b16 %v6413, %v6408
        %v6609 = vpack.c.b16 %v6414, %v6409
        %v6610 = vpack.c.b16 %v6415, %v6410
        %v6611 = vpack.c.b16 %v6421, %v6416
        %v6612 = vpack.c.b16 %v6422, %v6417
        %v6613 = vpack.c.b16 %v6423, %v6418
        %v6614 = vpack.c.b16 %v6424, %v6419
        %v6615 = vpack.c.b16 %v6425, %v6420
        %v6616 = vpack.c.b16 %v6431, %v6426
        %v6617 = vpack.c.b16 %v6432, %v6427
        %v6618 = vpack.c.b16 %v6433, %v6428
        %v6619 = vpack.c.b16 %v6434, %v6429
        %v6620 = vpack.c.b16 %v6435, %v6430
        %v6621 = vpack.c.b16 %v6441, %v6436
        %v6622 = vpack.c.b16 %v6442, %v6437
        %v6623 = vpack.c.b16 %v6443, %v6438
        %v6624 = vpack.c.b16 %v6444, %v6439
        %v6625 = vpack.c.b16 %v6445, %v6440
        %v6626 = vpack.c.b16 %v6451, %v6446
        %v6627 = vpack.c.b16 %v6452, %v6447
        %v6628 = vpack.c.b16 %v6453, %v6448
        %v6629 = vpack.c.b16 %v6454, %v6449
        %v6630 = vpack.c.b16 %v6455, %v6450
        %v6631 = vpack.c.b16 %v6461, %v6456
        %v6632 = vpack.c.b16 %v6462, %v6457
        %v6633 = vpack.c.b16 %v6463, %v6458
        %v6634 = vpack.c.b16 %v6464, %v6459
        %v6635 = vpack.c.b16 %v6465, %v6460
        %v6636 = vpack.c.b16 %v6471, %v6466
        %v6637 = vpack.c.b16 %v6472, %v6467
        %v6638 = vpack.c.b16 %v6473, %v6468
        %v6639 = vpack.c.b16 %v6474, %v6469
        %v6640 = vpack.c.b16 %v6475, %v6470
        %v6641 = vpack.c.b16 %v6481, %v6476
        %v6642 = vpack.c.b16 %v6482, %v6477
        %v6643 = vpack.c.b16 %v6483, %v6478
        %v6644 = vpack.c.b16 %v6484, %v6479
        %v6645 = vpack.c.b16 %v6485, %v6480
        %v6646 = vpack.c.b16 %v6491, %v6486
        %v6647 = vpack.c.b16 %v6492, %v6487
        %v6648 = vpack.c.b16 %v6493, %v6488
        %v6649 = vpack.c.b16 %v6494, %v6489
        %v6650 = vpack.c.b16 %v6495, %v6490
        %v6651 = vpack.c.b16 %v6501, %v6496
        %v6652 = vpack.c.b16 %v6502, %v6497
        %v6653 = vpack.c.b16 %v6503, %v6498
        %v6654 = vpack.c.b16 %v6504, %v6499
        %v6655 = vpack.c.b16 %v6505, %v6500
        %v6656 = vpack.c.b16 %v6511, %v6506
        %v6657 = vpack.c.b16 %v6512, %v6507
        %v6658 = vpack.c.b16 %v6513, %v6508
        %v6659 = vpack.c.b16 %v6514, %v6509
        %v6660 = vpack.c.b16 %v6515, %v6510
        %v6661 = vpack.c.b16 %v6521, %v6516
        %v6662 = vpack.c.b16 %v6522, %v6517
        %v6663 = vpack.c.b16 %v6523, %v6518
        %v6664 = vpack.c.b16 %v6524, %v6519
        %v6665 = vpack.c.b16 %v6525, %v6520
        %v6666 = vpack.c.b16 %v6531, %v6526
        %v6667 = vpack.c.b16 %v6532, %v6527
        %v6668 = vpack.c.b16 %v6533, %v6528
        %v6669 = vpack.c.b16 %v6534, %v6529
        %v6670 = vpack.c.b16 %v6535, %v6530
        %v6671 = vpack.c.b16 %v6541, %v6536
        %v6672 = vpack.c.b16 %v6542, %v6537
        %v6673 = vpack.c.b16 %v6543, %v6538
        %v6674 = vpack.c.b16 %v6544, %v6539
        %v6675 = vpack.c.b16 %v6545, %v6540
        %v6676 = vpack.c.b16 %v6551, %v6546
        %v6677 = vpack.c.b16 %v6552, %v6547
        %v6678 = vpack.c.b16 %v6553, %v6548
        %v6679 = vpack.c.b16 %v6554, %v6549
        %v6680 = vpack.c.b16 %v6555, %v6550
        %v6681 = vpack.c.b16 %v6561, %v6556
        %v6682 = vpack.c.b16 %v6562, %v6557
        %v6683 = vpack.c.b16 %v6563, %v6558
        %v6684 = vpack.c.b16 %v6564, %v6559
        %v6685 = vpack.c.b16 %v6565, %v6560
        %6806 = vmatpush.bf16.msra.mxu0 %v6601
        %6807 = vmatpush.bf16.msra.mxu0 %v6596
        %6808 = vmatpush.bf16.msra.mxu0 %v6591
        %6809 = vmatpush.bf16.msra.mxu0 %v6586
        %6810 = vmatpush.bf16.msra.mxu0 %v6581
        %6811 = vmatpush.bf16.msra.mxu0 %v6576
        %6812 = vmatpush.bf16.msra.mxu0 %v6571
        %6813 = vmatpush.bf16.msra.mxu0 %v6566
        %6814 = vmatmul.bf16.gmra.mxu0 %v6022
        %v6815 = vpop.f32.mrf.mxu0
        %v6816 = vadd.f32 0.0, %v6815
        %v6817 = vpop.f32.mrf.mxu0
        %v6818 = vadd.f32 0.0, %v6817
        %6819 = vmatmul.bf16.gmra.mxu0 %v6025
        %v6820 = vpop.f32.mrf.mxu0
        %v6821 = vadd.f32 0.0, %v6820
        %v6822 = vpop.f32.mrf.mxu0
        %v6823 = vadd.f32 0.0, %v6822
        %6824 = vmatmul.bf16.gmra.mxu0 %v6028
        %v6825 = vpop.f32.mrf.mxu0
        %v6826 = vadd.f32 0.0, %v6825
        %v6827 = vpop.f32.mrf.mxu0
        %v6828 = vadd.f32 0.0, %v6827
        %6829 = vmatmul.bf16.gmra.mxu0 %v6031
        %v6830 = vpop.f32.mrf.mxu0
        %v6831 = vadd.f32 0.0, %v6830
        %v6832 = vpop.f32.mrf.mxu0
        %v6833 = vadd.f32 0.0, %v6832
        %6834 = vmatmul.bf16.gmra.mxu0 %v6034
        %v6835 = vpop.f32.mrf.mxu0
        %v6836 = vadd.f32 0.0, %v6835
        %v6837 = vpop.f32.mrf.mxu0
        %v6838 = vadd.f32 0.0, %v6837
        %6839 = vdwg.mxu0
        %6840 = vmatpush.bf16.msra.mxu0 %v6641
        %6841 = vmatpush.bf16.msra.mxu0 %v6636
        %6842 = vmatpush.bf16.msra.mxu0 %v6631
        %6843 = vmatpush.bf16.msra.mxu0 %v6626
        %6844 = vmatpush.bf16.msra.mxu0 %v6621
        %6845 = vmatpush.bf16.msra.mxu0 %v6616
        %6846 = vmatpush.bf16.msra.mxu0 %v6611
        %6847 = vmatpush.bf16.msra.mxu0 %v6606
        %6848 = vmatmul.bf16.gmra.mxu0 %v6023
        %v6849 = vpop.f32.mrf.mxu0
        %v6850 = vadd.f32 %v6816, %v6849
        %v6851 = vpop.f32.mrf.mxu0
        %v6852 = vadd.f32 %v6818, %v6851
        %6853 = vmatmul.bf16.gmra.mxu0 %v6026
        %v6854 = vpop.f32.mrf.mxu0
        %v6855 = vadd.f32 %v6821, %v6854
        %v6856 = vpop.f32.mrf.mxu0
        %v6857 = vadd.f32 %v6823, %v6856
        %6858 = vmatmul.bf16.gmra.mxu0 %v6029
        %v6859 = vpop.f32.mrf.mxu0
        %v6860 = vadd.f32 %v6826, %v6859
        %v6861 = vpop.f32.mrf.mxu0
        %v6862 = vadd.f32 %v6828, %v6861
        %6863 = vmatmul.bf16.gmra.mxu0 %v6032
        %v6864 = vpop.f32.mrf.mxu0
        %v6865 = vadd.f32 %v6831, %v6864
        %v6866 = vpop.f32.mrf.mxu0
        %v6867 = vadd.f32 %v6833, %v6866
        %6868 = vmatmul.bf16.gmra.mxu0 %v6035
        %v6869 = vpop.f32.mrf.mxu0
        %v6870 = vadd.f32 %v6836, %v6869
        %v6871 = vpop.f32.mrf.mxu0
        %v6872 = vadd.f32 %v6838, %v6871
        %6873 = vdwg.mxu0
        %6874 = vmatpush.bf16.msra.mxu0 %v6681
        %6875 = vmatpush.bf16.msra.mxu0 %v6676
        %6876 = vmatpush.bf16.msra.mxu0 %v6671
        %6877 = vmatpush.bf16.msra.mxu0 %v6666
        %6878 = vmatpush.bf16.msra.mxu0 %v6661
        %6879 = vmatpush.bf16.msra.mxu0 %v6656
        %6880 = vmatpush.bf16.msra.mxu0 %v6651
        %6881 = vmatpush.bf16.msra.mxu0 %v6646
        %6882 = vmatmul.bf16.gmra.mxu0 %v6024
        %v6883 = vpop.f32.mrf.mxu0
        %v6884 = vadd.f32 %v6850, %v6883
        %v6885 = vpop.f32.mrf.mxu0
        %v6886 = vadd.f32 %v6852, %v6885
        %6887 = vmatmul.bf16.gmra.mxu0 %v6027
        %v6888 = vpop.f32.mrf.mxu0
        %v6889 = vadd.f32 %v6855, %v6888
        %v6890 = vpop.f32.mrf.mxu0
        %v6891 = vadd.f32 %v6857, %v6890
        %6892 = vmatmul.bf16.gmra.mxu0 %v6030
        %v6893 = vpop.f32.mrf.mxu0
        %v6894 = vadd.f32 %v6860, %v6893
        %v6895 = vpop.f32.mrf.mxu0
        %v6896 = vadd.f32 %v6862, %v6895
        %6897 = vmatmul.bf16.gmra.mxu0 %v6033
        %v6898 = vpop.f32.mrf.mxu0
        %v6899 = vadd.f32 %v6865, %v6898
        %v6900 = vpop.f32.mrf.mxu0
        %v6901 = vadd.f32 %v6867, %v6900
        %6902 = vmatmul.bf16.gmra.mxu0 %v6036
        %v6903 = vpop.f32.mrf.mxu0
        %v6904 = vadd.f32 %v6870, %v6903
        %v6905 = vpop.f32.mrf.mxu0
        %v6906 = vadd.f32 %v6872, %v6905
        %6907 = vdwg.mxu0
        %6908 = vmatpush.bf16.msra.mxu0 %v6602
        %6909 = vmatpush.bf16.msra.mxu0 %v6597
        %6910 = vmatpush.bf16.msra.mxu0 %v6592
        %6911 = vmatpush.bf16.msra.mxu0 %v6587
        %6912 = vmatpush.bf16.msra.mxu0 %v6582
        %6913 = vmatpush.bf16.msra.mxu0 %v6577
        %6914 = vmatpush.bf16.msra.mxu0 %v6572
        %6915 = vmatpush.bf16.msra.mxu0 %v6567
        %6916 = vmatmul.bf16.gmra.mxu0 %v6022
        %v6917 = vpop.f32.mrf.mxu0
        %v6918 = vadd.f32 0.0, %v6917
        %v6919 = vpop.f32.mrf.mxu0
        %v6920 = vadd.f32 0.0, %v6919
        %6921 = vmatmul.bf16.gmra.mxu0 %v6025
        %v6922 = vpop.f32.mrf.mxu0
        %v6923 = vadd.f32 0.0, %v6922
        %v6924 = vpop.f32.mrf.mxu0
        %v6925 = vadd.f32 0.0, %v6924
        %6926 = vmatmul.bf16.gmra.mxu0 %v6028
        %v6927 = vpop.f32.mrf.mxu0
        %v6928 = vadd.f32 0.0, %v6927
        %v6929 = vpop.f32.mrf.mxu0
        %v6930 = vadd.f32 0.0, %v6929
        %6931 = vmatmul.bf16.gmra.mxu0 %v6031
        %v6932 = vpop.f32.mrf.mxu0
        %v6933 = vadd.f32 0.0, %v6932
        %v6934 = vpop.f32.mrf.mxu0
        %v6935 = vadd.f32 0.0, %v6934
        %6936 = vmatmul.bf16.gmra.mxu0 %v6034
        %v6937 = vpop.f32.mrf.mxu0
        %v6938 = vadd.f32 0.0, %v6937
        %v6939 = vpop.f32.mrf.mxu0
        %v6940 = vadd.f32 0.0, %v6939
        %6941 = vdwg.mxu0
        %6942 = vmatpush.bf16.msra.mxu0 %v6642
        %6943 = vmatpush.bf16.msra.mxu0 %v6637
        %6944 = vmatpush.bf16.msra.mxu0 %v6632
        %6945 = vmatpush.bf16.msra.mxu0 %v6627
        %6946 = vmatpush.bf16.msra.mxu0 %v6622
        %6947 = vmatpush.bf16.msra.mxu0 %v6617
        %6948 = vmatpush.bf16.msra.mxu0 %v6612
        %6949 = vmatpush.bf16.msra.mxu0 %v6607
        %6950 = vmatmul.bf16.gmra.mxu0 %v6023
        %v6951 = vpop.f32.mrf.mxu0
        %v6952 = vadd.f32 %v6918, %v6951
        %v6953 = vpop.f32.mrf.mxu0
        %v6954 = vadd.f32 %v6920, %v6953
        %6955 = vmatmul.bf16.gmra.mxu0 %v6026
        %v6956 = vpop.f32.mrf.mxu0
        %v6957 = vadd.f32 %v6923, %v6956
        %v6958 = vpop.f32.mrf.mxu0
        %v6959 = vadd.f32 %v6925, %v6958
        %6960 = vmatmul.bf16.gmra.mxu0 %v6029
        %v6961 = vpop.f32.mrf.mxu0
        %v6962 = vadd.f32 %v6928, %v6961
        %v6963 = vpop.f32.mrf.mxu0
        %v6964 = vadd.f32 %v6930, %v6963
        %6965 = vmatmul.bf16.gmra.mxu0 %v6032
        %v6966 = vpop.f32.mrf.mxu0
        %v6967 = vadd.f32 %v6933, %v6966
        %v6968 = vpop.f32.mrf.mxu0
        %v6969 = vadd.f32 %v6935, %v6968
        %6970 = vmatmul.bf16.gmra.mxu0 %v6035
        %v6971 = vpop.f32.mrf.mxu0
        %v6972 = vadd.f32 %v6938, %v6971
        %v6973 = vpop.f32.mrf.mxu0
        %v6974 = vadd.f32 %v6940, %v6973
        %6975 = vdwg.mxu0
        %6976 = vmatpush.bf16.msra.mxu0 %v6682
        %6977 = vmatpush.bf16.msra.mxu0 %v6677
        %6978 = vmatpush.bf16.msra.mxu0 %v6672
        %6979 = vmatpush.bf16.msra.mxu0 %v6667
        %6980 = vmatpush.bf16.msra.mxu0 %v6662
        %6981 = vmatpush.bf16.msra.mxu0 %v6657
        %6982 = vmatpush.bf16.msra.mxu0 %v6652
        %6983 = vmatpush.bf16.msra.mxu0 %v6647
        %6984 = vmatmul.bf16.gmra.mxu0 %v6024
        %v6985 = vpop.f32.mrf.mxu0
        %v6986 = vadd.f32 %v6952, %v6985
        %v6987 = vpop.f32.mrf.mxu0
        %v6988 = vadd.f32 %v6954, %v6987
        %6989 = vmatmul.bf16.gmra.mxu0 %v6027
        %v6990 = vpop.f32.mrf.mxu0
        %v6991 = vadd.f32 %v6957, %v6990
        %v6992 = vpop.f32.mrf.mxu0
        %v6993 = vadd.f32 %v6959, %v6992
        %6994 = vmatmul.bf16.gmra.mxu0 %v6030
        %v6995 = vpop.f32.mrf.mxu0
        %v6996 = vadd.f32 %v6962, %v6995
        %v6997 = vpop.f32.mrf.mxu0
        %v6998 = vadd.f32 %v6964, %v6997
        %6999 = vmatmul.bf16.gmra.mxu0 %v6033
        %v7000 = vpop.f32.mrf.mxu0
        %v7001 = vadd.f32 %v6967, %v7000
        %v7002 = vpop.f32.mrf.mxu0
        %v7003 = vadd.f32 %v6969, %v7002
        %7004 = vmatmul.bf16.gmra.mxu0 %v6036
        %v7005 = vpop.f32.mrf.mxu0
        %v7006 = vadd.f32 %v6972, %v7005
        %v7007 = vpop.f32.mrf.mxu0
        %v7008 = vadd.f32 %v6974, %v7007
        %7009 = vdwg.mxu0
        %7010 = vmatpush.bf16.msra.mxu0 %v6603
        %7011 = vmatpush.bf16.msra.mxu0 %v6598
        %7012 = vmatpush.bf16.msra.mxu0 %v6593
        %7013 = vmatpush.bf16.msra.mxu0 %v6588
        %7014 = vmatpush.bf16.msra.mxu0 %v6583
        %7015 = vmatpush.bf16.msra.mxu0 %v6578
        %7016 = vmatpush.bf16.msra.mxu0 %v6573
        %7017 = vmatpush.bf16.msra.mxu0 %v6568
        %7018 = vmatmul.bf16.gmra.mxu0 %v6022
        %v7019 = vpop.f32.mrf.mxu0
        %v7020 = vadd.f32 0.0, %v7019
        %v7021 = vpop.f32.mrf.mxu0
        %v7022 = vadd.f32 0.0, %v7021
        %7023 = vmatmul.bf16.gmra.mxu0 %v6025
        %v7024 = vpop.f32.mrf.mxu0
        %v7025 = vadd.f32 0.0, %v7024
        %v7026 = vpop.f32.mrf.mxu0
        %v7027 = vadd.f32 0.0, %v7026
        %7028 = vmatmul.bf16.gmra.mxu0 %v6028
        %v7029 = vpop.f32.mrf.mxu0
        %v7030 = vadd.f32 0.0, %v7029
        %v7031 = vpop.f32.mrf.mxu0
        %v7032 = vadd.f32 0.0, %v7031
        %7033 = vmatmul.bf16.gmra.mxu0 %v6031
        %v7034 = vpop.f32.mrf.mxu0
        %v7035 = vadd.f32 0.0, %v7034
        %v7036 = vpop.f32.mrf.mxu0
        %v7037 = vadd.f32 0.0, %v7036
        %7038 = vmatmul.bf16.gmra.mxu0 %v6034
        %v7039 = vpop.f32.mrf.mxu0
        %v7040 = vadd.f32 0.0, %v7039
        %v7041 = vpop.f32.mrf.mxu0
        %v7042 = vadd.f32 0.0, %v7041
        %7043 = vdwg.mxu0
        %7044 = vmatpush.bf16.msra.mxu0 %v6643
        %7045 = vmatpush.bf16.msra.mxu0 %v6638
        %7046 = vmatpush.bf16.msra.mxu0 %v6633
        %7047 = vmatpush.bf16.msra.mxu0 %v6628
        %7048 = vmatpush.bf16.msra.mxu0 %v6623
        %7049 = vmatpush.bf16.msra.mxu0 %v6618
        %7050 = vmatpush.bf16.msra.mxu0 %v6613
        %7051 = vmatpush.bf16.msra.mxu0 %v6608
        %7052 = vmatmul.bf16.gmra.mxu0 %v6023
        %v7053 = vpop.f32.mrf.mxu0
        %v7054 = vadd.f32 %v7020, %v7053
        %v7055 = vpop.f32.mrf.mxu0
        %v7056 = vadd.f32 %v7022, %v7055
        %7057 = vmatmul.bf16.gmra.mxu0 %v6026
        %v7058 = vpop.f32.mrf.mxu0
        %v7059 = vadd.f32 %v7025, %v7058
        %v7060 = vpop.f32.mrf.mxu0
        %v7061 = vadd.f32 %v7027, %v7060
        %7062 = vmatmul.bf16.gmra.mxu0 %v6029
        %v7063 = vpop.f32.mrf.mxu0
        %v7064 = vadd.f32 %v7030, %v7063
        %v7065 = vpop.f32.mrf.mxu0
        %v7066 = vadd.f32 %v7032, %v7065
        %7067 = vmatmul.bf16.gmra.mxu0 %v6032
        %v7068 = vpop.f32.mrf.mxu0
        %v7069 = vadd.f32 %v7035, %v7068
        %v7070 = vpop.f32.mrf.mxu0
        %v7071 = vadd.f32 %v7037, %v7070
        %7072 = vmatmul.bf16.gmra.mxu0 %v6035
        %v7073 = vpop.f32.mrf.mxu0
        %v7074 = vadd.f32 %v7040, %v7073
        %v7075 = vpop.f32.mrf.mxu0
        %v7076 = vadd.f32 %v7042, %v7075
        %7077 = vdwg.mxu0
        %7078 = vmatpush.bf16.msra.mxu0 %v6683
        %7079 = vmatpush.bf16.msra.mxu0 %v6678
        %7080 = vmatpush.bf16.msra.mxu0 %v6673
        %7081 = vmatpush.bf16.msra.mxu0 %v6668
        %7082 = vmatpush.bf16.msra.mxu0 %v6663
        %7083 = vmatpush.bf16.msra.mxu0 %v6658
        %7084 = vmatpush.bf16.msra.mxu0 %v6653
        %7085 = vmatpush.bf16.msra.mxu0 %v6648
        %7086 = vmatmul.bf16.gmra.mxu0 %v6024
        %v7087 = vpop.f32.mrf.mxu0
        %v7088 = vadd.f32 %v7054, %v7087
        %v7089 = vpop.f32.mrf.mxu0
        %v7090 = vadd.f32 %v7056, %v7089
        %7091 = vmatmul.bf16.gmra.mxu0 %v6027
        %v7092 = vpop.f32.mrf.mxu0
        %v7093 = vadd.f32 %v7059, %v7092
        %v7094 = vpop.f32.mrf.mxu0
        %v7095 = vadd.f32 %v7061, %v7094
        %7096 = vmatmul.bf16.gmra.mxu0 %v6030
        %v7097 = vpop.f32.mrf.mxu0
        %v7098 = vadd.f32 %v7064, %v7097
        %v7099 = vpop.f32.mrf.mxu0
        %v7100 = vadd.f32 %v7066, %v7099
        %7101 = vmatmul.bf16.gmra.mxu0 %v6033
        %v7102 = vpop.f32.mrf.mxu0
        %v7103 = vadd.f32 %v7069, %v7102
        %v7104 = vpop.f32.mrf.mxu0
        %v7105 = vadd.f32 %v7071, %v7104
        %7106 = vmatmul.bf16.gmra.mxu0 %v6036
        %v7107 = vpop.f32.mrf.mxu0
        %v7108 = vadd.f32 %v7074, %v7107
        %v7109 = vpop.f32.mrf.mxu0
        %v7110 = vadd.f32 %v7076, %v7109
        %7111 = vdwg.mxu0
        %7112 = vmatpush.bf16.msra.mxu0 %v6604
        %7113 = vmatpush.bf16.msra.mxu0 %v6599
        %7114 = vmatpush.bf16.msra.mxu0 %v6594
        %7115 = vmatpush.bf16.msra.mxu0 %v6589
        %7116 = vmatpush.bf16.msra.mxu0 %v6584
        %7117 = vmatpush.bf16.msra.mxu0 %v6579
        %7118 = vmatpush.bf16.msra.mxu0 %v6574
        %7119 = vmatpush.bf16.msra.mxu0 %v6569
        %7120 = vmatmul.bf16.gmra.mxu0 %v6022
        %v7121 = vpop.f32.mrf.mxu0
        %v7122 = vadd.f32 0.0, %v7121
        %v7123 = vpop.f32.mrf.mxu0
        %v7124 = vadd.f32 0.0, %v7123
        %7125 = vmatmul.bf16.gmra.mxu0 %v6025
        %v7126 = vpop.f32.mrf.mxu0
        %v7127 = vadd.f32 0.0, %v7126
        %v7128 = vpop.f32.mrf.mxu0
        %v7129 = vadd.f32 0.0, %v7128
        %7130 = vmatmul.bf16.gmra.mxu0 %v6028
        %v7131 = vpop.f32.mrf.mxu0
        %v7132 = vadd.f32 0.0, %v7131
        %v7133 = vpop.f32.mrf.mxu0
        %v7134 = vadd.f32 0.0, %v7133
        %7135 = vmatmul.bf16.gmra.mxu0 %v6031
        %v7136 = vpop.f32.mrf.mxu0
        %v7137 = vadd.f32 0.0, %v7136
        %v7138 = vpop.f32.mrf.mxu0
        %v7139 = vadd.f32 0.0, %v7138
        %7140 = vmatmul.bf16.gmra.mxu0 %v6034
        %v7141 = vpop.f32.mrf.mxu0
        %v7142 = vadd.f32 0.0, %v7141
        %v7143 = vpop.f32.mrf.mxu0
        %v7144 = vadd.f32 0.0, %v7143
        %7145 = vdwg.mxu0
        %7146 = vmatpush.bf16.msra.mxu0 %v6644
        %7147 = vmatpush.bf16.msra.mxu0 %v6639
        %7148 = vmatpush.bf16.msra.mxu0 %v6634
        %7149 = vmatpush.bf16.msra.mxu0 %v6629
        %7150 = vmatpush.bf16.msra.mxu0 %v6624
        %7151 = vmatpush.bf16.msra.mxu0 %v6619
        %7152 = vmatpush.bf16.msra.mxu0 %v6614
        %7153 = vmatpush.bf16.msra.mxu0 %v6609
        %7154 = vmatmul.bf16.gmra.mxu0 %v6023
        %v7155 = vpop.f32.mrf.mxu0
        %v7156 = vadd.f32 %v7122, %v7155
        %v7157 = vpop.f32.mrf.mxu0
        %v7158 = vadd.f32 %v7124, %v7157
        %7159 = vmatmul.bf16.gmra.mxu0 %v6026
        %v7160 = vpop.f32.mrf.mxu0
        %v7161 = vadd.f32 %v7127, %v7160
        %v7162 = vpop.f32.mrf.mxu0
        %v7163 = vadd.f32 %v7129, %v7162
        %7164 = vmatmul.bf16.gmra.mxu0 %v6029
        %v7165 = vpop.f32.mrf.mxu0
        %v7166 = vadd.f32 %v7132, %v7165
        %v7167 = vpop.f32.mrf.mxu0
        %v7168 = vadd.f32 %v7134, %v7167
        %7169 = vmatmul.bf16.gmra.mxu0 %v6032
        %v7170 = vpop.f32.mrf.mxu0
        %v7171 = vadd.f32 %v7137, %v7170
        %v7172 = vpop.f32.mrf.mxu0
        %v7173 = vadd.f32 %v7139, %v7172
        %7174 = vmatmul.bf16.gmra.mxu0 %v6035
        %v7175 = vpop.f32.mrf.mxu0
        %v7176 = vadd.f32 %v7142, %v7175
        %v7177 = vpop.f32.mrf.mxu0
        %v7178 = vadd.f32 %v7144, %v7177
        %7179 = vdwg.mxu0
        %7180 = vmatpush.bf16.msra.mxu0 %v6684
        %7181 = vmatpush.bf16.msra.mxu0 %v6679
        %7182 = vmatpush.bf16.msra.mxu0 %v6674
        %7183 = vmatpush.bf16.msra.mxu0 %v6669
        %7184 = vmatpush.bf16.msra.mxu0 %v6664
        %7185 = vmatpush.bf16.msra.mxu0 %v6659
        %7186 = vmatpush.bf16.msra.mxu0 %v6654
        %7187 = vmatpush.bf16.msra.mxu0 %v6649
        %7188 = vmatmul.bf16.gmra.mxu0 %v6024
        %v7189 = vpop.f32.mrf.mxu0
        %v7190 = vadd.f32 %v7156, %v7189
        %v7191 = vpop.f32.mrf.mxu0
        %v7192 = vadd.f32 %v7158, %v7191
        %7193 = vmatmul.bf16.gmra.mxu0 %v6027
        %v7194 = vpop.f32.mrf.mxu0
        %v7195 = vadd.f32 %v7161, %v7194
        %v7196 = vpop.f32.mrf.mxu0
        %v7197 = vadd.f32 %v7163, %v7196
        %7198 = vmatmul.bf16.gmra.mxu0 %v6030
        %v7199 = vpop.f32.mrf.mxu0
        %v7200 = vadd.f32 %v7166, %v7199
        %v7201 = vpop.f32.mrf.mxu0
        %v7202 = vadd.f32 %v7168, %v7201
        %7203 = vmatmul.bf16.gmra.mxu0 %v6033
        %v7204 = vpop.f32.mrf.mxu0
        %v7205 = vadd.f32 %v7171, %v7204
        %v7206 = vpop.f32.mrf.mxu0
        %v7207 = vadd.f32 %v7173, %v7206
        %7208 = vmatmul.bf16.gmra.mxu0 %v6036
        %v7209 = vpop.f32.mrf.mxu0
        %v7210 = vadd.f32 %v7176, %v7209
        %v7211 = vpop.f32.mrf.mxu0
        %v7212 = vadd.f32 %v7178, %v7211
        %7213 = vdwg.mxu0
        %7214 = vmatpush.bf16.msra.mxu0 %v6605
        %7215 = vmatpush.bf16.msra.mxu0 %v6600
        %7216 = vmatpush.bf16.msra.mxu0 %v6595
        %7217 = vmatpush.bf16.msra.mxu0 %v6590
        %7218 = vmatpush.bf16.msra.mxu0 %v6585
        %7219 = vmatpush.bf16.msra.mxu0 %v6580
        %7220 = vmatpush.bf16.msra.mxu0 %v6575
        %7221 = vmatpush.bf16.msra.mxu0 %v6570
        %7222 = vmatmul.bf16.gmra.mxu0 %v6022
        %v7223 = vpop.f32.mrf.mxu0
        %v7224 = vadd.f32 0.0, %v7223
        %v7225 = vpop.f32.mrf.mxu0
        %v7226 = vadd.f32 0.0, %v7225
        %7227 = vmatmul.bf16.gmra.mxu0 %v6025
        %v7228 = vpop.f32.mrf.mxu0
        %v7229 = vadd.f32 0.0, %v7228
        %v7230 = vpop.f32.mrf.mxu0
        %v7231 = vadd.f32 0.0, %v7230
        %7232 = vmatmul.bf16.gmra.mxu0 %v6028
        %v7233 = vpop.f32.mrf.mxu0
        %v7234 = vadd.f32 0.0, %v7233
        %v7235 = vpop.f32.mrf.mxu0
        %v7236 = vadd.f32 0.0, %v7235
        %7237 = vmatmul.bf16.gmra.mxu0 %v6031
        %v7238 = vpop.f32.mrf.mxu0
        %v7239 = vadd.f32 0.0, %v7238
        %v7240 = vpop.f32.mrf.mxu0
        %v7241 = vadd.f32 0.0, %v7240
        %7242 = vmatmul.bf16.gmra.mxu0 %v6034
        %v7243 = vpop.f32.mrf.mxu0
        %v7244 = vadd.f32 0.0, %v7243
        %v7245 = vpop.f32.mrf.mxu0
        %v7246 = vadd.f32 0.0, %v7245
        %7247 = vdwg.mxu0
        %7248 = vmatpush.bf16.msra.mxu0 %v6645
        %7249 = vmatpush.bf16.msra.mxu0 %v6640
        %7250 = vmatpush.bf16.msra.mxu0 %v6635
        %7251 = vmatpush.bf16.msra.mxu0 %v6630
        %7252 = vmatpush.bf16.msra.mxu0 %v6625
        %7253 = vmatpush.bf16.msra.mxu0 %v6620
        %7254 = vmatpush.bf16.msra.mxu0 %v6615
        %7255 = vmatpush.bf16.msra.mxu0 %v6610
        %7256 = vmatmul.bf16.gmra.mxu0 %v6023
        %v7257 = vpop.f32.mrf.mxu0
        %v7258 = vadd.f32 %v7224, %v7257
        %v7259 = vpop.f32.mrf.mxu0
        %v7260 = vadd.f32 %v7226, %v7259
        %7261 = vmatmul.bf16.gmra.mxu0 %v6026
        %v7262 = vpop.f32.mrf.mxu0
        %v7263 = vadd.f32 %v7229, %v7262
        %v7264 = vpop.f32.mrf.mxu0
        %v7265 = vadd.f32 %v7231, %v7264
        %7266 = vmatmul.bf16.gmra.mxu0 %v6029
        %v7267 = vpop.f32.mrf.mxu0
        %v7268 = vadd.f32 %v7234, %v7267
        %v7269 = vpop.f32.mrf.mxu0
        %v7270 = vadd.f32 %v7236, %v7269
        %7271 = vmatmul.bf16.gmra.mxu0 %v6032
        %v7272 = vpop.f32.mrf.mxu0
        %v7273 = vadd.f32 %v7239, %v7272
        %v7274 = vpop.f32.mrf.mxu0
        %v7275 = vadd.f32 %v7241, %v7274
        %7276 = vmatmul.bf16.gmra.mxu0 %v6035
        %v7277 = vpop.f32.mrf.mxu0
        %v7278 = vadd.f32 %v7244, %v7277
        %v7279 = vpop.f32.mrf.mxu0
        %v7280 = vadd.f32 %v7246, %v7279
        %7281 = vdwg.mxu0
        %7282 = vmatpush.bf16.msra.mxu0 %v6685
        %7283 = vmatpush.bf16.msra.mxu0 %v6680
        %7284 = vmatpush.bf16.msra.mxu0 %v6675
        %7285 = vmatpush.bf16.msra.mxu0 %v6670
        %7286 = vmatpush.bf16.msra.mxu0 %v6665
        %7287 = vmatpush.bf16.msra.mxu0 %v6660
        %7288 = vmatpush.bf16.msra.mxu0 %v6655
        %7289 = vmatpush.bf16.msra.mxu0 %v6650
        %7290 = vmatmul.bf16.gmra.mxu0 %v6024
        %v7291 = vpop.f32.mrf.mxu0
        %v7292 = vadd.f32 %v7258, %v7291
        %v7293 = vpop.f32.mrf.mxu0
        %v7294 = vadd.f32 %v7260, %v7293
        %7295 = vmatmul.bf16.gmra.mxu0 %v6027
        %v7296 = vpop.f32.mrf.mxu0
        %v7297 = vadd.f32 %v7263, %v7296
        %v7298 = vpop.f32.mrf.mxu0
        %v7299 = vadd.f32 %v7265, %v7298
        %7300 = vmatmul.bf16.gmra.mxu0 %v6030
        %v7301 = vpop.f32.mrf.mxu0
        %v7302 = vadd.f32 %v7268, %v7301
        %v7303 = vpop.f32.mrf.mxu0
        %v7304 = vadd.f32 %v7270, %v7303
        %7305 = vmatmul.bf16.gmra.mxu0 %v6033
        %v7306 = vpop.f32.mrf.mxu0
        %v7307 = vadd.f32 %v7273, %v7306
        %v7308 = vpop.f32.mrf.mxu0
        %v7309 = vadd.f32 %v7275, %v7308
        %7310 = vmatmul.bf16.gmra.mxu0 %v6036
        %v7311 = vpop.f32.mrf.mxu0
        %v7312 = vadd.f32 %v7278, %v7311
        %v7313 = vpop.f32.mrf.mxu0
        %v7314 = vadd.f32 %v7280, %v7313
        %7315 = vdwg.mxu0
        %v7460 = vunpack.c.l.b16 %v5878
        %v7461 = vunpack.c.h.b16 %v5878
        %v7462 = vunpack.c.l.b16 %v5879
        %v7463 = vunpack.c.h.b16 %v5879
        %v7464 = vunpack.c.l.b16 %v5880
        %v7465 = vunpack.c.l.b16 %v5881
        %v7466 = vunpack.c.h.b16 %v5881
        %v7467 = vunpack.c.l.b16 %v5882
        %v7468 = vunpack.c.h.b16 %v5882
        %v7469 = vunpack.c.l.b16 %v5883
        %v7470 = vunpack.c.l.b16 %v5884
        %v7471 = vunpack.c.h.b16 %v5884
        %v7472 = vunpack.c.l.b16 %v5885
        %v7473 = vunpack.c.h.b16 %v5885
        %v7474 = vunpack.c.l.b16 %v5886
        %v7475 = vunpack.c.l.b16 %v5887
        %v7476 = vunpack.c.h.b16 %v5887
        %v7477 = vunpack.c.l.b16 %v5888
        %v7478 = vunpack.c.h.b16 %v5888
        %v7479 = vunpack.c.l.b16 %v5889
        %v7480 = vunpack.c.l.b16 %v5890
        %v7481 = vunpack.c.h.b16 %v5890
        %v7482 = vunpack.c.l.b16 %v5891
        %v7483 = vunpack.c.h.b16 %v5891
        %v7484 = vunpack.c.l.b16 %v5892
        %v7485 = vunpack.c.l.b16 %v5893
        %v7486 = vunpack.c.h.b16 %v5893
        %v7487 = vunpack.c.l.b16 %v5894
        %v7488 = vunpack.c.h.b16 %v5894
        %v7489 = vunpack.c.l.b16 %v5895
        %v7490 = vunpack.c.l.b16 %v5896
        %v7491 = vunpack.c.h.b16 %v5896
        %v7492 = vunpack.c.l.b16 %v5897
        %v7493 = vunpack.c.h.b16 %v5897
        %v7494 = vunpack.c.l.b16 %v5898
        %v7495 = vunpack.c.l.b16 %v5899
        %v7496 = vunpack.c.h.b16 %v5899
        %v7497 = vunpack.c.l.b16 %v5900
        %v7498 = vunpack.c.h.b16 %v5900
        %v7499 = vunpack.c.l.b16 %v5901
        %v7500 = vunpack.c.l.b16 %v5902
        %v7501 = vunpack.c.h.b16 %v5902
        %v7502 = vunpack.c.l.b16 %v5903
        %v7503 = vunpack.c.h.b16 %v5903
        %v7504 = vunpack.c.l.b16 %v5904
        %v7505 = vunpack.c.l.b16 %v5905
        %v7506 = vunpack.c.h.b16 %v5905
        %v7507 = vunpack.c.l.b16 %v5906
        %v7508 = vunpack.c.h.b16 %v5906
        %v7509 = vunpack.c.l.b16 %v5907
        %v7510 = vunpack.c.l.b16 %v5908
        %v7511 = vunpack.c.h.b16 %v5908
        %v7512 = vunpack.c.l.b16 %v5909
        %v7513 = vunpack.c.h.b16 %v5909
        %v7514 = vunpack.c.l.b16 %v5910
        %v7515 = vunpack.c.l.b16 %v5911
        %v7516 = vunpack.c.h.b16 %v5911
        %v7517 = vunpack.c.l.b16 %v5912
        %v7518 = vunpack.c.h.b16 %v5912
        %v7519 = vunpack.c.l.b16 %v5913
        %v7520 = vunpack.c.l.b16 %v5914
        %v7521 = vunpack.c.h.b16 %v5914
        %v7522 = vunpack.c.l.b16 %v5915
        %v7523 = vunpack.c.h.b16 %v5915
        %v7524 = vunpack.c.l.b16 %v5916
        %v7525 = vunpack.c.l.b16 %v5917
        %v7526 = vunpack.c.h.b16 %v5917
        %v7527 = vunpack.c.l.b16 %v5918
        %v7528 = vunpack.c.h.b16 %v5918
        %v7529 = vunpack.c.l.b16 %v5919
        %v7530 = vunpack.c.l.b16 %v5920
        %v7531 = vunpack.c.h.b16 %v5920
        %v7532 = vunpack.c.l.b16 %v5921
        %v7533 = vunpack.c.h.b16 %v5921
        %v7534 = vunpack.c.l.b16 %v5922
        %v7535 = vunpack.c.l.b16 %v5923
        %v7536 = vunpack.c.h.b16 %v5923
        %v7537 = vunpack.c.l.b16 %v5924
        %v7538 = vunpack.c.h.b16 %v5924
        %v7539 = vunpack.c.l.b16 %v5925
        %v7540 = vunpack.c.l.b16 %v5926
        %v7541 = vunpack.c.h.b16 %v5926
        %v7542 = vunpack.c.l.b16 %v5927
        %v7543 = vunpack.c.h.b16 %v5927
        %v7544 = vunpack.c.l.b16 %v5928
        %v7545 = vunpack.c.l.b16 %v5929
        %v7546 = vunpack.c.h.b16 %v5929
        %v7547 = vunpack.c.l.b16 %v5930
        %v7548 = vunpack.c.h.b16 %v5930
        %v7549 = vunpack.c.l.b16 %v5931
        %v7550 = vunpack.c.l.b16 %v5932
        %v7551 = vunpack.c.h.b16 %v5932
        %v7552 = vunpack.c.l.b16 %v5933
        %v7553 = vunpack.c.h.b16 %v5933
        %v7554 = vunpack.c.l.b16 %v5934
        %v7555 = vunpack.c.l.b16 %v5935
        %v7556 = vunpack.c.h.b16 %v5935
        %v7557 = vunpack.c.l.b16 %v5936
        %v7558 = vunpack.c.h.b16 %v5936
        %v7559 = vunpack.c.l.b16 %v5937
        %v7560 = vunpack.c.l.b16 %v5938
        %v7561 = vunpack.c.h.b16 %v5938
        %v7562 = vunpack.c.l.b16 %v5939
        %v7563 = vunpack.c.h.b16 %v5939
        %v7564 = vunpack.c.l.b16 %v5940
        %v7565 = vunpack.c.l.b16 %v5941
        %v7566 = vunpack.c.h.b16 %v5941
        %v7567 = vunpack.c.l.b16 %v5942
        %v7568 = vunpack.c.h.b16 %v5942
        %v7569 = vunpack.c.l.b16 %v5943
        %v7570 = vunpack.c.l.b16 %v5944
        %v7571 = vunpack.c.h.b16 %v5944
        %v7572 = vunpack.c.l.b16 %v5945
        %v7573 = vunpack.c.h.b16 %v5945
        %v7574 = vunpack.c.l.b16 %v5946
        %v7575 = vunpack.c.l.b16 %v5947
        %v7576 = vunpack.c.h.b16 %v5947
        %v7577 = vunpack.c.l.b16 %v5948
        %v7578 = vunpack.c.h.b16 %v5948
        %v7579 = vunpack.c.l.b16 %v5949
        %v7580 = vunpack.c.l.b16 %v5950
        %v7581 = vunpack.c.h.b16 %v5950
        %v7582 = vunpack.c.l.b16 %v5951
        %v7583 = vunpack.c.h.b16 %v5951
        %v7584 = vunpack.c.l.b16 %v5952
        %v7585 = vunpack.c.l.b16 %v5953
        %v7586 = vunpack.c.h.b16 %v5953
        %v7587 = vunpack.c.l.b16 %v5954
        %v7588 = vunpack.c.h.b16 %v5954
        %v7589 = vunpack.c.l.b16 %v5955
        %v7590 = vunpack.c.l.b16 %v5956
        %v7591 = vunpack.c.h.b16 %v5956
        %v7592 = vunpack.c.l.b16 %v5957
        %v7593 = vunpack.c.h.b16 %v5957
        %v7594 = vunpack.c.l.b16 %v5958
        %v7595 = vunpack.c.l.b16 %v5959
        %v7596 = vunpack.c.h.b16 %v5959
        %v7597 = vunpack.c.l.b16 %v5960
        %v7598 = vunpack.c.h.b16 %v5960
        %v7599 = vunpack.c.l.b16 %v5961
        %v7600 = vunpack.c.l.b16 %v5962
        %v7601 = vunpack.c.h.b16 %v5962
        %v7602 = vunpack.c.l.b16 %v5963
        %v7603 = vunpack.c.h.b16 %v5963
        %v7604 = vunpack.c.l.b16 %v5964
        %v7605 = vunpack.c.l.b16 %v5965
        %v7606 = vunpack.c.h.b16 %v5965
        %v7607 = vunpack.c.l.b16 %v5966
        %v7608 = vunpack.c.h.b16 %v5966
        %v7609 = vunpack.c.l.b16 %v5967
        %v7610 = vunpack.c.l.b16 %v5968
        %v7611 = vunpack.c.h.b16 %v5968
        %v7612 = vunpack.c.l.b16 %v5969
        %v7613 = vunpack.c.h.b16 %v5969
        %v7614 = vunpack.c.l.b16 %v5970
        %v7615 = vunpack.c.l.b16 %v5971
        %v7616 = vunpack.c.h.b16 %v5971
        %v7617 = vunpack.c.l.b16 %v5972
        %v7618 = vunpack.c.h.b16 %v5972
        %v7619 = vunpack.c.l.b16 %v5973
        %v7620 = vunpack.c.l.b16 %v5974
        %v7621 = vunpack.c.h.b16 %v5974
        %v7622 = vunpack.c.l.b16 %v5975
        %v7623 = vunpack.c.h.b16 %v5975
        %v7624 = vunpack.c.l.b16 %v5976
        %v7625 = vunpack.c.l.b16 %v5977
        %v7626 = vunpack.c.h.b16 %v5977
        %v7627 = vunpack.c.l.b16 %v5978
        %v7628 = vunpack.c.h.b16 %v5978
        %v7629 = vunpack.c.l.b16 %v5979
        %v7630 = vunpack.c.l.b16 %v5980
        %v7631 = vunpack.c.h.b16 %v5980
        %v7632 = vunpack.c.l.b16 %v5981
        %v7633 = vunpack.c.h.b16 %v5981
        %v7634 = vunpack.c.l.b16 %v5982
        %v7635 = vunpack.c.l.b16 %v5983
        %v7636 = vunpack.c.h.b16 %v5983
        %v7637 = vunpack.c.l.b16 %v5984
        %v7638 = vunpack.c.h.b16 %v5984
        %v7639 = vunpack.c.l.b16 %v5985
        %v7640 = vunpack.c.l.b16 %v5986
        %v7641 = vunpack.c.h.b16 %v5986
        %v7642 = vunpack.c.l.b16 %v5987
        %v7643 = vunpack.c.h.b16 %v5987
        %v7644 = vunpack.c.l.b16 %v5988
        %v7645 = vunpack.c.l.b16 %v5989
        %v7646 = vunpack.c.h.b16 %v5989
        %v7647 = vunpack.c.l.b16 %v5990
        %v7648 = vunpack.c.h.b16 %v5990
        %v7649 = vunpack.c.l.b16 %v5991
        %v7650 = vunpack.c.l.b16 %v5992
        %v7651 = vunpack.c.h.b16 %v5992
        %v7652 = vunpack.c.l.b16 %v5993
        %v7653 = vunpack.c.h.b16 %v5993
        %v7654 = vunpack.c.l.b16 %v5994
        %v7655 = vunpack.c.l.b16 %v5995
        %v7656 = vunpack.c.h.b16 %v5995
        %v7657 = vunpack.c.l.b16 %v5996
        %v7658 = vunpack.c.h.b16 %v5996
        %v7659 = vunpack.c.l.b16 %v5997
        %v7660 = vunpack.c.l.b16 %v5998
        %v7661 = vunpack.c.h.b16 %v5998
        %v7662 = vunpack.c.l.b16 %v5999
        %v7663 = vunpack.c.h.b16 %v5999
        %v7664 = vunpack.c.l.b16 %v6000
        %v7665 = vunpack.c.l.b16 %v6001
        %v7666 = vunpack.c.h.b16 %v6001
        %v7667 = vunpack.c.l.b16 %v6002
        %v7668 = vunpack.c.h.b16 %v6002
        %v7669 = vunpack.c.l.b16 %v6003
        %v7670 = vunpack.c.l.b16 %v6004
        %v7671 = vunpack.c.h.b16 %v6004
        %v7672 = vunpack.c.l.b16 %v6005
        %v7673 = vunpack.c.h.b16 %v6005
        %v7674 = vunpack.c.l.b16 %v6006
        %v7675 = vunpack.c.l.b16 %v6007
        %v7676 = vunpack.c.h.b16 %v6007
        %v7677 = vunpack.c.l.b16 %v6008
        %v7678 = vunpack.c.h.b16 %v6008
        %v7679 = vunpack.c.l.b16 %v6009
        %v7680 = vunpack.c.l.b16 %v6010
        %v7681 = vunpack.c.h.b16 %v6010
        %v7682 = vunpack.c.l.b16 %v6011
        %v7683 = vunpack.c.h.b16 %v6011
        %v7684 = vunpack.c.l.b16 %v6012
        %v7685 = vunpack.c.l.b16 %v6013
        %v7686 = vunpack.c.h.b16 %v6013
        %v7687 = vunpack.c.l.b16 %v6014
        %v7688 = vunpack.c.h.b16 %v6014
        %v7689 = vunpack.c.l.b16 %v6015
        %v7690 = vunpack.c.l.b16 %v6016
        %v7691 = vunpack.c.h.b16 %v6016
        %v7692 = vunpack.c.l.b16 %v6017
        %v7693 = vunpack.c.h.b16 %v6017
        %v7694 = vunpack.c.l.b16 %v6018
        %v7695 = vunpack.c.l.b16 %v6019
        %v7696 = vunpack.c.h.b16 %v6019
        %v7697 = vunpack.c.l.b16 %v6020
        %v7698 = vunpack.c.h.b16 %v6020
        %v7699 = vunpack.c.l.b16 %v6021
        %v7700 = vpack.c.b16 %v7465, %v7460
        %v7701 = vpack.c.b16 %v7466, %v7461
        %v7702 = vpack.c.b16 %v7467, %v7462
        %v7703 = vpack.c.b16 %v7468, %v7463
        %v7704 = vpack.c.b16 %v7469, %v7464
        %v7705 = vpack.c.b16 %v7475, %v7470
        %v7706 = vpack.c.b16 %v7476, %v7471
        %v7707 = vpack.c.b16 %v7477, %v7472
        %v7708 = vpack.c.b16 %v7478, %v7473
        %v7709 = vpack.c.b16 %v7479, %v7474
        %v7710 = vpack.c.b16 %v7485, %v7480
        %v7711 = vpack.c.b16 %v7486, %v7481
        %v7712 = vpack.c.b16 %v7487, %v7482
        %v7713 = vpack.c.b16 %v7488, %v7483
        %v7714 = vpack.c.b16 %v7489, %v7484
        %v7715 = vpack.c.b16 %v7495, %v7490
        %v7716 = vpack.c.b16 %v7496, %v7491
        %v7717 = vpack.c.b16 %v7497, %v7492
        %v7718 = vpack.c.b16 %v7498, %v7493
        %v7719 = vpack.c.b16 %v7499, %v7494
        %v7720 = vpack.c.b16 %v7505, %v7500
        %v7721 = vpack.c.b16 %v7506, %v7501
        %v7722 = vpack.c.b16 %v7507, %v7502
        %v7723 = vpack.c.b16 %v7508, %v7503
        %v7724 = vpack.c.b16 %v7509, %v7504
        %v7725 = vpack.c.b16 %v7515, %v7510
        %v7726 = vpack.c.b16 %v7516, %v7511
        %v7727 = vpack.c.b16 %v7517, %v7512
        %v7728 = vpack.c.b16 %v7518, %v7513
        %v7729 = vpack.c.b16 %v7519, %v7514
        %v7730 = vpack.c.b16 %v7525, %v7520
        %v7731 = vpack.c.b16 %v7526, %v7521
        %v7732 = vpack.c.b16 %v7527, %v7522
        %v7733 = vpack.c.b16 %v7528, %v7523
        %v7734 = vpack.c.b16 %v7529, %v7524
        %v7735 = vpack.c.b16 %v7535, %v7530
        %v7736 = vpack.c.b16 %v7536, %v7531
        %v7737 = vpack.c.b16 %v7537, %v7532
        %v7738 = vpack.c.b16 %v7538, %v7533
        %v7739 = vpack.c.b16 %v7539, %v7534
        %v7740 = vpack.c.b16 %v7545, %v7540
        %v7741 = vpack.c.b16 %v7546, %v7541
        %v7742 = vpack.c.b16 %v7547, %v7542
        %v7743 = vpack.c.b16 %v7548, %v7543
        %v7744 = vpack.c.b16 %v7549, %v7544
        %v7745 = vpack.c.b16 %v7555, %v7550
        %v7746 = vpack.c.b16 %v7556, %v7551
        %v7747 = vpack.c.b16 %v7557, %v7552
        %v7748 = vpack.c.b16 %v7558, %v7553
        %v7749 = vpack.c.b16 %v7559, %v7554
        %v7750 = vpack.c.b16 %v7565, %v7560
        %v7751 = vpack.c.b16 %v7566, %v7561
        %v7752 = vpack.c.b16 %v7567, %v7562
        %v7753 = vpack.c.b16 %v7568, %v7563
        %v7754 = vpack.c.b16 %v7569, %v7564
        %v7755 = vpack.c.b16 %v7575, %v7570
        %v7756 = vpack.c.b16 %v7576, %v7571
        %v7757 = vpack.c.b16 %v7577, %v7572
        %v7758 = vpack.c.b16 %v7578, %v7573
        %v7759 = vpack.c.b16 %v7579, %v7574
        %v7760 = vpack.c.b16 %v7585, %v7580
        %v7761 = vpack.c.b16 %v7586, %v7581
        %v7762 = vpack.c.b16 %v7587, %v7582
        %v7763 = vpack.c.b16 %v7588, %v7583
        %v7764 = vpack.c.b16 %v7589, %v7584
        %v7765 = vpack.c.b16 %v7595, %v7590
        %v7766 = vpack.c.b16 %v7596, %v7591
        %v7767 = vpack.c.b16 %v7597, %v7592
        %v7768 = vpack.c.b16 %v7598, %v7593
        %v7769 = vpack.c.b16 %v7599, %v7594
        %v7770 = vpack.c.b16 %v7605, %v7600
        %v7771 = vpack.c.b16 %v7606, %v7601
        %v7772 = vpack.c.b16 %v7607, %v7602
        %v7773 = vpack.c.b16 %v7608, %v7603
        %v7774 = vpack.c.b16 %v7609, %v7604
        %v7775 = vpack.c.b16 %v7615, %v7610
        %v7776 = vpack.c.b16 %v7616, %v7611
        %v7777 = vpack.c.b16 %v7617, %v7612
        %v7778 = vpack.c.b16 %v7618, %v7613
        %v7779 = vpack.c.b16 %v7619, %v7614
        %v7780 = vpack.c.b16 %v7625, %v7620
        %v7781 = vpack.c.b16 %v7626, %v7621
        %v7782 = vpack.c.b16 %v7627, %v7622
        %v7783 = vpack.c.b16 %v7628, %v7623
        %v7784 = vpack.c.b16 %v7629, %v7624
        %v7785 = vpack.c.b16 %v7635, %v7630
        %v7786 = vpack.c.b16 %v7636, %v7631
        %v7787 = vpack.c.b16 %v7637, %v7632
        %v7788 = vpack.c.b16 %v7638, %v7633
        %v7789 = vpack.c.b16 %v7639, %v7634
        %v7790 = vpack.c.b16 %v7645, %v7640
        %v7791 = vpack.c.b16 %v7646, %v7641
        %v7792 = vpack.c.b16 %v7647, %v7642
        %v7793 = vpack.c.b16 %v7648, %v7643
        %v7794 = vpack.c.b16 %v7649, %v7644
        %v7795 = vpack.c.b16 %v7655, %v7650
        %v7796 = vpack.c.b16 %v7656, %v7651
        %v7797 = vpack.c.b16 %v7657, %v7652
        %v7798 = vpack.c.b16 %v7658, %v7653
        %v7799 = vpack.c.b16 %v7659, %v7654
        %v7800 = vpack.c.b16 %v7665, %v7660
        %v7801 = vpack.c.b16 %v7666, %v7661
        %v7802 = vpack.c.b16 %v7667, %v7662
        %v7803 = vpack.c.b16 %v7668, %v7663
        %v7804 = vpack.c.b16 %v7669, %v7664
        %v7805 = vpack.c.b16 %v7675, %v7670
        %v7806 = vpack.c.b16 %v7676, %v7671
        %v7807 = vpack.c.b16 %v7677, %v7672
        %v7808 = vpack.c.b16 %v7678, %v7673
        %v7809 = vpack.c.b16 %v7679, %v7674
        %v7810 = vpack.c.b16 %v7685, %v7680
        %v7811 = vpack.c.b16 %v7686, %v7681
        %v7812 = vpack.c.b16 %v7687, %v7682
        %v7813 = vpack.c.b16 %v7688, %v7683
        %v7814 = vpack.c.b16 %v7689, %v7684
        %v7815 = vpack.c.b16 %v7695, %v7690
        %v7816 = vpack.c.b16 %v7696, %v7691
        %v7817 = vpack.c.b16 %v7697, %v7692
        %v7818 = vpack.c.b16 %v7698, %v7693
        %v7819 = vpack.c.b16 %v7699, %v7694
        %7940 = vmatpush.bf16.msra.mxu0 %v7735
        %7941 = vmatpush.bf16.msra.mxu0 %v7730
        %7942 = vmatpush.bf16.msra.mxu0 %v7725
        %7943 = vmatpush.bf16.msra.mxu0 %v7720
        %7944 = vmatpush.bf16.msra.mxu0 %v7715
        %7945 = vmatpush.bf16.msra.mxu0 %v7710
        %7946 = vmatpush.bf16.msra.mxu0 %v7705
        %7947 = vmatpush.bf16.msra.mxu0 %v7700
        %7948 = vmatmul.bf16.gmra.mxu0 %v5863
        %v7949 = vpop.f32.mrf.mxu0
        %v7950 = vadd.f32 %v6884, %v7949
        %v7951 = vpop.f32.mrf.mxu0
        %v7952 = vadd.f32 %v6886, %v7951
        %7953 = vmatmul.bf16.gmra.mxu0 %v5866
        %v7954 = vpop.f32.mrf.mxu0
        %v7955 = vadd.f32 %v6889, %v7954
        %v7956 = vpop.f32.mrf.mxu0
        %v7957 = vadd.f32 %v6891, %v7956
        %7958 = vmatmul.bf16.gmra.mxu0 %v5869
        %v7959 = vpop.f32.mrf.mxu0
        %v7960 = vadd.f32 %v6894, %v7959
        %v7961 = vpop.f32.mrf.mxu0
        %v7962 = vadd.f32 %v6896, %v7961
        %7963 = vmatmul.bf16.gmra.mxu0 %v5872
        %v7964 = vpop.f32.mrf.mxu0
        %v7965 = vadd.f32 %v6899, %v7964
        %v7966 = vpop.f32.mrf.mxu0
        %v7967 = vadd.f32 %v6901, %v7966
        %7968 = vmatmul.bf16.gmra.mxu0 %v5875
        %v7969 = vpop.f32.mrf.mxu0
        %v7970 = vadd.f32 %v6904, %v7969
        %v7971 = vpop.f32.mrf.mxu0
        %v7972 = vadd.f32 %v6906, %v7971
        %7973 = vdwg.mxu0
        %7974 = vmatpush.bf16.msra.mxu0 %v7775
        %7975 = vmatpush.bf16.msra.mxu0 %v7770
        %7976 = vmatpush.bf16.msra.mxu0 %v7765
        %7977 = vmatpush.bf16.msra.mxu0 %v7760
        %7978 = vmatpush.bf16.msra.mxu0 %v7755
        %7979 = vmatpush.bf16.msra.mxu0 %v7750
        %7980 = vmatpush.bf16.msra.mxu0 %v7745
        %7981 = vmatpush.bf16.msra.mxu0 %v7740
        %7982 = vmatmul.bf16.gmra.mxu0 %v5864
        %v7983 = vpop.f32.mrf.mxu0
        %v7984 = vadd.f32 %v7950, %v7983
        %v7985 = vpop.f32.mrf.mxu0
        %v7986 = vadd.f32 %v7952, %v7985
        %7987 = vmatmul.bf16.gmra.mxu0 %v5867
        %v7988 = vpop.f32.mrf.mxu0
        %v7989 = vadd.f32 %v7955, %v7988
        %v7990 = vpop.f32.mrf.mxu0
        %v7991 = vadd.f32 %v7957, %v7990
        %7992 = vmatmul.bf16.gmra.mxu0 %v5870
        %v7993 = vpop.f32.mrf.mxu0
        %v7994 = vadd.f32 %v7960, %v7993
        %v7995 = vpop.f32.mrf.mxu0
        %v7996 = vadd.f32 %v7962, %v7995
        %7997 = vmatmul.bf16.gmra.mxu0 %v5873
        %v7998 = vpop.f32.mrf.mxu0
        %v7999 = vadd.f32 %v7965, %v7998
        %v8000 = vpop.f32.mrf.mxu0
        %v8001 = vadd.f32 %v7967, %v8000
        %8002 = vmatmul.bf16.gmra.mxu0 %v5876
        %v8003 = vpop.f32.mrf.mxu0
        %v8004 = vadd.f32 %v7970, %v8003
        %v8005 = vpop.f32.mrf.mxu0
        %v8006 = vadd.f32 %v7972, %v8005
        %8007 = vdwg.mxu0
        %8008 = vmatpush.bf16.msra.mxu0 %v7815
        %8009 = vmatpush.bf16.msra.mxu0 %v7810
        %8010 = vmatpush.bf16.msra.mxu0 %v7805
        %8011 = vmatpush.bf16.msra.mxu0 %v7800
        %8012 = vmatpush.bf16.msra.mxu0 %v7795
        %8013 = vmatpush.bf16.msra.mxu0 %v7790
        %8014 = vmatpush.bf16.msra.mxu0 %v7785
        %8015 = vmatpush.bf16.msra.mxu0 %v7780
        %8016 = vmatmul.bf16.gmra.mxu0 %v5865
        %v8017 = vpop.f32.mrf.mxu0
        %v8018 = vadd.f32 %v7984, %v8017
        %v8019 = vpop.f32.mrf.mxu0
        %v8020 = vadd.f32 %v7986, %v8019
        %8021 = vmatmul.bf16.gmra.mxu0 %v5868
        %v8022 = vpop.f32.mrf.mxu0
        %v8023 = vadd.f32 %v7989, %v8022
        %v8024 = vpop.f32.mrf.mxu0
        %v8025 = vadd.f32 %v7991, %v8024
        %8026 = vmatmul.bf16.gmra.mxu0 %v5871
        %v8027 = vpop.f32.mrf.mxu0
        %v8028 = vadd.f32 %v7994, %v8027
        %v8029 = vpop.f32.mrf.mxu0
        %v8030 = vadd.f32 %v7996, %v8029
        %8031 = vmatmul.bf16.gmra.mxu0 %v5874
        %v8032 = vpop.f32.mrf.mxu0
        %v8033 = vadd.f32 %v7999, %v8032
        %v8034 = vpop.f32.mrf.mxu0
        %v8035 = vadd.f32 %v8001, %v8034
        %8036 = vmatmul.bf16.gmra.mxu0 %v5877
        %v8037 = vpop.f32.mrf.mxu0
        %v8038 = vadd.f32 %v8004, %v8037
        %v8039 = vpop.f32.mrf.mxu0
        %v8040 = vadd.f32 %v8006, %v8039
        %8041 = vdwg.mxu0
        %8042 = vmatpush.bf16.msra.mxu0 %v7736
        %8043 = vmatpush.bf16.msra.mxu0 %v7731
        %8044 = vmatpush.bf16.msra.mxu0 %v7726
        %8045 = vmatpush.bf16.msra.mxu0 %v7721
        %8046 = vmatpush.bf16.msra.mxu0 %v7716
        %8047 = vmatpush.bf16.msra.mxu0 %v7711
        %8048 = vmatpush.bf16.msra.mxu0 %v7706
        %8049 = vmatpush.bf16.msra.mxu0 %v7701
        %8050 = vmatmul.bf16.gmra.mxu0 %v5863
        %v8051 = vpop.f32.mrf.mxu0
        %v8052 = vadd.f32 %v6986, %v8051
        %v8053 = vpop.f32.mrf.mxu0
        %v8054 = vadd.f32 %v6988, %v8053
        %8055 = vmatmul.bf16.gmra.mxu0 %v5866
        %v8056 = vpop.f32.mrf.mxu0
        %v8057 = vadd.f32 %v6991, %v8056
        %v8058 = vpop.f32.mrf.mxu0
        %v8059 = vadd.f32 %v6993, %v8058
        %8060 = vmatmul.bf16.gmra.mxu0 %v5869
        %v8061 = vpop.f32.mrf.mxu0
        %v8062 = vadd.f32 %v6996, %v8061
        %v8063 = vpop.f32.mrf.mxu0
        %v8064 = vadd.f32 %v6998, %v8063
        %8065 = vmatmul.bf16.gmra.mxu0 %v5872
        %v8066 = vpop.f32.mrf.mxu0
        %v8067 = vadd.f32 %v7001, %v8066
        %v8068 = vpop.f32.mrf.mxu0
        %v8069 = vadd.f32 %v7003, %v8068
        %8070 = vmatmul.bf16.gmra.mxu0 %v5875
        %v8071 = vpop.f32.mrf.mxu0
        %v8072 = vadd.f32 %v7006, %v8071
        %v8073 = vpop.f32.mrf.mxu0
        %v8074 = vadd.f32 %v7008, %v8073
        %8075 = vdwg.mxu0
        %8076 = vmatpush.bf16.msra.mxu0 %v7776
        %8077 = vmatpush.bf16.msra.mxu0 %v7771
        %8078 = vmatpush.bf16.msra.mxu0 %v7766
        %8079 = vmatpush.bf16.msra.mxu0 %v7761
        %8080 = vmatpush.bf16.msra.mxu0 %v7756
        %8081 = vmatpush.bf16.msra.mxu0 %v7751
        %8082 = vmatpush.bf16.msra.mxu0 %v7746
        %8083 = vmatpush.bf16.msra.mxu0 %v7741
        %8084 = vmatmul.bf16.gmra.mxu0 %v5864
        %v8085 = vpop.f32.mrf.mxu0
        %v8086 = vadd.f32 %v8052, %v8085
        %v8087 = vpop.f32.mrf.mxu0
        %v8088 = vadd.f32 %v8054, %v8087
        %8089 = vmatmul.bf16.gmra.mxu0 %v5867
        %v8090 = vpop.f32.mrf.mxu0
        %v8091 = vadd.f32 %v8057, %v8090
        %v8092 = vpop.f32.mrf.mxu0
        %v8093 = vadd.f32 %v8059, %v8092
        %8094 = vmatmul.bf16.gmra.mxu0 %v5870
        %v8095 = vpop.f32.mrf.mxu0
        %v8096 = vadd.f32 %v8062, %v8095
        %v8097 = vpop.f32.mrf.mxu0
        %v8098 = vadd.f32 %v8064, %v8097
        %8099 = vmatmul.bf16.gmra.mxu0 %v5873
        %v8100 = vpop.f32.mrf.mxu0
        %v8101 = vadd.f32 %v8067, %v8100
        %v8102 = vpop.f32.mrf.mxu0
        %v8103 = vadd.f32 %v8069, %v8102
        %8104 = vmatmul.bf16.gmra.mxu0 %v5876
        %v8105 = vpop.f32.mrf.mxu0
        %v8106 = vadd.f32 %v8072, %v8105
        %v8107 = vpop.f32.mrf.mxu0
        %v8108 = vadd.f32 %v8074, %v8107
        %8109 = vdwg.mxu0
        %8110 = vmatpush.bf16.msra.mxu0 %v7816
        %8111 = vmatpush.bf16.msra.mxu0 %v7811
        %8112 = vmatpush.bf16.msra.mxu0 %v7806
        %8113 = vmatpush.bf16.msra.mxu0 %v7801
        %8114 = vmatpush.bf16.msra.mxu0 %v7796
        %8115 = vmatpush.bf16.msra.mxu0 %v7791
        %8116 = vmatpush.bf16.msra.mxu0 %v7786
        %8117 = vmatpush.bf16.msra.mxu0 %v7781
        %8118 = vmatmul.bf16.gmra.mxu0 %v5865
        %v8119 = vpop.f32.mrf.mxu0
        %v8120 = vadd.f32 %v8086, %v8119
        %v8121 = vpop.f32.mrf.mxu0
        %v8122 = vadd.f32 %v8088, %v8121
        %8123 = vmatmul.bf16.gmra.mxu0 %v5868
        %v8124 = vpop.f32.mrf.mxu0
        %v8125 = vadd.f32 %v8091, %v8124
        %v8126 = vpop.f32.mrf.mxu0
        %v8127 = vadd.f32 %v8093, %v8126
        %8128 = vmatmul.bf16.gmra.mxu0 %v5871
        %v8129 = vpop.f32.mrf.mxu0
        %v8130 = vadd.f32 %v8096, %v8129
        %v8131 = vpop.f32.mrf.mxu0
        %v8132 = vadd.f32 %v8098, %v8131
        %8133 = vmatmul.bf16.gmra.mxu0 %v5874
        %v8134 = vpop.f32.mrf.mxu0
        %v8135 = vadd.f32 %v8101, %v8134
        %v8136 = vpop.f32.mrf.mxu0
        %v8137 = vadd.f32 %v8103, %v8136
        %8138 = vmatmul.bf16.gmra.mxu0 %v5877
        %v8139 = vpop.f32.mrf.mxu0
        %v8140 = vadd.f32 %v8106, %v8139
        %v8141 = vpop.f32.mrf.mxu0
        %v8142 = vadd.f32 %v8108, %v8141
        %8143 = vdwg.mxu0
        %8144 = vmatpush.bf16.msra.mxu0 %v7737
        %8145 = vmatpush.bf16.msra.mxu0 %v7732
        %8146 = vmatpush.bf16.msra.mxu0 %v7727
        %8147 = vmatpush.bf16.msra.mxu0 %v7722
        %8148 = vmatpush.bf16.msra.mxu0 %v7717
        %8149 = vmatpush.bf16.msra.mxu0 %v7712
        %8150 = vmatpush.bf16.msra.mxu0 %v7707
        %8151 = vmatpush.bf16.msra.mxu0 %v7702
        %8152 = vmatmul.bf16.gmra.mxu0 %v5863
        %v8153 = vpop.f32.mrf.mxu0
        %v8154 = vadd.f32 %v7088, %v8153
        %v8155 = vpop.f32.mrf.mxu0
        %v8156 = vadd.f32 %v7090, %v8155
        %8157 = vmatmul.bf16.gmra.mxu0 %v5866
        %v8158 = vpop.f32.mrf.mxu0
        %v8159 = vadd.f32 %v7093, %v8158
        %v8160 = vpop.f32.mrf.mxu0
        %v8161 = vadd.f32 %v7095, %v8160
        %8162 = vmatmul.bf16.gmra.mxu0 %v5869
        %v8163 = vpop.f32.mrf.mxu0
        %v8164 = vadd.f32 %v7098, %v8163
        %v8165 = vpop.f32.mrf.mxu0
        %v8166 = vadd.f32 %v7100, %v8165
        %8167 = vmatmul.bf16.gmra.mxu0 %v5872
        %v8168 = vpop.f32.mrf.mxu0
        %v8169 = vadd.f32 %v7103, %v8168
        %v8170 = vpop.f32.mrf.mxu0
        %v8171 = vadd.f32 %v7105, %v8170
        %8172 = vmatmul.bf16.gmra.mxu0 %v5875
        %v8173 = vpop.f32.mrf.mxu0
        %v8174 = vadd.f32 %v7108, %v8173
        %v8175 = vpop.f32.mrf.mxu0
        %v8176 = vadd.f32 %v7110, %v8175
        %8177 = vdwg.mxu0
        %8178 = vmatpush.bf16.msra.mxu0 %v7777
        %8179 = vmatpush.bf16.msra.mxu0 %v7772
        %8180 = vmatpush.bf16.msra.mxu0 %v7767
        %8181 = vmatpush.bf16.msra.mxu0 %v7762
        %8182 = vmatpush.bf16.msra.mxu0 %v7757
        %8183 = vmatpush.bf16.msra.mxu0 %v7752
        %8184 = vmatpush.bf16.msra.mxu0 %v7747
        %8185 = vmatpush.bf16.msra.mxu0 %v7742
        %8186 = vmatmul.bf16.gmra.mxu0 %v5864
        %v8187 = vpop.f32.mrf.mxu0
        %v8188 = vadd.f32 %v8154, %v8187
        %v8189 = vpop.f32.mrf.mxu0
        %v8190 = vadd.f32 %v8156, %v8189
        %8191 = vmatmul.bf16.gmra.mxu0 %v5867
        %v8192 = vpop.f32.mrf.mxu0
        %v8193 = vadd.f32 %v8159, %v8192
        %v8194 = vpop.f32.mrf.mxu0
        %v8195 = vadd.f32 %v8161, %v8194
        %8196 = vmatmul.bf16.gmra.mxu0 %v5870
        %v8197 = vpop.f32.mrf.mxu0
        %v8198 = vadd.f32 %v8164, %v8197
        %v8199 = vpop.f32.mrf.mxu0
        %v8200 = vadd.f32 %v8166, %v8199
        %8201 = vmatmul.bf16.gmra.mxu0 %v5873
        %v8202 = vpop.f32.mrf.mxu0
        %v8203 = vadd.f32 %v8169, %v8202
        %v8204 = vpop.f32.mrf.mxu0
        %v8205 = vadd.f32 %v8171, %v8204
        %8206 = vmatmul.bf16.gmra.mxu0 %v5876
        %v8207 = vpop.f32.mrf.mxu0
        %v8208 = vadd.f32 %v8174, %v8207
        %v8209 = vpop.f32.mrf.mxu0
        %v8210 = vadd.f32 %v8176, %v8209
        %8211 = vdwg.mxu0
        %8212 = vmatpush.bf16.msra.mxu0 %v7817
        %8213 = vmatpush.bf16.msra.mxu0 %v7812
        %8214 = vmatpush.bf16.msra.mxu0 %v7807
        %8215 = vmatpush.bf16.msra.mxu0 %v7802
        %8216 = vmatpush.bf16.msra.mxu0 %v7797
        %8217 = vmatpush.bf16.msra.mxu0 %v7792
        %8218 = vmatpush.bf16.msra.mxu0 %v7787
        %8219 = vmatpush.bf16.msra.mxu0 %v7782
        %8220 = vmatmul.bf16.gmra.mxu0 %v5865
        %v8221 = vpop.f32.mrf.mxu0
        %v8222 = vadd.f32 %v8188, %v8221
        %v8223 = vpop.f32.mrf.mxu0
        %v8224 = vadd.f32 %v8190, %v8223
        %8225 = vmatmul.bf16.gmra.mxu0 %v5868
        %v8226 = vpop.f32.mrf.mxu0
        %v8227 = vadd.f32 %v8193, %v8226
        %v8228 = vpop.f32.mrf.mxu0
        %v8229 = vadd.f32 %v8195, %v8228
        %8230 = vmatmul.bf16.gmra.mxu0 %v5871
        %v8231 = vpop.f32.mrf.mxu0
        %v8232 = vadd.f32 %v8198, %v8231
        %v8233 = vpop.f32.mrf.mxu0
        %v8234 = vadd.f32 %v8200, %v8233
        %8235 = vmatmul.bf16.gmra.mxu0 %v5874
        %v8236 = vpop.f32.mrf.mxu0
        %v8237 = vadd.f32 %v8203, %v8236
        %v8238 = vpop.f32.mrf.mxu0
        %v8239 = vadd.f32 %v8205, %v8238
        %8240 = vmatmul.bf16.gmra.mxu0 %v5877
        %v8241 = vpop.f32.mrf.mxu0
        %v8242 = vadd.f32 %v8208, %v8241
        %v8243 = vpop.f32.mrf.mxu0
        %v8244 = vadd.f32 %v8210, %v8243
        %8245 = vdwg.mxu0
        %8246 = vmatpush.bf16.msra.mxu0 %v7738
        %8247 = vmatpush.bf16.msra.mxu0 %v7733
        %8248 = vmatpush.bf16.msra.mxu0 %v7728
        %8249 = vmatpush.bf16.msra.mxu0 %v7723
        %8250 = vmatpush.bf16.msra.mxu0 %v7718
        %8251 = vmatpush.bf16.msra.mxu0 %v7713
        %8252 = vmatpush.bf16.msra.mxu0 %v7708
        %8253 = vmatpush.bf16.msra.mxu0 %v7703
        %8254 = vmatmul.bf16.gmra.mxu0 %v5863
        %v8255 = vpop.f32.mrf.mxu0
        %v8256 = vadd.f32 %v7190, %v8255
        %v8257 = vpop.f32.mrf.mxu0
        %v8258 = vadd.f32 %v7192, %v8257
        %8259 = vmatmul.bf16.gmra.mxu0 %v5866
        %v8260 = vpop.f32.mrf.mxu0
        %v8261 = vadd.f32 %v7195, %v8260
        %v8262 = vpop.f32.mrf.mxu0
        %v8263 = vadd.f32 %v7197, %v8262
        %8264 = vmatmul.bf16.gmra.mxu0 %v5869
        %v8265 = vpop.f32.mrf.mxu0
        %v8266 = vadd.f32 %v7200, %v8265
        %v8267 = vpop.f32.mrf.mxu0
        %v8268 = vadd.f32 %v7202, %v8267
        %8269 = vmatmul.bf16.gmra.mxu0 %v5872
        %v8270 = vpop.f32.mrf.mxu0
        %v8271 = vadd.f32 %v7205, %v8270
        %v8272 = vpop.f32.mrf.mxu0
        %v8273 = vadd.f32 %v7207, %v8272
        %8274 = vmatmul.bf16.gmra.mxu0 %v5875
        %v8275 = vpop.f32.mrf.mxu0
        %v8276 = vadd.f32 %v7210, %v8275
        %v8277 = vpop.f32.mrf.mxu0
        %v8278 = vadd.f32 %v7212, %v8277
        %8279 = vdwg.mxu0
        %8280 = vmatpush.bf16.msra.mxu0 %v7778
        %8281 = vmatpush.bf16.msra.mxu0 %v7773
        %8282 = vmatpush.bf16.msra.mxu0 %v7768
        %8283 = vmatpush.bf16.msra.mxu0 %v7763
        %8284 = vmatpush.bf16.msra.mxu0 %v7758
        %8285 = vmatpush.bf16.msra.mxu0 %v7753
        %8286 = vmatpush.bf16.msra.mxu0 %v7748
        %8287 = vmatpush.bf16.msra.mxu0 %v7743
        %8288 = vmatmul.bf16.gmra.mxu0 %v5864
        %v8289 = vpop.f32.mrf.mxu0
        %v8290 = vadd.f32 %v8256, %v8289
        %v8291 = vpop.f32.mrf.mxu0
        %v8292 = vadd.f32 %v8258, %v8291
        %8293 = vmatmul.bf16.gmra.mxu0 %v5867
        %v8294 = vpop.f32.mrf.mxu0
        %v8295 = vadd.f32 %v8261, %v8294
        %v8296 = vpop.f32.mrf.mxu0
        %v8297 = vadd.f32 %v8263, %v8296
        %8298 = vmatmul.bf16.gmra.mxu0 %v5870
        %v8299 = vpop.f32.mrf.mxu0
        %v8300 = vadd.f32 %v8266, %v8299
        %v8301 = vpop.f32.mrf.mxu0
        %v8302 = vadd.f32 %v8268, %v8301
        %8303 = vmatmul.bf16.gmra.mxu0 %v5873
        %v8304 = vpop.f32.mrf.mxu0
        %v8305 = vadd.f32 %v8271, %v8304
        %v8306 = vpop.f32.mrf.mxu0
        %v8307 = vadd.f32 %v8273, %v8306
        %8308 = vmatmul.bf16.gmra.mxu0 %v5876
        %v8309 = vpop.f32.mrf.mxu0
        %v8310 = vadd.f32 %v8276, %v8309
        %v8311 = vpop.f32.mrf.mxu0
        %v8312 = vadd.f32 %v8278, %v8311
        %8313 = vdwg.mxu0
        %8314 = vmatpush.bf16.msra.mxu0 %v7818
        %8315 = vmatpush.bf16.msra.mxu0 %v7813
        %8316 = vmatpush.bf16.msra.mxu0 %v7808
        %8317 = vmatpush.bf16.msra.mxu0 %v7803
        %8318 = vmatpush.bf16.msra.mxu0 %v7798
        %8319 = vmatpush.bf16.msra.mxu0 %v7793
        %8320 = vmatpush.bf16.msra.mxu0 %v7788
        %8321 = vmatpush.bf16.msra.mxu0 %v7783
        %8322 = vmatmul.bf16.gmra.mxu0 %v5865
        %v8323 = vpop.f32.mrf.mxu0
        %v8324 = vadd.f32 %v8290, %v8323
        %v8325 = vpop.f32.mrf.mxu0
        %v8326 = vadd.f32 %v8292, %v8325
        %8327 = vmatmul.bf16.gmra.mxu0 %v5868
        %v8328 = vpop.f32.mrf.mxu0
        %v8329 = vadd.f32 %v8295, %v8328
        %v8330 = vpop.f32.mrf.mxu0
        %v8331 = vadd.f32 %v8297, %v8330
        %8332 = vmatmul.bf16.gmra.mxu0 %v5871
        %v8333 = vpop.f32.mrf.mxu0
        %v8334 = vadd.f32 %v8300, %v8333
        %v8335 = vpop.f32.mrf.mxu0
        %v8336 = vadd.f32 %v8302, %v8335
        %8337 = vmatmul.bf16.gmra.mxu0 %v5874
        %v8338 = vpop.f32.mrf.mxu0
        %v8339 = vadd.f32 %v8305, %v8338
        %v8340 = vpop.f32.mrf.mxu0
        %v8341 = vadd.f32 %v8307, %v8340
        %8342 = vmatmul.bf16.gmra.mxu0 %v5877
        %v8343 = vpop.f32.mrf.mxu0
        %v8344 = vadd.f32 %v8310, %v8343
        %v8345 = vpop.f32.mrf.mxu0
        %v8346 = vadd.f32 %v8312, %v8345
        %8347 = vdwg.mxu0
        %8348 = vmatpush.bf16.msra.mxu0 %v7739
        %8349 = vmatpush.bf16.msra.mxu0 %v7734
        %8350 = vmatpush.bf16.msra.mxu0 %v7729
        %8351 = vmatpush.bf16.msra.mxu0 %v7724
        %8352 = vmatpush.bf16.msra.mxu0 %v7719
        %8353 = vmatpush.bf16.msra.mxu0 %v7714
        %8354 = vmatpush.bf16.msra.mxu0 %v7709
        %8355 = vmatpush.bf16.msra.mxu0 %v7704
        %8356 = vmatmul.bf16.gmra.mxu0 %v5863
        %v8357 = vpop.f32.mrf.mxu0
        %v8358 = vadd.f32 %v7292, %v8357
        %v8359 = vpop.f32.mrf.mxu0
        %v8360 = vadd.f32 %v7294, %v8359
        %8361 = vmatmul.bf16.gmra.mxu0 %v5866
        %v8362 = vpop.f32.mrf.mxu0
        %v8363 = vadd.f32 %v7297, %v8362
        %v8364 = vpop.f32.mrf.mxu0
        %v8365 = vadd.f32 %v7299, %v8364
        %8366 = vmatmul.bf16.gmra.mxu0 %v5869
        %v8367 = vpop.f32.mrf.mxu0
        %v8368 = vadd.f32 %v7302, %v8367
        %v8369 = vpop.f32.mrf.mxu0
        %v8370 = vadd.f32 %v7304, %v8369
        %8371 = vmatmul.bf16.gmra.mxu0 %v5872
        %v8372 = vpop.f32.mrf.mxu0
        %v8373 = vadd.f32 %v7307, %v8372
        %v8374 = vpop.f32.mrf.mxu0
        %v8375 = vadd.f32 %v7309, %v8374
        %8376 = vmatmul.bf16.gmra.mxu0 %v5875
        %v8377 = vpop.f32.mrf.mxu0
        %v8378 = vadd.f32 %v7312, %v8377
        %v8379 = vpop.f32.mrf.mxu0
        %v8380 = vadd.f32 %v7314, %v8379
        %8381 = vdwg.mxu0
        %8382 = vmatpush.bf16.msra.mxu0 %v7779
        %8383 = vmatpush.bf16.msra.mxu0 %v7774
        %8384 = vmatpush.bf16.msra.mxu0 %v7769
        %8385 = vmatpush.bf16.msra.mxu0 %v7764
        %8386 = vmatpush.bf16.msra.mxu0 %v7759
        %8387 = vmatpush.bf16.msra.mxu0 %v7754
        %8388 = vmatpush.bf16.msra.mxu0 %v7749
        %8389 = vmatpush.bf16.msra.mxu0 %v7744
        %8390 = vmatmul.bf16.gmra.mxu0 %v5864
        %v8391 = vpop.f32.mrf.mxu0
        %v8392 = vadd.f32 %v8358, %v8391
        %v8393 = vpop.f32.mrf.mxu0
        %v8394 = vadd.f32 %v8360, %v8393
        %8395 = vmatmul.bf16.gmra.mxu0 %v5867
        %v8396 = vpop.f32.mrf.mxu0
        %v8397 = vadd.f32 %v8363, %v8396
        %v8398 = vpop.f32.mrf.mxu0
        %v8399 = vadd.f32 %v8365, %v8398
        %8400 = vmatmul.bf16.gmra.mxu0 %v5870
        %v8401 = vpop.f32.mrf.mxu0
        %v8402 = vadd.f32 %v8368, %v8401
        %v8403 = vpop.f32.mrf.mxu0
        %v8404 = vadd.f32 %v8370, %v8403
        %8405 = vmatmul.bf16.gmra.mxu0 %v5873
        %v8406 = vpop.f32.mrf.mxu0
        %v8407 = vadd.f32 %v8373, %v8406
        %v8408 = vpop.f32.mrf.mxu0
        %v8409 = vadd.f32 %v8375, %v8408
        %8410 = vmatmul.bf16.gmra.mxu0 %v5876
        %v8411 = vpop.f32.mrf.mxu0
        %v8412 = vadd.f32 %v8378, %v8411
        %v8413 = vpop.f32.mrf.mxu0
        %v8414 = vadd.f32 %v8380, %v8413
        %8415 = vdwg.mxu0
        %8416 = vmatpush.bf16.msra.mxu0 %v7819
        %8417 = vmatpush.bf16.msra.mxu0 %v7814
        %8418 = vmatpush.bf16.msra.mxu0 %v7809
        %8419 = vmatpush.bf16.msra.mxu0 %v7804
        %8420 = vmatpush.bf16.msra.mxu0 %v7799
        %8421 = vmatpush.bf16.msra.mxu0 %v7794
        %8422 = vmatpush.bf16.msra.mxu0 %v7789
        %8423 = vmatpush.bf16.msra.mxu0 %v7784
        %8424 = vmatmul.bf16.gmra.mxu0 %v5865
        %v8425 = vpop.f32.mrf.mxu0
        %v8426 = vadd.f32 %v8392, %v8425
        %v8427 = vpop.f32.mrf.mxu0
        %v8428 = vadd.f32 %v8394, %v8427
        %8429 = vmatmul.bf16.gmra.mxu0 %v5868
        %v8430 = vpop.f32.mrf.mxu0
        %v8431 = vadd.f32 %v8397, %v8430
        %v8432 = vpop.f32.mrf.mxu0
        %v8433 = vadd.f32 %v8399, %v8432
        %8434 = vmatmul.bf16.gmra.mxu0 %v5871
        %v8435 = vpop.f32.mrf.mxu0
        %v8436 = vadd.f32 %v8402, %v8435
        %v8437 = vpop.f32.mrf.mxu0
        %v8438 = vadd.f32 %v8404, %v8437
        %8439 = vmatmul.bf16.gmra.mxu0 %v5874
        %v8440 = vpop.f32.mrf.mxu0
        %v8441 = vadd.f32 %v8407, %v8440
        %v8442 = vpop.f32.mrf.mxu0
        %v8443 = vadd.f32 %v8409, %v8442
        %8444 = vmatmul.bf16.gmra.mxu0 %v5877
        %v8445 = vpop.f32.mrf.mxu0
        %v8446 = vadd.f32 %v8412, %v8445
        %v8447 = vpop.f32.mrf.mxu0
        %v8448 = vadd.f32 %v8414, %v8447
        %8449 = vdwg.mxu0
        %v8450 = vpack.c.bf16 %v5393, %v5391
        %v8451 = vpack.c.bf16 %v5627, %v5625
        %v8452 = vpack.c.bf16 %v5861, %v5859
        %s8453 = scalar_lea.vmem [#allocation7], 1920
        %v8454 = vld [vmem:[%s8453] sm:$0xff]
        %v8455 = vld [vmem:[%s8453 + $0x8] sm:$0xff]
        %v8456 = vld [vmem:[%s8453 + $0x10] sm:$0xf]
        %v8457 = vld [vmem:[%s8453 + $0x14] sm:$0xff]
        %v8458 = vld [vmem:[%s8453 + $0x1c] sm:$0xff]
        %v8459 = vld [vmem:[%s8453 + $0x24] sm:$0xf]
        %v8460 = vld [vmem:[%s8453 + $0x28] sm:$0xff]
        %v8461 = vld [vmem:[%s8453 + $0x30] sm:$0xff]
        %v8462 = vld [vmem:[%s8453 + $0x38] sm:$0xf]
        %v8463 = vld [vmem:[%s8453 + $0x3c] sm:$0xff]
        %v8464 = vld [vmem:[%s8453 + $0x44] sm:$0xff]
        %v8465 = vld [vmem:[%s8453 + $0x4c] sm:$0xf]
        %v8466 = vld [vmem:[%s8453 + $0x50] sm:$0xff]
        %v8467 = vld [vmem:[%s8453 + $0x58] sm:$0xff]
        %v8468 = vld [vmem:[%s8453 + $0x60] sm:$0xf]
        %v8469 = vld [vmem:[%s8453 + $0x64] sm:$0xff]
        %v8470 = vld [vmem:[%s8453 + $0x6c] sm:$0xff]
        %v8471 = vld [vmem:[%s8453 + $0x74] sm:$0xf]
        %v8472 = vld [vmem:[%s8453 + $0x78] sm:$0xff]
        %v8473 = vld [vmem:[%s8453 + $0x80] sm:$0xff]
        %v8474 = vld [vmem:[%s8453 + $0x88] sm:$0xf]
        %v8475 = vld [vmem:[%s8453 + $0x8c] sm:$0xff]
        %v8476 = vld [vmem:[%s8453 + $0x94] sm:$0xff]
        %v8477 = vld [vmem:[%s8453 + $0x9c] sm:$0xf]
        %v8478 = vld [vmem:[%s8453 + $0xa0] sm:$0xff]
        %v8479 = vld [vmem:[%s8453 + $0xa8] sm:$0xff]
        %v8480 = vld [vmem:[%s8453 + $0xb0] sm:$0xf]
        %v8481 = vld [vmem:[%s8453 + $0xb4] sm:$0xff]
        %v8482 = vld [vmem:[%s8453 + $0xbc] sm:$0xff]
        %v8483 = vld [vmem:[%s8453 + $0xc4] sm:$0xf]
        %v8484 = vld [vmem:[%s8453 + $0xc8] sm:$0xff]
        %v8485 = vld [vmem:[%s8453 + $0xd0] sm:$0xff]
        %v8486 = vld [vmem:[%s8453 + $0xd8] sm:$0xf]
        %v8487 = vld [vmem:[%s8453 + $0xdc] sm:$0xff]
        %v8488 = vld [vmem:[%s8453 + $0xe4] sm:$0xff]
        %v8489 = vld [vmem:[%s8453 + $0xec] sm:$0xf]
        %v8490 = vld [vmem:[%s8453 + $0xf0] sm:$0xff]
        %v8491 = vld [vmem:[%s8453 + $0xf8] sm:$0xff]
        %v8492 = vld [vmem:[%s8453 + $0x100] sm:$0xf]
        %v8493 = vld [vmem:[%s8453 + $0x104] sm:$0xff]
        %v8494 = vld [vmem:[%s8453 + $0x10c] sm:$0xff]
        %v8495 = vld [vmem:[%s8453 + $0x114] sm:$0xf]
        %v8496 = vld [vmem:[%s8453 + $0x118] sm:$0xff]
        %v8497 = vld [vmem:[%s8453 + $0x120] sm:$0xff]
        %v8498 = vld [vmem:[%s8453 + $0x128] sm:$0xf]
        %v8499 = vld [vmem:[%s8453 + $0x12c] sm:$0xff]
        %v8500 = vld [vmem:[%s8453 + $0x134] sm:$0xff]
        %v8501 = vld [vmem:[%s8453 + $0x13c] sm:$0xf]
        %v8502 = vld [vmem:[%s8453 + $0x140] sm:$0xff]
        %v8503 = vld [vmem:[%s8453 + $0x148] sm:$0xff]
        %v8504 = vld [vmem:[%s8453 + $0x150] sm:$0xf]
        %v8505 = vld [vmem:[%s8453 + $0x154] sm:$0xff]
        %v8506 = vld [vmem:[%s8453 + $0x15c] sm:$0xff]
        %v8507 = vld [vmem:[%s8453 + $0x164] sm:$0xf]
        %v8508 = vld [vmem:[%s8453 + $0x168] sm:$0xff]
        %v8509 = vld [vmem:[%s8453 + $0x170] sm:$0xff]
        %v8510 = vld [vmem:[%s8453 + $0x178] sm:$0xf]
        %v8511 = vld [vmem:[%s8453 + $0x17c] sm:$0xff]
        %v8512 = vld [vmem:[%s8453 + $0x184] sm:$0xff]
        %v8513 = vld [vmem:[%s8453 + $0x18c] sm:$0xf]
        %v8514 = vld [vmem:[%s8453 + $0x190] sm:$0xff]
        %v8515 = vld [vmem:[%s8453 + $0x198] sm:$0xff]
        %v8516 = vld [vmem:[%s8453 + $0x1a0] sm:$0xf]
        %v8517 = vld [vmem:[%s8453 + $0x1a4] sm:$0xff]
        %v8518 = vld [vmem:[%s8453 + $0x1ac] sm:$0xff]
        %v8519 = vld [vmem:[%s8453 + $0x1b4] sm:$0xf]
        %v8520 = vld [vmem:[%s8453 + $0x1b8] sm:$0xff]
        %v8521 = vld [vmem:[%s8453 + $0x1c0] sm:$0xff]
        %v8522 = vld [vmem:[%s8453 + $0x1c8] sm:$0xf]
        %v8523 = vld [vmem:[%s8453 + $0x1cc] sm:$0xff]
        %v8524 = vld [vmem:[%s8453 + $0x1d4] sm:$0xff]
        %v8525 = vld [vmem:[%s8453 + $0x1dc] sm:$0xf]
        %v8526 = vld [vmem:[%s8453 + $0x1e0] sm:$0xff]
        %v8527 = vld [vmem:[%s8453 + $0x1e8] sm:$0xff]
        %v8528 = vld [vmem:[%s8453 + $0x1f0] sm:$0xf]
        %v8529 = vld [vmem:[%s8453 + $0x1f4] sm:$0xff]
        %v8530 = vld [vmem:[%s8453 + $0x1fc] sm:$0xff]
        %v8531 = vld [vmem:[%s8453 + $0x204] sm:$0xf]
        %v8532 = vld [vmem:[%s8453 + $0x208] sm:$0xff]
        %v8533 = vld [vmem:[%s8453 + $0x210] sm:$0xff]
        %v8534 = vld [vmem:[%s8453 + $0x218] sm:$0xf]
        %v8535 = vld [vmem:[%s8453 + $0x21c] sm:$0xff]
        %v8536 = vld [vmem:[%s8453 + $0x224] sm:$0xff]
        %v8537 = vld [vmem:[%s8453 + $0x22c] sm:$0xf]
        %v8538 = vld [vmem:[%s8453 + $0x230] sm:$0xff]
        %v8539 = vld [vmem:[%s8453 + $0x238] sm:$0xff]
        %v8540 = vld [vmem:[%s8453 + $0x240] sm:$0xf]
        %v8541 = vld [vmem:[%s8453 + $0x244] sm:$0xff]
        %v8542 = vld [vmem:[%s8453 + $0x24c] sm:$0xff]
        %v8543 = vld [vmem:[%s8453 + $0x254] sm:$0xf]
        %v8544 = vld [vmem:[%s8453 + $0x258] sm:$0xff]
        %v8545 = vld [vmem:[%s8453 + $0x260] sm:$0xff]
        %v8546 = vld [vmem:[%s8453 + $0x268] sm:$0xf]
        %v8547 = vld [vmem:[%s8453 + $0x26c] sm:$0xff]
        %v8548 = vld [vmem:[%s8453 + $0x274] sm:$0xff]
        %v8549 = vld [vmem:[%s8453 + $0x27c] sm:$0xf]
        %v8550 = vld [vmem:[%s8453 + $0x280] sm:$0xff]
        %v8551 = vld [vmem:[%s8453 + $0x288] sm:$0xff]
        %v8552 = vld [vmem:[%s8453 + $0x290] sm:$0xf]
        %v8553 = vld [vmem:[%s8453 + $0x294] sm:$0xff]
        %v8554 = vld [vmem:[%s8453 + $0x29c] sm:$0xff]
        %v8555 = vld [vmem:[%s8453 + $0x2a4] sm:$0xf]
        %v8556 = vld [vmem:[%s8453 + $0x2a8] sm:$0xff]
        %v8557 = vld [vmem:[%s8453 + $0x2b0] sm:$0xff]
        %v8558 = vld [vmem:[%s8453 + $0x2b8] sm:$0xf]
        %v8559 = vld [vmem:[%s8453 + $0x2bc] sm:$0xff]
        %v8560 = vld [vmem:[%s8453 + $0x2c4] sm:$0xff]
        %v8561 = vld [vmem:[%s8453 + $0x2cc] sm:$0xf]
        %v8562 = vld [vmem:[%s8453 + $0x2d0] sm:$0xff]
        %v8563 = vld [vmem:[%s8453 + $0x2d8] sm:$0xff]
        %v8564 = vld [vmem:[%s8453 + $0x2e0] sm:$0xf]
        %v8565 = vld [vmem:[%s8453 + $0x2e4] sm:$0xff]
        %v8566 = vld [vmem:[%s8453 + $0x2ec] sm:$0xff]
        %v8567 = vld [vmem:[%s8453 + $0x2f4] sm:$0xf]
        %v8568 = vld [vmem:[%s8453 + $0x2f8] sm:$0xff]
        %v8569 = vld [vmem:[%s8453 + $0x300] sm:$0xff]
        %v8570 = vld [vmem:[%s8453 + $0x308] sm:$0xf]
        %v8571 = vld [vmem:[%s8453 + $0x30c] sm:$0xff]
        %v8572 = vld [vmem:[%s8453 + $0x314] sm:$0xff]
        %v8573 = vld [vmem:[%s8453 + $0x31c] sm:$0xf]
        %v8574 = vld [vmem:[%s8453 + $0x320] sm:$0xff]
        %v8575 = vld [vmem:[%s8453 + $0x328] sm:$0xff]
        %v8576 = vld [vmem:[%s8453 + $0x330] sm:$0xf]
        %v8577 = vld [vmem:[%s8453 + $0x334] sm:$0xff]
        %v8578 = vld [vmem:[%s8453 + $0x33c] sm:$0xff]
        %v8579 = vld [vmem:[%s8453 + $0x344] sm:$0xf]
        %v8580 = vld [vmem:[%s8453 + $0x348] sm:$0xff]
        %v8581 = vld [vmem:[%s8453 + $0x350] sm:$0xff]
        %v8582 = vld [vmem:[%s8453 + $0x358] sm:$0xf]
        %v8583 = vld [vmem:[%s8453 + $0x35c] sm:$0xff]
        %v8584 = vld [vmem:[%s8453 + $0x364] sm:$0xff]
        %v8585 = vld [vmem:[%s8453 + $0x36c] sm:$0xf]
        %v8586 = vld [vmem:[%s8453 + $0x370] sm:$0xff]
        %v8587 = vld [vmem:[%s8453 + $0x378] sm:$0xff]
        %v8588 = vld [vmem:[%s8453 + $0x380] sm:$0xf]
        %v8589 = vld [vmem:[%s8453 + $0x384] sm:$0xff]
        %v8590 = vld [vmem:[%s8453 + $0x38c] sm:$0xff]
        %v8591 = vld [vmem:[%s8453 + $0x394] sm:$0xf]
        %v8592 = vld [vmem:[%s8453 + $0x398] sm:$0xff]
        %v8593 = vld [vmem:[%s8453 + $0x3a0] sm:$0xff]
        %v8594 = vld [vmem:[%s8453 + $0x3a8] sm:$0xf]
        %v8595 = vld [vmem:[%s8453 + $0x3ac] sm:$0xff]
        %v8596 = vld [vmem:[%s8453 + $0x3b4] sm:$0xff]
        %v8597 = vld [vmem:[%s8453 + $0x3bc] sm:$0xf]
        %v8742 = vunpack.c.l.b16 %v8454
        %v8743 = vunpack.c.h.b16 %v8454
        %v8744 = vunpack.c.l.b16 %v8455
        %v8745 = vunpack.c.h.b16 %v8455
        %v8746 = vunpack.c.l.b16 %v8456
        %v8747 = vunpack.c.l.b16 %v8457
        %v8748 = vunpack.c.h.b16 %v8457
        %v8749 = vunpack.c.l.b16 %v8458
        %v8750 = vunpack.c.h.b16 %v8458
        %v8751 = vunpack.c.l.b16 %v8459
        %v8752 = vunpack.c.l.b16 %v8460
        %v8753 = vunpack.c.h.b16 %v8460
        %v8754 = vunpack.c.l.b16 %v8461
        %v8755 = vunpack.c.h.b16 %v8461
        %v8756 = vunpack.c.l.b16 %v8462
        %v8757 = vunpack.c.l.b16 %v8463
        %v8758 = vunpack.c.h.b16 %v8463
        %v8759 = vunpack.c.l.b16 %v8464
        %v8760 = vunpack.c.h.b16 %v8464
        %v8761 = vunpack.c.l.b16 %v8465
        %v8762 = vunpack.c.l.b16 %v8466
        %v8763 = vunpack.c.h.b16 %v8466
        %v8764 = vunpack.c.l.b16 %v8467
        %v8765 = vunpack.c.h.b16 %v8467
        %v8766 = vunpack.c.l.b16 %v8468
        %v8767 = vunpack.c.l.b16 %v8469
        %v8768 = vunpack.c.h.b16 %v8469
        %v8769 = vunpack.c.l.b16 %v8470
        %v8770 = vunpack.c.h.b16 %v8470
        %v8771 = vunpack.c.l.b16 %v8471
        %v8772 = vunpack.c.l.b16 %v8472
        %v8773 = vunpack.c.h.b16 %v8472
        %v8774 = vunpack.c.l.b16 %v8473
        %v8775 = vunpack.c.h.b16 %v8473
        %v8776 = vunpack.c.l.b16 %v8474
        %v8777 = vunpack.c.l.b16 %v8475
        %v8778 = vunpack.c.h.b16 %v8475
        %v8779 = vunpack.c.l.b16 %v8476
        %v8780 = vunpack.c.h.b16 %v8476
        %v8781 = vunpack.c.l.b16 %v8477
        %v8782 = vunpack.c.l.b16 %v8478
        %v8783 = vunpack.c.h.b16 %v8478
        %v8784 = vunpack.c.l.b16 %v8479
        %v8785 = vunpack.c.h.b16 %v8479
        %v8786 = vunpack.c.l.b16 %v8480
        %v8787 = vunpack.c.l.b16 %v8481
        %v8788 = vunpack.c.h.b16 %v8481
        %v8789 = vunpack.c.l.b16 %v8482
        %v8790 = vunpack.c.h.b16 %v8482
        %v8791 = vunpack.c.l.b16 %v8483
        %v8792 = vunpack.c.l.b16 %v8484
        %v8793 = vunpack.c.h.b16 %v8484
        %v8794 = vunpack.c.l.b16 %v8485
        %v8795 = vunpack.c.h.b16 %v8485
        %v8796 = vunpack.c.l.b16 %v8486
        %v8797 = vunpack.c.l.b16 %v8487
        %v8798 = vunpack.c.h.b16 %v8487
        %v8799 = vunpack.c.l.b16 %v8488
        %v8800 = vunpack.c.h.b16 %v8488
        %v8801 = vunpack.c.l.b16 %v8489
        %v8802 = vunpack.c.l.b16 %v8490
        %v8803 = vunpack.c.h.b16 %v8490
        %v8804 = vunpack.c.l.b16 %v8491
        %v8805 = vunpack.c.h.b16 %v8491
        %v8806 = vunpack.c.l.b16 %v8492
        %v8807 = vunpack.c.l.b16 %v8493
        %v8808 = vunpack.c.h.b16 %v8493
        %v8809 = vunpack.c.l.b16 %v8494
        %v8810 = vunpack.c.h.b16 %v8494
        %v8811 = vunpack.c.l.b16 %v8495
        %v8812 = vunpack.c.l.b16 %v8496
        %v8813 = vunpack.c.h.b16 %v8496
        %v8814 = vunpack.c.l.b16 %v8497
        %v8815 = vunpack.c.h.b16 %v8497
        %v8816 = vunpack.c.l.b16 %v8498
        %v8817 = vunpack.c.l.b16 %v8499
        %v8818 = vunpack.c.h.b16 %v8499
        %v8819 = vunpack.c.l.b16 %v8500
        %v8820 = vunpack.c.h.b16 %v8500
        %v8821 = vunpack.c.l.b16 %v8501
        %v8822 = vunpack.c.l.b16 %v8502
        %v8823 = vunpack.c.h.b16 %v8502
        %v8824 = vunpack.c.l.b16 %v8503
        %v8825 = vunpack.c.h.b16 %v8503
        %v8826 = vunpack.c.l.b16 %v8504
        %v8827 = vunpack.c.l.b16 %v8505
        %v8828 = vunpack.c.h.b16 %v8505
        %v8829 = vunpack.c.l.b16 %v8506
        %v8830 = vunpack.c.h.b16 %v8506
        %v8831 = vunpack.c.l.b16 %v8507
        %v8832 = vunpack.c.l.b16 %v8508
        %v8833 = vunpack.c.h.b16 %v8508
        %v8834 = vunpack.c.l.b16 %v8509
        %v8835 = vunpack.c.h.b16 %v8509
        %v8836 = vunpack.c.l.b16 %v8510
        %v8837 = vunpack.c.l.b16 %v8511
        %v8838 = vunpack.c.h.b16 %v8511
        %v8839 = vunpack.c.l.b16 %v8512
        %v8840 = vunpack.c.h.b16 %v8512
        %v8841 = vunpack.c.l.b16 %v8513
        %v8842 = vunpack.c.l.b16 %v8514
        %v8843 = vunpack.c.h.b16 %v8514
        %v8844 = vunpack.c.l.b16 %v8515
        %v8845 = vunpack.c.h.b16 %v8515
        %v8846 = vunpack.c.l.b16 %v8516
        %v8847 = vunpack.c.l.b16 %v8517
        %v8848 = vunpack.c.h.b16 %v8517
        %v8849 = vunpack.c.l.b16 %v8518
        %v8850 = vunpack.c.h.b16 %v8518
        %v8851 = vunpack.c.l.b16 %v8519
        %v8852 = vunpack.c.l.b16 %v8520
        %v8853 = vunpack.c.h.b16 %v8520
        %v8854 = vunpack.c.l.b16 %v8521
        %v8855 = vunpack.c.h.b16 %v8521
        %v8856 = vunpack.c.l.b16 %v8522
        %v8857 = vunpack.c.l.b16 %v8523
        %v8858 = vunpack.c.h.b16 %v8523
        %v8859 = vunpack.c.l.b16 %v8524
        %v8860 = vunpack.c.h.b16 %v8524
        %v8861 = vunpack.c.l.b16 %v8525
        %v8862 = vunpack.c.l.b16 %v8526
        %v8863 = vunpack.c.h.b16 %v8526
        %v8864 = vunpack.c.l.b16 %v8527
        %v8865 = vunpack.c.h.b16 %v8527
        %v8866 = vunpack.c.l.b16 %v8528
        %v8867 = vunpack.c.l.b16 %v8529
        %v8868 = vunpack.c.h.b16 %v8529
        %v8869 = vunpack.c.l.b16 %v8530
        %v8870 = vunpack.c.h.b16 %v8530
        %v8871 = vunpack.c.l.b16 %v8531
        %v8872 = vunpack.c.l.b16 %v8532
        %v8873 = vunpack.c.h.b16 %v8532
        %v8874 = vunpack.c.l.b16 %v8533
        %v8875 = vunpack.c.h.b16 %v8533
        %v8876 = vunpack.c.l.b16 %v8534
        %v8877 = vunpack.c.l.b16 %v8535
        %v8878 = vunpack.c.h.b16 %v8535
        %v8879 = vunpack.c.l.b16 %v8536
        %v8880 = vunpack.c.h.b16 %v8536
        %v8881 = vunpack.c.l.b16 %v8537
        %v8882 = vunpack.c.l.b16 %v8538
        %v8883 = vunpack.c.h.b16 %v8538
        %v8884 = vunpack.c.l.b16 %v8539
        %v8885 = vunpack.c.h.b16 %v8539
        %v8886 = vunpack.c.l.b16 %v8540
        %v8887 = vunpack.c.l.b16 %v8541
        %v8888 = vunpack.c.h.b16 %v8541
        %v8889 = vunpack.c.l.b16 %v8542
        %v8890 = vunpack.c.h.b16 %v8542
        %v8891 = vunpack.c.l.b16 %v8543
        %v8892 = vunpack.c.l.b16 %v8544
        %v8893 = vunpack.c.h.b16 %v8544
        %v8894 = vunpack.c.l.b16 %v8545
        %v8895 = vunpack.c.h.b16 %v8545
        %v8896 = vunpack.c.l.b16 %v8546
        %v8897 = vunpack.c.l.b16 %v8547
        %v8898 = vunpack.c.h.b16 %v8547
        %v8899 = vunpack.c.l.b16 %v8548
        %v8900 = vunpack.c.h.b16 %v8548
        %v8901 = vunpack.c.l.b16 %v8549
        %v8902 = vunpack.c.l.b16 %v8550
        %v8903 = vunpack.c.h.b16 %v8550
        %v8904 = vunpack.c.l.b16 %v8551
        %v8905 = vunpack.c.h.b16 %v8551
        %v8906 = vunpack.c.l.b16 %v8552
        %v8907 = vunpack.c.l.b16 %v8553
        %v8908 = vunpack.c.h.b16 %v8553
        %v8909 = vunpack.c.l.b16 %v8554
        %v8910 = vunpack.c.h.b16 %v8554
        %v8911 = vunpack.c.l.b16 %v8555
        %v8912 = vunpack.c.l.b16 %v8556
        %v8913 = vunpack.c.h.b16 %v8556
        %v8914 = vunpack.c.l.b16 %v8557
        %v8915 = vunpack.c.h.b16 %v8557
        %v8916 = vunpack.c.l.b16 %v8558
        %v8917 = vunpack.c.l.b16 %v8559
        %v8918 = vunpack.c.h.b16 %v8559
        %v8919 = vunpack.c.l.b16 %v8560
        %v8920 = vunpack.c.h.b16 %v8560
        %v8921 = vunpack.c.l.b16 %v8561
        %v8922 = vunpack.c.l.b16 %v8562
        %v8923 = vunpack.c.h.b16 %v8562
        %v8924 = vunpack.c.l.b16 %v8563
        %v8925 = vunpack.c.h.b16 %v8563
        %v8926 = vunpack.c.l.b16 %v8564
        %v8927 = vunpack.c.l.b16 %v8565
        %v8928 = vunpack.c.h.b16 %v8565
        %v8929 = vunpack.c.l.b16 %v8566
        %v8930 = vunpack.c.h.b16 %v8566
        %v8931 = vunpack.c.l.b16 %v8567
        %v8932 = vunpack.c.l.b16 %v8568
        %v8933 = vunpack.c.h.b16 %v8568
        %v8934 = vunpack.c.l.b16 %v8569
        %v8935 = vunpack.c.h.b16 %v8569
        %v8936 = vunpack.c.l.b16 %v8570
        %v8937 = vunpack.c.l.b16 %v8571
        %v8938 = vunpack.c.h.b16 %v8571
        %v8939 = vunpack.c.l.b16 %v8572
        %v8940 = vunpack.c.h.b16 %v8572
        %v8941 = vunpack.c.l.b16 %v8573
        %v8942 = vunpack.c.l.b16 %v8574
        %v8943 = vunpack.c.h.b16 %v8574
        %v8944 = vunpack.c.l.b16 %v8575
        %v8945 = vunpack.c.h.b16 %v8575
        %v8946 = vunpack.c.l.b16 %v8576
        %v8947 = vunpack.c.l.b16 %v8577
        %v8948 = vunpack.c.h.b16 %v8577
        %v8949 = vunpack.c.l.b16 %v8578
        %v8950 = vunpack.c.h.b16 %v8578
        %v8951 = vunpack.c.l.b16 %v8579
        %v8952 = vunpack.c.l.b16 %v8580
        %v8953 = vunpack.c.h.b16 %v8580
        %v8954 = vunpack.c.l.b16 %v8581
        %v8955 = vunpack.c.h.b16 %v8581
        %v8956 = vunpack.c.l.b16 %v8582
        %v8957 = vunpack.c.l.b16 %v8583
        %v8958 = vunpack.c.h.b16 %v8583
        %v8959 = vunpack.c.l.b16 %v8584
        %v8960 = vunpack.c.h.b16 %v8584
        %v8961 = vunpack.c.l.b16 %v8585
        %v8962 = vunpack.c.l.b16 %v8586
        %v8963 = vunpack.c.h.b16 %v8586
        %v8964 = vunpack.c.l.b16 %v8587
        %v8965 = vunpack.c.h.b16 %v8587
        %v8966 = vunpack.c.l.b16 %v8588
        %v8967 = vunpack.c.l.b16 %v8589
        %v8968 = vunpack.c.h.b16 %v8589
        %v8969 = vunpack.c.l.b16 %v8590
        %v8970 = vunpack.c.h.b16 %v8590
        %v8971 = vunpack.c.l.b16 %v8591
        %v8972 = vunpack.c.l.b16 %v8592
        %v8973 = vunpack.c.h.b16 %v8592
        %v8974 = vunpack.c.l.b16 %v8593
        %v8975 = vunpack.c.h.b16 %v8593
        %v8976 = vunpack.c.l.b16 %v8594
        %v8977 = vunpack.c.l.b16 %v8595
        %v8978 = vunpack.c.h.b16 %v8595
        %v8979 = vunpack.c.l.b16 %v8596
        %v8980 = vunpack.c.h.b16 %v8596
        %v8981 = vunpack.c.l.b16 %v8597
        %v8982 = vpack.c.b16 %v8747, %v8742
        %v8983 = vpack.c.b16 %v8748, %v8743
        %v8984 = vpack.c.b16 %v8749, %v8744
        %v8985 = vpack.c.b16 %v8750, %v8745
        %v8986 = vpack.c.b16 %v8751, %v8746
        %v8987 = vpack.c.b16 %v8757, %v8752
        %v8988 = vpack.c.b16 %v8758, %v8753
        %v8989 = vpack.c.b16 %v8759, %v8754
        %v8990 = vpack.c.b16 %v8760, %v8755
        %v8991 = vpack.c.b16 %v8761, %v8756
        %v8992 = vpack.c.b16 %v8767, %v8762
        %v8993 = vpack.c.b16 %v8768, %v8763
        %v8994 = vpack.c.b16 %v8769, %v8764
        %v8995 = vpack.c.b16 %v8770, %v8765
        %v8996 = vpack.c.b16 %v8771, %v8766
        %v8997 = vpack.c.b16 %v8777, %v8772
        %v8998 = vpack.c.b16 %v8778, %v8773
        %v8999 = vpack.c.b16 %v8779, %v8774
        %v9000 = vpack.c.b16 %v8780, %v8775
        %v9001 = vpack.c.b16 %v8781, %v8776
        %v9002 = vpack.c.b16 %v8787, %v8782
        %v9003 = vpack.c.b16 %v8788, %v8783
        %v9004 = vpack.c.b16 %v8789, %v8784
        %v9005 = vpack.c.b16 %v8790, %v8785
        %v9006 = vpack.c.b16 %v8791, %v8786
        %v9007 = vpack.c.b16 %v8797, %v8792
        %v9008 = vpack.c.b16 %v8798, %v8793
        %v9009 = vpack.c.b16 %v8799, %v8794
        %v9010 = vpack.c.b16 %v8800, %v8795
        %v9011 = vpack.c.b16 %v8801, %v8796
        %v9012 = vpack.c.b16 %v8807, %v8802
        %v9013 = vpack.c.b16 %v8808, %v8803
        %v9014 = vpack.c.b16 %v8809, %v8804
        %v9015 = vpack.c.b16 %v8810, %v8805
        %v9016 = vpack.c.b16 %v8811, %v8806
        %v9017 = vpack.c.b16 %v8817, %v8812
        %v9018 = vpack.c.b16 %v8818, %v8813
        %v9019 = vpack.c.b16 %v8819, %v8814
        %v9020 = vpack.c.b16 %v8820, %v8815
        %v9021 = vpack.c.b16 %v8821, %v8816
        %v9022 = vpack.c.b16 %v8827, %v8822
        %v9023 = vpack.c.b16 %v8828, %v8823
        %v9024 = vpack.c.b16 %v8829, %v8824
        %v9025 = vpack.c.b16 %v8830, %v8825
        %v9026 = vpack.c.b16 %v8831, %v8826
        %v9027 = vpack.c.b16 %v8837, %v8832
        %v9028 = vpack.c.b16 %v8838, %v8833
        %v9029 = vpack.c.b16 %v8839, %v8834
        %v9030 = vpack.c.b16 %v8840, %v8835
        %v9031 = vpack.c.b16 %v8841, %v8836
        %v9032 = vpack.c.b16 %v8847, %v8842
        %v9033 = vpack.c.b16 %v8848, %v8843
        %v9034 = vpack.c.b16 %v8849, %v8844
        %v9035 = vpack.c.b16 %v8850, %v8845
        %v9036 = vpack.c.b16 %v8851, %v8846
        %v9037 = vpack.c.b16 %v8857, %v8852
        %v9038 = vpack.c.b16 %v8858, %v8853
        %v9039 = vpack.c.b16 %v8859, %v8854
        %v9040 = vpack.c.b16 %v8860, %v8855
        %v9041 = vpack.c.b16 %v8861, %v8856
        %v9042 = vpack.c.b16 %v8867, %v8862
        %v9043 = vpack.c.b16 %v8868, %v8863
        %v9044 = vpack.c.b16 %v8869, %v8864
        %v9045 = vpack.c.b16 %v8870, %v8865
        %v9046 = vpack.c.b16 %v8871, %v8866
        %v9047 = vpack.c.b16 %v8877, %v8872
        %v9048 = vpack.c.b16 %v8878, %v8873
        %v9049 = vpack.c.b16 %v8879, %v8874
        %v9050 = vpack.c.b16 %v8880, %v8875
        %v9051 = vpack.c.b16 %v8881, %v8876
        %v9052 = vpack.c.b16 %v8887, %v8882
        %v9053 = vpack.c.b16 %v8888, %v8883
        %v9054 = vpack.c.b16 %v8889, %v8884
        %v9055 = vpack.c.b16 %v8890, %v8885
        %v9056 = vpack.c.b16 %v8891, %v8886
        %v9057 = vpack.c.b16 %v8897, %v8892
        %v9058 = vpack.c.b16 %v8898, %v8893
        %v9059 = vpack.c.b16 %v8899, %v8894
        %v9060 = vpack.c.b16 %v8900, %v8895
        %v9061 = vpack.c.b16 %v8901, %v8896
        %v9062 = vpack.c.b16 %v8907, %v8902
        %v9063 = vpack.c.b16 %v8908, %v8903
        %v9064 = vpack.c.b16 %v8909, %v8904
        %v9065 = vpack.c.b16 %v8910, %v8905
        %v9066 = vpack.c.b16 %v8911, %v8906
        %v9067 = vpack.c.b16 %v8917, %v8912
        %v9068 = vpack.c.b16 %v8918, %v8913
        %v9069 = vpack.c.b16 %v8919, %v8914
        %v9070 = vpack.c.b16 %v8920, %v8915
        %v9071 = vpack.c.b16 %v8921, %v8916
        %v9072 = vpack.c.b16 %v8927, %v8922
        %v9073 = vpack.c.b16 %v8928, %v8923
        %v9074 = vpack.c.b16 %v8929, %v8924
        %v9075 = vpack.c.b16 %v8930, %v8925
        %v9076 = vpack.c.b16 %v8931, %v8926
        %v9077 = vpack.c.b16 %v8937, %v8932
        %v9078 = vpack.c.b16 %v8938, %v8933
        %v9079 = vpack.c.b16 %v8939, %v8934
        %v9080 = vpack.c.b16 %v8940, %v8935
        %v9081 = vpack.c.b16 %v8941, %v8936
        %v9082 = vpack.c.b16 %v8947, %v8942
        %v9083 = vpack.c.b16 %v8948, %v8943
        %v9084 = vpack.c.b16 %v8949, %v8944
        %v9085 = vpack.c.b16 %v8950, %v8945
        %v9086 = vpack.c.b16 %v8951, %v8946
        %v9087 = vpack.c.b16 %v8957, %v8952
        %v9088 = vpack.c.b16 %v8958, %v8953
        %v9089 = vpack.c.b16 %v8959, %v8954
        %v9090 = vpack.c.b16 %v8960, %v8955
        %v9091 = vpack.c.b16 %v8961, %v8956
        %v9092 = vpack.c.b16 %v8967, %v8962
        %v9093 = vpack.c.b16 %v8968, %v8963
        %v9094 = vpack.c.b16 %v8969, %v8964
        %v9095 = vpack.c.b16 %v8970, %v8965
        %v9096 = vpack.c.b16 %v8971, %v8966
        %v9097 = vpack.c.b16 %v8977, %v8972
        %v9098 = vpack.c.b16 %v8978, %v8973
        %v9099 = vpack.c.b16 %v8979, %v8974
        %v9100 = vpack.c.b16 %v8980, %v8975
        %v9101 = vpack.c.b16 %v8981, %v8976
        %9222 = vmatpush.bf16.msra.mxu0 %v9017
        %9223 = vmatpush.bf16.msra.mxu0 %v9012
        %9224 = vmatpush.bf16.msra.mxu0 %v9007
        %9225 = vmatpush.bf16.msra.mxu0 %v9002
        %9226 = vmatpush.bf16.msra.mxu0 %v8997
        %9227 = vmatpush.bf16.msra.mxu0 %v8992
        %9228 = vmatpush.bf16.msra.mxu0 %v8987
        %9229 = vmatpush.bf16.msra.mxu0 %v8982
        %9230 = vmatmul.bf16.gmra.mxu0 %v5866
        %v9231 = vpop.f32.mrf.mxu0
        %v9232 = vadd.f32 0.0, %v9231
        %v9233 = vpop.f32.mrf.mxu0
        %v9234 = vadd.f32 0.0, %v9233
        %9235 = vmatmul.bf16.gmra.mxu0 %v5869
        %v9236 = vpop.f32.mrf.mxu0
        %v9237 = vadd.f32 0.0, %v9236
        %v9238 = vpop.f32.mrf.mxu0
        %v9239 = vadd.f32 0.0, %v9238
        %9240 = vmatmul.bf16.gmra.mxu0 %v5872
        %v9241 = vpop.f32.mrf.mxu0
        %v9242 = vadd.f32 0.0, %v9241
        %v9243 = vpop.f32.mrf.mxu0
        %v9244 = vadd.f32 0.0, %v9243
        %9245 = vmatmul.bf16.gmra.mxu0 %v5875
        %v9246 = vpop.f32.mrf.mxu0
        %v9247 = vadd.f32 0.0, %v9246
        %v9248 = vpop.f32.mrf.mxu0
        %v9249 = vadd.f32 0.0, %v9248
        %9250 = vmatmul.bf16.gmra.mxu0 %v8450
        %v9251 = vpop.f32.mrf.mxu0
        %v9252 = vadd.f32 0.0, %v9251
        %v9253 = vpop.f32.mrf.mxu0
        %v9254 = vadd.f32 0.0, %v9253
        %9255 = vdwg.mxu0
        %9256 = vmatpush.bf16.msra.mxu0 %v9057
        %9257 = vmatpush.bf16.msra.mxu0 %v9052
        %9258 = vmatpush.bf16.msra.mxu0 %v9047
        %9259 = vmatpush.bf16.msra.mxu0 %v9042
        %9260 = vmatpush.bf16.msra.mxu0 %v9037
        %9261 = vmatpush.bf16.msra.mxu0 %v9032
        %9262 = vmatpush.bf16.msra.mxu0 %v9027
        %9263 = vmatpush.bf16.msra.mxu0 %v9022
        %9264 = vmatmul.bf16.gmra.mxu0 %v5867
        %v9265 = vpop.f32.mrf.mxu0
        %v9266 = vadd.f32 %v9232, %v9265
        %v9267 = vpop.f32.mrf.mxu0
        %v9268 = vadd.f32 %v9234, %v9267
        %9269 = vmatmul.bf16.gmra.mxu0 %v5870
        %v9270 = vpop.f32.mrf.mxu0
        %v9271 = vadd.f32 %v9237, %v9270
        %v9272 = vpop.f32.mrf.mxu0
        %v9273 = vadd.f32 %v9239, %v9272
        %9274 = vmatmul.bf16.gmra.mxu0 %v5873
        %v9275 = vpop.f32.mrf.mxu0
        %v9276 = vadd.f32 %v9242, %v9275
        %v9277 = vpop.f32.mrf.mxu0
        %v9278 = vadd.f32 %v9244, %v9277
        %9279 = vmatmul.bf16.gmra.mxu0 %v5876
        %v9280 = vpop.f32.mrf.mxu0
        %v9281 = vadd.f32 %v9247, %v9280
        %v9282 = vpop.f32.mrf.mxu0
        %v9283 = vadd.f32 %v9249, %v9282
        %9284 = vmatmul.bf16.gmra.mxu0 %v8451
        %v9285 = vpop.f32.mrf.mxu0
        %v9286 = vadd.f32 %v9252, %v9285
        %v9287 = vpop.f32.mrf.mxu0
        %v9288 = vadd.f32 %v9254, %v9287
        %9289 = vdwg.mxu0
        %9290 = vmatpush.bf16.msra.mxu0 %v9097
        %9291 = vmatpush.bf16.msra.mxu0 %v9092
        %9292 = vmatpush.bf16.msra.mxu0 %v9087
        %9293 = vmatpush.bf16.msra.mxu0 %v9082
        %9294 = vmatpush.bf16.msra.mxu0 %v9077
        %9295 = vmatpush.bf16.msra.mxu0 %v9072
        %9296 = vmatpush.bf16.msra.mxu0 %v9067
        %9297 = vmatpush.bf16.msra.mxu0 %v9062
        %9298 = vmatmul.bf16.gmra.mxu0 %v5868
        %v9299 = vpop.f32.mrf.mxu0
        %v9300 = vadd.f32 %v9266, %v9299
        %v9301 = vpop.f32.mrf.mxu0
        %v9302 = vadd.f32 %v9268, %v9301
        %9303 = vmatmul.bf16.gmra.mxu0 %v5871
        %v9304 = vpop.f32.mrf.mxu0
        %v9305 = vadd.f32 %v9271, %v9304
        %v9306 = vpop.f32.mrf.mxu0
        %v9307 = vadd.f32 %v9273, %v9306
        %9308 = vmatmul.bf16.gmra.mxu0 %v5874
        %v9309 = vpop.f32.mrf.mxu0
        %v9310 = vadd.f32 %v9276, %v9309
        %v9311 = vpop.f32.mrf.mxu0
        %v9312 = vadd.f32 %v9278, %v9311
        %9313 = vmatmul.bf16.gmra.mxu0 %v5877
        %v9314 = vpop.f32.mrf.mxu0
        %v9315 = vadd.f32 %v9281, %v9314
        %v9316 = vpop.f32.mrf.mxu0
        %v9317 = vadd.f32 %v9283, %v9316
        %9318 = vmatmul.bf16.gmra.mxu0 %v8452
        %v9319 = vpop.f32.mrf.mxu0
        %v9320 = vadd.f32 %v9286, %v9319
        %v9321 = vpop.f32.mrf.mxu0
        %v9322 = vadd.f32 %v9288, %v9321
        %9323 = vdwg.mxu0
        %9324 = vmatpush.bf16.msra.mxu0 %v9018
        %9325 = vmatpush.bf16.msra.mxu0 %v9013
        %9326 = vmatpush.bf16.msra.mxu0 %v9008
        %9327 = vmatpush.bf16.msra.mxu0 %v9003
        %9328 = vmatpush.bf16.msra.mxu0 %v8998
        %9329 = vmatpush.bf16.msra.mxu0 %v8993
        %9330 = vmatpush.bf16.msra.mxu0 %v8988
        %9331 = vmatpush.bf16.msra.mxu0 %v8983
        %9332 = vmatmul.bf16.gmra.mxu0 %v5866
        %v9333 = vpop.f32.mrf.mxu0
        %v9334 = vadd.f32 0.0, %v9333
        %v9335 = vpop.f32.mrf.mxu0
        %v9336 = vadd.f32 0.0, %v9335
        %9337 = vmatmul.bf16.gmra.mxu0 %v5869
        %v9338 = vpop.f32.mrf.mxu0
        %v9339 = vadd.f32 0.0, %v9338
        %v9340 = vpop.f32.mrf.mxu0
        %v9341 = vadd.f32 0.0, %v9340
        %9342 = vmatmul.bf16.gmra.mxu0 %v5872
        %v9343 = vpop.f32.mrf.mxu0
        %v9344 = vadd.f32 0.0, %v9343
        %v9345 = vpop.f32.mrf.mxu0
        %v9346 = vadd.f32 0.0, %v9345
        %9347 = vmatmul.bf16.gmra.mxu0 %v5875
        %v9348 = vpop.f32.mrf.mxu0
        %v9349 = vadd.f32 0.0, %v9348
        %v9350 = vpop.f32.mrf.mxu0
        %v9351 = vadd.f32 0.0, %v9350
        %9352 = vmatmul.bf16.gmra.mxu0 %v8450
        %v9353 = vpop.f32.mrf.mxu0
        %v9354 = vadd.f32 0.0, %v9353
        %v9355 = vpop.f32.mrf.mxu0
        %v9356 = vadd.f32 0.0, %v9355
        %9357 = vdwg.mxu0
        %9358 = vmatpush.bf16.msra.mxu0 %v9058
        %9359 = vmatpush.bf16.msra.mxu0 %v9053
        %9360 = vmatpush.bf16.msra.mxu0 %v9048
        %9361 = vmatpush.bf16.msra.mxu0 %v9043
        %9362 = vmatpush.bf16.msra.mxu0 %v9038
        %9363 = vmatpush.bf16.msra.mxu0 %v9033
        %9364 = vmatpush.bf16.msra.mxu0 %v9028
        %9365 = vmatpush.bf16.msra.mxu0 %v9023
        %9366 = vmatmul.bf16.gmra.mxu0 %v5867
        %v9367 = vpop.f32.mrf.mxu0
        %v9368 = vadd.f32 %v9334, %v9367
        %v9369 = vpop.f32.mrf.mxu0
        %v9370 = vadd.f32 %v9336, %v9369
        %9371 = vmatmul.bf16.gmra.mxu0 %v5870
        %v9372 = vpop.f32.mrf.mxu0
        %v9373 = vadd.f32 %v9339, %v9372
        %v9374 = vpop.f32.mrf.mxu0
        %v9375 = vadd.f32 %v9341, %v9374
        %9376 = vmatmul.bf16.gmra.mxu0 %v5873
        %v9377 = vpop.f32.mrf.mxu0
        %v9378 = vadd.f32 %v9344, %v9377
        %v9379 = vpop.f32.mrf.mxu0
        %v9380 = vadd.f32 %v9346, %v9379
        %9381 = vmatmul.bf16.gmra.mxu0 %v5876
        %v9382 = vpop.f32.mrf.mxu0
        %v9383 = vadd.f32 %v9349, %v9382
        %v9384 = vpop.f32.mrf.mxu0
        %v9385 = vadd.f32 %v9351, %v9384
        %9386 = vmatmul.bf16.gmra.mxu0 %v8451
        %v9387 = vpop.f32.mrf.mxu0
        %v9388 = vadd.f32 %v9354, %v9387
        %v9389 = vpop.f32.mrf.mxu0
        %v9390 = vadd.f32 %v9356, %v9389
        %9391 = vdwg.mxu0
        %9392 = vmatpush.bf16.msra.mxu0 %v9098
        %9393 = vmatpush.bf16.msra.mxu0 %v9093
        %9394 = vmatpush.bf16.msra.mxu0 %v9088
        %9395 = vmatpush.bf16.msra.mxu0 %v9083
        %9396 = vmatpush.bf16.msra.mxu0 %v9078
        %9397 = vmatpush.bf16.msra.mxu0 %v9073
        %9398 = vmatpush.bf16.msra.mxu0 %v9068
        %9399 = vmatpush.bf16.msra.mxu0 %v9063
        %9400 = vmatmul.bf16.gmra.mxu0 %v5868
        %v9401 = vpop.f32.mrf.mxu0
        %v9402 = vadd.f32 %v9368, %v9401
        %v9403 = vpop.f32.mrf.mxu0
        %v9404 = vadd.f32 %v9370, %v9403
        %9405 = vmatmul.bf16.gmra.mxu0 %v5871
        %v9406 = vpop.f32.mrf.mxu0
        %v9407 = vadd.f32 %v9373, %v9406
        %v9408 = vpop.f32.mrf.mxu0
        %v9409 = vadd.f32 %v9375, %v9408
        %9410 = vmatmul.bf16.gmra.mxu0 %v5874
        %v9411 = vpop.f32.mrf.mxu0
        %v9412 = vadd.f32 %v9378, %v9411
        %v9413 = vpop.f32.mrf.mxu0
        %v9414 = vadd.f32 %v9380, %v9413
        %9415 = vmatmul.bf16.gmra.mxu0 %v5877
        %v9416 = vpop.f32.mrf.mxu0
        %v9417 = vadd.f32 %v9383, %v9416
        %v9418 = vpop.f32.mrf.mxu0
        %v9419 = vadd.f32 %v9385, %v9418
        %9420 = vmatmul.bf16.gmra.mxu0 %v8452
        %v9421 = vpop.f32.mrf.mxu0
        %v9422 = vadd.f32 %v9388, %v9421
        %v9423 = vpop.f32.mrf.mxu0
        %v9424 = vadd.f32 %v9390, %v9423
        %9425 = vdwg.mxu0
        %9426 = vmatpush.bf16.msra.mxu0 %v9019
        %9427 = vmatpush.bf16.msra.mxu0 %v9014
        %9428 = vmatpush.bf16.msra.mxu0 %v9009
        %9429 = vmatpush.bf16.msra.mxu0 %v9004
        %9430 = vmatpush.bf16.msra.mxu0 %v8999
        %9431 = vmatpush.bf16.msra.mxu0 %v8994
        %9432 = vmatpush.bf16.msra.mxu0 %v8989
        %9433 = vmatpush.bf16.msra.mxu0 %v8984
        %9434 = vmatmul.bf16.gmra.mxu0 %v5866
        %v9435 = vpop.f32.mrf.mxu0
        %v9436 = vadd.f32 0.0, %v9435
        %v9437 = vpop.f32.mrf.mxu0
        %v9438 = vadd.f32 0.0, %v9437
        %9439 = vmatmul.bf16.gmra.mxu0 %v5869
        %v9440 = vpop.f32.mrf.mxu0
        %v9441 = vadd.f32 0.0, %v9440
        %v9442 = vpop.f32.mrf.mxu0
        %v9443 = vadd.f32 0.0, %v9442
        %9444 = vmatmul.bf16.gmra.mxu0 %v5872
        %v9445 = vpop.f32.mrf.mxu0
        %v9446 = vadd.f32 0.0, %v9445
        %v9447 = vpop.f32.mrf.mxu0
        %v9448 = vadd.f32 0.0, %v9447
        %9449 = vmatmul.bf16.gmra.mxu0 %v5875
        %v9450 = vpop.f32.mrf.mxu0
        %v9451 = vadd.f32 0.0, %v9450
        %v9452 = vpop.f32.mrf.mxu0
        %v9453 = vadd.f32 0.0, %v9452
        %9454 = vmatmul.bf16.gmra.mxu0 %v8450
        %v9455 = vpop.f32.mrf.mxu0
        %v9456 = vadd.f32 0.0, %v9455
        %v9457 = vpop.f32.mrf.mxu0
        %v9458 = vadd.f32 0.0, %v9457
        %9459 = vdwg.mxu0
        %9460 = vmatpush.bf16.msra.mxu0 %v9059
        %9461 = vmatpush.bf16.msra.mxu0 %v9054
        %9462 = vmatpush.bf16.msra.mxu0 %v9049
        %9463 = vmatpush.bf16.msra.mxu0 %v9044
        %9464 = vmatpush.bf16.msra.mxu0 %v9039
        %9465 = vmatpush.bf16.msra.mxu0 %v9034
        %9466 = vmatpush.bf16.msra.mxu0 %v9029
        %9467 = vmatpush.bf16.msra.mxu0 %v9024
        %9468 = vmatmul.bf16.gmra.mxu0 %v5867
        %v9469 = vpop.f32.mrf.mxu0
        %v9470 = vadd.f32 %v9436, %v9469
        %v9471 = vpop.f32.mrf.mxu0
        %v9472 = vadd.f32 %v9438, %v9471
        %9473 = vmatmul.bf16.gmra.mxu0 %v5870
        %v9474 = vpop.f32.mrf.mxu0
        %v9475 = vadd.f32 %v9441, %v9474
        %v9476 = vpop.f32.mrf.mxu0
        %v9477 = vadd.f32 %v9443, %v9476
        %9478 = vmatmul.bf16.gmra.mxu0 %v5873
        %v9479 = vpop.f32.mrf.mxu0
        %v9480 = vadd.f32 %v9446, %v9479
        %v9481 = vpop.f32.mrf.mxu0
        %v9482 = vadd.f32 %v9448, %v9481
        %9483 = vmatmul.bf16.gmra.mxu0 %v5876
        %v9484 = vpop.f32.mrf.mxu0
        %v9485 = vadd.f32 %v9451, %v9484
        %v9486 = vpop.f32.mrf.mxu0
        %v9487 = vadd.f32 %v9453, %v9486
        %9488 = vmatmul.bf16.gmra.mxu0 %v8451
        %v9489 = vpop.f32.mrf.mxu0
        %v9490 = vadd.f32 %v9456, %v9489
        %v9491 = vpop.f32.mrf.mxu0
        %v9492 = vadd.f32 %v9458, %v9491
        %9493 = vdwg.mxu0
        %9494 = vmatpush.bf16.msra.mxu0 %v9099
        %9495 = vmatpush.bf16.msra.mxu0 %v9094
        %9496 = vmatpush.bf16.msra.mxu0 %v9089
        %9497 = vmatpush.bf16.msra.mxu0 %v9084
        %9498 = vmatpush.bf16.msra.mxu0 %v9079
        %9499 = vmatpush.bf16.msra.mxu0 %v9074
        %9500 = vmatpush.bf16.msra.mxu0 %v9069
        %9501 = vmatpush.bf16.msra.mxu0 %v9064
        %9502 = vmatmul.bf16.gmra.mxu0 %v5868
        %v9503 = vpop.f32.mrf.mxu0
        %v9504 = vadd.f32 %v9470, %v9503
        %v9505 = vpop.f32.mrf.mxu0
        %v9506 = vadd.f32 %v9472, %v9505
        %9507 = vmatmul.bf16.gmra.mxu0 %v5871
        %v9508 = vpop.f32.mrf.mxu0
        %v9509 = vadd.f32 %v9475, %v9508
        %v9510 = vpop.f32.mrf.mxu0
        %v9511 = vadd.f32 %v9477, %v9510
        %9512 = vmatmul.bf16.gmra.mxu0 %v5874
        %v9513 = vpop.f32.mrf.mxu0
        %v9514 = vadd.f32 %v9480, %v9513
        %v9515 = vpop.f32.mrf.mxu0
        %v9516 = vadd.f32 %v9482, %v9515
        %9517 = vmatmul.bf16.gmra.mxu0 %v5877
        %v9518 = vpop.f32.mrf.mxu0
        %v9519 = vadd.f32 %v9485, %v9518
        %v9520 = vpop.f32.mrf.mxu0
        %v9521 = vadd.f32 %v9487, %v9520
        %9522 = vmatmul.bf16.gmra.mxu0 %v8452
        %v9523 = vpop.f32.mrf.mxu0
        %v9524 = vadd.f32 %v9490, %v9523
        %v9525 = vpop.f32.mrf.mxu0
        %v9526 = vadd.f32 %v9492, %v9525
        %9527 = vdwg.mxu0
        %9528 = vmatpush.bf16.msra.mxu0 %v9020
        %9529 = vmatpush.bf16.msra.mxu0 %v9015
        %9530 = vmatpush.bf16.msra.mxu0 %v9010
        %9531 = vmatpush.bf16.msra.mxu0 %v9005
        %9532 = vmatpush.bf16.msra.mxu0 %v9000
        %9533 = vmatpush.bf16.msra.mxu0 %v8995
        %9534 = vmatpush.bf16.msra.mxu0 %v8990
        %9535 = vmatpush.bf16.msra.mxu0 %v8985
        %9536 = vmatmul.bf16.gmra.mxu0 %v5866
        %v9537 = vpop.f32.mrf.mxu0
        %v9538 = vadd.f32 0.0, %v9537
        %v9539 = vpop.f32.mrf.mxu0
        %v9540 = vadd.f32 0.0, %v9539
        %9541 = vmatmul.bf16.gmra.mxu0 %v5869
        %v9542 = vpop.f32.mrf.mxu0
        %v9543 = vadd.f32 0.0, %v9542
        %v9544 = vpop.f32.mrf.mxu0
        %v9545 = vadd.f32 0.0, %v9544
        %9546 = vmatmul.bf16.gmra.mxu0 %v5872
        %v9547 = vpop.f32.mrf.mxu0
        %v9548 = vadd.f32 0.0, %v9547
        %v9549 = vpop.f32.mrf.mxu0
        %v9550 = vadd.f32 0.0, %v9549
        %9551 = vmatmul.bf16.gmra.mxu0 %v5875
        %v9552 = vpop.f32.mrf.mxu0
        %v9553 = vadd.f32 0.0, %v9552
        %v9554 = vpop.f32.mrf.mxu0
        %v9555 = vadd.f32 0.0, %v9554
        %9556 = vmatmul.bf16.gmra.mxu0 %v8450
        %v9557 = vpop.f32.mrf.mxu0
        %v9558 = vadd.f32 0.0, %v9557
        %v9559 = vpop.f32.mrf.mxu0
        %v9560 = vadd.f32 0.0, %v9559
        %9561 = vdwg.mxu0
        %9562 = vmatpush.bf16.msra.mxu0 %v9060
        %9563 = vmatpush.bf16.msra.mxu0 %v9055
        %9564 = vmatpush.bf16.msra.mxu0 %v9050
        %9565 = vmatpush.bf16.msra.mxu0 %v9045
        %9566 = vmatpush.bf16.msra.mxu0 %v9040
        %9567 = vmatpush.bf16.msra.mxu0 %v9035
        %9568 = vmatpush.bf16.msra.mxu0 %v9030
        %9569 = vmatpush.bf16.msra.mxu0 %v9025
        %9570 = vmatmul.bf16.gmra.mxu0 %v5867
        %v9571 = vpop.f32.mrf.mxu0
        %v9572 = vadd.f32 %v9538, %v9571
        %v9573 = vpop.f32.mrf.mxu0
        %v9574 = vadd.f32 %v9540, %v9573
        %9575 = vmatmul.bf16.gmra.mxu0 %v5870
        %v9576 = vpop.f32.mrf.mxu0
        %v9577 = vadd.f32 %v9543, %v9576
        %v9578 = vpop.f32.mrf.mxu0
        %v9579 = vadd.f32 %v9545, %v9578
        %9580 = vmatmul.bf16.gmra.mxu0 %v5873
        %v9581 = vpop.f32.mrf.mxu0
        %v9582 = vadd.f32 %v9548, %v9581
        %v9583 = vpop.f32.mrf.mxu0
        %v9584 = vadd.f32 %v9550, %v9583
        %9585 = vmatmul.bf16.gmra.mxu0 %v5876
        %v9586 = vpop.f32.mrf.mxu0
        %v9587 = vadd.f32 %v9553, %v9586
        %v9588 = vpop.f32.mrf.mxu0
        %v9589 = vadd.f32 %v9555, %v9588
        %9590 = vmatmul.bf16.gmra.mxu0 %v8451
        %v9591 = vpop.f32.mrf.mxu0
        %v9592 = vadd.f32 %v9558, %v9591
        %v9593 = vpop.f32.mrf.mxu0
        %v9594 = vadd.f32 %v9560, %v9593
        %9595 = vdwg.mxu0
        %9596 = vmatpush.bf16.msra.mxu0 %v9100
        %9597 = vmatpush.bf16.msra.mxu0 %v9095
        %9598 = vmatpush.bf16.msra.mxu0 %v9090
        %9599 = vmatpush.bf16.msra.mxu0 %v9085
        %9600 = vmatpush.bf16.msra.mxu0 %v9080
        %9601 = vmatpush.bf16.msra.mxu0 %v9075
        %9602 = vmatpush.bf16.msra.mxu0 %v9070
        %9603 = vmatpush.bf16.msra.mxu0 %v9065
        %9604 = vmatmul.bf16.gmra.mxu0 %v5868
        %v9605 = vpop.f32.mrf.mxu0
        %v9606 = vadd.f32 %v9572, %v9605
        %v9607 = vpop.f32.mrf.mxu0
        %v9608 = vadd.f32 %v9574, %v9607
        %9609 = vmatmul.bf16.gmra.mxu0 %v5871
        %v9610 = vpop.f32.mrf.mxu0
        %v9611 = vadd.f32 %v9577, %v9610
        %v9612 = vpop.f32.mrf.mxu0
        %v9613 = vadd.f32 %v9579, %v9612
        %9614 = vmatmul.bf16.gmra.mxu0 %v5874
        %v9615 = vpop.f32.mrf.mxu0
        %v9616 = vadd.f32 %v9582, %v9615
        %v9617 = vpop.f32.mrf.mxu0
        %v9618 = vadd.f32 %v9584, %v9617
        %9619 = vmatmul.bf16.gmra.mxu0 %v5877
        %v9620 = vpop.f32.mrf.mxu0
        %v9621 = vadd.f32 %v9587, %v9620
        %v9622 = vpop.f32.mrf.mxu0
        %v9623 = vadd.f32 %v9589, %v9622
        %9624 = vmatmul.bf16.gmra.mxu0 %v8452
        %v9625 = vpop.f32.mrf.mxu0
        %v9626 = vadd.f32 %v9592, %v9625
        %v9627 = vpop.f32.mrf.mxu0
        %v9628 = vadd.f32 %v9594, %v9627
        %9629 = vdwg.mxu0
        %9630 = vmatpush.bf16.msra.mxu0 %v9021
        %9631 = vmatpush.bf16.msra.mxu0 %v9016
        %9632 = vmatpush.bf16.msra.mxu0 %v9011
        %9633 = vmatpush.bf16.msra.mxu0 %v9006
        %9634 = vmatpush.bf16.msra.mxu0 %v9001
        %9635 = vmatpush.bf16.msra.mxu0 %v8996
        %9636 = vmatpush.bf16.msra.mxu0 %v8991
        %9637 = vmatpush.bf16.msra.mxu0 %v8986
        %9638 = vmatmul.bf16.gmra.mxu0 %v5866
        %v9639 = vpop.f32.mrf.mxu0
        %v9640 = vadd.f32 0.0, %v9639
        %v9641 = vpop.f32.mrf.mxu0
        %v9642 = vadd.f32 0.0, %v9641
        %9643 = vmatmul.bf16.gmra.mxu0 %v5869
        %v9644 = vpop.f32.mrf.mxu0
        %v9645 = vadd.f32 0.0, %v9644
        %v9646 = vpop.f32.mrf.mxu0
        %v9647 = vadd.f32 0.0, %v9646
        %9648 = vmatmul.bf16.gmra.mxu0 %v5872
        %v9649 = vpop.f32.mrf.mxu0
        %v9650 = vadd.f32 0.0, %v9649
        %v9651 = vpop.f32.mrf.mxu0
        %v9652 = vadd.f32 0.0, %v9651
        %9653 = vmatmul.bf16.gmra.mxu0 %v5875
        %v9654 = vpop.f32.mrf.mxu0
        %v9655 = vadd.f32 0.0, %v9654
        %v9656 = vpop.f32.mrf.mxu0
        %v9657 = vadd.f32 0.0, %v9656
        %9658 = vmatmul.bf16.gmra.mxu0 %v8450
        %v9659 = vpop.f32.mrf.mxu0
        %v9660 = vadd.f32 0.0, %v9659
        %v9661 = vpop.f32.mrf.mxu0
        %v9662 = vadd.f32 0.0, %v9661
        %9663 = vdwg.mxu0
        %9664 = vmatpush.bf16.msra.mxu0 %v9061
        %9665 = vmatpush.bf16.msra.mxu0 %v9056
        %9666 = vmatpush.bf16.msra.mxu0 %v9051
        %9667 = vmatpush.bf16.msra.mxu0 %v9046
        %9668 = vmatpush.bf16.msra.mxu0 %v9041
        %9669 = vmatpush.bf16.msra.mxu0 %v9036
        %9670 = vmatpush.bf16.msra.mxu0 %v9031
        %9671 = vmatpush.bf16.msra.mxu0 %v9026
        %9672 = vmatmul.bf16.gmra.mxu0 %v5867
        %v9673 = vpop.f32.mrf.mxu0
        %v9674 = vadd.f32 %v9640, %v9673
        %v9675 = vpop.f32.mrf.mxu0
        %v9676 = vadd.f32 %v9642, %v9675
        %9677 = vmatmul.bf16.gmra.mxu0 %v5870
        %v9678 = vpop.f32.mrf.mxu0
        %v9679 = vadd.f32 %v9645, %v9678
        %v9680 = vpop.f32.mrf.mxu0
        %v9681 = vadd.f32 %v9647, %v9680
        %9682 = vmatmul.bf16.gmra.mxu0 %v5873
        %v9683 = vpop.f32.mrf.mxu0
        %v9684 = vadd.f32 %v9650, %v9683
        %v9685 = vpop.f32.mrf.mxu0
        %v9686 = vadd.f32 %v9652, %v9685
        %9687 = vmatmul.bf16.gmra.mxu0 %v5876
        %v9688 = vpop.f32.mrf.mxu0
        %v9689 = vadd.f32 %v9655, %v9688
        %v9690 = vpop.f32.mrf.mxu0
        %v9691 = vadd.f32 %v9657, %v9690
        %9692 = vmatmul.bf16.gmra.mxu0 %v8451
        %v9693 = vpop.f32.mrf.mxu0
        %v9694 = vadd.f32 %v9660, %v9693
        %v9695 = vpop.f32.mrf.mxu0
        %v9696 = vadd.f32 %v9662, %v9695
        %9697 = vdwg.mxu0
        %9698 = vmatpush.bf16.msra.mxu0 %v9101
        %9699 = vmatpush.bf16.msra.mxu0 %v9096
        %9700 = vmatpush.bf16.msra.mxu0 %v9091
        %9701 = vmatpush.bf16.msra.mxu0 %v9086
        %9702 = vmatpush.bf16.msra.mxu0 %v9081
        %9703 = vmatpush.bf16.msra.mxu0 %v9076
        %9704 = vmatpush.bf16.msra.mxu0 %v9071
        %9705 = vmatpush.bf16.msra.mxu0 %v9066
        %9706 = vmatmul.bf16.gmra.mxu0 %v5868
        %v9707 = vpop.f32.mrf.mxu0
        %v9708 = vadd.f32 %v9674, %v9707
        %v9709 = vpop.f32.mrf.mxu0
        %v9710 = vadd.f32 %v9676, %v9709
        %9711 = vmatmul.bf16.gmra.mxu0 %v5871
        %v9712 = vpop.f32.mrf.mxu0
        %v9713 = vadd.f32 %v9679, %v9712
        %v9714 = vpop.f32.mrf.mxu0
        %v9715 = vadd.f32 %v9681, %v9714
        %9716 = vmatmul.bf16.gmra.mxu0 %v5874
        %v9717 = vpop.f32.mrf.mxu0
        %v9718 = vadd.f32 %v9684, %v9717
        %v9719 = vpop.f32.mrf.mxu0
        %v9720 = vadd.f32 %v9686, %v9719
        %9721 = vmatmul.bf16.gmra.mxu0 %v5877
        %v9722 = vpop.f32.mrf.mxu0
        %v9723 = vadd.f32 %v9689, %v9722
        %v9724 = vpop.f32.mrf.mxu0
        %v9725 = vadd.f32 %v9691, %v9724
        %9726 = vmatmul.bf16.gmra.mxu0 %v8452
        %v9727 = vpop.f32.mrf.mxu0
        %v9728 = vadd.f32 %v9694, %v9727
        %v9729 = vpop.f32.mrf.mxu0
        %v9730 = vadd.f32 %v9696, %v9729
        %9731 = vdwg.mxu0
        %v9732 = vadd.f32 %v8018, %v9300
        %v9733 = vadd.f32 %v8120, %v9402
        %v9734 = vadd.f32 %v8222, %v9504
        %v9735 = vadd.f32 %v8324, %v9606
        %v9736 = vadd.f32 %v8426, %v9708
        %v9737 = vadd.f32 %v8020, %v9302
        %v9738 = vadd.f32 %v8122, %v9404
        %v9739 = vadd.f32 %v8224, %v9506
        %v9740 = vadd.f32 %v8326, %v9608
        %v9741 = vadd.f32 %v8428, %v9710
        %v9742 = vadd.f32 %v8023, %v9305
        %v9743 = vadd.f32 %v8125, %v9407
        %v9744 = vadd.f32 %v8227, %v9509
        %v9745 = vadd.f32 %v8329, %v9611
        %v9746 = vadd.f32 %v8431, %v9713
        %v9747 = vadd.f32 %v8025, %v9307
        %v9748 = vadd.f32 %v8127, %v9409
        %v9749 = vadd.f32 %v8229, %v9511
        %v9750 = vadd.f32 %v8331, %v9613
        %v9751 = vadd.f32 %v8433, %v9715
        %v9752 = vadd.f32 %v8028, %v9310
        %v9753 = vadd.f32 %v8130, %v9412
        %v9754 = vadd.f32 %v8232, %v9514
        %v9755 = vadd.f32 %v8334, %v9616
        %v9756 = vadd.f32 %v8436, %v9718
        %v9757 = vadd.f32 %v8030, %v9312
        %v9758 = vadd.f32 %v8132, %v9414
        %v9759 = vadd.f32 %v8234, %v9516
        %v9760 = vadd.f32 %v8336, %v9618
        %v9761 = vadd.f32 %v8438, %v9720
        %v9762 = vadd.f32 %v8033, %v9315
        %v9763 = vadd.f32 %v8135, %v9417
        %v9764 = vadd.f32 %v8237, %v9519
        %v9765 = vadd.f32 %v8339, %v9621
        %v9766 = vadd.f32 %v8441, %v9723
        %v9767 = vadd.f32 %v8035, %v9317
        %v9768 = vadd.f32 %v8137, %v9419
        %v9769 = vadd.f32 %v8239, %v9521
        %v9770 = vadd.f32 %v8341, %v9623
        %v9771 = vadd.f32 %v8443, %v9725
        %v9772 = vadd.f32 %v8038, %v9320
        %v9773 = vadd.f32 %v8140, %v9422
        %v9774 = vadd.f32 %v8242, %v9524
        %v9775 = vadd.f32 %v8344, %v9626
        %v9776 = vadd.f32 %v8446, %v9728
        %v9777 = vadd.f32 %v8040, %v9322
        %v9778 = vadd.f32 %v8142, %v9424
        %v9779 = vadd.f32 %v8244, %v9526
        %v9780 = vadd.f32 %v8346, %v9628
        %v9781 = vadd.f32 %v8448, %v9730
        %v9782 = vld [vmem:[#allocation9] sm:$0x1f]
        %v9784 = vperm.slane %v9782, 0
        %v9785 = vperm.slane %v9782, 1
        %v9786 = vperm.slane %v9782, 2
        %v9787 = vperm.slane %v9782, 3
        %v9788 = vperm.slane %v9782, 4
        %v9794 = vadd.f32 %v9732, %v9784
        %v9795 = vadd.f32 %v9733, %v9785
        %v9796 = vadd.f32 %v9734, %v9786
        %v9797 = vadd.f32 %v9735, %v9787
        %v9798 = vadd.f32 %v9736, %v9788
        %v9799 = vadd.f32 %v9737, %v9784
        %v9800 = vadd.f32 %v9738, %v9785
        %v9801 = vadd.f32 %v9739, %v9786
        %v9802 = vadd.f32 %v9740, %v9787
        %v9803 = vadd.f32 %v9741, %v9788
        %v9804 = vadd.f32 %v9742, %v9784
        %v9805 = vadd.f32 %v9743, %v9785
        %v9806 = vadd.f32 %v9744, %v9786
        %v9807 = vadd.f32 %v9745, %v9787
        %v9808 = vadd.f32 %v9746, %v9788
        %v9809 = vadd.f32 %v9747, %v9784
        %v9810 = vadd.f32 %v9748, %v9785
        %v9811 = vadd.f32 %v9749, %v9786
        %v9812 = vadd.f32 %v9750, %v9787
        %v9813 = vadd.f32 %v9751, %v9788
        %v9814 = vadd.f32 %v9752, %v9784
        %v9815 = vadd.f32 %v9753, %v9785
        %v9816 = vadd.f32 %v9754, %v9786
        %v9817 = vadd.f32 %v9755, %v9787
        %v9818 = vadd.f32 %v9756, %v9788
        %v9819 = vadd.f32 %v9757, %v9784
        %v9820 = vadd.f32 %v9758, %v9785
        %v9821 = vadd.f32 %v9759, %v9786
        %v9822 = vadd.f32 %v9760, %v9787
        %v9823 = vadd.f32 %v9761, %v9788
        %v9824 = vadd.f32 %v9762, %v9784
        %v9825 = vadd.f32 %v9763, %v9785
        %v9826 = vadd.f32 %v9764, %v9786
        %v9827 = vadd.f32 %v9765, %v9787
        %v9828 = vadd.f32 %v9766, %v9788
        %v9829 = vadd.f32 %v9767, %v9784
        %v9830 = vadd.f32 %v9768, %v9785
        %v9831 = vadd.f32 %v9769, %v9786
        %v9832 = vadd.f32 %v9770, %v9787
        %v9833 = vadd.f32 %v9771, %v9788
        %v9834 = vadd.f32 %v9772, %v9784
        %v9835 = vadd.f32 %v9773, %v9785
        %v9836 = vadd.f32 %v9774, %v9786
        %v9837 = vadd.f32 %v9775, %v9787
        %v9838 = vadd.f32 %v9776, %v9788
        %v9839 = vadd.f32 %v9777, %v9784
        %v9840 = vadd.f32 %v9778, %v9785
        %v9841 = vadd.f32 %v9779, %v9786
        %v9842 = vadd.f32 %v9780, %v9787
        %v9843 = vadd.f32 %v9781, %v9788
        %v9844 = vmax.f32 %v9794, 0.0
        %v9845 = vmax.f32 %v9795, 0.0
        %v9846 = vmax.f32 %v9796, 0.0
        %v9847 = vmax.f32 %v9797, 0.0
        %v9848 = vmax.f32 %v9798, 0.0
        %v9849 = vmax.f32 %v9799, 0.0
        %v9850 = vmax.f32 %v9800, 0.0
        %v9851 = vmax.f32 %v9801, 0.0
        %v9852 = vmax.f32 %v9802, 0.0
        %v9853 = vmax.f32 %v9803, 0.0
        %v9854 = vmax.f32 %v9804, 0.0
        %v9855 = vmax.f32 %v9805, 0.0
        %v9856 = vmax.f32 %v9806, 0.0
        %v9857 = vmax.f32 %v9807, 0.0
        %v9858 = vmax.f32 %v9808, 0.0
        %v9859 = vmax.f32 %v9809, 0.0
        %v9860 = vmax.f32 %v9810, 0.0
        %v9861 = vmax.f32 %v9811, 0.0
        %v9862 = vmax.f32 %v9812, 0.0
        %v9863 = vmax.f32 %v9813, 0.0
        %v9864 = vmax.f32 %v9814, 0.0
        %v9865 = vmax.f32 %v9815, 0.0
        %v9866 = vmax.f32 %v9816, 0.0
        %v9867 = vmax.f32 %v9817, 0.0
        %v9868 = vmax.f32 %v9818, 0.0
        %v9869 = vmax.f32 %v9819, 0.0
        %v9870 = vmax.f32 %v9820, 0.0
        %v9871 = vmax.f32 %v9821, 0.0
        %v9872 = vmax.f32 %v9822, 0.0
        %v9873 = vmax.f32 %v9823, 0.0
        %v9874 = vmax.f32 %v9824, 0.0
        %v9875 = vmax.f32 %v9825, 0.0
        %v9876 = vmax.f32 %v9826, 0.0
        %v9877 = vmax.f32 %v9827, 0.0
        %v9878 = vmax.f32 %v9828, 0.0
        %v9879 = vmax.f32 %v9829, 0.0
        %v9880 = vmax.f32 %v9830, 0.0
        %v9881 = vmax.f32 %v9831, 0.0
        %v9882 = vmax.f32 %v9832, 0.0
        %v9883 = vmax.f32 %v9833, 0.0
        %v9884 = vmax.f32 %v9834, 0.0
        %v9885 = vmax.f32 %v9835, 0.0
        %v9886 = vmax.f32 %v9836, 0.0
        %v9887 = vmax.f32 %v9837, 0.0
        %v9888 = vmax.f32 %v9838, 0.0
        %v9889 = vmax.f32 %v9839, 0.0
        %v9890 = vmax.f32 %v9840, 0.0
        %v9891 = vmax.f32 %v9841, 0.0
        %v9892 = vmax.f32 %v9842, 0.0
        %v9893 = vmax.f32 %v9843, 0.0
        %v9894 = vadd.f32 %v9844, %v9849
        %v9895 = vadd.f32 %v9845, %v9850
        %v9896 = vadd.f32 %v9846, %v9851
        %v9897 = vadd.f32 %v9847, %v9852
        %v9898 = vadd.f32 %v9848, %v9853
        %v9899 = vadd.f32 %v9894, %v9854
        %v9900 = vadd.f32 %v9895, %v9855
        %v9901 = vadd.f32 %v9896, %v9856
        %v9902 = vadd.f32 %v9897, %v9857
        %v9903 = vadd.f32 %v9898, %v9858
        %v9904 = vadd.f32 %v9899, %v9859
        %v9905 = vadd.f32 %v9900, %v9860
        %v9906 = vadd.f32 %v9901, %v9861
        %v9907 = vadd.f32 %v9902, %v9862
        %v9908 = vadd.f32 %v9903, %v9863
        %v9909 = vadd.f32 %v9904, %v9864
        %v9910 = vadd.f32 %v9905, %v9865
        %v9911 = vadd.f32 %v9906, %v9866
        %v9912 = vadd.f32 %v9907, %v9867
        %v9913 = vadd.f32 %v9908, %v9868
        %v9914 = vadd.f32 %v9869, %v9874
        %v9915 = vadd.f32 %v9870, %v9875
        %v9916 = vadd.f32 %v9871, %v9876
        %v9917 = vadd.f32 %v9872, %v9877
        %v9918 = vadd.f32 %v9873, %v9878
        %v9919 = vadd.f32 %v9914, %v9879
        %v9920 = vadd.f32 %v9915, %v9880
        %v9921 = vadd.f32 %v9916, %v9881
        %v9922 = vadd.f32 %v9917, %v9882
        %v9923 = vadd.f32 %v9918, %v9883
        %v9924 = vadd.f32 %v9919, %v9884
        %v9925 = vadd.f32 %v9920, %v9885
        %v9926 = vadd.f32 %v9921, %v9886
        %v9927 = vadd.f32 %v9922, %v9887
        %v9928 = vadd.f32 %v9923, %v9888
        %v9929 = vadd.f32 %v9924, %v9889
        %v9930 = vadd.f32 %v9925, %v9890
        %v9931 = vadd.f32 %v9926, %v9891
        %v9932 = vadd.f32 %v9927, %v9892
        %v9933 = vadd.f32 %v9928, %v9893
        %v9934 = vpack.c.bf16 %v9909, %v9909
        %v9935 = vpack.c.bf16 %v9910, %v9910
        %v9936 = vpack.c.bf16 %v9911, %v9911
        %v9937 = vpack.c.bf16 %v9912, %v9912
        %v9938 = vpack.c.bf16 %v9913, %v9913
        %v9939 = vld [vmem:[#allocation10] sm:$0xff]
        %v9940 = vld [vmem:[#allocation10 + $0x8] sm:$0xff]
        %v9941 = vld [vmem:[#allocation10 + $0x10] sm:$0xff]
        %v9942 = vld [vmem:[#allocation10 + $0x18] sm:$0xff]
        %v9943 = vld [vmem:[#allocation10 + $0x20] sm:$0xff]
        %v9944 = vld [vmem:[#allocation10 + $0x28] sm:$0xff]
        %v9945 = vld [vmem:[#allocation10 + $0x30] sm:$0xff]
        %v9946 = vld [vmem:[#allocation10 + $0x38] sm:$0xff]
        %v9947 = vld [vmem:[#allocation10 + $0x40] sm:$0xff]
        %v9948 = vld [vmem:[#allocation10 + $0x48] sm:$0xff]
        %v9949 = vld [vmem:[#allocation10 + $0x50] sm:$0xff]
        %v9950 = vld [vmem:[#allocation10 + $0x58] sm:$0xff]
        %v9951 = vld [vmem:[#allocation10 + $0x60] sm:$0xff]
        %v9952 = vld [vmem:[#allocation10 + $0x68] sm:$0xff]
        %v9953 = vld [vmem:[#allocation10 + $0x70] sm:$0xff]
        %v9954 = vld [vmem:[#allocation10 + $0x78] sm:$0xff]
        %v9955 = vld [vmem:[#allocation10 + $0x80] sm:$0xff]
        %v9956 = vld [vmem:[#allocation10 + $0x88] sm:$0xff]
        %v9957 = vld [vmem:[#allocation10 + $0x90] sm:$0xff]
        %v9958 = vld [vmem:[#allocation10 + $0x98] sm:$0xff]
        %v9959 = vld [vmem:[#allocation10 + $0xa0] sm:$0xff]
        %v9960 = vld [vmem:[#allocation10 + $0xa8] sm:$0xff]
        %v9961 = vld [vmem:[#allocation10 + $0xb0] sm:$0xff]
        %v9962 = vld [vmem:[#allocation10 + $0xb8] sm:$0xff]
        %v9963 = vld [vmem:[#allocation10 + $0xc0] sm:$0xff]
        %v9964 = vld [vmem:[#allocation10 + $0xc8] sm:$0xff]
        %v9965 = vld [vmem:[#allocation10 + $0xd0] sm:$0xff]
        %v9966 = vld [vmem:[#allocation10 + $0xd8] sm:$0xff]
        %v9967 = vld [vmem:[#allocation10 + $0xe0] sm:$0xff]
        %v9968 = vld [vmem:[#allocation10 + $0xe8] sm:$0xff]
        %v9969 = vld [vmem:[#allocation10 + $0xf0] sm:$0xff]
        %v9970 = vld [vmem:[#allocation10 + $0xf8] sm:$0xff]
        %v9971 = vld [vmem:[#allocation10 + $0x100] sm:$0xff]
        %v9972 = vld [vmem:[#allocation10 + $0x108] sm:$0xff]
        %v9973 = vld [vmem:[#allocation10 + $0x110] sm:$0xff]
        %v9974 = vld [vmem:[#allocation10 + $0x118] sm:$0xff]
        %v9975 = vld [vmem:[#allocation10 + $0x120] sm:$0xff]
        %v9976 = vld [vmem:[#allocation10 + $0x128] sm:$0xff]
        %v9977 = vld [vmem:[#allocation10 + $0x130] sm:$0xff]
        %v9978 = vld [vmem:[#allocation10 + $0x138] sm:$0xff]
        %v9979 = vld [vmem:[#allocation10 + $0x140] sm:$0xff]
        %v9980 = vld [vmem:[#allocation10 + $0x148] sm:$0xff]
        %v9981 = vld [vmem:[#allocation10 + $0x150] sm:$0xff]
        %v9982 = vld [vmem:[#allocation10 + $0x158] sm:$0xff]
        %v9983 = vld [vmem:[#allocation10 + $0x160] sm:$0xff]
        %v9984 = vld [vmem:[#allocation10 + $0x168] sm:$0xff]
        %v9985 = vld [vmem:[#allocation10 + $0x170] sm:$0xff]
        %v9986 = vld [vmem:[#allocation10 + $0x178] sm:$0xff]
        %v9987 = vld [vmem:[#allocation10 + $0x180] sm:$0xff]
        %v9988 = vld [vmem:[#allocation10 + $0x188] sm:$0xff]
        %v9989 = vld [vmem:[#allocation10 + $0x190] sm:$0xff]
        %v9990 = vld [vmem:[#allocation10 + $0x198] sm:$0xff]
        %v9991 = vld [vmem:[#allocation10 + $0x1a0] sm:$0xff]
        %v9992 = vld [vmem:[#allocation10 + $0x1a8] sm:$0xff]
        %v9993 = vld [vmem:[#allocation10 + $0x1b0] sm:$0xff]
        %v9994 = vld [vmem:[#allocation10 + $0x1b8] sm:$0xff]
        %v9995 = vld [vmem:[#allocation10 + $0x1c0] sm:$0xff]
        %v9996 = vld [vmem:[#allocation10 + $0x1c8] sm:$0xff]
        %v9997 = vld [vmem:[#allocation10 + $0x1d0] sm:$0xff]
        %v9998 = vld [vmem:[#allocation10 + $0x1d8] sm:$0xff]
        %v9999 = vld [vmem:[#allocation10 + $0x1e0] sm:$0xff]
        %v10000 = vld [vmem:[#allocation10 + $0x1e8] sm:$0xff]
        %v10001 = vld [vmem:[#allocation10 + $0x1f0] sm:$0xff]
        %v10002 = vld [vmem:[#allocation10 + $0x1f8] sm:$0xff]
        %v10003 = vld [vmem:[#allocation10 + $0x200] sm:$0xff]
        %v10004 = vld [vmem:[#allocation10 + $0x208] sm:$0xff]
        %v10005 = vld [vmem:[#allocation10 + $0x210] sm:$0xff]
        %v10006 = vld [vmem:[#allocation10 + $0x218] sm:$0xff]
        %v10007 = vld [vmem:[#allocation10 + $0x220] sm:$0xff]
        %v10008 = vld [vmem:[#allocation10 + $0x228] sm:$0xff]
        %v10009 = vld [vmem:[#allocation10 + $0x230] sm:$0xff]
        %v10010 = vld [vmem:[#allocation10 + $0x238] sm:$0xff]
        %v10011 = vld [vmem:[#allocation10 + $0x240] sm:$0xff]
        %v10012 = vld [vmem:[#allocation10 + $0x248] sm:$0xff]
        %v10013 = vld [vmem:[#allocation10 + $0x250] sm:$0xff]
        %v10014 = vld [vmem:[#allocation10 + $0x258] sm:$0xff]
        %v10015 = vld [vmem:[#allocation10 + $0x260] sm:$0xff]
        %v10016 = vld [vmem:[#allocation10 + $0x268] sm:$0xff]
        %v10017 = vld [vmem:[#allocation10 + $0x270] sm:$0xff]
        %v10018 = vld [vmem:[#allocation10 + $0x278] sm:$0xff]
        %v10019 = vpack.c.bf16 %v9929, %v9929
        %v10020 = vpack.c.bf16 %v9930, %v9930
        %v10021 = vpack.c.bf16 %v9931, %v9931
        %v10022 = vpack.c.bf16 %v9932, %v9932
        %v10023 = vpack.c.bf16 %v9933, %v9933
        %v10024 = vld [vmem:[#allocation12] sm:$0xff]
        %v10025 = vld [vmem:[#allocation12 + $0x8] sm:$0xff]
        %v10026 = vld [vmem:[#allocation12 + $0x10] sm:$0xff]
        %v10027 = vld [vmem:[#allocation12 + $0x18] sm:$0xff]
        %v10028 = vld [vmem:[#allocation12 + $0x20] sm:$0xff]
        %v10029 = vld [vmem:[#allocation12 + $0x28] sm:$0xff]
        %v10030 = vld [vmem:[#allocation12 + $0x30] sm:$0xff]
        %v10031 = vld [vmem:[#allocation12 + $0x38] sm:$0xff]
        %v10032 = vld [vmem:[#allocation12 + $0x40] sm:$0xff]
        %v10033 = vld [vmem:[#allocation12 + $0x48] sm:$0xff]
        %v10034 = vld [vmem:[#allocation12 + $0x50] sm:$0xff]
        %v10035 = vld [vmem:[#allocation12 + $0x58] sm:$0xff]
        %v10036 = vld [vmem:[#allocation12 + $0x60] sm:$0xff]
        %v10037 = vld [vmem:[#allocation12 + $0x68] sm:$0xff]
        %v10038 = vld [vmem:[#allocation12 + $0x70] sm:$0xff]
        %v10039 = vld [vmem:[#allocation12 + $0x78] sm:$0xff]
        %v10040 = vld [vmem:[#allocation12 + $0x80] sm:$0xff]
        %v10041 = vld [vmem:[#allocation12 + $0x88] sm:$0xff]
        %v10042 = vld [vmem:[#allocation12 + $0x90] sm:$0xff]
        %v10043 = vld [vmem:[#allocation12 + $0x98] sm:$0xff]
        %v10044 = vld [vmem:[#allocation12 + $0xa0] sm:$0xff]
        %v10045 = vld [vmem:[#allocation12 + $0xa8] sm:$0xff]
        %v10046 = vld [vmem:[#allocation12 + $0xb0] sm:$0xff]
        %v10047 = vld [vmem:[#allocation12 + $0xb8] sm:$0xff]
        %v10048 = vld [vmem:[#allocation12 + $0xc0] sm:$0xff]
        %v10049 = vld [vmem:[#allocation12 + $0xc8] sm:$0xff]
        %v10050 = vld [vmem:[#allocation12 + $0xd0] sm:$0xff]
        %v10051 = vld [vmem:[#allocation12 + $0xd8] sm:$0xff]
        %v10052 = vld [vmem:[#allocation12 + $0xe0] sm:$0xff]
        %v10053 = vld [vmem:[#allocation12 + $0xe8] sm:$0xff]
        %v10054 = vld [vmem:[#allocation12 + $0xf0] sm:$0xff]
        %v10055 = vld [vmem:[#allocation12 + $0xf8] sm:$0xff]
        %v10056 = vld [vmem:[#allocation12 + $0x100] sm:$0xff]
        %v10057 = vld [vmem:[#allocation12 + $0x108] sm:$0xff]
        %v10058 = vld [vmem:[#allocation12 + $0x110] sm:$0xff]
        %v10059 = vld [vmem:[#allocation12 + $0x118] sm:$0xff]
        %v10060 = vld [vmem:[#allocation12 + $0x120] sm:$0xff]
        %v10061 = vld [vmem:[#allocation12 + $0x128] sm:$0xff]
        %v10062 = vld [vmem:[#allocation12 + $0x130] sm:$0xff]
        %v10063 = vld [vmem:[#allocation12 + $0x138] sm:$0xff]
        %v10064 = vld [vmem:[#allocation12 + $0x140] sm:$0xff]
        %v10065 = vld [vmem:[#allocation12 + $0x148] sm:$0xff]
        %v10066 = vld [vmem:[#allocation12 + $0x150] sm:$0xff]
        %v10067 = vld [vmem:[#allocation12 + $0x158] sm:$0xff]
        %v10068 = vld [vmem:[#allocation12 + $0x160] sm:$0xff]
        %v10069 = vld [vmem:[#allocation12 + $0x168] sm:$0xff]
        %v10070 = vld [vmem:[#allocation12 + $0x170] sm:$0xff]
        %v10071 = vld [vmem:[#allocation12 + $0x178] sm:$0xff]
        %v10072 = vld [vmem:[#allocation12 + $0x180] sm:$0xff]
        %v10073 = vld [vmem:[#allocation12 + $0x188] sm:$0xff]
        %v10074 = vld [vmem:[#allocation12 + $0x190] sm:$0xff]
        %v10075 = vld [vmem:[#allocation12 + $0x198] sm:$0xff]
        %v10076 = vld [vmem:[#allocation12 + $0x1a0] sm:$0xff]
        %v10077 = vld [vmem:[#allocation12 + $0x1a8] sm:$0xff]
        %v10078 = vld [vmem:[#allocation12 + $0x1b0] sm:$0xff]
        %v10079 = vld [vmem:[#allocation12 + $0x1b8] sm:$0xff]
        %v10080 = vld [vmem:[#allocation12 + $0x1c0] sm:$0xff]
        %v10081 = vld [vmem:[#allocation12 + $0x1c8] sm:$0xff]
        %v10082 = vld [vmem:[#allocation12 + $0x1d0] sm:$0xff]
        %v10083 = vld [vmem:[#allocation12 + $0x1d8] sm:$0xff]
        %v10084 = vld [vmem:[#allocation12 + $0x1e0] sm:$0xff]
        %v10085 = vld [vmem:[#allocation12 + $0x1e8] sm:$0xff]
        %v10086 = vld [vmem:[#allocation12 + $0x1f0] sm:$0xff]
        %v10087 = vld [vmem:[#allocation12 + $0x1f8] sm:$0xff]
        %v10088 = vld [vmem:[#allocation12 + $0x200] sm:$0xff]
        %v10089 = vld [vmem:[#allocation12 + $0x208] sm:$0xff]
        %v10090 = vld [vmem:[#allocation12 + $0x210] sm:$0xff]
        %v10091 = vld [vmem:[#allocation12 + $0x218] sm:$0xff]
        %v10092 = vld [vmem:[#allocation12 + $0x220] sm:$0xff]
        %v10093 = vld [vmem:[#allocation12 + $0x228] sm:$0xff]
        %v10094 = vld [vmem:[#allocation12 + $0x230] sm:$0xff]
        %v10095 = vld [vmem:[#allocation12 + $0x238] sm:$0xff]
        %v10096 = vld [vmem:[#allocation12 + $0x240] sm:$0xff]
        %v10097 = vld [vmem:[#allocation12 + $0x248] sm:$0xff]
        %v10098 = vld [vmem:[#allocation12 + $0x250] sm:$0xff]
        %v10099 = vld [vmem:[#allocation12 + $0x258] sm:$0xff]
        %v10100 = vld [vmem:[#allocation12 + $0x260] sm:$0xff]
        %v10101 = vld [vmem:[#allocation12 + $0x268] sm:$0xff]
        %v10102 = vld [vmem:[#allocation12 + $0x270] sm:$0xff]
        %v10103 = vld [vmem:[#allocation12 + $0x278] sm:$0xff]
        %v10184 = vunpack.c.l.b16 %v10024
        %v10185 = vunpack.c.h.b16 %v10024
        %v10186 = vunpack.c.l.b16 %v10025
        %v10187 = vunpack.c.h.b16 %v10025
        %v10188 = vunpack.c.l.b16 %v10026
        %v10189 = vunpack.c.h.b16 %v10026
        %v10190 = vunpack.c.l.b16 %v10027
        %v10191 = vunpack.c.h.b16 %v10027
        %v10192 = vunpack.c.l.b16 %v10028
        %v10193 = vunpack.c.h.b16 %v10028
        %v10194 = vunpack.c.l.b16 %v10029
        %v10195 = vunpack.c.h.b16 %v10029
        %v10196 = vunpack.c.l.b16 %v10030
        %v10197 = vunpack.c.h.b16 %v10030
        %v10198 = vunpack.c.l.b16 %v10031
        %v10199 = vunpack.c.h.b16 %v10031
        %v10200 = vunpack.c.l.b16 %v10032
        %v10201 = vunpack.c.h.b16 %v10032
        %v10202 = vunpack.c.l.b16 %v10033
        %v10203 = vunpack.c.h.b16 %v10033
        %v10204 = vunpack.c.l.b16 %v10034
        %v10205 = vunpack.c.h.b16 %v10034
        %v10206 = vunpack.c.l.b16 %v10035
        %v10207 = vunpack.c.h.b16 %v10035
        %v10208 = vunpack.c.l.b16 %v10036
        %v10209 = vunpack.c.h.b16 %v10036
        %v10210 = vunpack.c.l.b16 %v10037
        %v10211 = vunpack.c.h.b16 %v10037
        %v10212 = vunpack.c.l.b16 %v10038
        %v10213 = vunpack.c.h.b16 %v10038
        %v10214 = vunpack.c.l.b16 %v10039
        %v10215 = vunpack.c.h.b16 %v10039
        %v10216 = vunpack.c.l.b16 %v10040
        %v10217 = vunpack.c.h.b16 %v10040
        %v10218 = vunpack.c.l.b16 %v10041
        %v10219 = vunpack.c.h.b16 %v10041
        %v10220 = vunpack.c.l.b16 %v10042
        %v10221 = vunpack.c.h.b16 %v10042
        %v10222 = vunpack.c.l.b16 %v10043
        %v10223 = vunpack.c.h.b16 %v10043
        %v10224 = vunpack.c.l.b16 %v10044
        %v10225 = vunpack.c.h.b16 %v10044
        %v10226 = vunpack.c.l.b16 %v10045
        %v10227 = vunpack.c.h.b16 %v10045
        %v10228 = vunpack.c.l.b16 %v10046
        %v10229 = vunpack.c.h.b16 %v10046
        %v10230 = vunpack.c.l.b16 %v10047
        %v10231 = vunpack.c.h.b16 %v10047
        %v10232 = vunpack.c.l.b16 %v10048
        %v10233 = vunpack.c.h.b16 %v10048
        %v10234 = vunpack.c.l.b16 %v10049
        %v10235 = vunpack.c.h.b16 %v10049
        %v10236 = vunpack.c.l.b16 %v10050
        %v10237 = vunpack.c.h.b16 %v10050
        %v10238 = vunpack.c.l.b16 %v10051
        %v10239 = vunpack.c.h.b16 %v10051
        %v10240 = vunpack.c.l.b16 %v10052
        %v10241 = vunpack.c.h.b16 %v10052
        %v10242 = vunpack.c.l.b16 %v10053
        %v10243 = vunpack.c.h.b16 %v10053
        %v10244 = vunpack.c.l.b16 %v10054
        %v10245 = vunpack.c.h.b16 %v10054
        %v10246 = vunpack.c.l.b16 %v10055
        %v10247 = vunpack.c.h.b16 %v10055
        %v10248 = vunpack.c.l.b16 %v10056
        %v10249 = vunpack.c.h.b16 %v10056
        %v10250 = vunpack.c.l.b16 %v10057
        %v10251 = vunpack.c.h.b16 %v10057
        %v10252 = vunpack.c.l.b16 %v10058
        %v10253 = vunpack.c.h.b16 %v10058
        %v10254 = vunpack.c.l.b16 %v10059
        %v10255 = vunpack.c.h.b16 %v10059
        %v10256 = vunpack.c.l.b16 %v10060
        %v10257 = vunpack.c.h.b16 %v10060
        %v10258 = vunpack.c.l.b16 %v10061
        %v10259 = vunpack.c.h.b16 %v10061
        %v10260 = vunpack.c.l.b16 %v10062
        %v10261 = vunpack.c.h.b16 %v10062
        %v10262 = vunpack.c.l.b16 %v10063
        %v10263 = vunpack.c.h.b16 %v10063
        %v10264 = vunpack.c.l.b16 %v10064
        %v10265 = vunpack.c.h.b16 %v10064
        %v10266 = vunpack.c.l.b16 %v10065
        %v10267 = vunpack.c.h.b16 %v10065
        %v10268 = vunpack.c.l.b16 %v10066
        %v10269 = vunpack.c.h.b16 %v10066
        %v10270 = vunpack.c.l.b16 %v10067
        %v10271 = vunpack.c.h.b16 %v10067
        %v10272 = vunpack.c.l.b16 %v10068
        %v10273 = vunpack.c.h.b16 %v10068
        %v10274 = vunpack.c.l.b16 %v10069
        %v10275 = vunpack.c.h.b16 %v10069
        %v10276 = vunpack.c.l.b16 %v10070
        %v10277 = vunpack.c.h.b16 %v10070
        %v10278 = vunpack.c.l.b16 %v10071
        %v10279 = vunpack.c.h.b16 %v10071
        %v10280 = vunpack.c.l.b16 %v10072
        %v10281 = vunpack.c.h.b16 %v10072
        %v10282 = vunpack.c.l.b16 %v10073
        %v10283 = vunpack.c.h.b16 %v10073
        %v10284 = vunpack.c.l.b16 %v10074
        %v10285 = vunpack.c.h.b16 %v10074
        %v10286 = vunpack.c.l.b16 %v10075
        %v10287 = vunpack.c.h.b16 %v10075
        %v10288 = vunpack.c.l.b16 %v10076
        %v10289 = vunpack.c.h.b16 %v10076
        %v10290 = vunpack.c.l.b16 %v10077
        %v10291 = vunpack.c.h.b16 %v10077
        %v10292 = vunpack.c.l.b16 %v10078
        %v10293 = vunpack.c.h.b16 %v10078
        %v10294 = vunpack.c.l.b16 %v10079
        %v10295 = vunpack.c.h.b16 %v10079
        %v10296 = vunpack.c.l.b16 %v10080
        %v10297 = vunpack.c.h.b16 %v10080
        %v10298 = vunpack.c.l.b16 %v10081
        %v10299 = vunpack.c.h.b16 %v10081
        %v10300 = vunpack.c.l.b16 %v10082
        %v10301 = vunpack.c.h.b16 %v10082
        %v10302 = vunpack.c.l.b16 %v10083
        %v10303 = vunpack.c.h.b16 %v10083
        %v10304 = vunpack.c.l.b16 %v10084
        %v10305 = vunpack.c.h.b16 %v10084
        %v10306 = vunpack.c.l.b16 %v10085
        %v10307 = vunpack.c.h.b16 %v10085
        %v10308 = vunpack.c.l.b16 %v10086
        %v10309 = vunpack.c.h.b16 %v10086
        %v10310 = vunpack.c.l.b16 %v10087
        %v10311 = vunpack.c.h.b16 %v10087
        %v10312 = vunpack.c.l.b16 %v10088
        %v10313 = vunpack.c.h.b16 %v10088
        %v10314 = vunpack.c.l.b16 %v10089
        %v10315 = vunpack.c.h.b16 %v10089
        %v10316 = vunpack.c.l.b16 %v10090
        %v10317 = vunpack.c.h.b16 %v10090
        %v10318 = vunpack.c.l.b16 %v10091
        %v10319 = vunpack.c.h.b16 %v10091
        %v10320 = vunpack.c.l.b16 %v10092
        %v10321 = vunpack.c.h.b16 %v10092
        %v10322 = vunpack.c.l.b16 %v10093
        %v10323 = vunpack.c.h.b16 %v10093
        %v10324 = vunpack.c.l.b16 %v10094
        %v10325 = vunpack.c.h.b16 %v10094
        %v10326 = vunpack.c.l.b16 %v10095
        %v10327 = vunpack.c.h.b16 %v10095
        %v10328 = vunpack.c.l.b16 %v10096
        %v10329 = vunpack.c.h.b16 %v10096
        %v10330 = vunpack.c.l.b16 %v10097
        %v10331 = vunpack.c.h.b16 %v10097
        %v10332 = vunpack.c.l.b16 %v10098
        %v10333 = vunpack.c.h.b16 %v10098
        %v10334 = vunpack.c.l.b16 %v10099
        %v10335 = vunpack.c.h.b16 %v10099
        %v10336 = vunpack.c.l.b16 %v10100
        %v10337 = vunpack.c.h.b16 %v10100
        %v10338 = vunpack.c.l.b16 %v10101
        %v10339 = vunpack.c.h.b16 %v10101
        %v10340 = vunpack.c.l.b16 %v10102
        %v10341 = vunpack.c.h.b16 %v10102
        %v10342 = vunpack.c.l.b16 %v10103
        %v10343 = vunpack.c.h.b16 %v10103
        %v10344 = vpack.c.b16 %v10186, %v10184
        %v10345 = vpack.c.b16 %v10187, %v10185
        %v10346 = vpack.c.b16 %v10190, %v10188
        %v10347 = vpack.c.b16 %v10191, %v10189
        %v10348 = vpack.c.b16 %v10194, %v10192
        %v10349 = vpack.c.b16 %v10195, %v10193
        %v10350 = vpack.c.b16 %v10198, %v10196
        %v10351 = vpack.c.b16 %v10199, %v10197
        %v10352 = vpack.c.b16 %v10202, %v10200
        %v10353 = vpack.c.b16 %v10203, %v10201
        %v10354 = vpack.c.b16 %v10206, %v10204
        %v10355 = vpack.c.b16 %v10207, %v10205
        %v10356 = vpack.c.b16 %v10210, %v10208
        %v10357 = vpack.c.b16 %v10211, %v10209
        %v10358 = vpack.c.b16 %v10214, %v10212
        %v10359 = vpack.c.b16 %v10215, %v10213
        %v10360 = vpack.c.b16 %v10218, %v10216
        %v10361 = vpack.c.b16 %v10219, %v10217
        %v10362 = vpack.c.b16 %v10222, %v10220
        %v10363 = vpack.c.b16 %v10223, %v10221
        %v10364 = vpack.c.b16 %v10226, %v10224
        %v10365 = vpack.c.b16 %v10227, %v10225
        %v10366 = vpack.c.b16 %v10230, %v10228
        %v10367 = vpack.c.b16 %v10231, %v10229
        %v10368 = vpack.c.b16 %v10234, %v10232
        %v10369 = vpack.c.b16 %v10235, %v10233
        %v10370 = vpack.c.b16 %v10238, %v10236
        %v10371 = vpack.c.b16 %v10239, %v10237
        %v10372 = vpack.c.b16 %v10242, %v10240
        %v10373 = vpack.c.b16 %v10243, %v10241
        %v10374 = vpack.c.b16 %v10246, %v10244
        %v10375 = vpack.c.b16 %v10247, %v10245
        %v10376 = vpack.c.b16 %v10250, %v10248
        %v10377 = vpack.c.b16 %v10251, %v10249
        %v10378 = vpack.c.b16 %v10254, %v10252
        %v10379 = vpack.c.b16 %v10255, %v10253
        %v10380 = vpack.c.b16 %v10258, %v10256
        %v10381 = vpack.c.b16 %v10259, %v10257
        %v10382 = vpack.c.b16 %v10262, %v10260
        %v10383 = vpack.c.b16 %v10263, %v10261
        %v10384 = vpack.c.b16 %v10266, %v10264
        %v10385 = vpack.c.b16 %v10267, %v10265
        %v10386 = vpack.c.b16 %v10270, %v10268
        %v10387 = vpack.c.b16 %v10271, %v10269
        %v10388 = vpack.c.b16 %v10274, %v10272
        %v10389 = vpack.c.b16 %v10275, %v10273
        %v10390 = vpack.c.b16 %v10278, %v10276
        %v10391 = vpack.c.b16 %v10279, %v10277
        %v10392 = vpack.c.b16 %v10282, %v10280
        %v10393 = vpack.c.b16 %v10283, %v10281
        %v10394 = vpack.c.b16 %v10286, %v10284
        %v10395 = vpack.c.b16 %v10287, %v10285
        %v10396 = vpack.c.b16 %v10290, %v10288
        %v10397 = vpack.c.b16 %v10291, %v10289
        %v10398 = vpack.c.b16 %v10294, %v10292
        %v10399 = vpack.c.b16 %v10295, %v10293
        %v10400 = vpack.c.b16 %v10298, %v10296
        %v10401 = vpack.c.b16 %v10299, %v10297
        %v10402 = vpack.c.b16 %v10302, %v10300
        %v10403 = vpack.c.b16 %v10303, %v10301
        %v10404 = vpack.c.b16 %v10306, %v10304
        %v10405 = vpack.c.b16 %v10307, %v10305
        %v10406 = vpack.c.b16 %v10310, %v10308
        %v10407 = vpack.c.b16 %v10311, %v10309
        %v10408 = vpack.c.b16 %v10314, %v10312
        %v10409 = vpack.c.b16 %v10315, %v10313
        %v10410 = vpack.c.b16 %v10318, %v10316
        %v10411 = vpack.c.b16 %v10319, %v10317
        %v10412 = vpack.c.b16 %v10322, %v10320
        %v10413 = vpack.c.b16 %v10323, %v10321
        %v10414 = vpack.c.b16 %v10326, %v10324
        %v10415 = vpack.c.b16 %v10327, %v10325
        %v10416 = vpack.c.b16 %v10330, %v10328
        %v10417 = vpack.c.b16 %v10331, %v10329
        %v10418 = vpack.c.b16 %v10334, %v10332
        %v10419 = vpack.c.b16 %v10335, %v10333
        %v10420 = vpack.c.b16 %v10338, %v10336
        %v10421 = vpack.c.b16 %v10339, %v10337
        %v10422 = vpack.c.b16 %v10342, %v10340
        %v10423 = vpack.c.b16 %v10343, %v10341
        %10504 = vmatpush.bf16.msra.mxu0 %v10358
        %10505 = vmatpush.bf16.msra.mxu0 %v10356
        %10506 = vmatpush.bf16.msra.mxu0 %v10354
        %10507 = vmatpush.bf16.msra.mxu0 %v10352
        %10508 = vmatpush.bf16.msra.mxu0 %v10350
        %10509 = vmatpush.bf16.msra.mxu0 %v10348
        %10510 = vmatpush.bf16.msra.mxu0 %v10346
        %10511 = vmatpush.bf16.msra.mxu0 %v10344
        %10512 = vmatmul.bf16.gmra.mxu0 %v10019
        %v10513 = vpop.f32.mrf.mxu0
        %v10514 = vadd.f32 0.0, %v10513
        %v10515 = vpop.f32.mrf.mxu0
        %10516 = vdwg.mxu0
        %10517 = vmatpush.bf16.msra.mxu0 %v10374
        %10518 = vmatpush.bf16.msra.mxu0 %v10372
        %10519 = vmatpush.bf16.msra.mxu0 %v10370
        %10520 = vmatpush.bf16.msra.mxu0 %v10368
        %10521 = vmatpush.bf16.msra.mxu0 %v10366
        %10522 = vmatpush.bf16.msra.mxu0 %v10364
        %10523 = vmatpush.bf16.msra.mxu0 %v10362
        %10524 = vmatpush.bf16.msra.mxu0 %v10360
        %10525 = vmatmul.bf16.gmra.mxu0 %v10020
        %v10526 = vpop.f32.mrf.mxu0
        %v10527 = vadd.f32 %v10514, %v10526
        %v10528 = vpop.f32.mrf.mxu0
        %10529 = vdwg.mxu0
        %10530 = vmatpush.bf16.msra.mxu0 %v10390
        %10531 = vmatpush.bf16.msra.mxu0 %v10388
        %10532 = vmatpush.bf16.msra.mxu0 %v10386
        %10533 = vmatpush.bf16.msra.mxu0 %v10384
        %10534 = vmatpush.bf16.msra.mxu0 %v10382
        %10535 = vmatpush.bf16.msra.mxu0 %v10380
        %10536 = vmatpush.bf16.msra.mxu0 %v10378
        %10537 = vmatpush.bf16.msra.mxu0 %v10376
        %10538 = vmatmul.bf16.gmra.mxu0 %v10021
        %v10539 = vpop.f32.mrf.mxu0
        %v10540 = vadd.f32 %v10527, %v10539
        %v10541 = vpop.f32.mrf.mxu0
        %10542 = vdwg.mxu0
        %10543 = vmatpush.bf16.msra.mxu0 %v10406
        %10544 = vmatpush.bf16.msra.mxu0 %v10404
        %10545 = vmatpush.bf16.msra.mxu0 %v10402
        %10546 = vmatpush.bf16.msra.mxu0 %v10400
        %10547 = vmatpush.bf16.msra.mxu0 %v10398
        %10548 = vmatpush.bf16.msra.mxu0 %v10396
        %10549 = vmatpush.bf16.msra.mxu0 %v10394
        %10550 = vmatpush.bf16.msra.mxu0 %v10392
        %10551 = vmatmul.bf16.gmra.mxu0 %v10022
        %v10552 = vpop.f32.mrf.mxu0
        %v10553 = vadd.f32 %v10540, %v10552
        %v10554 = vpop.f32.mrf.mxu0
        %10555 = vdwg.mxu0
        %10556 = vmatpush.bf16.msra.mxu0 %v10422
        %10557 = vmatpush.bf16.msra.mxu0 %v10420
        %10558 = vmatpush.bf16.msra.mxu0 %v10418
        %10559 = vmatpush.bf16.msra.mxu0 %v10416
        %10560 = vmatpush.bf16.msra.mxu0 %v10414
        %10561 = vmatpush.bf16.msra.mxu0 %v10412
        %10562 = vmatpush.bf16.msra.mxu0 %v10410
        %10563 = vmatpush.bf16.msra.mxu0 %v10408
        %10564 = vmatmul.bf16.gmra.mxu0 %v10023
        %v10565 = vpop.f32.mrf.mxu0
        %v10566 = vadd.f32 %v10553, %v10565
        %v10567 = vpop.f32.mrf.mxu0
        %10568 = vdwg.mxu0
        %10569 = vmatpush.bf16.msra.mxu0 %v10359
        %10570 = vmatpush.bf16.msra.mxu0 %v10357
        %10571 = vmatpush.bf16.msra.mxu0 %v10355
        %10572 = vmatpush.bf16.msra.mxu0 %v10353
        %10573 = vmatpush.bf16.msra.mxu0 %v10351
        %10574 = vmatpush.bf16.msra.mxu0 %v10349
        %10575 = vmatpush.bf16.msra.mxu0 %v10347
        %10576 = vmatpush.bf16.msra.mxu0 %v10345
        %10577 = vmatmul.bf16.gmra.mxu0 %v10019
        %v10578 = vpop.f32.mrf.mxu0
        %v10579 = vadd.f32 0.0, %v10578
        %v10580 = vpop.f32.mrf.mxu0
        %10581 = vdwg.mxu0
        %10582 = vmatpush.bf16.msra.mxu0 %v10375
        %10583 = vmatpush.bf16.msra.mxu0 %v10373
        %10584 = vmatpush.bf16.msra.mxu0 %v10371
        %10585 = vmatpush.bf16.msra.mxu0 %v10369
        %10586 = vmatpush.bf16.msra.mxu0 %v10367
        %10587 = vmatpush.bf16.msra.mxu0 %v10365
        %10588 = vmatpush.bf16.msra.mxu0 %v10363
        %10589 = vmatpush.bf16.msra.mxu0 %v10361
        %10590 = vmatmul.bf16.gmra.mxu0 %v10020
        %v10591 = vpop.f32.mrf.mxu0
        %v10592 = vadd.f32 %v10579, %v10591
        %v10593 = vpop.f32.mrf.mxu0
        %10594 = vdwg.mxu0
        %10595 = vmatpush.bf16.msra.mxu0 %v10391
        %10596 = vmatpush.bf16.msra.mxu0 %v10389
        %10597 = vmatpush.bf16.msra.mxu0 %v10387
        %10598 = vmatpush.bf16.msra.mxu0 %v10385
        %10599 = vmatpush.bf16.msra.mxu0 %v10383
        %10600 = vmatpush.bf16.msra.mxu0 %v10381
        %10601 = vmatpush.bf16.msra.mxu0 %v10379
        %10602 = vmatpush.bf16.msra.mxu0 %v10377
        %10603 = vmatmul.bf16.gmra.mxu0 %v10021
        %v10604 = vpop.f32.mrf.mxu0
        %v10605 = vadd.f32 %v10592, %v10604
        %v10606 = vpop.f32.mrf.mxu0
        %10607 = vdwg.mxu0
        %10608 = vmatpush.bf16.msra.mxu0 %v10407
        %10609 = vmatpush.bf16.msra.mxu0 %v10405
        %10610 = vmatpush.bf16.msra.mxu0 %v10403
        %10611 = vmatpush.bf16.msra.mxu0 %v10401
        %10612 = vmatpush.bf16.msra.mxu0 %v10399
        %10613 = vmatpush.bf16.msra.mxu0 %v10397
        %10614 = vmatpush.bf16.msra.mxu0 %v10395
        %10615 = vmatpush.bf16.msra.mxu0 %v10393
        %10616 = vmatmul.bf16.gmra.mxu0 %v10022
        %v10617 = vpop.f32.mrf.mxu0
        %v10618 = vadd.f32 %v10605, %v10617
        %v10619 = vpop.f32.mrf.mxu0
        %10620 = vdwg.mxu0
        %10621 = vmatpush.bf16.msra.mxu0 %v10423
        %10622 = vmatpush.bf16.msra.mxu0 %v10421
        %10623 = vmatpush.bf16.msra.mxu0 %v10419
        %10624 = vmatpush.bf16.msra.mxu0 %v10417
        %10625 = vmatpush.bf16.msra.mxu0 %v10415
        %10626 = vmatpush.bf16.msra.mxu0 %v10413
        %10627 = vmatpush.bf16.msra.mxu0 %v10411
        %10628 = vmatpush.bf16.msra.mxu0 %v10409
        %10629 = vmatmul.bf16.gmra.mxu0 %v10023
        %v10630 = vpop.f32.mrf.mxu0
        %v10631 = vadd.f32 %v10618, %v10630
        %v10632 = vpop.f32.mrf.mxu0
        %10633 = vdwg.mxu0
        %v10714 = vunpack.c.l.b16 %v9939
        %v10715 = vunpack.c.h.b16 %v9939
        %v10716 = vunpack.c.l.b16 %v9940
        %v10717 = vunpack.c.h.b16 %v9940
        %v10718 = vunpack.c.l.b16 %v9941
        %v10719 = vunpack.c.h.b16 %v9941
        %v10720 = vunpack.c.l.b16 %v9942
        %v10721 = vunpack.c.h.b16 %v9942
        %v10722 = vunpack.c.l.b16 %v9943
        %v10723 = vunpack.c.h.b16 %v9943
        %v10724 = vunpack.c.l.b16 %v9944
        %v10725 = vunpack.c.h.b16 %v9944
        %v10726 = vunpack.c.l.b16 %v9945
        %v10727 = vunpack.c.h.b16 %v9945
        %v10728 = vunpack.c.l.b16 %v9946
        %v10729 = vunpack.c.h.b16 %v9946
        %v10730 = vunpack.c.l.b16 %v9947
        %v10731 = vunpack.c.h.b16 %v9947
        %v10732 = vunpack.c.l.b16 %v9948
        %v10733 = vunpack.c.h.b16 %v9948
        %v10734 = vunpack.c.l.b16 %v9949
        %v10735 = vunpack.c.h.b16 %v9949
        %v10736 = vunpack.c.l.b16 %v9950
        %v10737 = vunpack.c.h.b16 %v9950
        %v10738 = vunpack.c.l.b16 %v9951
        %v10739 = vunpack.c.h.b16 %v9951
        %v10740 = vunpack.c.l.b16 %v9952
        %v10741 = vunpack.c.h.b16 %v9952
        %v10742 = vunpack.c.l.b16 %v9953
        %v10743 = vunpack.c.h.b16 %v9953
        %v10744 = vunpack.c.l.b16 %v9954
        %v10745 = vunpack.c.h.b16 %v9954
        %v10746 = vunpack.c.l.b16 %v9955
        %v10747 = vunpack.c.h.b16 %v9955
        %v10748 = vunpack.c.l.b16 %v9956
        %v10749 = vunpack.c.h.b16 %v9956
        %v10750 = vunpack.c.l.b16 %v9957
        %v10751 = vunpack.c.h.b16 %v9957
        %v10752 = vunpack.c.l.b16 %v9958
        %v10753 = vunpack.c.h.b16 %v9958
        %v10754 = vunpack.c.l.b16 %v9959
        %v10755 = vunpack.c.h.b16 %v9959
        %v10756 = vunpack.c.l.b16 %v9960
        %v10757 = vunpack.c.h.b16 %v9960
        %v10758 = vunpack.c.l.b16 %v9961
        %v10759 = vunpack.c.h.b16 %v9961
        %v10760 = vunpack.c.l.b16 %v9962
        %v10761 = vunpack.c.h.b16 %v9962
        %v10762 = vunpack.c.l.b16 %v9963
        %v10763 = vunpack.c.h.b16 %v9963
        %v10764 = vunpack.c.l.b16 %v9964
        %v10765 = vunpack.c.h.b16 %v9964
        %v10766 = vunpack.c.l.b16 %v9965
        %v10767 = vunpack.c.h.b16 %v9965
        %v10768 = vunpack.c.l.b16 %v9966
        %v10769 = vunpack.c.h.b16 %v9966
        %v10770 = vunpack.c.l.b16 %v9967
        %v10771 = vunpack.c.h.b16 %v9967
        %v10772 = vunpack.c.l.b16 %v9968
        %v10773 = vunpack.c.h.b16 %v9968
        %v10774 = vunpack.c.l.b16 %v9969
        %v10775 = vunpack.c.h.b16 %v9969
        %v10776 = vunpack.c.l.b16 %v9970
        %v10777 = vunpack.c.h.b16 %v9970
        %v10778 = vunpack.c.l.b16 %v9971
        %v10779 = vunpack.c.h.b16 %v9971
        %v10780 = vunpack.c.l.b16 %v9972
        %v10781 = vunpack.c.h.b16 %v9972
        %v10782 = vunpack.c.l.b16 %v9973
        %v10783 = vunpack.c.h.b16 %v9973
        %v10784 = vunpack.c.l.b16 %v9974
        %v10785 = vunpack.c.h.b16 %v9974
        %v10786 = vunpack.c.l.b16 %v9975
        %v10787 = vunpack.c.h.b16 %v9975
        %v10788 = vunpack.c.l.b16 %v9976
        %v10789 = vunpack.c.h.b16 %v9976
        %v10790 = vunpack.c.l.b16 %v9977
        %v10791 = vunpack.c.h.b16 %v9977
        %v10792 = vunpack.c.l.b16 %v9978
        %v10793 = vunpack.c.h.b16 %v9978
        %v10794 = vunpack.c.l.b16 %v9979
        %v10795 = vunpack.c.h.b16 %v9979
        %v10796 = vunpack.c.l.b16 %v9980
        %v10797 = vunpack.c.h.b16 %v9980
        %v10798 = vunpack.c.l.b16 %v9981
        %v10799 = vunpack.c.h.b16 %v9981
        %v10800 = vunpack.c.l.b16 %v9982
        %v10801 = vunpack.c.h.b16 %v9982
        %v10802 = vunpack.c.l.b16 %v9983
        %v10803 = vunpack.c.h.b16 %v9983
        %v10804 = vunpack.c.l.b16 %v9984
        %v10805 = vunpack.c.h.b16 %v9984
        %v10806 = vunpack.c.l.b16 %v9985
        %v10807 = vunpack.c.h.b16 %v9985
        %v10808 = vunpack.c.l.b16 %v9986
        %v10809 = vunpack.c.h.b16 %v9986
        %v10810 = vunpack.c.l.b16 %v9987
        %v10811 = vunpack.c.h.b16 %v9987
        %v10812 = vunpack.c.l.b16 %v9988
        %v10813 = vunpack.c.h.b16 %v9988
        %v10814 = vunpack.c.l.b16 %v9989
        %v10815 = vunpack.c.h.b16 %v9989
        %v10816 = vunpack.c.l.b16 %v9990
        %v10817 = vunpack.c.h.b16 %v9990
        %v10818 = vunpack.c.l.b16 %v9991
        %v10819 = vunpack.c.h.b16 %v9991
        %v10820 = vunpack.c.l.b16 %v9992
        %v10821 = vunpack.c.h.b16 %v9992
        %v10822 = vunpack.c.l.b16 %v9993
        %v10823 = vunpack.c.h.b16 %v9993
        %v10824 = vunpack.c.l.b16 %v9994
        %v10825 = vunpack.c.h.b16 %v9994
        %v10826 = vunpack.c.l.b16 %v9995
        %v10827 = vunpack.c.h.b16 %v9995
        %v10828 = vunpack.c.l.b16 %v9996
        %v10829 = vunpack.c.h.b16 %v9996
        %v10830 = vunpack.c.l.b16 %v9997
        %v10831 = vunpack.c.h.b16 %v9997
        %v10832 = vunpack.c.l.b16 %v9998
        %v10833 = vunpack.c.h.b16 %v9998
        %v10834 = vunpack.c.l.b16 %v9999
        %v10835 = vunpack.c.h.b16 %v9999
        %v10836 = vunpack.c.l.b16 %v10000
        %v10837 = vunpack.c.h.b16 %v10000
        %v10838 = vunpack.c.l.b16 %v10001
        %v10839 = vunpack.c.h.b16 %v10001
        %v10840 = vunpack.c.l.b16 %v10002
        %v10841 = vunpack.c.h.b16 %v10002
        %v10842 = vunpack.c.l.b16 %v10003
        %v10843 = vunpack.c.h.b16 %v10003
        %v10844 = vunpack.c.l.b16 %v10004
        %v10845 = vunpack.c.h.b16 %v10004
        %v10846 = vunpack.c.l.b16 %v10005
        %v10847 = vunpack.c.h.b16 %v10005
        %v10848 = vunpack.c.l.b16 %v10006
        %v10849 = vunpack.c.h.b16 %v10006
        %v10850 = vunpack.c.l.b16 %v10007
        %v10851 = vunpack.c.h.b16 %v10007
        %v10852 = vunpack.c.l.b16 %v10008
        %v10853 = vunpack.c.h.b16 %v10008
        %v10854 = vunpack.c.l.b16 %v10009
        %v10855 = vunpack.c.h.b16 %v10009
        %v10856 = vunpack.c.l.b16 %v10010
        %v10857 = vunpack.c.h.b16 %v10010
        %v10858 = vunpack.c.l.b16 %v10011
        %v10859 = vunpack.c.h.b16 %v10011
        %v10860 = vunpack.c.l.b16 %v10012
        %v10861 = vunpack.c.h.b16 %v10012
        %v10862 = vunpack.c.l.b16 %v10013
        %v10863 = vunpack.c.h.b16 %v10013
        %v10864 = vunpack.c.l.b16 %v10014
        %v10865 = vunpack.c.h.b16 %v10014
        %v10866 = vunpack.c.l.b16 %v10015
        %v10867 = vunpack.c.h.b16 %v10015
        %v10868 = vunpack.c.l.b16 %v10016
        %v10869 = vunpack.c.h.b16 %v10016
        %v10870 = vunpack.c.l.b16 %v10017
        %v10871 = vunpack.c.h.b16 %v10017
        %v10872 = vunpack.c.l.b16 %v10018
        %v10873 = vunpack.c.h.b16 %v10018
        %v10874 = vpack.c.b16 %v10716, %v10714
        %v10875 = vpack.c.b16 %v10717, %v10715
        %v10876 = vpack.c.b16 %v10720, %v10718
        %v10877 = vpack.c.b16 %v10721, %v10719
        %v10878 = vpack.c.b16 %v10724, %v10722
        %v10879 = vpack.c.b16 %v10725, %v10723
        %v10880 = vpack.c.b16 %v10728, %v10726
        %v10881 = vpack.c.b16 %v10729, %v10727
        %v10882 = vpack.c.b16 %v10732, %v10730
        %v10883 = vpack.c.b16 %v10733, %v10731
        %v10884 = vpack.c.b16 %v10736, %v10734
        %v10885 = vpack.c.b16 %v10737, %v10735
        %v10886 = vpack.c.b16 %v10740, %v10738
        %v10887 = vpack.c.b16 %v10741, %v10739
        %v10888 = vpack.c.b16 %v10744, %v10742
        %v10889 = vpack.c.b16 %v10745, %v10743
        %v10890 = vpack.c.b16 %v10748, %v10746
        %v10891 = vpack.c.b16 %v10749, %v10747
        %v10892 = vpack.c.b16 %v10752, %v10750
        %v10893 = vpack.c.b16 %v10753, %v10751
        %v10894 = vpack.c.b16 %v10756, %v10754
        %v10895 = vpack.c.b16 %v10757, %v10755
        %v10896 = vpack.c.b16 %v10760, %v10758
        %v10897 = vpack.c.b16 %v10761, %v10759
        %v10898 = vpack.c.b16 %v10764, %v10762
        %v10899 = vpack.c.b16 %v10765, %v10763
        %v10900 = vpack.c.b16 %v10768, %v10766
        %v10901 = vpack.c.b16 %v10769, %v10767
        %v10902 = vpack.c.b16 %v10772, %v10770
        %v10903 = vpack.c.b16 %v10773, %v10771
        %v10904 = vpack.c.b16 %v10776, %v10774
        %v10905 = vpack.c.b16 %v10777, %v10775
        %v10906 = vpack.c.b16 %v10780, %v10778
        %v10907 = vpack.c.b16 %v10781, %v10779
        %v10908 = vpack.c.b16 %v10784, %v10782
        %v10909 = vpack.c.b16 %v10785, %v10783
        %v10910 = vpack.c.b16 %v10788, %v10786
        %v10911 = vpack.c.b16 %v10789, %v10787
        %v10912 = vpack.c.b16 %v10792, %v10790
        %v10913 = vpack.c.b16 %v10793, %v10791
        %v10914 = vpack.c.b16 %v10796, %v10794
        %v10915 = vpack.c.b16 %v10797, %v10795
        %v10916 = vpack.c.b16 %v10800, %v10798
        %v10917 = vpack.c.b16 %v10801, %v10799
        %v10918 = vpack.c.b16 %v10804, %v10802
        %v10919 = vpack.c.b16 %v10805, %v10803
        %v10920 = vpack.c.b16 %v10808, %v10806
        %v10921 = vpack.c.b16 %v10809, %v10807
        %v10922 = vpack.c.b16 %v10812, %v10810
        %v10923 = vpack.c.b16 %v10813, %v10811
        %v10924 = vpack.c.b16 %v10816, %v10814
        %v10925 = vpack.c.b16 %v10817, %v10815
        %v10926 = vpack.c.b16 %v10820, %v10818
        %v10927 = vpack.c.b16 %v10821, %v10819
        %v10928 = vpack.c.b16 %v10824, %v10822
        %v10929 = vpack.c.b16 %v10825, %v10823
        %v10930 = vpack.c.b16 %v10828, %v10826
        %v10931 = vpack.c.b16 %v10829, %v10827
        %v10932 = vpack.c.b16 %v10832, %v10830
        %v10933 = vpack.c.b16 %v10833, %v10831
        %v10934 = vpack.c.b16 %v10836, %v10834
        %v10935 = vpack.c.b16 %v10837, %v10835
        %v10936 = vpack.c.b16 %v10840, %v10838
        %v10937 = vpack.c.b16 %v10841, %v10839
        %v10938 = vpack.c.b16 %v10844, %v10842
        %v10939 = vpack.c.b16 %v10845, %v10843
        %v10940 = vpack.c.b16 %v10848, %v10846
        %v10941 = vpack.c.b16 %v10849, %v10847
        %v10942 = vpack.c.b16 %v10852, %v10850
        %v10943 = vpack.c.b16 %v10853, %v10851
        %v10944 = vpack.c.b16 %v10856, %v10854
        %v10945 = vpack.c.b16 %v10857, %v10855
        %v10946 = vpack.c.b16 %v10860, %v10858
        %v10947 = vpack.c.b16 %v10861, %v10859
        %v10948 = vpack.c.b16 %v10864, %v10862
        %v10949 = vpack.c.b16 %v10865, %v10863
        %v10950 = vpack.c.b16 %v10868, %v10866
        %v10951 = vpack.c.b16 %v10869, %v10867
        %v10952 = vpack.c.b16 %v10872, %v10870
        %v10953 = vpack.c.b16 %v10873, %v10871
        %11034 = vmatpush.bf16.msra.mxu0 %v10888
        %11035 = vmatpush.bf16.msra.mxu0 %v10886
        %11036 = vmatpush.bf16.msra.mxu0 %v10884
        %11037 = vmatpush.bf16.msra.mxu0 %v10882
        %11038 = vmatpush.bf16.msra.mxu0 %v10880
        %11039 = vmatpush.bf16.msra.mxu0 %v10878
        %11040 = vmatpush.bf16.msra.mxu0 %v10876
        %11041 = vmatpush.bf16.msra.mxu0 %v10874
        %11042 = vmatmul.bf16.gmra.mxu0 %v9934
        %v11043 = vpop.f32.mrf.mxu0
        %v11044 = vadd.f32 %v10566, %v11043
        %v11045 = vpop.f32.mrf.mxu0
        %11046 = vdwg.mxu0
        %11047 = vmatpush.bf16.msra.mxu0 %v10904
        %11048 = vmatpush.bf16.msra.mxu0 %v10902
        %11049 = vmatpush.bf16.msra.mxu0 %v10900
        %11050 = vmatpush.bf16.msra.mxu0 %v10898
        %11051 = vmatpush.bf16.msra.mxu0 %v10896
        %11052 = vmatpush.bf16.msra.mxu0 %v10894
        %11053 = vmatpush.bf16.msra.mxu0 %v10892
        %11054 = vmatpush.bf16.msra.mxu0 %v10890
        %11055 = vmatmul.bf16.gmra.mxu0 %v9935
        %v11056 = vpop.f32.mrf.mxu0
        %v11057 = vadd.f32 %v11044, %v11056
        %v11058 = vpop.f32.mrf.mxu0
        %11059 = vdwg.mxu0
        %11060 = vmatpush.bf16.msra.mxu0 %v10920
        %11061 = vmatpush.bf16.msra.mxu0 %v10918
        %11062 = vmatpush.bf16.msra.mxu0 %v10916
        %11063 = vmatpush.bf16.msra.mxu0 %v10914
        %11064 = vmatpush.bf16.msra.mxu0 %v10912
        %11065 = vmatpush.bf16.msra.mxu0 %v10910
        %11066 = vmatpush.bf16.msra.mxu0 %v10908
        %11067 = vmatpush.bf16.msra.mxu0 %v10906
        %11068 = vmatmul.bf16.gmra.mxu0 %v9936
        %v11069 = vpop.f32.mrf.mxu0
        %v11070 = vadd.f32 %v11057, %v11069
        %v11071 = vpop.f32.mrf.mxu0
        %11072 = vdwg.mxu0
        %11073 = vmatpush.bf16.msra.mxu0 %v10936
        %11074 = vmatpush.bf16.msra.mxu0 %v10934
        %11075 = vmatpush.bf16.msra.mxu0 %v10932
        %11076 = vmatpush.bf16.msra.mxu0 %v10930
        %11077 = vmatpush.bf16.msra.mxu0 %v10928
        %11078 = vmatpush.bf16.msra.mxu0 %v10926
        %11079 = vmatpush.bf16.msra.mxu0 %v10924
        %11080 = vmatpush.bf16.msra.mxu0 %v10922
        %11081 = vmatmul.bf16.gmra.mxu0 %v9937
        %v11082 = vpop.f32.mrf.mxu0
        %v11083 = vadd.f32 %v11070, %v11082
        %v11084 = vpop.f32.mrf.mxu0
        %11085 = vdwg.mxu0
        %11086 = vmatpush.bf16.msra.mxu0 %v10952
        %11087 = vmatpush.bf16.msra.mxu0 %v10950
        %11088 = vmatpush.bf16.msra.mxu0 %v10948
        %11089 = vmatpush.bf16.msra.mxu0 %v10946
        %11090 = vmatpush.bf16.msra.mxu0 %v10944
        %11091 = vmatpush.bf16.msra.mxu0 %v10942
        %11092 = vmatpush.bf16.msra.mxu0 %v10940
        %11093 = vmatpush.bf16.msra.mxu0 %v10938
        %11094 = vmatmul.bf16.gmra.mxu0 %v9938
        %v11095 = vpop.f32.mrf.mxu0
        %v11096 = vadd.f32 %v11083, %v11095
        %v11097 = vpop.f32.mrf.mxu0
        %11098 = vdwg.mxu0
        %11099 = vmatpush.bf16.msra.mxu0 %v10889
        %11100 = vmatpush.bf16.msra.mxu0 %v10887
        %11101 = vmatpush.bf16.msra.mxu0 %v10885
        %11102 = vmatpush.bf16.msra.mxu0 %v10883
        %11103 = vmatpush.bf16.msra.mxu0 %v10881
        %11104 = vmatpush.bf16.msra.mxu0 %v10879
        %11105 = vmatpush.bf16.msra.mxu0 %v10877
        %11106 = vmatpush.bf16.msra.mxu0 %v10875
        %11107 = vmatmul.bf16.gmra.mxu0 %v9934
        %v11108 = vpop.f32.mrf.mxu0
        %v11109 = vadd.f32 %v10631, %v11108
        %v11110 = vpop.f32.mrf.mxu0
        %11111 = vdwg.mxu0
        %11112 = vmatpush.bf16.msra.mxu0 %v10905
        %11113 = vmatpush.bf16.msra.mxu0 %v10903
        %11114 = vmatpush.bf16.msra.mxu0 %v10901
        %11115 = vmatpush.bf16.msra.mxu0 %v10899
        %11116 = vmatpush.bf16.msra.mxu0 %v10897
        %11117 = vmatpush.bf16.msra.mxu0 %v10895
        %11118 = vmatpush.bf16.msra.mxu0 %v10893
        %11119 = vmatpush.bf16.msra.mxu0 %v10891
        %11120 = vmatmul.bf16.gmra.mxu0 %v9935
        %v11121 = vpop.f32.mrf.mxu0
        %v11122 = vadd.f32 %v11109, %v11121
        %v11123 = vpop.f32.mrf.mxu0
        %11124 = vdwg.mxu0
        %11125 = vmatpush.bf16.msra.mxu0 %v10921
        %11126 = vmatpush.bf16.msra.mxu0 %v10919
        %11127 = vmatpush.bf16.msra.mxu0 %v10917
        %11128 = vmatpush.bf16.msra.mxu0 %v10915
        %11129 = vmatpush.bf16.msra.mxu0 %v10913
        %11130 = vmatpush.bf16.msra.mxu0 %v10911
        %11131 = vmatpush.bf16.msra.mxu0 %v10909
        %11132 = vmatpush.bf16.msra.mxu0 %v10907
        %11133 = vmatmul.bf16.gmra.mxu0 %v9936
        %v11134 = vpop.f32.mrf.mxu0
        %v11135 = vadd.f32 %v11122, %v11134
        %v11136 = vpop.f32.mrf.mxu0
        %11137 = vdwg.mxu0
        %11138 = vmatpush.bf16.msra.mxu0 %v10937
        %11139 = vmatpush.bf16.msra.mxu0 %v10935
        %11140 = vmatpush.bf16.msra.mxu0 %v10933
        %11141 = vmatpush.bf16.msra.mxu0 %v10931
        %11142 = vmatpush.bf16.msra.mxu0 %v10929
        %11143 = vmatpush.bf16.msra.mxu0 %v10927
        %11144 = vmatpush.bf16.msra.mxu0 %v10925
        %11145 = vmatpush.bf16.msra.mxu0 %v10923
        %11146 = vmatmul.bf16.gmra.mxu0 %v9937
        %v11147 = vpop.f32.mrf.mxu0
        %v11148 = vadd.f32 %v11135, %v11147
        %v11149 = vpop.f32.mrf.mxu0
        %11150 = vdwg.mxu0
        %11151 = vmatpush.bf16.msra.mxu0 %v10953
        %11152 = vmatpush.bf16.msra.mxu0 %v10951
        %11153 = vmatpush.bf16.msra.mxu0 %v10949
        %11154 = vmatpush.bf16.msra.mxu0 %v10947
        %11155 = vmatpush.bf16.msra.mxu0 %v10945
        %11156 = vmatpush.bf16.msra.mxu0 %v10943
        %11157 = vmatpush.bf16.msra.mxu0 %v10941
        %11158 = vmatpush.bf16.msra.mxu0 %v10939
        %11159 = vmatmul.bf16.gmra.mxu0 %v9938
        %v11160 = vpop.f32.mrf.mxu0
        %v11161 = vadd.f32 %v11148, %v11160
        %v11162 = vpop.f32.mrf.mxu0
        %11163 = vdwg.mxu0
        %v11164 = vld [vmem:[#allocation13] sm:$0x3]
        %v11166 = vperm.slane %v11164, 0
        %v11167 = vperm.slane %v11164, 1
        %v11170 = vadd.f32 %v11096, %v11166
        %v11171 = vadd.f32 %v11161, %v11167
        %v11172 = vmax.f32 %v11170, 0.0
        %v11173 = vmax.f32 %v11171, 0.0
        %11174 = vst [vmem:[%s459] sm:$0xff] %v11172
        %11175 = vst [vmem:[%s459 + $0x8] sm:$0xff] %v11173
        %p11176 = scmp.lt.s32.totalorder %s25, 1
        %s11177 = scalar_select %p11176, %s25, 1
        %s11178 = smul.addr %s11177, 2
        %s11179 = smul.addr %s11178, 8
        %s11180 = scalar_lea.vmem %s9, %s11179
        // Predicated region
        $region89: #{forward.1} parent=55 // pred_check
          %p11181 = pneg %p237
        $region90: #{forward.1} parent=55 // pred_check_branch
          %11183 = sbr.rel (%p11181) target = $region92
        $region91: #{forward.1} parent=55 // pred_region
          _
        $region92: #{forward.1} parent=55 // pred_fallthru
          _
      $region56: #{forward.1} parent=5 // pred_fallthru
        _
      %p11184 = scmp.le.s32.totalorder 2, %s20
      // Predicated region
      $region93: #{forward.1} parent=5 // pred_check
        %p11185 = pneg %p11184
      $region94: #{forward.1} parent=5 // pred_check_branch
        %11187 = sbr.rel (%p11185) target = $region96
      $region95: #{forward.1} parent=5 // pred_region
        %s11188 = ssub.s32 %s20, 2
        // Predicated region
        $region97: #{forward.1} parent=95 // pred_check
          %p11189 = pneg %p243
        $region98: #{forward.1} parent=95 // pred_check_branch
          %11191 = sbr.rel (%p11189) target = $region100
        $region99: #{forward.1} parent=95 // pred_region
          %p11192 = scmp.lt.s32.totalorder %s26, 1
          %s11193 = scalar_select %p11192, %s26, 1
          %s11194 = smul.addr %s11193, 2
          %s11195 = smul.addr %s11194, 8
          %s11196 = scalar_lea.vmem %s9, %s11195
        $region100: #{forward.1} parent=95 // pred_fallthru
          _
      $region96: #{forward.1} parent=5 // pred_fallthru
        _
    $region6: #{forward.1} parent=1 // loop_footer
      %s24 = sadd.s32 1, %s20
    $region7: #{forward.1} parent=1 // loop_footer_branch
      %19 = sbr.rel target = $region3
    $region8: #{forward.1} parent=1 // loop_exit
      _
    %11197 = vsyncpa [#allocation3], 1
    %s11198 = scalar_lea.sflag [#allocation3], 1
    %11199 = vsyncpa %s11198, 1
    %11200 = vsyncpa [#allocation5], 1
    %11201 = vsyncpa [#allocation8], 1
    %11202 = vsyncpa [#allocation11], 1
    %11203 = vsyncpa [#allocation14], 1

</llo_original>
